<compile_context>
chip_gen: v7x
topology: tpu7x:2x2x1
jax: 0.10.0
libtpu: 0.0.40
codegen_flags: <defaults>
</compile_context>

<pallas_src>
import functools
import math

import jax
import jax.numpy as jnp
from jax.experimental import pallas as pl
from jax.experimental.pallas import tpu as pltpu  # noqa: F401  (TPU backend)

# ----------------------------- tiny config ---------------------------------
VOCAB = 256
DIM = 128
N_HEADS = 4
HEAD_DIM = DIM // N_HEADS            # 32
HALF = HEAD_DIM // 2                 # 16
N_LAYERS = 4
QUERY_LAYER = 2                      # last 2 layers receive the adapter
FFN = 256
EPS = 1e-5
PAD_ID = -1                          # LLaMA sentencepiece pad_id
IGNORE = -100
NEG_INF = -1e30
SUBLANE_PAD = 16                     # pad per-candidate seq len to this


# ----------------------- fused whole-model Pallas kernel --------------------
def _fused_forward_kernel(
    h0_ref, cos_ref, sin_ref, amask_ref, labels_ref, adapter_ref, gate_ref,
    seg_ref,
    wqkv_ref, wo_ref, w13_ref, w2_ref,
    attn_norm_ref, ffn_norm_ref, final_norm_ref, w_out_ref,
    loss_ref, *, B, S):
    """Entire LLaMA-adapter forward + per-candidate summed CE in one kernel.

    Activations are (B*S, D) f32 in VMEM; weights are bf16 (f32 MXU accum).
    RoPE rotate-half and the attention scale are pre-folded into wqkv.
    """
    BS = B * S

    h = h0_ref[...]                                  # (BS, D) f32
    cos = cos_ref[...]                               # (BS, D)
    sin = sin_ref[...]                               # (BS, D)
    amask = amask_ref[...]                           # (BS, BS) additive mask

    def rmsnorm(x, w):                               # x:(BS,D), w:(1,D)
        var = jnp.mean(x * x, axis=-1, keepdims=True)
        return x * jax.lax.rsqrt(var + EPS) * w

    def mm(a, w_bf16):                               # bf16 MXU, f32 accum
        return jax.lax.dot_general(
            a.astype(jnp.bfloat16), w_bf16,
            dimension_numbers=(((1,), (0,)), ((), ())),
            preferred_element_type=jnp.float32)

    for li in range(N_LAYERS):
        wqkv = wqkv_ref[li]                          # (D, 5D) bf16
        x = rmsnorm(h, attn_norm_ref[li])
        qkv = mm(x, wqkv)                            # (BS, 5D) f32
        # RoPE with rotate-half pre-folded into weight columns (lane-aligned
        # 128-wide slices only, scale already folded into the q columns).
        q = qkv[:, :DIM] * cos + qkv[:, 3 * DIM:4 * DIM] * sin
        k = qkv[:, DIM:2 * DIM] * cos + qkv[:, 4 * DIM:5 * DIM] * sin
        v = qkv[:, 2 * DIM:3 * DIM]

        o = jnp.zeros((BS, DIM), jnp.float32)
        for hh in range(N_HEADS):
            sl = slice(hh * HEAD_DIM, (hh + 1) * HEAD_DIM)
            qh = q[:, sl].astype(jnp.bfloat16)
            kh = k[:, sl].astype(jnp.bfloat16)
            vh = v[:, sl].astype(jnp.bfloat16)
            s = jax.lax.dot_general(                 # q @ k^T over all rows
                qh, kh, dimension_numbers=(((1,), (1,)), ((), ())),
                preferred_element_type=jnp.float32)
            s = s + amask                            # block-diag causal mask
            m = jnp.max(s, axis=-1, keepdims=True)
            e = jnp.exp(s - m)
            p = e * pl.reciprocal(jnp.sum(e, axis=-1, keepdims=True),
                                  approx=True)
            head_o = jax.lax.dot_general(            # (BS, HEAD_DIM)
                p.astype(jnp.bfloat16), vh,
                dimension_numbers=(((1,), (0,)), ((), ())),
                preferred_element_type=jnp.float32)
            # accumulate through the 32-row (sublane-aligned) Wo slice instead
            # of concatenating heads along lanes.
            o = o + mm(head_o, wo_ref[li][sl, :])

        qi = li - (N_LAYERS - QUERY_LAYER)
        if qi >= 0:
            # Single adapter token: softmax over one key is identically 1, so
            # the gated adapter attention reduces to gate * (adapter @ Wv)
            # (adapter already expanded to (BS, D) on the host).
            av = mm(adapter_ref[qi], wqkv[:, 2 * DIM:3 * DIM]) * gate_ref[qi]
            o = o + mm(av, wo_ref[li])

        h = h + o

        x = rmsnorm(h, ffn_norm_ref[li])
        h13 = mm(x, w13_ref[li])                     # (BS, 2F)
        h1 = h13[:, :FFN]
        h3 = h13[:, FFN:]
        # silu(h1) * h3 -- divide via EUP reciprocal (exp already on EUP)
        g = h1 * pl.reciprocal(1.0 + jnp.exp(-h1), approx=True) * h3
        h = h + mm(g, w2_ref[li])

    # ---- final RMSNorm + output head + per-candidate summed CE ----
    xf = rmsnorm(h, final_norm_ref[...])
    logits = mm(xf, w_out_ref[...])                  # (BS, V) f32, stays VMEM
    m = jnp.max(logits, axis=-1, keepdims=True)
    lse = jnp.log(jnp.sum(jnp.exp(logits - m), axis=-1, keepdims=True)) + m
    labels = labels_ref[...]                         # (BS, 1) int32
    col = jax.lax.broadcasted_iota(jnp.int32, (BS, VOCAB), 1)
    onehot = (col == labels).astype(jnp.float32)     # never matches -100
    tgt = jnp.sum(logits * onehot, axis=-1, keepdims=True)
    valid = (labels != IGNORE).astype(jnp.float32)
    tok = (lse - tgt) * valid                        # (BS, 1) per-token CE
    # per-candidate sums via one tiny f32 matmul against the segment matrix
    loss_ref[...] = jax.lax.dot_general(
        seg_ref[...], tok, dimension_numbers=(((1,), (0,)), ((), ())),
        preferred_element_type=jnp.float32)          # (B, 1)


# ----------------------------- host-side glue --------------------------------
def _rope_tables(S):
    """Rotate-half cos/sin tables of full width D (per-head pattern tiled)."""
    inv_freq = 1.0 / (10000.0 ** (jnp.arange(0, HEAD_DIM, 2, dtype=jnp.float32)
                                  / HEAD_DIM))                 # (16,)
    t = jnp.arange(S, dtype=jnp.float32)
    ang = jnp.outer(t, inv_freq)                                # (S, 16)
    ang = jnp.concatenate([ang, ang], axis=-1)                  # (S, 32)
    ang = jnp.tile(ang, (1, N_HEADS))                           # (S, 128)
    return jnp.cos(ang), jnp.sin(ang)


@jax.jit
def _forward_losses(params, tokens, targets):
    B, S_real = tokens.shape
    # pad per-candidate sequence length to a sublane-friendly multiple of 16;
    # padded rows self-attend causally and carry IGNORE labels, so results
    # are exactly unchanged.
    S = max(SUBLANE_PAD, ((S_real + SUBLANE_PAD - 1) // SUBLANE_PAD)
            * SUBLANE_PAD)
    pad = S - S_real
    tokens_p = jnp.pad(tokens, ((0, 0), (0, pad)), constant_values=0)
    targets_p = jnp.pad(targets, ((0, 0), (0, pad)), constant_values=IGNORE)
    BS = B * S

    h0 = jnp.take(params["embed"], tokens_p, axis=0).reshape(BS, DIM)

    cos_s, sin_s = _rope_tables(S)
    cos_bs = jnp.tile(cos_s, (B, 1))
    sin_bs = jnp.tile(sin_s, (B, 1))

    # block-diagonal (per candidate) causal additive mask over flattened rows
    r = jnp.arange(BS)
    rb, rp = r // S, r % S
    allowed = (rb[:, None] == rb[None, :]) & (rp[None, :] <= rp[:, None])
    amask = jnp.where(allowed, 0.0, NEG_INF).astype(jnp.float32)

    # per-candidate segment-sum matrix for the final CE reduction
    seg = (rb[None, :] == jnp.arange(B)[:, None]).astype(jnp.float32)  # (B,BS)

    # shifted labels aligned with each position's logits (last position ignored)
    labels = jnp.concatenate(
        [targets_p[:, 1:], jnp.full((B, 1), IGNORE, jnp.int32)],
        axis=1).reshape(BS, 1)

    # adapter token per adapter layer: visual_query + prefix_query[layer],
    # pre-expanded over sequence positions (lane/sublane-dense in the kernel)
    vq = jnp.broadcast_to(params["visual_query"], (B, DIM))
    adapter = vq[None, :, :] + params["prefix_query"][:, None, :]   # (QL,B,D)
    adapter_exp = jnp.repeat(adapter, S, axis=1)                    # (QL,BS,D)
    gate_lanes = jnp.repeat(jnp.tanh(params["gate"]), HEAD_DIM,
                            axis=-1)[:, None, :]                    # (QL,1,D)

    kern = functools.partial(_fused_forward_kernel, B=B, S=S)
    loss = pl.pallas_call(
        kern,
        out_shape=jax.ShapeDtypeStruct((B, 1), jnp.float32),
    )(h0, cos_bs, sin_bs, amask, labels, adapter_exp, gate_lanes, seg,
      params["wqkv"], params["wo"], params["w13"], params["w2"],
      params["attn_norm"], params["ffn_norm"], params["final_norm"],
      params["w_out"])
    return loss[:, 0]


def init_params(key):
    def normal(k, shape, scale=0.02):
        return jax.random.normal(k, shape, jnp.float32) * scale

    keys = jax.random.split(key, 4 + 7 * N_LAYERS)
    it = iter(keys)

    # Per-head column permutation taking LLaMA's interleaved RoPE layout to
    # rotate-half layout (evens then odds); applying it to the output columns
    # of wq/wk keeps attention scores exactly identical to interleaved RoPE.
    perm = jnp.concatenate([
        jnp.concatenate([jnp.arange(0, HEAD_DIM, 2),
                         jnp.arange(1, HEAD_DIM, 2)]) + hh * HEAD_DIM
        for hh in range(N_HEADS)])

    def rot_half_cols(w):
        # rotate_half applied to the output columns: x @ rot(w) == rotate_half(x @ w)
        w3 = w.reshape(DIM, N_HEADS, HEAD_DIM)
        return jnp.concatenate([-w3[:, :, HALF:], w3[:, :, :HALF]],
                               axis=-1).reshape(DIM, DIM)

    scale = 1.0 / math.sqrt(HEAD_DIM)      # attention scale folded into wq

    wqkv, wo, w13, w2 = [], [], [], []
    for _ in range(N_LAYERS):
        wq = normal(next(it), (DIM, DIM))[:, perm] * scale
        wk = normal(next(it), (DIM, DIM))[:, perm]
        wv = normal(next(it), (DIM, DIM))
        wqkv.append(jnp.concatenate(
            [wq, wk, wv, rot_half_cols(wq), rot_half_cols(wk)], axis=1))
        wo.append(normal(next(it), (DIM, DIM)))
        w1 = normal(next(it), (DIM, FFN))
        w3 = normal(next(it), (DIM, FFN))
        w13.append(jnp.concatenate([w1, w3], axis=1))           # (D, 2F)
        w2.append(normal(next(it), (FFN, DIM)))

    return {
        "embed": normal(next(it), (VOCAB, DIM)),
        "wqkv": jnp.stack(wqkv).astype(jnp.bfloat16),           # (L, D, 5D)
        "wo": jnp.stack(wo).astype(jnp.bfloat16),               # (L, D, D)
        "w13": jnp.stack(w13).astype(jnp.bfloat16),             # (L, D, 2F)
        "w2": jnp.stack(w2).astype(jnp.bfloat16),               # (L, F, D)
        "attn_norm": jnp.ones((N_LAYERS, 1, DIM), jnp.float32),
        "ffn_norm": jnp.ones((N_LAYERS, 1, DIM), jnp.float32),
        "final_norm": jnp.ones((1, DIM), jnp.float32),
        "w_out": normal(next(it), (DIM, VOCAB)).astype(jnp.bfloat16),
        "prefix_query": normal(next(it), (QUERY_LAYER, DIM)),
        "visual_query": normal(next(it), (1, DIM)),
        # torch zero-inits the gate; nonzero here so the adapter path carries
        # signal with synthetic weights.
        "gate": jnp.full((QUERY_LAYER, N_HEADS), 0.1, jnp.float32),
    }


def raw_predict(params, prompt_ids, candidate_token_lists):
    """Mirrors imagebindLLM_Interface.raw_predict (likelihood_reduction='sum')."""
    n_cand = len(candidate_token_lists)
    input_ids = jnp.tile(prompt_ids[None, :], (n_cand, 1))            # (B, P)

    max_len = max(len(c) for c in candidate_token_lists)
    padded = jnp.full((n_cand, max_len), PAD_ID, jnp.int32)
    for i, cand in enumerate(candidate_token_lists):
        padded = padded.at[i, : len(cand)].set(jnp.asarray(cand, jnp.int32))

    candidates_ids = padded[:, 1:]                                    # drop BOS
    cand_targets = jnp.where(candidates_ids == PAD_ID, IGNORE, candidates_ids)
    targets = jnp.concatenate(
        [jnp.full_like(input_ids, IGNORE), cand_targets], axis=1)     # (B, S)
    candidates_ids = jnp.where(candidates_ids == PAD_ID, 0, candidates_ids)
    tokens = jnp.concatenate([input_ids, candidates_ids], axis=1)     # (B, S)

    loss = _forward_losses(params, tokens, targets)                   # (B,)
    output_class_rank = jnp.argsort(loss)[0]
    return output_class_rank, loss


if __name__ == "__main__":
    key = jax.random.PRNGKey(0)
    pkey, tkey, ckey = jax.random.split(key, 3)
    params = init_params(pkey)

    # deterministic "tokenized" prompt (len 6, BOS first) and 3 candidates
    prompt_ids = jax.random.randint(tkey, (6,), 1, VOCAB, dtype=jnp.int32)
    cand_raw = jax.random.randint(ckey, (3, 4), 1, VOCAB, dtype=jnp.int32)
    candidate_token_lists = [
        [int(x) for x in cand_raw[0]],        # len 4
        [int(x) for x in cand_raw[1][:3]],    # len 3
        [int(x) for x in cand_raw[2][:2]],    # len 2
    ]

    rank, loss = raw_predict(params, prompt_ids, candidate_token_lists)
    jax.block_until_ready((rank, loss))
    print("KERNEL_OK")
</pallas_src>

<mosaic_0001>
module attributes {stable_mosaic.version = 11 : i64} {
  func.func @_fused_forward_kernel(%arg0: memref<48x128xf32, #tpu.memory_space<vmem>>, %arg1: memref<48x128xf32, #tpu.memory_space<vmem>>, %arg2: memref<48x128xf32, #tpu.memory_space<vmem>>, %arg3: memref<48x48xf32, #tpu.memory_space<vmem>>, %arg4: memref<48x1xi32, #tpu.memory_space<vmem>>, %arg5: memref<2x48x128xf32, #tpu.memory_space<vmem>>, %arg6: memref<2x1x128xf32, #tpu.memory_space<vmem>>, %arg7: memref<3x48xf32, #tpu.memory_space<vmem>>, %arg8: memref<4x128x640xbf16, #tpu.memory_space<vmem>>, %arg9: memref<4x128x128xbf16, #tpu.memory_space<vmem>>, %arg10: memref<4x128x512xbf16, #tpu.memory_space<vmem>>, %arg11: memref<4x256x128xbf16, #tpu.memory_space<vmem>>, %arg12: memref<4x1x128xf32, #tpu.memory_space<vmem>>, %arg13: memref<4x1x128xf32, #tpu.memory_space<vmem>>, %arg14: memref<1x128xf32, #tpu.memory_space<vmem>>, %arg15: memref<128x256xbf16, #tpu.memory_space<vmem>>, %arg16: memref<3x1xf32, #tpu.memory_space<vmem>>) attributes {dimension_semantics = [], scalar_prefetch = 0 : i64, scratch_operands = 0 : i64, tpu.core_type = #tpu.core_type<tc>} {
    %c0 = arith.constant 0 : index
    %c0_0 = arith.constant 0 : index
    %0 = vector.load %arg0[%c0, %c0_0] : memref<48x128xf32, #tpu.memory_space<vmem>>, vector<48x128xf32>
    %c0_1 = arith.constant 0 : index
    %c0_2 = arith.constant 0 : index
    %1 = vector.load %arg1[%c0_1, %c0_2] : memref<48x128xf32, #tpu.memory_space<vmem>>, vector<48x128xf32>
    %c0_3 = arith.constant 0 : index
    %c0_4 = arith.constant 0 : index
    %2 = vector.load %arg2[%c0_3, %c0_4] : memref<48x128xf32, #tpu.memory_space<vmem>>, vector<48x128xf32>
    %c0_5 = arith.constant 0 : index
    %c0_6 = arith.constant 0 : index
    %3 = vector.load %arg3[%c0_5, %c0_6] : memref<48x48xf32, #tpu.memory_space<vmem>>, vector<48x48xf32>
    %c0_7 = arith.constant 0 : index
    %c0_8 = arith.constant 0 : index
    %c0_9 = arith.constant 0 : index
    %4 = vector.load %arg8[%c0_7, %c0_8, %c0_9] : memref<4x128x640xbf16, #tpu.memory_space<vmem>>, vector<1x128x640xbf16>
    %5 = vector.shape_cast %4 : vector<1x128x640xbf16> to vector<128x640xbf16>
    %c0_10 = arith.constant 0 : index
    %c0_11 = arith.constant 0 : index
    %c0_12 = arith.constant 0 : index
    %6 = vector.load %arg12[%c0_10, %c0_11, %c0_12] : memref<4x1x128xf32, #tpu.memory_space<vmem>>, vector<1x1x128xf32>
    %7 = vector.shape_cast %6 : vector<1x1x128xf32> to vector<1x128xf32>
    %8 = arith.mulf %0, %0 : vector<48x128xf32>
    %cst = arith.constant dense<0.000000e+00> : vector<48xf32>
    %9 = vector.multi_reduction <add>, %8, %cst [1] : vector<48x128xf32> to vector<48xf32>
    %10 = vector.shape_cast %9 : vector<48xf32> to vector<48x1xf32>
    %cst_13 = arith.constant 1.280000e+02 : f32
    %11 = vector.broadcast %cst_13 : f32 to vector<48x1xf32>
    %12 = arith.divf %10, %11 : vector<48x1xf32>
    %cst_14 = arith.constant 9.99999974E-6 : f32
    %13 = vector.broadcast %cst_14 : f32 to vector<48x1xf32>
    %14 = arith.addf %12, %13 : vector<48x1xf32>
    %15 = math.rsqrt %14 : vector<48x1xf32>
    %16 = vector.broadcast %15 : vector<48x1xf32> to vector<48x128xf32>
    %17 = arith.mulf %0, %16 : vector<48x128xf32>
    %18 = vector.broadcast %7 : vector<1x128xf32> to vector<48x128xf32>
    %19 = arith.mulf %17, %18 : vector<48x128xf32>
    %20 = arith.truncf %19 : vector<48x128xf32> to vector<48x128xbf16>
    %cst_15 = arith.constant dense<0.000000e+00> : vector<48x640xf32>
    %21 = tpu.matmul %20, %5, %cst_15 {dimension_numbers = #tpu.dot_dimension_numbers<[1], [0], [0], [1], [0, 0, 1, 1], [], []>} : vector<48x128xbf16>, vector<128x640xbf16>, vector<48x640xf32> -> vector<48x640xf32>
    %22 = vector.extract_strided_slice %21 {offsets = [0, 0], sizes = [48, 128], strides = [1, 1]} : vector<48x640xf32> to vector<48x128xf32>
    %23 = arith.mulf %22, %1 : vector<48x128xf32>
    %24 = vector.extract_strided_slice %21 {offsets = [0, 384], sizes = [48, 128], strides = [1, 1]} : vector<48x640xf32> to vector<48x128xf32>
    %25 = arith.mulf %24, %2 : vector<48x128xf32>
    %26 = arith.addf %23, %25 : vector<48x128xf32>
    %27 = vector.extract_strided_slice %21 {offsets = [0, 128], sizes = [48, 128], strides = [1, 1]} : vector<48x640xf32> to vector<48x128xf32>
    %28 = arith.mulf %27, %1 : vector<48x128xf32>
    %29 = vector.extract_strided_slice %21 {offsets = [0, 512], sizes = [48, 128], strides = [1, 1]} : vector<48x640xf32> to vector<48x128xf32>
    %30 = arith.mulf %29, %2 : vector<48x128xf32>
    %31 = arith.addf %28, %30 : vector<48x128xf32>
    %32 = vector.extract_strided_slice %21 {offsets = [0, 256], sizes = [48, 128], strides = [1, 1]} : vector<48x640xf32> to vector<48x128xf32>
    %cst_16 = arith.constant 0.000000e+00 : f32
    %33 = vector.broadcast %cst_16 : f32 to vector<48x128xf32>
    %34 = vector.extract_strided_slice %26 {offsets = [0, 0], sizes = [48, 32], strides = [1, 1]} : vector<48x128xf32> to vector<48x32xf32>
    %35 = arith.truncf %34 : vector<48x32xf32> to vector<48x32xbf16>
    %36 = vector.extract_strided_slice %31 {offsets = [0, 0], sizes = [48, 32], strides = [1, 1]} : vector<48x128xf32> to vector<48x32xf32>
    %37 = arith.truncf %36 : vector<48x32xf32> to vector<48x32xbf16>
    %38 = vector.extract_strided_slice %32 {offsets = [0, 0], sizes = [48, 32], strides = [1, 1]} : vector<48x128xf32> to vector<48x32xf32>
    %39 = arith.truncf %38 : vector<48x32xf32> to vector<48x32xbf16>
    %cst_17 = arith.constant dense<0.000000e+00> : vector<48x48xf32>
    %40 = tpu.matmul %35, %37, %cst_17 {dimension_numbers = #tpu.dot_dimension_numbers<[1], [1], [0], [0], [0, 0, 1, 0], [], []>} : vector<48x32xbf16>, vector<48x32xbf16>, vector<48x48xf32> -> vector<48x48xf32>
    %41 = arith.addf %40, %3 : vector<48x48xf32>
    %cst_18 = arith.constant dense<0xFF800000> : vector<48xf32>
    %42 = vector.multi_reduction <maximumf>, %41, %cst_18 [1] : vector<48x48xf32> to vector<48xf32>
    %43 = vector.shape_cast %42 : vector<48xf32> to vector<48x1xf32>
    %44 = vector.broadcast %43 : vector<48x1xf32> to vector<48x48xf32>
    %45 = arith.subf %41, %44 : vector<48x48xf32>
    %46 = math.exp %45 : vector<48x48xf32>
    %cst_19 = arith.constant dense<0.000000e+00> : vector<48xf32>
    %47 = vector.multi_reduction <add>, %46, %cst_19 [1] : vector<48x48xf32> to vector<48xf32>
    %48 = vector.shape_cast %47 : vector<48xf32> to vector<48x1xf32>
    %49 = tpu.reciprocal %48 {approx = true} : vector<48x1xf32> -> vector<48x1xf32>
    %50 = vector.broadcast %49 : vector<48x1xf32> to vector<48x48xf32>
    %51 = arith.mulf %46, %50 : vector<48x48xf32>
    %52 = arith.truncf %51 : vector<48x48xf32> to vector<48x48xbf16>
    %cst_20 = arith.constant dense<0.000000e+00> : vector<48x32xf32>
    %53 = tpu.matmul %52, %39, %cst_20 {dimension_numbers = #tpu.dot_dimension_numbers<[1], [0], [0], [1], [0, 0, 1, 1], [], []>} : vector<48x48xbf16>, vector<48x32xbf16>, vector<48x32xf32> -> vector<48x32xf32>
    %c0_21 = arith.constant 0 : index
    %c0_22 = arith.constant 0 : index
    %c0_23 = arith.constant 0 : index
    %54 = vector.load %arg9[%c0_21, %c0_22, %c0_23] : memref<4x128x128xbf16, #tpu.memory_space<vmem>>, vector<1x128x128xbf16>
    %55 = vector.shape_cast %54 : vector<1x128x128xbf16> to vector<128x128xbf16>
    %56 = vector.extract_strided_slice %55 {offsets = [0, 0], sizes = [32, 128], strides = [1, 1]} : vector<128x128xbf16> to vector<32x128xbf16>
    %57 = arith.truncf %53 : vector<48x32xf32> to vector<48x32xbf16>
    %cst_24 = arith.constant dense<0.000000e+00> : vector<48x128xf32>
    %58 = tpu.matmul %57, %56, %cst_24 {dimension_numbers = #tpu.dot_dimension_numbers<[1], [0], [0], [1], [0, 0, 1, 1], [], []>} : vector<48x32xbf16>, vector<32x128xbf16>, vector<48x128xf32> -> vector<48x128xf32>
    %59 = arith.addf %33, %58 : vector<48x128xf32>
    %60 = vector.extract_strided_slice %26 {offsets = [0, 32], sizes = [48, 32], strides = [1, 1]} : vector<48x128xf32> to vector<48x32xf32>
    %61 = arith.truncf %60 : vector<48x32xf32> to vector<48x32xbf16>
    %62 = vector.extract_strided_slice %31 {offsets = [0, 32], sizes = [48, 32], strides = [1, 1]} : vector<48x128xf32> to vector<48x32xf32>
    %63 = arith.truncf %62 : vector<48x32xf32> to vector<48x32xbf16>
    %64 = vector.extract_strided_slice %32 {offsets = [0, 32], sizes = [48, 32], strides = [1, 1]} : vector<48x128xf32> to vector<48x32xf32>
    %65 = arith.truncf %64 : vector<48x32xf32> to vector<48x32xbf16>
    %cst_25 = arith.constant dense<0.000000e+00> : vector<48x48xf32>
    %66 = tpu.matmul %61, %63, %cst_25 {dimension_numbers = #tpu.dot_dimension_numbers<[1], [1], [0], [0], [0, 0, 1, 0], [], []>} : vector<48x32xbf16>, vector<48x32xbf16>, vector<48x48xf32> -> vector<48x48xf32>
    %67 = arith.addf %66, %3 : vector<48x48xf32>
    %cst_26 = arith.constant dense<0xFF800000> : vector<48xf32>
    %68 = vector.multi_reduction <maximumf>, %67, %cst_26 [1] : vector<48x48xf32> to vector<48xf32>
    %69 = vector.shape_cast %68 : vector<48xf32> to vector<48x1xf32>
    %70 = vector.broadcast %69 : vector<48x1xf32> to vector<48x48xf32>
    %71 = arith.subf %67, %70 : vector<48x48xf32>
    %72 = math.exp %71 : vector<48x48xf32>
    %cst_27 = arith.constant dense<0.000000e+00> : vector<48xf32>
    %73 = vector.multi_reduction <add>, %72, %cst_27 [1] : vector<48x48xf32> to vector<48xf32>
    %74 = vector.shape_cast %73 : vector<48xf32> to vector<48x1xf32>
    %75 = tpu.reciprocal %74 {approx = true} : vector<48x1xf32> -> vector<48x1xf32>
    %76 = vector.broadcast %75 : vector<48x1xf32> to vector<48x48xf32>
    %77 = arith.mulf %72, %76 : vector<48x48xf32>
    %78 = arith.truncf %77 : vector<48x48xf32> to vector<48x48xbf16>
    %cst_28 = arith.constant dense<0.000000e+00> : vector<48x32xf32>
    %79 = tpu.matmul %78, %65, %cst_28 {dimension_numbers = #tpu.dot_dimension_numbers<[1], [0], [0], [1], [0, 0, 1, 1], [], []>} : vector<48x48xbf16>, vector<48x32xbf16>, vector<48x32xf32> -> vector<48x32xf32>
    %c0_29 = arith.constant 0 : index
    %c0_30 = arith.constant 0 : index
    %c0_31 = arith.constant 0 : index
    %80 = vector.load %arg9[%c0_29, %c0_30, %c0_31] : memref<4x128x128xbf16, #tpu.memory_space<vmem>>, vector<1x128x128xbf16>
    %81 = vector.shape_cast %80 : vector<1x128x128xbf16> to vector<128x128xbf16>
    %82 = vector.extract_strided_slice %81 {offsets = [32, 0], sizes = [32, 128], strides = [1, 1]} : vector<128x128xbf16> to vector<32x128xbf16>
    %83 = arith.truncf %79 : vector<48x32xf32> to vector<48x32xbf16>
    %cst_32 = arith.constant dense<0.000000e+00> : vector<48x128xf32>
    %84 = tpu.matmul %83, %82, %cst_32 {dimension_numbers = #tpu.dot_dimension_numbers<[1], [0], [0], [1], [0, 0, 1, 1], [], []>} : vector<48x32xbf16>, vector<32x128xbf16>, vector<48x128xf32> -> vector<48x128xf32>
    %85 = arith.addf %59, %84 : vector<48x128xf32>
    %86 = vector.extract_strided_slice %26 {offsets = [0, 64], sizes = [48, 32], strides = [1, 1]} : vector<48x128xf32> to vector<48x32xf32>
    %87 = arith.truncf %86 : vector<48x32xf32> to vector<48x32xbf16>
    %88 = vector.extract_strided_slice %31 {offsets = [0, 64], sizes = [48, 32], strides = [1, 1]} : vector<48x128xf32> to vector<48x32xf32>
    %89 = arith.truncf %88 : vector<48x32xf32> to vector<48x32xbf16>
    %90 = vector.extract_strided_slice %32 {offsets = [0, 64], sizes = [48, 32], strides = [1, 1]} : vector<48x128xf32> to vector<48x32xf32>
    %91 = arith.truncf %90 : vector<48x32xf32> to vector<48x32xbf16>
    %cst_33 = arith.constant dense<0.000000e+00> : vector<48x48xf32>
    %92 = tpu.matmul %87, %89, %cst_33 {dimension_numbers = #tpu.dot_dimension_numbers<[1], [1], [0], [0], [0, 0, 1, 0], [], []>} : vector<48x32xbf16>, vector<48x32xbf16>, vector<48x48xf32> -> vector<48x48xf32>
    %93 = arith.addf %92, %3 : vector<48x48xf32>
    %cst_34 = arith.constant dense<0xFF800000> : vector<48xf32>
    %94 = vector.multi_reduction <maximumf>, %93, %cst_34 [1] : vector<48x48xf32> to vector<48xf32>
    %95 = vector.shape_cast %94 : vector<48xf32> to vector<48x1xf32>
    %96 = vector.broadcast %95 : vector<48x1xf32> to vector<48x48xf32>
    %97 = arith.subf %93, %96 : vector<48x48xf32>
    %98 = math.exp %97 : vector<48x48xf32>
    %cst_35 = arith.constant dense<0.000000e+00> : vector<48xf32>
    %99 = vector.multi_reduction <add>, %98, %cst_35 [1] : vector<48x48xf32> to vector<48xf32>
    %100 = vector.shape_cast %99 : vector<48xf32> to vector<48x1xf32>
    %101 = tpu.reciprocal %100 {approx = true} : vector<48x1xf32> -> vector<48x1xf32>
    %102 = vector.broadcast %101 : vector<48x1xf32> to vector<48x48xf32>
    %103 = arith.mulf %98, %102 : vector<48x48xf32>
    %104 = arith.truncf %103 : vector<48x48xf32> to vector<48x48xbf16>
    %cst_36 = arith.constant dense<0.000000e+00> : vector<48x32xf32>
    %105 = tpu.matmul %104, %91, %cst_36 {dimension_numbers = #tpu.dot_dimension_numbers<[1], [0], [0], [1], [0, 0, 1, 1], [], []>} : vector<48x48xbf16>, vector<48x32xbf16>, vector<48x32xf32> -> vector<48x32xf32>
    %c0_37 = arith.constant 0 : index
    %c0_38 = arith.constant 0 : index
    %c0_39 = arith.constant 0 : index
    %106 = vector.load %arg9[%c0_37, %c0_38, %c0_39] : memref<4x128x128xbf16, #tpu.memory_space<vmem>>, vector<1x128x128xbf16>
    %107 = vector.shape_cast %106 : vector<1x128x128xbf16> to vector<128x128xbf16>
    %108 = vector.extract_strided_slice %107 {offsets = [64, 0], sizes = [32, 128], strides = [1, 1]} : vector<128x128xbf16> to vector<32x128xbf16>
    %109 = arith.truncf %105 : vector<48x32xf32> to vector<48x32xbf16>
    %cst_40 = arith.constant dense<0.000000e+00> : vector<48x128xf32>
    %110 = tpu.matmul %109, %108, %cst_40 {dimension_numbers = #tpu.dot_dimension_numbers<[1], [0], [0], [1], [0, 0, 1, 1], [], []>} : vector<48x32xbf16>, vector<32x128xbf16>, vector<48x128xf32> -> vector<48x128xf32>
    %111 = arith.addf %85, %110 : vector<48x128xf32>
    %112 = vector.extract_strided_slice %26 {offsets = [0, 96], sizes = [48, 32], strides = [1, 1]} : vector<48x128xf32> to vector<48x32xf32>
    %113 = arith.truncf %112 : vector<48x32xf32> to vector<48x32xbf16>
    %114 = vector.extract_strided_slice %31 {offsets = [0, 96], sizes = [48, 32], strides = [1, 1]} : vector<48x128xf32> to vector<48x32xf32>
    %115 = arith.truncf %114 : vector<48x32xf32> to vector<48x32xbf16>
    %116 = vector.extract_strided_slice %32 {offsets = [0, 96], sizes = [48, 32], strides = [1, 1]} : vector<48x128xf32> to vector<48x32xf32>
    %117 = arith.truncf %116 : vector<48x32xf32> to vector<48x32xbf16>
    %cst_41 = arith.constant dense<0.000000e+00> : vector<48x48xf32>
    %118 = tpu.matmul %113, %115, %cst_41 {dimension_numbers = #tpu.dot_dimension_numbers<[1], [1], [0], [0], [0, 0, 1, 0], [], []>} : vector<48x32xbf16>, vector<48x32xbf16>, vector<48x48xf32> -> vector<48x48xf32>
    %119 = arith.addf %118, %3 : vector<48x48xf32>
    %cst_42 = arith.constant dense<0xFF800000> : vector<48xf32>
    %120 = vector.multi_reduction <maximumf>, %119, %cst_42 [1] : vector<48x48xf32> to vector<48xf32>
    %121 = vector.shape_cast %120 : vector<48xf32> to vector<48x1xf32>
    %122 = vector.broadcast %121 : vector<48x1xf32> to vector<48x48xf32>
    %123 = arith.subf %119, %122 : vector<48x48xf32>
    %124 = math.exp %123 : vector<48x48xf32>
    %cst_43 = arith.constant dense<0.000000e+00> : vector<48xf32>
    %125 = vector.multi_reduction <add>, %124, %cst_43 [1] : vector<48x48xf32> to vector<48xf32>
    %126 = vector.shape_cast %125 : vector<48xf32> to vector<48x1xf32>
    %127 = tpu.reciprocal %126 {approx = true} : vector<48x1xf32> -> vector<48x1xf32>
    %128 = vector.broadcast %127 : vector<48x1xf32> to vector<48x48xf32>
    %129 = arith.mulf %124, %128 : vector<48x48xf32>
    %130 = arith.truncf %129 : vector<48x48xf32> to vector<48x48xbf16>
    %cst_44 = arith.constant dense<0.000000e+00> : vector<48x32xf32>
    %131 = tpu.matmul %130, %117, %cst_44 {dimension_numbers = #tpu.dot_dimension_numbers<[1], [0], [0], [1], [0, 0, 1, 1], [], []>} : vector<48x48xbf16>, vector<48x32xbf16>, vector<48x32xf32> -> vector<48x32xf32>
    %c0_45 = arith.constant 0 : index
    %c0_46 = arith.constant 0 : index
    %c0_47 = arith.constant 0 : index
    %132 = vector.load %arg9[%c0_45, %c0_46, %c0_47] : memref<4x128x128xbf16, #tpu.memory_space<vmem>>, vector<1x128x128xbf16>
    %133 = vector.shape_cast %132 : vector<1x128x128xbf16> to vector<128x128xbf16>
    %134 = vector.extract_strided_slice %133 {offsets = [96, 0], sizes = [32, 128], strides = [1, 1]} : vector<128x128xbf16> to vector<32x128xbf16>
    %135 = arith.truncf %131 : vector<48x32xf32> to vector<48x32xbf16>
    %cst_48 = arith.constant dense<0.000000e+00> : vector<48x128xf32>
    %136 = tpu.matmul %135, %134, %cst_48 {dimension_numbers = #tpu.dot_dimension_numbers<[1], [0], [0], [1], [0, 0, 1, 1], [], []>} : vector<48x32xbf16>, vector<32x128xbf16>, vector<48x128xf32> -> vector<48x128xf32>
    %137 = arith.addf %111, %136 : vector<48x128xf32>
    %138 = arith.addf %0, %137 : vector<48x128xf32>
    %c0_49 = arith.constant 0 : index
    %c0_50 = arith.constant 0 : index
    %c0_51 = arith.constant 0 : index
    %139 = vector.load %arg13[%c0_49, %c0_50, %c0_51] : memref<4x1x128xf32, #tpu.memory_space<vmem>>, vector<1x1x128xf32>
    %140 = vector.shape_cast %139 : vector<1x1x128xf32> to vector<1x128xf32>
    %141 = arith.mulf %138, %138 : vector<48x128xf32>
    %cst_52 = arith.constant dense<0.000000e+00> : vector<48xf32>
    %142 = vector.multi_reduction <add>, %141, %cst_52 [1] : vector<48x128xf32> to vector<48xf32>
    %143 = vector.shape_cast %142 : vector<48xf32> to vector<48x1xf32>
    %cst_53 = arith.constant 1.280000e+02 : f32
    %144 = vector.broadcast %cst_53 : f32 to vector<48x1xf32>
    %145 = arith.divf %143, %144 : vector<48x1xf32>
    %cst_54 = arith.constant 9.99999974E-6 : f32
    %146 = vector.broadcast %cst_54 : f32 to vector<48x1xf32>
    %147 = arith.addf %145, %146 : vector<48x1xf32>
    %148 = math.rsqrt %147 : vector<48x1xf32>
    %149 = vector.broadcast %148 : vector<48x1xf32> to vector<48x128xf32>
    %150 = arith.mulf %138, %149 : vector<48x128xf32>
    %151 = vector.broadcast %140 : vector<1x128xf32> to vector<48x128xf32>
    %152 = arith.mulf %150, %151 : vector<48x128xf32>
    %c0_55 = arith.constant 0 : index
    %c0_56 = arith.constant 0 : index
    %c0_57 = arith.constant 0 : index
    %153 = vector.load %arg10[%c0_55, %c0_56, %c0_57] : memref<4x128x512xbf16, #tpu.memory_space<vmem>>, vector<1x128x512xbf16>
    %154 = vector.shape_cast %153 : vector<1x128x512xbf16> to vector<128x512xbf16>
    %155 = arith.truncf %152 : vector<48x128xf32> to vector<48x128xbf16>
    %cst_58 = arith.constant dense<0.000000e+00> : vector<48x512xf32>
    %156 = tpu.matmul %155, %154, %cst_58 {dimension_numbers = #tpu.dot_dimension_numbers<[1], [0], [0], [1], [0, 0, 1, 1], [], []>} : vector<48x128xbf16>, vector<128x512xbf16>, vector<48x512xf32> -> vector<48x512xf32>
    %157 = vector.extract_strided_slice %156 {offsets = [0, 0], sizes = [48, 256], strides = [1, 1]} : vector<48x512xf32> to vector<48x256xf32>
    %158 = vector.extract_strided_slice %156 {offsets = [0, 256], sizes = [48, 256], strides = [1, 1]} : vector<48x512xf32> to vector<48x256xf32>
    %cst_59 = arith.constant 0.000000e+00 : f32
    %159 = vector.broadcast %cst_59 : f32 to vector<48x256xf32>
    %160 = arith.subf %159, %157 : vector<48x256xf32>
    %161 = math.exp %160 : vector<48x256xf32>
    %cst_60 = arith.constant 1.000000e+00 : f32
    %162 = vector.broadcast %cst_60 : f32 to vector<48x256xf32>
    %163 = arith.addf %162, %161 : vector<48x256xf32>
    %164 = tpu.reciprocal %163 {approx = true} : vector<48x256xf32> -> vector<48x256xf32>
    %165 = arith.mulf %157, %164 : vector<48x256xf32>
    %166 = arith.mulf %165, %158 : vector<48x256xf32>
    %c0_61 = arith.constant 0 : index
    %c0_62 = arith.constant 0 : index
    %c0_63 = arith.constant 0 : index
    %167 = vector.load %arg11[%c0_61, %c0_62, %c0_63] : memref<4x256x128xbf16, #tpu.memory_space<vmem>>, vector<1x256x128xbf16>
    %168 = vector.shape_cast %167 : vector<1x256x128xbf16> to vector<256x128xbf16>
    %169 = arith.truncf %166 : vector<48x256xf32> to vector<48x256xbf16>
    %cst_64 = arith.constant dense<0.000000e+00> : vector<48x128xf32>
    %170 = tpu.matmul %169, %168, %cst_64 {dimension_numbers = #tpu.dot_dimension_numbers<[1], [0], [0], [1], [0, 0, 1, 1], [], []>} : vector<48x256xbf16>, vector<256x128xbf16>, vector<48x128xf32> -> vector<48x128xf32>
    %171 = arith.addf %138, %170 : vector<48x128xf32>
    %c1 = arith.constant 1 : index
    %c0_65 = arith.constant 0 : index
    %c0_66 = arith.constant 0 : index
    %172 = vector.load %arg8[%c1, %c0_65, %c0_66] : memref<4x128x640xbf16, #tpu.memory_space<vmem>>, vector<1x128x640xbf16>
    %173 = vector.shape_cast %172 : vector<1x128x640xbf16> to vector<128x640xbf16>
    %c1_67 = arith.constant 1 : index
    %c0_68 = arith.constant 0 : index
    %c0_69 = arith.constant 0 : index
    %174 = vector.load %arg12[%c1_67, %c0_68, %c0_69] : memref<4x1x128xf32, #tpu.memory_space<vmem>>, vector<1x1x128xf32>
    %175 = vector.shape_cast %174 : vector<1x1x128xf32> to vector<1x128xf32>
    %176 = arith.mulf %171, %171 : vector<48x128xf32>
    %cst_70 = arith.constant dense<0.000000e+00> : vector<48xf32>
    %177 = vector.multi_reduction <add>, %176, %cst_70 [1] : vector<48x128xf32> to vector<48xf32>
    %178 = vector.shape_cast %177 : vector<48xf32> to vector<48x1xf32>
    %cst_71 = arith.constant 1.280000e+02 : f32
    %179 = vector.broadcast %cst_71 : f32 to vector<48x1xf32>
    %180 = arith.divf %178, %179 : vector<48x1xf32>
    %cst_72 = arith.constant 9.99999974E-6 : f32
    %181 = vector.broadcast %cst_72 : f32 to vector<48x1xf32>
    %182 = arith.addf %180, %181 : vector<48x1xf32>
    %183 = math.rsqrt %182 : vector<48x1xf32>
    %184 = vector.broadcast %183 : vector<48x1xf32> to vector<48x128xf32>
    %185 = arith.mulf %171, %184 : vector<48x128xf32>
    %186 = vector.broadcast %175 : vector<1x128xf32> to vector<48x128xf32>
    %187 = arith.mulf %185, %186 : vector<48x128xf32>
    %188 = arith.truncf %187 : vector<48x128xf32> to vector<48x128xbf16>
    %cst_73 = arith.constant dense<0.000000e+00> : vector<48x640xf32>
    %189 = tpu.matmul %188, %173, %cst_73 {dimension_numbers = #tpu.dot_dimension_numbers<[1], [0], [0], [1], [0, 0, 1, 1], [], []>} : vector<48x128xbf16>, vector<128x640xbf16>, vector<48x640xf32> -> vector<48x640xf32>
    %190 = vector.extract_strided_slice %189 {offsets = [0, 0], sizes = [48, 128], strides = [1, 1]} : vector<48x640xf32> to vector<48x128xf32>
    %191 = arith.mulf %190, %1 : vector<48x128xf32>
    %192 = vector.extract_strided_slice %189 {offsets = [0, 384], sizes = [48, 128], strides = [1, 1]} : vector<48x640xf32> to vector<48x128xf32>
    %193 = arith.mulf %192, %2 : vector<48x128xf32>
    %194 = arith.addf %191, %193 : vector<48x128xf32>
    %195 = vector.extract_strided_slice %189 {offsets = [0, 128], sizes = [48, 128], strides = [1, 1]} : vector<48x640xf32> to vector<48x128xf32>
    %196 = arith.mulf %195, %1 : vector<48x128xf32>
    %197 = vector.extract_strided_slice %189 {offsets = [0, 512], sizes = [48, 128], strides = [1, 1]} : vector<48x640xf32> to vector<48x128xf32>
    %198 = arith.mulf %197, %2 : vector<48x128xf32>
    %199 = arith.addf %196, %198 : vector<48x128xf32>
    %200 = vector.extract_strided_slice %189 {offsets = [0, 256], sizes = [48, 128], strides = [1, 1]} : vector<48x640xf32> to vector<48x128xf32>
    %cst_74 = arith.constant 0.000000e+00 : f32
    %201 = vector.broadcast %cst_74 : f32 to vector<48x128xf32>
    %202 = vector.extract_strided_slice %194 {offsets = [0, 0], sizes = [48, 32], strides = [1, 1]} : vector<48x128xf32> to vector<48x32xf32>
    %203 = arith.truncf %202 : vector<48x32xf32> to vector<48x32xbf16>
    %204 = vector.extract_strided_slice %199 {offsets = [0, 0], sizes = [48, 32], strides = [1, 1]} : vector<48x128xf32> to vector<48x32xf32>
    %205 = arith.truncf %204 : vector<48x32xf32> to vector<48x32xbf16>
    %206 = vector.extract_strided_slice %200 {offsets = [0, 0], sizes = [48, 32], strides = [1, 1]} : vector<48x128xf32> to vector<48x32xf32>
    %207 = arith.truncf %206 : vector<48x32xf32> to vector<48x32xbf16>
    %cst_75 = arith.constant dense<0.000000e+00> : vector<48x48xf32>
    %208 = tpu.matmul %203, %205, %cst_75 {dimension_numbers = #tpu.dot_dimension_numbers<[1], [1], [0], [0], [0, 0, 1, 0], [], []>} : vector<48x32xbf16>, vector<48x32xbf16>, vector<48x48xf32> -> vector<48x48xf32>
    %209 = arith.addf %208, %3 : vector<48x48xf32>
    %cst_76 = arith.constant dense<0xFF800000> : vector<48xf32>
    %210 = vector.multi_reduction <maximumf>, %209, %cst_76 [1] : vector<48x48xf32> to vector<48xf32>
    %211 = vector.shape_cast %210 : vector<48xf32> to vector<48x1xf32>
    %212 = vector.broadcast %211 : vector<48x1xf32> to vector<48x48xf32>
    %213 = arith.subf %209, %212 : vector<48x48xf32>
    %214 = math.exp %213 : vector<48x48xf32>
    %cst_77 = arith.constant dense<0.000000e+00> : vector<48xf32>
    %215 = vector.multi_reduction <add>, %214, %cst_77 [1] : vector<48x48xf32> to vector<48xf32>
    %216 = vector.shape_cast %215 : vector<48xf32> to vector<48x1xf32>
    %217 = tpu.reciprocal %216 {approx = true} : vector<48x1xf32> -> vector<48x1xf32>
    %218 = vector.broadcast %217 : vector<48x1xf32> to vector<48x48xf32>
    %219 = arith.mulf %214, %218 : vector<48x48xf32>
    %220 = arith.truncf %219 : vector<48x48xf32> to vector<48x48xbf16>
    %cst_78 = arith.constant dense<0.000000e+00> : vector<48x32xf32>
    %221 = tpu.matmul %220, %207, %cst_78 {dimension_numbers = #tpu.dot_dimension_numbers<[1], [0], [0], [1], [0, 0, 1, 1], [], []>} : vector<48x48xbf16>, vector<48x32xbf16>, vector<48x32xf32> -> vector<48x32xf32>
    %c1_79 = arith.constant 1 : index
    %c0_80 = arith.constant 0 : index
    %c0_81 = arith.constant 0 : index
    %222 = vector.load %arg9[%c1_79, %c0_80, %c0_81] : memref<4x128x128xbf16, #tpu.memory_space<vmem>>, vector<1x128x128xbf16>
    %223 = vector.shape_cast %222 : vector<1x128x128xbf16> to vector<128x128xbf16>
    %224 = vector.extract_strided_slice %223 {offsets = [0, 0], sizes = [32, 128], strides = [1, 1]} : vector<128x128xbf16> to vector<32x128xbf16>
    %225 = arith.truncf %221 : vector<48x32xf32> to vector<48x32xbf16>
    %cst_82 = arith.constant dense<0.000000e+00> : vector<48x128xf32>
    %226 = tpu.matmul %225, %224, %cst_82 {dimension_numbers = #tpu.dot_dimension_numbers<[1], [0], [0], [1], [0, 0, 1, 1], [], []>} : vector<48x32xbf16>, vector<32x128xbf16>, vector<48x128xf32> -> vector<48x128xf32>
    %227 = arith.addf %201, %226 : vector<48x128xf32>
    %228 = vector.extract_strided_slice %194 {offsets = [0, 32], sizes = [48, 32], strides = [1, 1]} : vector<48x128xf32> to vector<48x32xf32>
    %229 = arith.truncf %228 : vector<48x32xf32> to vector<48x32xbf16>
    %230 = vector.extract_strided_slice %199 {offsets = [0, 32], sizes = [48, 32], strides = [1, 1]} : vector<48x128xf32> to vector<48x32xf32>
    %231 = arith.truncf %230 : vector<48x32xf32> to vector<48x32xbf16>
    %232 = vector.extract_strided_slice %200 {offsets = [0, 32], sizes = [48, 32], strides = [1, 1]} : vector<48x128xf32> to vector<48x32xf32>
    %233 = arith.truncf %232 : vector<48x32xf32> to vector<48x32xbf16>
    %cst_83 = arith.constant dense<0.000000e+00> : vector<48x48xf32>
    %234 = tpu.matmul %229, %231, %cst_83 {dimension_numbers = #tpu.dot_dimension_numbers<[1], [1], [0], [0], [0, 0, 1, 0], [], []>} : vector<48x32xbf16>, vector<48x32xbf16>, vector<48x48xf32> -> vector<48x48xf32>
    %235 = arith.addf %234, %3 : vector<48x48xf32>
    %cst_84 = arith.constant dense<0xFF800000> : vector<48xf32>
    %236 = vector.multi_reduction <maximumf>, %235, %cst_84 [1] : vector<48x48xf32> to vector<48xf32>
    %237 = vector.shape_cast %236 : vector<48xf32> to vector<48x1xf32>
    %238 = vector.broadcast %237 : vector<48x1xf32> to vector<48x48xf32>
    %239 = arith.subf %235, %238 : vector<48x48xf32>
    %240 = math.exp %239 : vector<48x48xf32>
    %cst_85 = arith.constant dense<0.000000e+00> : vector<48xf32>
    %241 = vector.multi_reduction <add>, %240, %cst_85 [1] : vector<48x48xf32> to vector<48xf32>
    %242 = vector.shape_cast %241 : vector<48xf32> to vector<48x1xf32>
    %243 = tpu.reciprocal %242 {approx = true} : vector<48x1xf32> -> vector<48x1xf32>
    %244 = vector.broadcast %243 : vector<48x1xf32> to vector<48x48xf32>
    %245 = arith.mulf %240, %244 : vector<48x48xf32>
    %246 = arith.truncf %245 : vector<48x48xf32> to vector<48x48xbf16>
    %cst_86 = arith.constant dense<0.000000e+00> : vector<48x32xf32>
    %247 = tpu.matmul %246, %233, %cst_86 {dimension_numbers = #tpu.dot_dimension_numbers<[1], [0], [0], [1], [0, 0, 1, 1], [], []>} : vector<48x48xbf16>, vector<48x32xbf16>, vector<48x32xf32> -> vector<48x32xf32>
    %c1_87 = arith.constant 1 : index
    %c0_88 = arith.constant 0 : index
    %c0_89 = arith.constant 0 : index
    %248 = vector.load %arg9[%c1_87, %c0_88, %c0_89] : memref<4x128x128xbf16, #tpu.memory_space<vmem>>, vector<1x128x128xbf16>
    %249 = vector.shape_cast %248 : vector<1x128x128xbf16> to vector<128x128xbf16>
    %250 = vector.extract_strided_slice %249 {offsets = [32, 0], sizes = [32, 128], strides = [1, 1]} : vector<128x128xbf16> to vector<32x128xbf16>
    %251 = arith.truncf %247 : vector<48x32xf32> to vector<48x32xbf16>
    %cst_90 = arith.constant dense<0.000000e+00> : vector<48x128xf32>
    %252 = tpu.matmul %251, %250, %cst_90 {dimension_numbers = #tpu.dot_dimension_numbers<[1], [0], [0], [1], [0, 0, 1, 1], [], []>} : vector<48x32xbf16>, vector<32x128xbf16>, vector<48x128xf32> -> vector<48x128xf32>
    %253 = arith.addf %227, %252 : vector<48x128xf32>
    %254 = vector.extract_strided_slice %194 {offsets = [0, 64], sizes = [48, 32], strides = [1, 1]} : vector<48x128xf32> to vector<48x32xf32>
    %255 = arith.truncf %254 : vector<48x32xf32> to vector<48x32xbf16>
    %256 = vector.extract_strided_slice %199 {offsets = [0, 64], sizes = [48, 32], strides = [1, 1]} : vector<48x128xf32> to vector<48x32xf32>
    %257 = arith.truncf %256 : vector<48x32xf32> to vector<48x32xbf16>
    %258 = vector.extract_strided_slice %200 {offsets = [0, 64], sizes = [48, 32], strides = [1, 1]} : vector<48x128xf32> to vector<48x32xf32>
    %259 = arith.truncf %258 : vector<48x32xf32> to vector<48x32xbf16>
    %cst_91 = arith.constant dense<0.000000e+00> : vector<48x48xf32>
    %260 = tpu.matmul %255, %257, %cst_91 {dimension_numbers = #tpu.dot_dimension_numbers<[1], [1], [0], [0], [0, 0, 1, 0], [], []>} : vector<48x32xbf16>, vector<48x32xbf16>, vector<48x48xf32> -> vector<48x48xf32>
    %261 = arith.addf %260, %3 : vector<48x48xf32>
    %cst_92 = arith.constant dense<0xFF800000> : vector<48xf32>
    %262 = vector.multi_reduction <maximumf>, %261, %cst_92 [1] : vector<48x48xf32> to vector<48xf32>
    %263 = vector.shape_cast %262 : vector<48xf32> to vector<48x1xf32>
    %264 = vector.broadcast %263 : vector<48x1xf32> to vector<48x48xf32>
    %265 = arith.subf %261, %264 : vector<48x48xf32>
    %266 = math.exp %265 : vector<48x48xf32>
    %cst_93 = arith.constant dense<0.000000e+00> : vector<48xf32>
    %267 = vector.multi_reduction <add>, %266, %cst_93 [1] : vector<48x48xf32> to vector<48xf32>
    %268 = vector.shape_cast %267 : vector<48xf32> to vector<48x1xf32>
    %269 = tpu.reciprocal %268 {approx = true} : vector<48x1xf32> -> vector<48x1xf32>
    %270 = vector.broadcast %269 : vector<48x1xf32> to vector<48x48xf32>
    %271 = arith.mulf %266, %270 : vector<48x48xf32>
    %272 = arith.truncf %271 : vector<48x48xf32> to vector<48x48xbf16>
    %cst_94 = arith.constant dense<0.000000e+00> : vector<48x32xf32>
    %273 = tpu.matmul %272, %259, %cst_94 {dimension_numbers = #tpu.dot_dimension_numbers<[1], [0], [0], [1], [0, 0, 1, 1], [], []>} : vector<48x48xbf16>, vector<48x32xbf16>, vector<48x32xf32> -> vector<48x32xf32>
    %c1_95 = arith.constant 1 : index
    %c0_96 = arith.constant 0 : index
    %c0_97 = arith.constant 0 : index
    %274 = vector.load %arg9[%c1_95, %c0_96, %c0_97] : memref<4x128x128xbf16, #tpu.memory_space<vmem>>, vector<1x128x128xbf16>
    %275 = vector.shape_cast %274 : vector<1x128x128xbf16> to vector<128x128xbf16>
    %276 = vector.extract_strided_slice %275 {offsets = [64, 0], sizes = [32, 128], strides = [1, 1]} : vector<128x128xbf16> to vector<32x128xbf16>
    %277 = arith.truncf %273 : vector<48x32xf32> to vector<48x32xbf16>
    %cst_98 = arith.constant dense<0.000000e+00> : vector<48x128xf32>
    %278 = tpu.matmul %277, %276, %cst_98 {dimension_numbers = #tpu.dot_dimension_numbers<[1], [0], [0], [1], [0, 0, 1, 1], [], []>} : vector<48x32xbf16>, vector<32x128xbf16>, vector<48x128xf32> -> vector<48x128xf32>
    %279 = arith.addf %253, %278 : vector<48x128xf32>
    %280 = vector.extract_strided_slice %194 {offsets = [0, 96], sizes = [48, 32], strides = [1, 1]} : vector<48x128xf32> to vector<48x32xf32>
    %281 = arith.truncf %280 : vector<48x32xf32> to vector<48x32xbf16>
    %282 = vector.extract_strided_slice %199 {offsets = [0, 96], sizes = [48, 32], strides = [1, 1]} : vector<48x128xf32> to vector<48x32xf32>
    %283 = arith.truncf %282 : vector<48x32xf32> to vector<48x32xbf16>
    %284 = vector.extract_strided_slice %200 {offsets = [0, 96], sizes = [48, 32], strides = [1, 1]} : vector<48x128xf32> to vector<48x32xf32>
    %285 = arith.truncf %284 : vector<48x32xf32> to vector<48x32xbf16>
    %cst_99 = arith.constant dense<0.000000e+00> : vector<48x48xf32>
    %286 = tpu.matmul %281, %283, %cst_99 {dimension_numbers = #tpu.dot_dimension_numbers<[1], [1], [0], [0], [0, 0, 1, 0], [], []>} : vector<48x32xbf16>, vector<48x32xbf16>, vector<48x48xf32> -> vector<48x48xf32>
    %287 = arith.addf %286, %3 : vector<48x48xf32>
    %cst_100 = arith.constant dense<0xFF800000> : vector<48xf32>
    %288 = vector.multi_reduction <maximumf>, %287, %cst_100 [1] : vector<48x48xf32> to vector<48xf32>
    %289 = vector.shape_cast %288 : vector<48xf32> to vector<48x1xf32>
    %290 = vector.broadcast %289 : vector<48x1xf32> to vector<48x48xf32>
    %291 = arith.subf %287, %290 : vector<48x48xf32>
    %292 = math.exp %291 : vector<48x48xf32>
    %cst_101 = arith.constant dense<0.000000e+00> : vector<48xf32>
    %293 = vector.multi_reduction <add>, %292, %cst_101 [1] : vector<48x48xf32> to vector<48xf32>
    %294 = vector.shape_cast %293 : vector<48xf32> to vector<48x1xf32>
    %295 = tpu.reciprocal %294 {approx = true} : vector<48x1xf32> -> vector<48x1xf32>
    %296 = vector.broadcast %295 : vector<48x1xf32> to vector<48x48xf32>
    %297 = arith.mulf %292, %296 : vector<48x48xf32>
    %298 = arith.truncf %297 : vector<48x48xf32> to vector<48x48xbf16>
    %cst_102 = arith.constant dense<0.000000e+00> : vector<48x32xf32>
    %299 = tpu.matmul %298, %285, %cst_102 {dimension_numbers = #tpu.dot_dimension_numbers<[1], [0], [0], [1], [0, 0, 1, 1], [], []>} : vector<48x48xbf16>, vector<48x32xbf16>, vector<48x32xf32> -> vector<48x32xf32>
    %c1_103 = arith.constant 1 : index
    %c0_104 = arith.constant 0 : index
    %c0_105 = arith.constant 0 : index
    %300 = vector.load %arg9[%c1_103, %c0_104, %c0_105] : memref<4x128x128xbf16, #tpu.memory_space<vmem>>, vector<1x128x128xbf16>
    %301 = vector.shape_cast %300 : vector<1x128x128xbf16> to vector<128x128xbf16>
    %302 = vector.extract_strided_slice %301 {offsets = [96, 0], sizes = [32, 128], strides = [1, 1]} : vector<128x128xbf16> to vector<32x128xbf16>
    %303 = arith.truncf %299 : vector<48x32xf32> to vector<48x32xbf16>
    %cst_106 = arith.constant dense<0.000000e+00> : vector<48x128xf32>
    %304 = tpu.matmul %303, %302, %cst_106 {dimension_numbers = #tpu.dot_dimension_numbers<[1], [0], [0], [1], [0, 0, 1, 1], [], []>} : vector<48x32xbf16>, vector<32x128xbf16>, vector<48x128xf32> -> vector<48x128xf32>
    %305 = arith.addf %279, %304 : vector<48x128xf32>
    %306 = arith.addf %171, %305 : vector<48x128xf32>
    %c1_107 = arith.constant 1 : index
    %c0_108 = arith.constant 0 : index
    %c0_109 = arith.constant 0 : index
    %307 = vector.load %arg13[%c1_107, %c0_108, %c0_109] : memref<4x1x128xf32, #tpu.memory_space<vmem>>, vector<1x1x128xf32>
    %308 = vector.shape_cast %307 : vector<1x1x128xf32> to vector<1x128xf32>
    %309 = arith.mulf %306, %306 : vector<48x128xf32>
    %cst_110 = arith.constant dense<0.000000e+00> : vector<48xf32>
    %310 = vector.multi_reduction <add>, %309, %cst_110 [1] : vector<48x128xf32> to vector<48xf32>
    %311 = vector.shape_cast %310 : vector<48xf32> to vector<48x1xf32>
    %cst_111 = arith.constant 1.280000e+02 : f32
    %312 = vector.broadcast %cst_111 : f32 to vector<48x1xf32>
    %313 = arith.divf %311, %312 : vector<48x1xf32>
    %cst_112 = arith.constant 9.99999974E-6 : f32
    %314 = vector.broadcast %cst_112 : f32 to vector<48x1xf32>
    %315 = arith.addf %313, %314 : vector<48x1xf32>
    %316 = math.rsqrt %315 : vector<48x1xf32>
    %317 = vector.broadcast %316 : vector<48x1xf32> to vector<48x128xf32>
    %318 = arith.mulf %306, %317 : vector<48x128xf32>
    %319 = vector.broadcast %308 : vector<1x128xf32> to vector<48x128xf32>
    %320 = arith.mulf %318, %319 : vector<48x128xf32>
    %c1_113 = arith.constant 1 : index
    %c0_114 = arith.constant 0 : index
    %c0_115 = arith.constant 0 : index
    %321 = vector.load %arg10[%c1_113, %c0_114, %c0_115] : memref<4x128x512xbf16, #tpu.memory_space<vmem>>, vector<1x128x512xbf16>
    %322 = vector.shape_cast %321 : vector<1x128x512xbf16> to vector<128x512xbf16>
    %323 = arith.truncf %320 : vector<48x128xf32> to vector<48x128xbf16>
    %cst_116 = arith.constant dense<0.000000e+00> : vector<48x512xf32>
    %324 = tpu.matmul %323, %322, %cst_116 {dimension_numbers = #tpu.dot_dimension_numbers<[1], [0], [0], [1], [0, 0, 1, 1], [], []>} : vector<48x128xbf16>, vector<128x512xbf16>, vector<48x512xf32> -> vector<48x512xf32>
    %325 = vector.extract_strided_slice %324 {offsets = [0, 0], sizes = [48, 256], strides = [1, 1]} : vector<48x512xf32> to vector<48x256xf32>
    %326 = vector.extract_strided_slice %324 {offsets = [0, 256], sizes = [48, 256], strides = [1, 1]} : vector<48x512xf32> to vector<48x256xf32>
    %cst_117 = arith.constant 0.000000e+00 : f32
    %327 = vector.broadcast %cst_117 : f32 to vector<48x256xf32>
    %328 = arith.subf %327, %325 : vector<48x256xf32>
    %329 = math.exp %328 : vector<48x256xf32>
    %cst_118 = arith.constant 1.000000e+00 : f32
    %330 = vector.broadcast %cst_118 : f32 to vector<48x256xf32>
    %331 = arith.addf %330, %329 : vector<48x256xf32>
    %332 = tpu.reciprocal %331 {approx = true} : vector<48x256xf32> -> vector<48x256xf32>
    %333 = arith.mulf %325, %332 : vector<48x256xf32>
    %334 = arith.mulf %333, %326 : vector<48x256xf32>
    %c1_119 = arith.constant 1 : index
    %c0_120 = arith.constant 0 : index
    %c0_121 = arith.constant 0 : index
    %335 = vector.load %arg11[%c1_119, %c0_120, %c0_121] : memref<4x256x128xbf16, #tpu.memory_space<vmem>>, vector<1x256x128xbf16>
    %336 = vector.shape_cast %335 : vector<1x256x128xbf16> to vector<256x128xbf16>
    %337 = arith.truncf %334 : vector<48x256xf32> to vector<48x256xbf16>
    %cst_122 = arith.constant dense<0.000000e+00> : vector<48x128xf32>
    %338 = tpu.matmul %337, %336, %cst_122 {dimension_numbers = #tpu.dot_dimension_numbers<[1], [0], [0], [1], [0, 0, 1, 1], [], []>} : vector<48x256xbf16>, vector<256x128xbf16>, vector<48x128xf32> -> vector<48x128xf32>
    %339 = arith.addf %306, %338 : vector<48x128xf32>
    %c2 = arith.constant 2 : index
    %c0_123 = arith.constant 0 : index
    %c0_124 = arith.constant 0 : index
    %340 = vector.load %arg8[%c2, %c0_123, %c0_124] : memref<4x128x640xbf16, #tpu.memory_space<vmem>>, vector<1x128x640xbf16>
    %341 = vector.shape_cast %340 : vector<1x128x640xbf16> to vector<128x640xbf16>
    %c2_125 = arith.constant 2 : index
    %c0_126 = arith.constant 0 : index
    %c0_127 = arith.constant 0 : index
    %342 = vector.load %arg12[%c2_125, %c0_126, %c0_127] : memref<4x1x128xf32, #tpu.memory_space<vmem>>, vector<1x1x128xf32>
    %343 = vector.shape_cast %342 : vector<1x1x128xf32> to vector<1x128xf32>
    %344 = arith.mulf %339, %339 : vector<48x128xf32>
    %cst_128 = arith.constant dense<0.000000e+00> : vector<48xf32>
    %345 = vector.multi_reduction <add>, %344, %cst_128 [1] : vector<48x128xf32> to vector<48xf32>
    %346 = vector.shape_cast %345 : vector<48xf32> to vector<48x1xf32>
    %cst_129 = arith.constant 1.280000e+02 : f32
    %347 = vector.broadcast %cst_129 : f32 to vector<48x1xf32>
    %348 = arith.divf %346, %347 : vector<48x1xf32>
    %cst_130 = arith.constant 9.99999974E-6 : f32
    %349 = vector.broadcast %cst_130 : f32 to vector<48x1xf32>
    %350 = arith.addf %348, %349 : vector<48x1xf32>
    %351 = math.rsqrt %350 : vector<48x1xf32>
    %352 = vector.broadcast %351 : vector<48x1xf32> to vector<48x128xf32>
    %353 = arith.mulf %339, %352 : vector<48x128xf32>
    %354 = vector.broadcast %343 : vector<1x128xf32> to vector<48x128xf32>
    %355 = arith.mulf %353, %354 : vector<48x128xf32>
    %356 = arith.truncf %355 : vector<48x128xf32> to vector<48x128xbf16>
    %cst_131 = arith.constant dense<0.000000e+00> : vector<48x640xf32>
    %357 = tpu.matmul %356, %341, %cst_131 {dimension_numbers = #tpu.dot_dimension_numbers<[1], [0], [0], [1], [0, 0, 1, 1], [], []>} : vector<48x128xbf16>, vector<128x640xbf16>, vector<48x640xf32> -> vector<48x640xf32>
    %358 = vector.extract_strided_slice %357 {offsets = [0, 0], sizes = [48, 128], strides = [1, 1]} : vector<48x640xf32> to vector<48x128xf32>
    %359 = arith.mulf %358, %1 : vector<48x128xf32>
    %360 = vector.extract_strided_slice %357 {offsets = [0, 384], sizes = [48, 128], strides = [1, 1]} : vector<48x640xf32> to vector<48x128xf32>
    %361 = arith.mulf %360, %2 : vector<48x128xf32>
    %362 = arith.addf %359, %361 : vector<48x128xf32>
    %363 = vector.extract_strided_slice %357 {offsets = [0, 128], sizes = [48, 128], strides = [1, 1]} : vector<48x640xf32> to vector<48x128xf32>
    %364 = arith.mulf %363, %1 : vector<48x128xf32>
    %365 = vector.extract_strided_slice %357 {offsets = [0, 512], sizes = [48, 128], strides = [1, 1]} : vector<48x640xf32> to vector<48x128xf32>
    %366 = arith.mulf %365, %2 : vector<48x128xf32>
    %367 = arith.addf %364, %366 : vector<48x128xf32>
    %368 = vector.extract_strided_slice %357 {offsets = [0, 256], sizes = [48, 128], strides = [1, 1]} : vector<48x640xf32> to vector<48x128xf32>
    %cst_132 = arith.constant 0.000000e+00 : f32
    %369 = vector.broadcast %cst_132 : f32 to vector<48x128xf32>
    %370 = vector.extract_strided_slice %362 {offsets = [0, 0], sizes = [48, 32], strides = [1, 1]} : vector<48x128xf32> to vector<48x32xf32>
    %371 = arith.truncf %370 : vector<48x32xf32> to vector<48x32xbf16>
    %372 = vector.extract_strided_slice %367 {offsets = [0, 0], sizes = [48, 32], strides = [1, 1]} : vector<48x128xf32> to vector<48x32xf32>
    %373 = arith.truncf %372 : vector<48x32xf32> to vector<48x32xbf16>
    %374 = vector.extract_strided_slice %368 {offsets = [0, 0], sizes = [48, 32], strides = [1, 1]} : vector<48x128xf32> to vector<48x32xf32>
    %375 = arith.truncf %374 : vector<48x32xf32> to vector<48x32xbf16>
    %cst_133 = arith.constant dense<0.000000e+00> : vector<48x48xf32>
    %376 = tpu.matmul %371, %373, %cst_133 {dimension_numbers = #tpu.dot_dimension_numbers<[1], [1], [0], [0], [0, 0, 1, 0], [], []>} : vector<48x32xbf16>, vector<48x32xbf16>, vector<48x48xf32> -> vector<48x48xf32>
    %377 = arith.addf %376, %3 : vector<48x48xf32>
    %cst_134 = arith.constant dense<0xFF800000> : vector<48xf32>
    %378 = vector.multi_reduction <maximumf>, %377, %cst_134 [1] : vector<48x48xf32> to vector<48xf32>
    %379 = vector.shape_cast %378 : vector<48xf32> to vector<48x1xf32>
    %380 = vector.broadcast %379 : vector<48x1xf32> to vector<48x48xf32>
    %381 = arith.subf %377, %380 : vector<48x48xf32>
    %382 = math.exp %381 : vector<48x48xf32>
    %cst_135 = arith.constant dense<0.000000e+00> : vector<48xf32>
    %383 = vector.multi_reduction <add>, %382, %cst_135 [1] : vector<48x48xf32> to vector<48xf32>
    %384 = vector.shape_cast %383 : vector<48xf32> to vector<48x1xf32>
    %385 = tpu.reciprocal %384 {approx = true} : vector<48x1xf32> -> vector<48x1xf32>
    %386 = vector.broadcast %385 : vector<48x1xf32> to vector<48x48xf32>
    %387 = arith.mulf %382, %386 : vector<48x48xf32>
    %388 = arith.truncf %387 : vector<48x48xf32> to vector<48x48xbf16>
    %cst_136 = arith.constant dense<0.000000e+00> : vector<48x32xf32>
    %389 = tpu.matmul %388, %375, %cst_136 {dimension_numbers = #tpu.dot_dimension_numbers<[1], [0], [0], [1], [0, 0, 1, 1], [], []>} : vector<48x48xbf16>, vector<48x32xbf16>, vector<48x32xf32> -> vector<48x32xf32>
    %c2_137 = arith.constant 2 : index
    %c0_138 = arith.constant 0 : index
    %c0_139 = arith.constant 0 : index
    %390 = vector.load %arg9[%c2_137, %c0_138, %c0_139] : memref<4x128x128xbf16, #tpu.memory_space<vmem>>, vector<1x128x128xbf16>
    %391 = vector.shape_cast %390 : vector<1x128x128xbf16> to vector<128x128xbf16>
    %392 = vector.extract_strided_slice %391 {offsets = [0, 0], sizes = [32, 128], strides = [1, 1]} : vector<128x128xbf16> to vector<32x128xbf16>
    %393 = arith.truncf %389 : vector<48x32xf32> to vector<48x32xbf16>
    %cst_140 = arith.constant dense<0.000000e+00> : vector<48x128xf32>
    %394 = tpu.matmul %393, %392, %cst_140 {dimension_numbers = #tpu.dot_dimension_numbers<[1], [0], [0], [1], [0, 0, 1, 1], [], []>} : vector<48x32xbf16>, vector<32x128xbf16>, vector<48x128xf32> -> vector<48x128xf32>
    %395 = arith.addf %369, %394 : vector<48x128xf32>
    %396 = vector.extract_strided_slice %362 {offsets = [0, 32], sizes = [48, 32], strides = [1, 1]} : vector<48x128xf32> to vector<48x32xf32>
    %397 = arith.truncf %396 : vector<48x32xf32> to vector<48x32xbf16>
    %398 = vector.extract_strided_slice %367 {offsets = [0, 32], sizes = [48, 32], strides = [1, 1]} : vector<48x128xf32> to vector<48x32xf32>
    %399 = arith.truncf %398 : vector<48x32xf32> to vector<48x32xbf16>
    %400 = vector.extract_strided_slice %368 {offsets = [0, 32], sizes = [48, 32], strides = [1, 1]} : vector<48x128xf32> to vector<48x32xf32>
    %401 = arith.truncf %400 : vector<48x32xf32> to vector<48x32xbf16>
    %cst_141 = arith.constant dense<0.000000e+00> : vector<48x48xf32>
    %402 = tpu.matmul %397, %399, %cst_141 {dimension_numbers = #tpu.dot_dimension_numbers<[1], [1], [0], [0], [0, 0, 1, 0], [], []>} : vector<48x32xbf16>, vector<48x32xbf16>, vector<48x48xf32> -> vector<48x48xf32>
    %403 = arith.addf %402, %3 : vector<48x48xf32>
    %cst_142 = arith.constant dense<0xFF800000> : vector<48xf32>
    %404 = vector.multi_reduction <maximumf>, %403, %cst_142 [1] : vector<48x48xf32> to vector<48xf32>
    %405 = vector.shape_cast %404 : vector<48xf32> to vector<48x1xf32>
    %406 = vector.broadcast %405 : vector<48x1xf32> to vector<48x48xf32>
    %407 = arith.subf %403, %406 : vector<48x48xf32>
    %408 = math.exp %407 : vector<48x48xf32>
    %cst_143 = arith.constant dense<0.000000e+00> : vector<48xf32>
    %409 = vector.multi_reduction <add>, %408, %cst_143 [1] : vector<48x48xf32> to vector<48xf32>
    %410 = vector.shape_cast %409 : vector<48xf32> to vector<48x1xf32>
    %411 = tpu.reciprocal %410 {approx = true} : vector<48x1xf32> -> vector<48x1xf32>
    %412 = vector.broadcast %411 : vector<48x1xf32> to vector<48x48xf32>
    %413 = arith.mulf %408, %412 : vector<48x48xf32>
    %414 = arith.truncf %413 : vector<48x48xf32> to vector<48x48xbf16>
    %cst_144 = arith.constant dense<0.000000e+00> : vector<48x32xf32>
    %415 = tpu.matmul %414, %401, %cst_144 {dimension_numbers = #tpu.dot_dimension_numbers<[1], [0], [0], [1], [0, 0, 1, 1], [], []>} : vector<48x48xbf16>, vector<48x32xbf16>, vector<48x32xf32> -> vector<48x32xf32>
    %c2_145 = arith.constant 2 : index
    %c0_146 = arith.constant 0 : index
    %c0_147 = arith.constant 0 : index
    %416 = vector.load %arg9[%c2_145, %c0_146, %c0_147] : memref<4x128x128xbf16, #tpu.memory_space<vmem>>, vector<1x128x128xbf16>
    %417 = vector.shape_cast %416 : vector<1x128x128xbf16> to vector<128x128xbf16>
    %418 = vector.extract_strided_slice %417 {offsets = [32, 0], sizes = [32, 128], strides = [1, 1]} : vector<128x128xbf16> to vector<32x128xbf16>
    %419 = arith.truncf %415 : vector<48x32xf32> to vector<48x32xbf16>
    %cst_148 = arith.constant dense<0.000000e+00> : vector<48x128xf32>
    %420 = tpu.matmul %419, %418, %cst_148 {dimension_numbers = #tpu.dot_dimension_numbers<[1], [0], [0], [1], [0, 0, 1, 1], [], []>} : vector<48x32xbf16>, vector<32x128xbf16>, vector<48x128xf32> -> vector<48x128xf32>
    %421 = arith.addf %395, %420 : vector<48x128xf32>
    %422 = vector.extract_strided_slice %362 {offsets = [0, 64], sizes = [48, 32], strides = [1, 1]} : vector<48x128xf32> to vector<48x32xf32>
    %423 = arith.truncf %422 : vector<48x32xf32> to vector<48x32xbf16>
    %424 = vector.extract_strided_slice %367 {offsets = [0, 64], sizes = [48, 32], strides = [1, 1]} : vector<48x128xf32> to vector<48x32xf32>
    %425 = arith.truncf %424 : vector<48x32xf32> to vector<48x32xbf16>
    %426 = vector.extract_strided_slice %368 {offsets = [0, 64], sizes = [48, 32], strides = [1, 1]} : vector<48x128xf32> to vector<48x32xf32>
    %427 = arith.truncf %426 : vector<48x32xf32> to vector<48x32xbf16>
    %cst_149 = arith.constant dense<0.000000e+00> : vector<48x48xf32>
    %428 = tpu.matmul %423, %425, %cst_149 {dimension_numbers = #tpu.dot_dimension_numbers<[1], [1], [0], [0], [0, 0, 1, 0], [], []>} : vector<48x32xbf16>, vector<48x32xbf16>, vector<48x48xf32> -> vector<48x48xf32>
    %429 = arith.addf %428, %3 : vector<48x48xf32>
    %cst_150 = arith.constant dense<0xFF800000> : vector<48xf32>
    %430 = vector.multi_reduction <maximumf>, %429, %cst_150 [1] : vector<48x48xf32> to vector<48xf32>
    %431 = vector.shape_cast %430 : vector<48xf32> to vector<48x1xf32>
    %432 = vector.broadcast %431 : vector<48x1xf32> to vector<48x48xf32>
    %433 = arith.subf %429, %432 : vector<48x48xf32>
    %434 = math.exp %433 : vector<48x48xf32>
    %cst_151 = arith.constant dense<0.000000e+00> : vector<48xf32>
    %435 = vector.multi_reduction <add>, %434, %cst_151 [1] : vector<48x48xf32> to vector<48xf32>
    %436 = vector.shape_cast %435 : vector<48xf32> to vector<48x1xf32>
    %437 = tpu.reciprocal %436 {approx = true} : vector<48x1xf32> -> vector<48x1xf32>
    %438 = vector.broadcast %437 : vector<48x1xf32> to vector<48x48xf32>
    %439 = arith.mulf %434, %438 : vector<48x48xf32>
    %440 = arith.truncf %439 : vector<48x48xf32> to vector<48x48xbf16>
    %cst_152 = arith.constant dense<0.000000e+00> : vector<48x32xf32>
    %441 = tpu.matmul %440, %427, %cst_152 {dimension_numbers = #tpu.dot_dimension_numbers<[1], [0], [0], [1], [0, 0, 1, 1], [], []>} : vector<48x48xbf16>, vector<48x32xbf16>, vector<48x32xf32> -> vector<48x32xf32>
    %c2_153 = arith.constant 2 : index
    %c0_154 = arith.constant 0 : index
    %c0_155 = arith.constant 0 : index
    %442 = vector.load %arg9[%c2_153, %c0_154, %c0_155] : memref<4x128x128xbf16, #tpu.memory_space<vmem>>, vector<1x128x128xbf16>
    %443 = vector.shape_cast %442 : vector<1x128x128xbf16> to vector<128x128xbf16>
    %444 = vector.extract_strided_slice %443 {offsets = [64, 0], sizes = [32, 128], strides = [1, 1]} : vector<128x128xbf16> to vector<32x128xbf16>
    %445 = arith.truncf %441 : vector<48x32xf32> to vector<48x32xbf16>
    %cst_156 = arith.constant dense<0.000000e+00> : vector<48x128xf32>
    %446 = tpu.matmul %445, %444, %cst_156 {dimension_numbers = #tpu.dot_dimension_numbers<[1], [0], [0], [1], [0, 0, 1, 1], [], []>} : vector<48x32xbf16>, vector<32x128xbf16>, vector<48x128xf32> -> vector<48x128xf32>
    %447 = arith.addf %421, %446 : vector<48x128xf32>
    %448 = vector.extract_strided_slice %362 {offsets = [0, 96], sizes = [48, 32], strides = [1, 1]} : vector<48x128xf32> to vector<48x32xf32>
    %449 = arith.truncf %448 : vector<48x32xf32> to vector<48x32xbf16>
    %450 = vector.extract_strided_slice %367 {offsets = [0, 96], sizes = [48, 32], strides = [1, 1]} : vector<48x128xf32> to vector<48x32xf32>
    %451 = arith.truncf %450 : vector<48x32xf32> to vector<48x32xbf16>
    %452 = vector.extract_strided_slice %368 {offsets = [0, 96], sizes = [48, 32], strides = [1, 1]} : vector<48x128xf32> to vector<48x32xf32>
    %453 = arith.truncf %452 : vector<48x32xf32> to vector<48x32xbf16>
    %cst_157 = arith.constant dense<0.000000e+00> : vector<48x48xf32>
    %454 = tpu.matmul %449, %451, %cst_157 {dimension_numbers = #tpu.dot_dimension_numbers<[1], [1], [0], [0], [0, 0, 1, 0], [], []>} : vector<48x32xbf16>, vector<48x32xbf16>, vector<48x48xf32> -> vector<48x48xf32>
    %455 = arith.addf %454, %3 : vector<48x48xf32>
    %cst_158 = arith.constant dense<0xFF800000> : vector<48xf32>
    %456 = vector.multi_reduction <maximumf>, %455, %cst_158 [1] : vector<48x48xf32> to vector<48xf32>
    %457 = vector.shape_cast %456 : vector<48xf32> to vector<48x1xf32>
    %458 = vector.broadcast %457 : vector<48x1xf32> to vector<48x48xf32>
    %459 = arith.subf %455, %458 : vector<48x48xf32>
    %460 = math.exp %459 : vector<48x48xf32>
    %cst_159 = arith.constant dense<0.000000e+00> : vector<48xf32>
    %461 = vector.multi_reduction <add>, %460, %cst_159 [1] : vector<48x48xf32> to vector<48xf32>
    %462 = vector.shape_cast %461 : vector<48xf32> to vector<48x1xf32>
    %463 = tpu.reciprocal %462 {approx = true} : vector<48x1xf32> -> vector<48x1xf32>
    %464 = vector.broadcast %463 : vector<48x1xf32> to vector<48x48xf32>
    %465 = arith.mulf %460, %464 : vector<48x48xf32>
    %466 = arith.truncf %465 : vector<48x48xf32> to vector<48x48xbf16>
    %cst_160 = arith.constant dense<0.000000e+00> : vector<48x32xf32>
    %467 = tpu.matmul %466, %453, %cst_160 {dimension_numbers = #tpu.dot_dimension_numbers<[1], [0], [0], [1], [0, 0, 1, 1], [], []>} : vector<48x48xbf16>, vector<48x32xbf16>, vector<48x32xf32> -> vector<48x32xf32>
    %c2_161 = arith.constant 2 : index
    %c0_162 = arith.constant 0 : index
    %c0_163 = arith.constant 0 : index
    %468 = vector.load %arg9[%c2_161, %c0_162, %c0_163] : memref<4x128x128xbf16, #tpu.memory_space<vmem>>, vector<1x128x128xbf16>
    %469 = vector.shape_cast %468 : vector<1x128x128xbf16> to vector<128x128xbf16>
    %470 = vector.extract_strided_slice %469 {offsets = [96, 0], sizes = [32, 128], strides = [1, 1]} : vector<128x128xbf16> to vector<32x128xbf16>
    %471 = arith.truncf %467 : vector<48x32xf32> to vector<48x32xbf16>
    %cst_164 = arith.constant dense<0.000000e+00> : vector<48x128xf32>
    %472 = tpu.matmul %471, %470, %cst_164 {dimension_numbers = #tpu.dot_dimension_numbers<[1], [0], [0], [1], [0, 0, 1, 1], [], []>} : vector<48x32xbf16>, vector<32x128xbf16>, vector<48x128xf32> -> vector<48x128xf32>
    %473 = arith.addf %447, %472 : vector<48x128xf32>
    %c0_165 = arith.constant 0 : index
    %c0_166 = arith.constant 0 : index
    %c0_167 = arith.constant 0 : index
    %474 = vector.load %arg5[%c0_165, %c0_166, %c0_167] : memref<2x48x128xf32, #tpu.memory_space<vmem>>, vector<1x48x128xf32>
    %475 = vector.shape_cast %474 : vector<1x48x128xf32> to vector<48x128xf32>
    %476 = vector.extract_strided_slice %341 {offsets = [0, 256], sizes = [128, 128], strides = [1, 1]} : vector<128x640xbf16> to vector<128x128xbf16>
    %477 = arith.truncf %475 : vector<48x128xf32> to vector<48x128xbf16>
    %cst_168 = arith.constant dense<0.000000e+00> : vector<48x128xf32>
    %478 = tpu.matmul %477, %476, %cst_168 {dimension_numbers = #tpu.dot_dimension_numbers<[1], [0], [0], [1], [0, 0, 1, 1], [], []>} : vector<48x128xbf16>, vector<128x128xbf16>, vector<48x128xf32> -> vector<48x128xf32>
    %c0_169 = arith.constant 0 : index
    %c0_170 = arith.constant 0 : index
    %c0_171 = arith.constant 0 : index
    %479 = vector.load %arg6[%c0_169, %c0_170, %c0_171] : memref<2x1x128xf32, #tpu.memory_space<vmem>>, vector<1x1x128xf32>
    %480 = vector.shape_cast %479 : vector<1x1x128xf32> to vector<1x128xf32>
    %481 = vector.broadcast %480 : vector<1x128xf32> to vector<48x128xf32>
    %482 = arith.mulf %478, %481 : vector<48x128xf32>
    %c2_172 = arith.constant 2 : index
    %c0_173 = arith.constant 0 : index
    %c0_174 = arith.constant 0 : index
    %483 = vector.load %arg9[%c2_172, %c0_173, %c0_174] : memref<4x128x128xbf16, #tpu.memory_space<vmem>>, vector<1x128x128xbf16>
    %484 = vector.shape_cast %483 : vector<1x128x128xbf16> to vector<128x128xbf16>
    %485 = arith.truncf %482 : vector<48x128xf32> to vector<48x128xbf16>
    %cst_175 = arith.constant dense<0.000000e+00> : vector<48x128xf32>
    %486 = tpu.matmul %485, %484, %cst_175 {dimension_numbers = #tpu.dot_dimension_numbers<[1], [0], [0], [1], [0, 0, 1, 1], [], []>} : vector<48x128xbf16>, vector<128x128xbf16>, vector<48x128xf32> -> vector<48x128xf32>
    %487 = arith.addf %473, %486 : vector<48x128xf32>
    %488 = arith.addf %339, %487 : vector<48x128xf32>
    %c2_176 = arith.constant 2 : index
    %c0_177 = arith.constant 0 : index
    %c0_178 = arith.constant 0 : index
    %489 = vector.load %arg13[%c2_176, %c0_177, %c0_178] : memref<4x1x128xf32, #tpu.memory_space<vmem>>, vector<1x1x128xf32>
    %490 = vector.shape_cast %489 : vector<1x1x128xf32> to vector<1x128xf32>
    %491 = arith.mulf %488, %488 : vector<48x128xf32>
    %cst_179 = arith.constant dense<0.000000e+00> : vector<48xf32>
    %492 = vector.multi_reduction <add>, %491, %cst_179 [1] : vector<48x128xf32> to vector<48xf32>
    %493 = vector.shape_cast %492 : vector<48xf32> to vector<48x1xf32>
    %cst_180 = arith.constant 1.280000e+02 : f32
    %494 = vector.broadcast %cst_180 : f32 to vector<48x1xf32>
    %495 = arith.divf %493, %494 : vector<48x1xf32>
    %cst_181 = arith.constant 9.99999974E-6 : f32
    %496 = vector.broadcast %cst_181 : f32 to vector<48x1xf32>
    %497 = arith.addf %495, %496 : vector<48x1xf32>
    %498 = math.rsqrt %497 : vector<48x1xf32>
    %499 = vector.broadcast %498 : vector<48x1xf32> to vector<48x128xf32>
    %500 = arith.mulf %488, %499 : vector<48x128xf32>
    %501 = vector.broadcast %490 : vector<1x128xf32> to vector<48x128xf32>
    %502 = arith.mulf %500, %501 : vector<48x128xf32>
    %c2_182 = arith.constant 2 : index
    %c0_183 = arith.constant 0 : index
    %c0_184 = arith.constant 0 : index
    %503 = vector.load %arg10[%c2_182, %c0_183, %c0_184] : memref<4x128x512xbf16, #tpu.memory_space<vmem>>, vector<1x128x512xbf16>
    %504 = vector.shape_cast %503 : vector<1x128x512xbf16> to vector<128x512xbf16>
    %505 = arith.truncf %502 : vector<48x128xf32> to vector<48x128xbf16>
    %cst_185 = arith.constant dense<0.000000e+00> : vector<48x512xf32>
    %506 = tpu.matmul %505, %504, %cst_185 {dimension_numbers = #tpu.dot_dimension_numbers<[1], [0], [0], [1], [0, 0, 1, 1], [], []>} : vector<48x128xbf16>, vector<128x512xbf16>, vector<48x512xf32> -> vector<48x512xf32>
    %507 = vector.extract_strided_slice %506 {offsets = [0, 0], sizes = [48, 256], strides = [1, 1]} : vector<48x512xf32> to vector<48x256xf32>
    %508 = vector.extract_strided_slice %506 {offsets = [0, 256], sizes = [48, 256], strides = [1, 1]} : vector<48x512xf32> to vector<48x256xf32>
    %cst_186 = arith.constant 0.000000e+00 : f32
    %509 = vector.broadcast %cst_186 : f32 to vector<48x256xf32>
    %510 = arith.subf %509, %507 : vector<48x256xf32>
    %511 = math.exp %510 : vector<48x256xf32>
    %cst_187 = arith.constant 1.000000e+00 : f32
    %512 = vector.broadcast %cst_187 : f32 to vector<48x256xf32>
    %513 = arith.addf %512, %511 : vector<48x256xf32>
    %514 = tpu.reciprocal %513 {approx = true} : vector<48x256xf32> -> vector<48x256xf32>
    %515 = arith.mulf %507, %514 : vector<48x256xf32>
    %516 = arith.mulf %515, %508 : vector<48x256xf32>
    %c2_188 = arith.constant 2 : index
    %c0_189 = arith.constant 0 : index
    %c0_190 = arith.constant 0 : index
    %517 = vector.load %arg11[%c2_188, %c0_189, %c0_190] : memref<4x256x128xbf16, #tpu.memory_space<vmem>>, vector<1x256x128xbf16>
    %518 = vector.shape_cast %517 : vector<1x256x128xbf16> to vector<256x128xbf16>
    %519 = arith.truncf %516 : vector<48x256xf32> to vector<48x256xbf16>
    %cst_191 = arith.constant dense<0.000000e+00> : vector<48x128xf32>
    %520 = tpu.matmul %519, %518, %cst_191 {dimension_numbers = #tpu.dot_dimension_numbers<[1], [0], [0], [1], [0, 0, 1, 1], [], []>} : vector<48x256xbf16>, vector<256x128xbf16>, vector<48x128xf32> -> vector<48x128xf32>
    %521 = arith.addf %488, %520 : vector<48x128xf32>
    %c3 = arith.constant 3 : index
    %c0_192 = arith.constant 0 : index
    %c0_193 = arith.constant 0 : index
    %522 = vector.load %arg8[%c3, %c0_192, %c0_193] : memref<4x128x640xbf16, #tpu.memory_space<vmem>>, vector<1x128x640xbf16>
    %523 = vector.shape_cast %522 : vector<1x128x640xbf16> to vector<128x640xbf16>
    %c3_194 = arith.constant 3 : index
    %c0_195 = arith.constant 0 : index
    %c0_196 = arith.constant 0 : index
    %524 = vector.load %arg12[%c3_194, %c0_195, %c0_196] : memref<4x1x128xf32, #tpu.memory_space<vmem>>, vector<1x1x128xf32>
    %525 = vector.shape_cast %524 : vector<1x1x128xf32> to vector<1x128xf32>
    %526 = arith.mulf %521, %521 : vector<48x128xf32>
    %cst_197 = arith.constant dense<0.000000e+00> : vector<48xf32>
    %527 = vector.multi_reduction <add>, %526, %cst_197 [1] : vector<48x128xf32> to vector<48xf32>
    %528 = vector.shape_cast %527 : vector<48xf32> to vector<48x1xf32>
    %cst_198 = arith.constant 1.280000e+02 : f32
    %529 = vector.broadcast %cst_198 : f32 to vector<48x1xf32>
    %530 = arith.divf %528, %529 : vector<48x1xf32>
    %cst_199 = arith.constant 9.99999974E-6 : f32
    %531 = vector.broadcast %cst_199 : f32 to vector<48x1xf32>
    %532 = arith.addf %530, %531 : vector<48x1xf32>
    %533 = math.rsqrt %532 : vector<48x1xf32>
    %534 = vector.broadcast %533 : vector<48x1xf32> to vector<48x128xf32>
    %535 = arith.mulf %521, %534 : vector<48x128xf32>
    %536 = vector.broadcast %525 : vector<1x128xf32> to vector<48x128xf32>
    %537 = arith.mulf %535, %536 : vector<48x128xf32>
    %538 = arith.truncf %537 : vector<48x128xf32> to vector<48x128xbf16>
    %cst_200 = arith.constant dense<0.000000e+00> : vector<48x640xf32>
    %539 = tpu.matmul %538, %523, %cst_200 {dimension_numbers = #tpu.dot_dimension_numbers<[1], [0], [0], [1], [0, 0, 1, 1], [], []>} : vector<48x128xbf16>, vector<128x640xbf16>, vector<48x640xf32> -> vector<48x640xf32>
    %540 = vector.extract_strided_slice %539 {offsets = [0, 0], sizes = [48, 128], strides = [1, 1]} : vector<48x640xf32> to vector<48x128xf32>
    %541 = arith.mulf %540, %1 : vector<48x128xf32>
    %542 = vector.extract_strided_slice %539 {offsets = [0, 384], sizes = [48, 128], strides = [1, 1]} : vector<48x640xf32> to vector<48x128xf32>
    %543 = arith.mulf %542, %2 : vector<48x128xf32>
    %544 = arith.addf %541, %543 : vector<48x128xf32>
    %545 = vector.extract_strided_slice %539 {offsets = [0, 128], sizes = [48, 128], strides = [1, 1]} : vector<48x640xf32> to vector<48x128xf32>
    %546 = arith.mulf %545, %1 : vector<48x128xf32>
    %547 = vector.extract_strided_slice %539 {offsets = [0, 512], sizes = [48, 128], strides = [1, 1]} : vector<48x640xf32> to vector<48x128xf32>
    %548 = arith.mulf %547, %2 : vector<48x128xf32>
    %549 = arith.addf %546, %548 : vector<48x128xf32>
    %550 = vector.extract_strided_slice %539 {offsets = [0, 256], sizes = [48, 128], strides = [1, 1]} : vector<48x640xf32> to vector<48x128xf32>
    %cst_201 = arith.constant 0.000000e+00 : f32
    %551 = vector.broadcast %cst_201 : f32 to vector<48x128xf32>
    %552 = vector.extract_strided_slice %544 {offsets = [0, 0], sizes = [48, 32], strides = [1, 1]} : vector<48x128xf32> to vector<48x32xf32>
    %553 = arith.truncf %552 : vector<48x32xf32> to vector<48x32xbf16>
    %554 = vector.extract_strided_slice %549 {offsets = [0, 0], sizes = [48, 32], strides = [1, 1]} : vector<48x128xf32> to vector<48x32xf32>
    %555 = arith.truncf %554 : vector<48x32xf32> to vector<48x32xbf16>
    %556 = vector.extract_strided_slice %550 {offsets = [0, 0], sizes = [48, 32], strides = [1, 1]} : vector<48x128xf32> to vector<48x32xf32>
    %557 = arith.truncf %556 : vector<48x32xf32> to vector<48x32xbf16>
    %cst_202 = arith.constant dense<0.000000e+00> : vector<48x48xf32>
    %558 = tpu.matmul %553, %555, %cst_202 {dimension_numbers = #tpu.dot_dimension_numbers<[1], [1], [0], [0], [0, 0, 1, 0], [], []>} : vector<48x32xbf16>, vector<48x32xbf16>, vector<48x48xf32> -> vector<48x48xf32>
    %559 = arith.addf %558, %3 : vector<48x48xf32>
    %cst_203 = arith.constant dense<0xFF800000> : vector<48xf32>
    %560 = vector.multi_reduction <maximumf>, %559, %cst_203 [1] : vector<48x48xf32> to vector<48xf32>
    %561 = vector.shape_cast %560 : vector<48xf32> to vector<48x1xf32>
    %562 = vector.broadcast %561 : vector<48x1xf32> to vector<48x48xf32>
    %563 = arith.subf %559, %562 : vector<48x48xf32>
    %564 = math.exp %563 : vector<48x48xf32>
    %cst_204 = arith.constant dense<0.000000e+00> : vector<48xf32>
    %565 = vector.multi_reduction <add>, %564, %cst_204 [1] : vector<48x48xf32> to vector<48xf32>
    %566 = vector.shape_cast %565 : vector<48xf32> to vector<48x1xf32>
    %567 = tpu.reciprocal %566 {approx = true} : vector<48x1xf32> -> vector<48x1xf32>
    %568 = vector.broadcast %567 : vector<48x1xf32> to vector<48x48xf32>
    %569 = arith.mulf %564, %568 : vector<48x48xf32>
    %570 = arith.truncf %569 : vector<48x48xf32> to vector<48x48xbf16>
    %cst_205 = arith.constant dense<0.000000e+00> : vector<48x32xf32>
    %571 = tpu.matmul %570, %557, %cst_205 {dimension_numbers = #tpu.dot_dimension_numbers<[1], [0], [0], [1], [0, 0, 1, 1], [], []>} : vector<48x48xbf16>, vector<48x32xbf16>, vector<48x32xf32> -> vector<48x32xf32>
    %c3_206 = arith.constant 3 : index
    %c0_207 = arith.constant 0 : index
    %c0_208 = arith.constant 0 : index
    %572 = vector.load %arg9[%c3_206, %c0_207, %c0_208] : memref<4x128x128xbf16, #tpu.memory_space<vmem>>, vector<1x128x128xbf16>
    %573 = vector.shape_cast %572 : vector<1x128x128xbf16> to vector<128x128xbf16>
    %574 = vector.extract_strided_slice %573 {offsets = [0, 0], sizes = [32, 128], strides = [1, 1]} : vector<128x128xbf16> to vector<32x128xbf16>
    %575 = arith.truncf %571 : vector<48x32xf32> to vector<48x32xbf16>
    %cst_209 = arith.constant dense<0.000000e+00> : vector<48x128xf32>
    %576 = tpu.matmul %575, %574, %cst_209 {dimension_numbers = #tpu.dot_dimension_numbers<[1], [0], [0], [1], [0, 0, 1, 1], [], []>} : vector<48x32xbf16>, vector<32x128xbf16>, vector<48x128xf32> -> vector<48x128xf32>
    %577 = arith.addf %551, %576 : vector<48x128xf32>
    %578 = vector.extract_strided_slice %544 {offsets = [0, 32], sizes = [48, 32], strides = [1, 1]} : vector<48x128xf32> to vector<48x32xf32>
    %579 = arith.truncf %578 : vector<48x32xf32> to vector<48x32xbf16>
    %580 = vector.extract_strided_slice %549 {offsets = [0, 32], sizes = [48, 32], strides = [1, 1]} : vector<48x128xf32> to vector<48x32xf32>
    %581 = arith.truncf %580 : vector<48x32xf32> to vector<48x32xbf16>
    %582 = vector.extract_strided_slice %550 {offsets = [0, 32], sizes = [48, 32], strides = [1, 1]} : vector<48x128xf32> to vector<48x32xf32>
    %583 = arith.truncf %582 : vector<48x32xf32> to vector<48x32xbf16>
    %cst_210 = arith.constant dense<0.000000e+00> : vector<48x48xf32>
    %584 = tpu.matmul %579, %581, %cst_210 {dimension_numbers = #tpu.dot_dimension_numbers<[1], [1], [0], [0], [0, 0, 1, 0], [], []>} : vector<48x32xbf16>, vector<48x32xbf16>, vector<48x48xf32> -> vector<48x48xf32>
    %585 = arith.addf %584, %3 : vector<48x48xf32>
    %cst_211 = arith.constant dense<0xFF800000> : vector<48xf32>
    %586 = vector.multi_reduction <maximumf>, %585, %cst_211 [1] : vector<48x48xf32> to vector<48xf32>
    %587 = vector.shape_cast %586 : vector<48xf32> to vector<48x1xf32>
    %588 = vector.broadcast %587 : vector<48x1xf32> to vector<48x48xf32>
    %589 = arith.subf %585, %588 : vector<48x48xf32>
    %590 = math.exp %589 : vector<48x48xf32>
    %cst_212 = arith.constant dense<0.000000e+00> : vector<48xf32>
    %591 = vector.multi_reduction <add>, %590, %cst_212 [1] : vector<48x48xf32> to vector<48xf32>
    %592 = vector.shape_cast %591 : vector<48xf32> to vector<48x1xf32>
    %593 = tpu.reciprocal %592 {approx = true} : vector<48x1xf32> -> vector<48x1xf32>
    %594 = vector.broadcast %593 : vector<48x1xf32> to vector<48x48xf32>
    %595 = arith.mulf %590, %594 : vector<48x48xf32>
    %596 = arith.truncf %595 : vector<48x48xf32> to vector<48x48xbf16>
    %cst_213 = arith.constant dense<0.000000e+00> : vector<48x32xf32>
    %597 = tpu.matmul %596, %583, %cst_213 {dimension_numbers = #tpu.dot_dimension_numbers<[1], [0], [0], [1], [0, 0, 1, 1], [], []>} : vector<48x48xbf16>, vector<48x32xbf16>, vector<48x32xf32> -> vector<48x32xf32>
    %c3_214 = arith.constant 3 : index
    %c0_215 = arith.constant 0 : index
    %c0_216 = arith.constant 0 : index
    %598 = vector.load %arg9[%c3_214, %c0_215, %c0_216] : memref<4x128x128xbf16, #tpu.memory_space<vmem>>, vector<1x128x128xbf16>
    %599 = vector.shape_cast %598 : vector<1x128x128xbf16> to vector<128x128xbf16>
    %600 = vector.extract_strided_slice %599 {offsets = [32, 0], sizes = [32, 128], strides = [1, 1]} : vector<128x128xbf16> to vector<32x128xbf16>
    %601 = arith.truncf %597 : vector<48x32xf32> to vector<48x32xbf16>
    %cst_217 = arith.constant dense<0.000000e+00> : vector<48x128xf32>
    %602 = tpu.matmul %601, %600, %cst_217 {dimension_numbers = #tpu.dot_dimension_numbers<[1], [0], [0], [1], [0, 0, 1, 1], [], []>} : vector<48x32xbf16>, vector<32x128xbf16>, vector<48x128xf32> -> vector<48x128xf32>
    %603 = arith.addf %577, %602 : vector<48x128xf32>
    %604 = vector.extract_strided_slice %544 {offsets = [0, 64], sizes = [48, 32], strides = [1, 1]} : vector<48x128xf32> to vector<48x32xf32>
    %605 = arith.truncf %604 : vector<48x32xf32> to vector<48x32xbf16>
    %606 = vector.extract_strided_slice %549 {offsets = [0, 64], sizes = [48, 32], strides = [1, 1]} : vector<48x128xf32> to vector<48x32xf32>
    %607 = arith.truncf %606 : vector<48x32xf32> to vector<48x32xbf16>
    %608 = vector.extract_strided_slice %550 {offsets = [0, 64], sizes = [48, 32], strides = [1, 1]} : vector<48x128xf32> to vector<48x32xf32>
    %609 = arith.truncf %608 : vector<48x32xf32> to vector<48x32xbf16>
    %cst_218 = arith.constant dense<0.000000e+00> : vector<48x48xf32>
    %610 = tpu.matmul %605, %607, %cst_218 {dimension_numbers = #tpu.dot_dimension_numbers<[1], [1], [0], [0], [0, 0, 1, 0], [], []>} : vector<48x32xbf16>, vector<48x32xbf16>, vector<48x48xf32> -> vector<48x48xf32>
    %611 = arith.addf %610, %3 : vector<48x48xf32>
    %cst_219 = arith.constant dense<0xFF800000> : vector<48xf32>
    %612 = vector.multi_reduction <maximumf>, %611, %cst_219 [1] : vector<48x48xf32> to vector<48xf32>
    %613 = vector.shape_cast %612 : vector<48xf32> to vector<48x1xf32>
    %614 = vector.broadcast %613 : vector<48x1xf32> to vector<48x48xf32>
    %615 = arith.subf %611, %614 : vector<48x48xf32>
    %616 = math.exp %615 : vector<48x48xf32>
    %cst_220 = arith.constant dense<0.000000e+00> : vector<48xf32>
    %617 = vector.multi_reduction <add>, %616, %cst_220 [1] : vector<48x48xf32> to vector<48xf32>
    %618 = vector.shape_cast %617 : vector<48xf32> to vector<48x1xf32>
    %619 = tpu.reciprocal %618 {approx = true} : vector<48x1xf32> -> vector<48x1xf32>
    %620 = vector.broadcast %619 : vector<48x1xf32> to vector<48x48xf32>
    %621 = arith.mulf %616, %620 : vector<48x48xf32>
    %622 = arith.truncf %621 : vector<48x48xf32> to vector<48x48xbf16>
    %cst_221 = arith.constant dense<0.000000e+00> : vector<48x32xf32>
    %623 = tpu.matmul %622, %609, %cst_221 {dimension_numbers = #tpu.dot_dimension_numbers<[1], [0], [0], [1], [0, 0, 1, 1], [], []>} : vector<48x48xbf16>, vector<48x32xbf16>, vector<48x32xf32> -> vector<48x32xf32>
    %c3_222 = arith.constant 3 : index
    %c0_223 = arith.constant 0 : index
    %c0_224 = arith.constant 0 : index
    %624 = vector.load %arg9[%c3_222, %c0_223, %c0_224] : memref<4x128x128xbf16, #tpu.memory_space<vmem>>, vector<1x128x128xbf16>
    %625 = vector.shape_cast %624 : vector<1x128x128xbf16> to vector<128x128xbf16>
    %626 = vector.extract_strided_slice %625 {offsets = [64, 0], sizes = [32, 128], strides = [1, 1]} : vector<128x128xbf16> to vector<32x128xbf16>
    %627 = arith.truncf %623 : vector<48x32xf32> to vector<48x32xbf16>
    %cst_225 = arith.constant dense<0.000000e+00> : vector<48x128xf32>
    %628 = tpu.matmul %627, %626, %cst_225 {dimension_numbers = #tpu.dot_dimension_numbers<[1], [0], [0], [1], [0, 0, 1, 1], [], []>} : vector<48x32xbf16>, vector<32x128xbf16>, vector<48x128xf32> -> vector<48x128xf32>
    %629 = arith.addf %603, %628 : vector<48x128xf32>
    %630 = vector.extract_strided_slice %544 {offsets = [0, 96], sizes = [48, 32], strides = [1, 1]} : vector<48x128xf32> to vector<48x32xf32>
    %631 = arith.truncf %630 : vector<48x32xf32> to vector<48x32xbf16>
    %632 = vector.extract_strided_slice %549 {offsets = [0, 96], sizes = [48, 32], strides = [1, 1]} : vector<48x128xf32> to vector<48x32xf32>
    %633 = arith.truncf %632 : vector<48x32xf32> to vector<48x32xbf16>
    %634 = vector.extract_strided_slice %550 {offsets = [0, 96], sizes = [48, 32], strides = [1, 1]} : vector<48x128xf32> to vector<48x32xf32>
    %635 = arith.truncf %634 : vector<48x32xf32> to vector<48x32xbf16>
    %cst_226 = arith.constant dense<0.000000e+00> : vector<48x48xf32>
    %636 = tpu.matmul %631, %633, %cst_226 {dimension_numbers = #tpu.dot_dimension_numbers<[1], [1], [0], [0], [0, 0, 1, 0], [], []>} : vector<48x32xbf16>, vector<48x32xbf16>, vector<48x48xf32> -> vector<48x48xf32>
    %637 = arith.addf %636, %3 : vector<48x48xf32>
    %cst_227 = arith.constant dense<0xFF800000> : vector<48xf32>
    %638 = vector.multi_reduction <maximumf>, %637, %cst_227 [1] : vector<48x48xf32> to vector<48xf32>
    %639 = vector.shape_cast %638 : vector<48xf32> to vector<48x1xf32>
    %640 = vector.broadcast %639 : vector<48x1xf32> to vector<48x48xf32>
    %641 = arith.subf %637, %640 : vector<48x48xf32>
    %642 = math.exp %641 : vector<48x48xf32>
    %cst_228 = arith.constant dense<0.000000e+00> : vector<48xf32>
    %643 = vector.multi_reduction <add>, %642, %cst_228 [1] : vector<48x48xf32> to vector<48xf32>
    %644 = vector.shape_cast %643 : vector<48xf32> to vector<48x1xf32>
    %645 = tpu.reciprocal %644 {approx = true} : vector<48x1xf32> -> vector<48x1xf32>
    %646 = vector.broadcast %645 : vector<48x1xf32> to vector<48x48xf32>
    %647 = arith.mulf %642, %646 : vector<48x48xf32>
    %648 = arith.truncf %647 : vector<48x48xf32> to vector<48x48xbf16>
    %cst_229 = arith.constant dense<0.000000e+00> : vector<48x32xf32>
    %649 = tpu.matmul %648, %635, %cst_229 {dimension_numbers = #tpu.dot_dimension_numbers<[1], [0], [0], [1], [0, 0, 1, 1], [], []>} : vector<48x48xbf16>, vector<48x32xbf16>, vector<48x32xf32> -> vector<48x32xf32>
    %c3_230 = arith.constant 3 : index
    %c0_231 = arith.constant 0 : index
    %c0_232 = arith.constant 0 : index
    %650 = vector.load %arg9[%c3_230, %c0_231, %c0_232] : memref<4x128x128xbf16, #tpu.memory_space<vmem>>, vector<1x128x128xbf16>
    %651 = vector.shape_cast %650 : vector<1x128x128xbf16> to vector<128x128xbf16>
    %652 = vector.extract_strided_slice %651 {offsets = [96, 0], sizes = [32, 128], strides = [1, 1]} : vector<128x128xbf16> to vector<32x128xbf16>
    %653 = arith.truncf %649 : vector<48x32xf32> to vector<48x32xbf16>
    %cst_233 = arith.constant dense<0.000000e+00> : vector<48x128xf32>
    %654 = tpu.matmul %653, %652, %cst_233 {dimension_numbers = #tpu.dot_dimension_numbers<[1], [0], [0], [1], [0, 0, 1, 1], [], []>} : vector<48x32xbf16>, vector<32x128xbf16>, vector<48x128xf32> -> vector<48x128xf32>
    %655 = arith.addf %629, %654 : vector<48x128xf32>
    %c1_234 = arith.constant 1 : index
    %c0_235 = arith.constant 0 : index
    %c0_236 = arith.constant 0 : index
    %656 = vector.load %arg5[%c1_234, %c0_235, %c0_236] : memref<2x48x128xf32, #tpu.memory_space<vmem>>, vector<1x48x128xf32>
    %657 = vector.shape_cast %656 : vector<1x48x128xf32> to vector<48x128xf32>
    %658 = vector.extract_strided_slice %523 {offsets = [0, 256], sizes = [128, 128], strides = [1, 1]} : vector<128x640xbf16> to vector<128x128xbf16>
    %659 = arith.truncf %657 : vector<48x128xf32> to vector<48x128xbf16>
    %cst_237 = arith.constant dense<0.000000e+00> : vector<48x128xf32>
    %660 = tpu.matmul %659, %658, %cst_237 {dimension_numbers = #tpu.dot_dimension_numbers<[1], [0], [0], [1], [0, 0, 1, 1], [], []>} : vector<48x128xbf16>, vector<128x128xbf16>, vector<48x128xf32> -> vector<48x128xf32>
    %c1_238 = arith.constant 1 : index
    %c0_239 = arith.constant 0 : index
    %c0_240 = arith.constant 0 : index
    %661 = vector.load %arg6[%c1_238, %c0_239, %c0_240] : memref<2x1x128xf32, #tpu.memory_space<vmem>>, vector<1x1x128xf32>
    %662 = vector.shape_cast %661 : vector<1x1x128xf32> to vector<1x128xf32>
    %663 = vector.broadcast %662 : vector<1x128xf32> to vector<48x128xf32>
    %664 = arith.mulf %660, %663 : vector<48x128xf32>
    %c3_241 = arith.constant 3 : index
    %c0_242 = arith.constant 0 : index
    %c0_243 = arith.constant 0 : index
    %665 = vector.load %arg9[%c3_241, %c0_242, %c0_243] : memref<4x128x128xbf16, #tpu.memory_space<vmem>>, vector<1x128x128xbf16>
    %666 = vector.shape_cast %665 : vector<1x128x128xbf16> to vector<128x128xbf16>
    %667 = arith.truncf %664 : vector<48x128xf32> to vector<48x128xbf16>
    %cst_244 = arith.constant dense<0.000000e+00> : vector<48x128xf32>
    %668 = tpu.matmul %667, %666, %cst_244 {dimension_numbers = #tpu.dot_dimension_numbers<[1], [0], [0], [1], [0, 0, 1, 1], [], []>} : vector<48x128xbf16>, vector<128x128xbf16>, vector<48x128xf32> -> vector<48x128xf32>
    %669 = arith.addf %655, %668 : vector<48x128xf32>
    %670 = arith.addf %521, %669 : vector<48x128xf32>
    %c3_245 = arith.constant 3 : index
    %c0_246 = arith.constant 0 : index
    %c0_247 = arith.constant 0 : index
    %671 = vector.load %arg13[%c3_245, %c0_246, %c0_247] : memref<4x1x128xf32, #tpu.memory_space<vmem>>, vector<1x1x128xf32>
    %672 = vector.shape_cast %671 : vector<1x1x128xf32> to vector<1x128xf32>
    %673 = arith.mulf %670, %670 : vector<48x128xf32>
    %cst_248 = arith.constant dense<0.000000e+00> : vector<48xf32>
    %674 = vector.multi_reduction <add>, %673, %cst_248 [1] : vector<48x128xf32> to vector<48xf32>
    %675 = vector.shape_cast %674 : vector<48xf32> to vector<48x1xf32>
    %cst_249 = arith.constant 1.280000e+02 : f32
    %676 = vector.broadcast %cst_249 : f32 to vector<48x1xf32>
    %677 = arith.divf %675, %676 : vector<48x1xf32>
    %cst_250 = arith.constant 9.99999974E-6 : f32
    %678 = vector.broadcast %cst_250 : f32 to vector<48x1xf32>
    %679 = arith.addf %677, %678 : vector<48x1xf32>
    %680 = math.rsqrt %679 : vector<48x1xf32>
    %681 = vector.broadcast %680 : vector<48x1xf32> to vector<48x128xf32>
    %682 = arith.mulf %670, %681 : vector<48x128xf32>
    %683 = vector.broadcast %672 : vector<1x128xf32> to vector<48x128xf32>
    %684 = arith.mulf %682, %683 : vector<48x128xf32>
    %c3_251 = arith.constant 3 : index
    %c0_252 = arith.constant 0 : index
    %c0_253 = arith.constant 0 : index
    %685 = vector.load %arg10[%c3_251, %c0_252, %c0_253] : memref<4x128x512xbf16, #tpu.memory_space<vmem>>, vector<1x128x512xbf16>
    %686 = vector.shape_cast %685 : vector<1x128x512xbf16> to vector<128x512xbf16>
    %687 = arith.truncf %684 : vector<48x128xf32> to vector<48x128xbf16>
    %cst_254 = arith.constant dense<0.000000e+00> : vector<48x512xf32>
    %688 = tpu.matmul %687, %686, %cst_254 {dimension_numbers = #tpu.dot_dimension_numbers<[1], [0], [0], [1], [0, 0, 1, 1], [], []>} : vector<48x128xbf16>, vector<128x512xbf16>, vector<48x512xf32> -> vector<48x512xf32>
    %689 = vector.extract_strided_slice %688 {offsets = [0, 0], sizes = [48, 256], strides = [1, 1]} : vector<48x512xf32> to vector<48x256xf32>
    %690 = vector.extract_strided_slice %688 {offsets = [0, 256], sizes = [48, 256], strides = [1, 1]} : vector<48x512xf32> to vector<48x256xf32>
    %cst_255 = arith.constant 0.000000e+00 : f32
    %691 = vector.broadcast %cst_255 : f32 to vector<48x256xf32>
    %692 = arith.subf %691, %689 : vector<48x256xf32>
    %693 = math.exp %692 : vector<48x256xf32>
    %cst_256 = arith.constant 1.000000e+00 : f32
    %694 = vector.broadcast %cst_256 : f32 to vector<48x256xf32>
    %695 = arith.addf %694, %693 : vector<48x256xf32>
    %696 = tpu.reciprocal %695 {approx = true} : vector<48x256xf32> -> vector<48x256xf32>
    %697 = arith.mulf %689, %696 : vector<48x256xf32>
    %698 = arith.mulf %697, %690 : vector<48x256xf32>
    %c3_257 = arith.constant 3 : index
    %c0_258 = arith.constant 0 : index
    %c0_259 = arith.constant 0 : index
    %699 = vector.load %arg11[%c3_257, %c0_258, %c0_259] : memref<4x256x128xbf16, #tpu.memory_space<vmem>>, vector<1x256x128xbf16>
    %700 = vector.shape_cast %699 : vector<1x256x128xbf16> to vector<256x128xbf16>
    %701 = arith.truncf %698 : vector<48x256xf32> to vector<48x256xbf16>
    %cst_260 = arith.constant dense<0.000000e+00> : vector<48x128xf32>
    %702 = tpu.matmul %701, %700, %cst_260 {dimension_numbers = #tpu.dot_dimension_numbers<[1], [0], [0], [1], [0, 0, 1, 1], [], []>} : vector<48x256xbf16>, vector<256x128xbf16>, vector<48x128xf32> -> vector<48x128xf32>
    %703 = arith.addf %670, %702 : vector<48x128xf32>
    %c0_261 = arith.constant 0 : index
    %c0_262 = arith.constant 0 : index
    %704 = vector.load %arg14[%c0_261, %c0_262] : memref<1x128xf32, #tpu.memory_space<vmem>>, vector<1x128xf32>
    %705 = arith.mulf %703, %703 : vector<48x128xf32>
    %cst_263 = arith.constant dense<0.000000e+00> : vector<48xf32>
    %706 = vector.multi_reduction <add>, %705, %cst_263 [1] : vector<48x128xf32> to vector<48xf32>
    %707 = vector.shape_cast %706 : vector<48xf32> to vector<48x1xf32>
    %cst_264 = arith.constant 1.280000e+02 : f32
    %708 = vector.broadcast %cst_264 : f32 to vector<48x1xf32>
    %709 = arith.divf %707, %708 : vector<48x1xf32>
    %cst_265 = arith.constant 9.99999974E-6 : f32
    %710 = vector.broadcast %cst_265 : f32 to vector<48x1xf32>
    %711 = arith.addf %709, %710 : vector<48x1xf32>
    %712 = math.rsqrt %711 : vector<48x1xf32>
    %713 = vector.broadcast %712 : vector<48x1xf32> to vector<48x128xf32>
    %714 = arith.mulf %703, %713 : vector<48x128xf32>
    %715 = vector.broadcast %704 : vector<1x128xf32> to vector<48x128xf32>
    %716 = arith.mulf %714, %715 : vector<48x128xf32>
    %c0_266 = arith.constant 0 : index
    %c0_267 = arith.constant 0 : index
    %717 = vector.load %arg15[%c0_266, %c0_267] : memref<128x256xbf16, #tpu.memory_space<vmem>>, vector<128x256xbf16>
    %718 = arith.truncf %716 : vector<48x128xf32> to vector<48x128xbf16>
    %cst_268 = arith.constant dense<0.000000e+00> : vector<48x256xf32>
    %719 = tpu.matmul %718, %717, %cst_268 {dimension_numbers = #tpu.dot_dimension_numbers<[1], [0], [0], [1], [0, 0, 1, 1], [], []>} : vector<48x128xbf16>, vector<128x256xbf16>, vector<48x256xf32> -> vector<48x256xf32>
    %cst_269 = arith.constant dense<0xFF800000> : vector<48xf32>
    %720 = vector.multi_reduction <maximumf>, %719, %cst_269 [1] : vector<48x256xf32> to vector<48xf32>
    %721 = vector.shape_cast %720 : vector<48xf32> to vector<48x1xf32>
    %722 = vector.broadcast %721 : vector<48x1xf32> to vector<48x256xf32>
    %723 = arith.subf %719, %722 : vector<48x256xf32>
    %724 = math.exp %723 : vector<48x256xf32>
    %cst_270 = arith.constant dense<0.000000e+00> : vector<48xf32>
    %725 = vector.multi_reduction <add>, %724, %cst_270 [1] : vector<48x256xf32> to vector<48xf32>
    %726 = vector.shape_cast %725 : vector<48xf32> to vector<48x1xf32>
    %727 = math.log %726 : vector<48x1xf32>
    %728 = arith.addf %727, %721 : vector<48x1xf32>
    %c0_271 = arith.constant 0 : index
    %c0_272 = arith.constant 0 : index
    %729 = vector.load %arg4[%c0_271, %c0_272] : memref<48x1xi32, #tpu.memory_space<vmem>>, vector<48x1xi32>
    %730 = tpu.iota {dimensions = array<i32: 1>} : vector<48x256xi32>
    %731 = vector.broadcast %729 : vector<48x1xi32> to vector<48x256xi32>
    %732 = arith.cmpi eq, %730, %731 : vector<48x256xi32>
    %733 = arith.extui %732 : vector<48x256xi1> to vector<48x256xi32>
    %734 = arith.sitofp %733 : vector<48x256xi32> to vector<48x256xf32>
    %735 = arith.mulf %719, %734 : vector<48x256xf32>
    %cst_273 = arith.constant dense<0.000000e+00> : vector<48xf32>
    %736 = vector.multi_reduction <add>, %735, %cst_273 [1] : vector<48x256xf32> to vector<48xf32>
    %737 = vector.shape_cast %736 : vector<48xf32> to vector<48x1xf32>
    %c-100_i32 = arith.constant -100 : i32
    %738 = vector.broadcast %c-100_i32 : i32 to vector<48x1xi32>
    %739 = arith.cmpi ne, %729, %738 : vector<48x1xi32>
    %740 = arith.extui %739 : vector<48x1xi1> to vector<48x1xi32>
    %741 = arith.sitofp %740 : vector<48x1xi32> to vector<48x1xf32>
    %742 = arith.subf %728, %737 : vector<48x1xf32>
    %743 = arith.mulf %742, %741 : vector<48x1xf32>
    %c0_274 = arith.constant 0 : index
    %c0_275 = arith.constant 0 : index
    %744 = vector.load %arg7[%c0_274, %c0_275] : memref<3x48xf32, #tpu.memory_space<vmem>>, vector<3x48xf32>
    %cst_276 = arith.constant dense<0.000000e+00> : vector<3x1xf32>
    %745 = tpu.matmul %744, %743, %cst_276 {dimension_numbers = #tpu.dot_dimension_numbers<[1], [0], [0], [1], [0, 0, 1, 1], [], []>} : vector<3x48xf32>, vector<48x1xf32>, vector<3x1xf32> -> vector<3x1xf32>
    %c0_277 = arith.constant 0 : index
    %c0_278 = arith.constant 0 : index
    %746 = vector.load %arg16[%c0_277, %c0_278] : memref<3x1xf32, #tpu.memory_space<vmem>>, vector<3x1xf32>
    tpu.vector_store %arg16[%c0_277, %c0_278], %745 {strides = array<i32>} : memref<3x1xf32, #tpu.memory_space<vmem>>, vector<3x1xf32>,
    return
  }
}

</mosaic_0001>

<llo_original>
// kernel: _forward_losses.1
$region0: #{_forward_losses.1}
  #allocation0 [shape = 'u32[]', space=smem, size = 0x4, offset = 0x4, fixed_abs, tag = 'smem constant byte address 0x4 - core index']
  #allocation1 [shape = 'u32[144,128]{1,0:T(1,128)}', space=vmem, size = 0x12000, scoped, tag = 'internal scratch']
  %s0 = inlined_call_operand.vmem [shape: f32[48,128], index: 0, kind: input, shape index: {}]
  %s1 = inlined_call_operand.vmem [shape: f32[48,128], index: 1, kind: input, shape index: {}]
  %s2 = inlined_call_operand.vmem [shape: f32[48,128], index: 2, kind: input, shape index: {}]
  %s3 = inlined_call_operand.vmem [shape: f32[48,48], index: 3, kind: input, shape index: {}]
  %s4 = inlined_call_operand.vmem [shape: s32[48,1], index: 4, kind: input, shape index: {}]
  %s5 = inlined_call_operand.vmem [shape: f32[2,48,128], index: 5, kind: input, shape index: {}]
  %s6 = inlined_call_operand.vmem [shape: f32[2,1,128], index: 6, kind: input, shape index: {}]
  %s7 = inlined_call_operand.vmem [shape: f32[3,48], index: 7, kind: input, shape index: {}]
  %s8 = inlined_call_operand.vmem [shape: bf16[4,128,640], index: 8, kind: input, shape index: {}]
  %s9 = inlined_call_operand.hbm [shape: bf16[4,128,128], index: 9, kind: input, shape index: {}]
  %s10 = inlined_call_operand.hbm [shape: bf16[4,128,512], index: 10, kind: input, shape index: {}]
  %s11 = inlined_call_operand.hbm [shape: bf16[4,256,128], index: 11, kind: input, shape index: {}]
  %s12 = inlined_call_operand.vmem [shape: f32[4,1,128], index: 12, kind: input, shape index: {}]
  %s13 = inlined_call_operand.vmem [shape: f32[4,1,128], index: 13, kind: input, shape index: {}]
  %s14 = inlined_call_operand.vmem [shape: f32[1,128], index: 14, kind: input, shape index: {}]
  %s15 = inlined_call_operand.hbm [shape: bf16[128,256], index: 15, kind: input, shape index: {}]
  %s16 = inlined_call_operand.vmem [shape: f32[3,1], index: 16, kind: output, shape index: {}]
  %s17 = sld [smem:[#allocation0]]
  $region90: #{_forward_losses.1} parent=0
    _
  %s19 = ssub.s32 1, %s17
  %s20 = scalar_select 0, %s19, %s17
  $region1: #{_forward_losses.1} parent=0
    #allocation2 [shape = 'u8[131072]{0}', space=vmem, size = 0x20000, scoped, tag = 'input window, operand 9, single buffered']
    #allocation3 [shape = 's32[1]{0}', space=sflag, size = 0x4, scoped, tag = 'scoped memory for _forward_losses.1']
    #allocation4 [shape = 'u8[524288]{0}', space=vmem, size = 0x80000, scoped, tag = 'input window, operand 10, single buffered']
    #allocation5 [shape = 's32[1]{0}', space=sflag, size = 0x4, scoped, tag = 'scoped memory for _forward_losses.1']
    #allocation6 [shape = 'u8[262144]{0}', space=vmem, size = 0x40000, scoped, tag = 'input window, operand 11, single buffered']
    #allocation7 [shape = 'u8[65536]{0}', space=vmem, size = 0x10000, scoped, tag = 'input window, operand 15, single buffered']
    #allocation8 [shape = 's32[1]{0}', space=sflag, size = 0x4, scoped, tag = 'scoped memory for _forward_losses.1']
    %21 = vsyncpa [#allocation3], 0
    %22 = vsyncpa [#allocation5], 0
    %23 = vsyncpa [#allocation8], 0
    // Predicated region
    $region2: #{_forward_losses.1} parent=1 // pred_check
      _
    $region3: #{_forward_losses.1} parent=1 // pred_check_branch
      %25 = sbr.rel (0) target = $region5
    $region4: #{_forward_losses.1} parent=1 // pred_region
      _
    $region5: #{_forward_losses.1} parent=1 // pred_fallthru
      _
    // Predicated region
    $region6: #{_forward_losses.1} parent=1 // pred_check
      _
    $region7: #{_forward_losses.1} parent=1 // pred_check_branch
      %27 = sbr.rel (0) target = $region9
    $region8: #{_forward_losses.1} parent=1 // pred_region
      _
    $region9: #{_forward_losses.1} parent=1 // pred_fallthru
      _
    // Predicated region
    $region10: #{_forward_losses.1} parent=1 // pred_check
      _
    $region11: #{_forward_losses.1} parent=1 // pred_check_branch
      %29 = sbr.rel (0) target = $region13
    $region12: #{_forward_losses.1} parent=1 // pred_region
      _
    $region13: #{_forward_losses.1} parent=1 // pred_fallthru
      _
    // Predicated region
    $region14: #{_forward_losses.1} parent=1 // pred_check
      _
    $region15: #{_forward_losses.1} parent=1 // pred_check_branch
      %31 = sbr.rel (0) target = $region17
    $region16: #{_forward_losses.1} parent=1 // pred_region
      _
    $region17: #{_forward_losses.1} parent=1 // pred_fallthru
      _
    // Predicated region
    $region18: #{_forward_losses.1} parent=1 // pred_check
      _
    $region19: #{_forward_losses.1} parent=1 // pred_check_branch
      %33 = sbr.rel (0) target = $region21
    $region20: #{_forward_losses.1} parent=1 // pred_region
      _
    $region21: #{_forward_losses.1} parent=1 // pred_fallthru
      _
    // Predicated region
    $region22: #{_forward_losses.1} parent=1 // pred_check
      _
    $region23: #{_forward_losses.1} parent=1 // pred_check_branch
      %35 = sbr.rel (0) target = $region25
    $region24: #{_forward_losses.1} parent=1 // pred_region
      _
    $region25: #{_forward_losses.1} parent=1 // pred_fallthru
      _
    // Predicated region
    $region26: #{_forward_losses.1} parent=1 // pred_check
      _
    $region27: #{_forward_losses.1} parent=1 // pred_check_branch
      %37 = sbr.rel (0) target = $region29
    $region28: #{_forward_losses.1} parent=1 // pred_region
      _
    $region29: #{_forward_losses.1} parent=1 // pred_fallthru
      _
    // Predicated region
    $region30: #{_forward_losses.1} parent=1 // pred_check
      _
    $region31: #{_forward_losses.1} parent=1 // pred_check_branch
      %39 = sbr.rel (0) target = $region33
    $region32: #{_forward_losses.1} parent=1 // pred_region
      _
    $region33: #{_forward_losses.1} parent=1 // pred_fallthru
      _
    // Predicated region
    $region34: #{_forward_losses.1} parent=1 // pred_check
      _
    $region35: #{_forward_losses.1} parent=1 // pred_check_branch
      %41 = sbr.rel (0) target = $region37
    $region36: #{_forward_losses.1} parent=1 // pred_region
      _
    $region37: #{_forward_losses.1} parent=1 // pred_fallthru
      _
    // Predicated region
    $region38: #{_forward_losses.1} parent=1 // pred_check
      _
    $region39: #{_forward_losses.1} parent=1 // pred_check_branch
      %43 = sbr.rel (0) target = $region41
    $region40: #{_forward_losses.1} parent=1 // pred_region
      %s45 = ssub.s32 4096, 4096
      %46 = vsyncadd [#allocation3], %s45
      %s47 = sshll.u32 [#allocation2], 4
      %s48 = int_to_ptr.vmem [resolvable:$true] %s47
      %53 = dma.hbm_to_vmem [thread:$0]  %s9, 4096, %s48, [#allocation3], 64, 64, 4
    $region41: #{_forward_losses.1} parent=1 // pred_fallthru
      _
    // Predicated region
    $region42: #{_forward_losses.1} parent=1 // pred_check
      _
    $region43: #{_forward_losses.1} parent=1 // pred_check_branch
      %55 = sbr.rel (0) target = $region45
    $region44: #{_forward_losses.1} parent=1 // pred_region
      %s57 = ssub.s32 16384, 16384
      %58 = vsyncadd [#allocation5], %s57
      %s59 = sshll.u32 [#allocation4], 4
      %s60 = int_to_ptr.vmem [resolvable:$true] %s59
      %65 = dma.hbm_to_vmem [thread:$0]  %s10, 16384, %s60, [#allocation5], 256, 256, 16
    $region45: #{_forward_losses.1} parent=1 // pred_fallthru
      _
    // Predicated region
    $region46: #{_forward_losses.1} parent=1 // pred_check
      _
    $region47: #{_forward_losses.1} parent=1 // pred_check_branch
      %67 = sbr.rel (0) target = $region49
    $region48: #{_forward_losses.1} parent=1 // pred_region
      %s69 = ssub.s32 8192, 8192
      %70 = vsyncadd [#allocation5], %s69
      %s71 = sshll.u32 [#allocation6], 4
      %s72 = int_to_ptr.vmem [resolvable:$true] %s71
      %77 = dma.hbm_to_vmem [thread:$0]  %s11, 8192, %s72, [#allocation5], 64, 64, 4
    $region49: #{_forward_losses.1} parent=1 // pred_fallthru
      _
    // Predicated region
    $region50: #{_forward_losses.1} parent=1 // pred_check
      _
    $region51: #{_forward_losses.1} parent=1 // pred_check_branch
      %79 = sbr.rel (0) target = $region53
    $region52: #{_forward_losses.1} parent=1 // pred_region
      _
    $region53: #{_forward_losses.1} parent=1 // pred_fallthru
      _
    // Predicated region
    $region54: #{_forward_losses.1} parent=1 // pred_check
      _
    $region55: #{_forward_losses.1} parent=1 // pred_check_branch
      %81 = sbr.rel (0) target = $region57
    $region56: #{_forward_losses.1} parent=1 // pred_region
      _
    $region57: #{_forward_losses.1} parent=1 // pred_fallthru
      _
    // Predicated region
    $region58: #{_forward_losses.1} parent=1 // pred_check
      _
    $region59: #{_forward_losses.1} parent=1 // pred_check_branch
      %83 = sbr.rel (0) target = $region61
    $region60: #{_forward_losses.1} parent=1 // pred_region
      _
    $region61: #{_forward_losses.1} parent=1 // pred_fallthru
      _
    // Predicated region
    $region62: #{_forward_losses.1} parent=1 // pred_check
      _
    $region63: #{_forward_losses.1} parent=1 // pred_check_branch
      %85 = sbr.rel (0) target = $region65
    $region64: #{_forward_losses.1} parent=1 // pred_region
      %s87 = ssub.s32 2048, 2048
      %88 = vsyncadd [#allocation8], %s87
      %s89 = sshll.u32 [#allocation7], 4
      %s90 = int_to_ptr.vmem [resolvable:$true] %s89
      %95 = dma.hbm_to_vmem [thread:$0]  %s15, 2048, %s90, [#allocation8], 128, 128, 8
    $region65: #{_forward_losses.1} parent=1 // pred_fallthru
      _
    // Predicated region
    $region66: #{_forward_losses.1} parent=1 // pred_check
      _
    $region67: #{_forward_losses.1} parent=1 // pred_check_branch
      %97 = sbr.rel (0) target = $region69
    $region68: #{_forward_losses.1} parent=1 // pred_region
      %98 = dma.done [#allocation3], 4096
    $region69: #{_forward_losses.1} parent=1 // pred_fallthru
      _
    // Predicated region
    $region70: #{_forward_losses.1} parent=1 // pred_check
      _
    $region71: #{_forward_losses.1} parent=1 // pred_check_branch
      %100 = sbr.rel (0) target = $region73
    $region72: #{_forward_losses.1} parent=1 // pred_region
      %101 = dma.done [#allocation5], 16384
    $region73: #{_forward_losses.1} parent=1 // pred_fallthru
      _
    // Predicated region
    $region74: #{_forward_losses.1} parent=1 // pred_check
      _
    $region75: #{_forward_losses.1} parent=1 // pred_check_branch
      %103 = sbr.rel (0) target = $region77
    $region76: #{_forward_losses.1} parent=1 // pred_region
      %104 = dma.done [#allocation5], 8192
    $region77: #{_forward_losses.1} parent=1 // pred_fallthru
      _
    // Predicated region
    $region78: #{_forward_losses.1} parent=1 // pred_check
      _
    $region79: #{_forward_losses.1} parent=1 // pred_check_branch
      %106 = sbr.rel (0) target = $region81
    $region80: #{_forward_losses.1} parent=1 // pred_region
      %107 = dma.done [#allocation8], 2048
    $region81: #{_forward_losses.1} parent=1 // pred_fallthru
      _
    %v109 = vld [vmem:[%s0] sm:$0xff]
    %v110 = vld [vmem:[%s0 + $0x8] sm:$0xff]
    %v111 = vld [vmem:[%s0 + $0x10] sm:$0xff]
    %v112 = vld [vmem:[%s0 + $0x18] sm:$0xff]
    %v113 = vld [vmem:[%s0 + $0x20] sm:$0xff]
    %v114 = vld [vmem:[%s0 + $0x28] sm:$0xff]
    %v115 = vld [vmem:[%s1] sm:$0xff]
    %v116 = vld [vmem:[%s1 + $0x8] sm:$0xff]
    %v117 = vld [vmem:[%s1 + $0x10] sm:$0xff]
    %v118 = vld [vmem:[%s1 + $0x18] sm:$0xff]
    %v119 = vld [vmem:[%s1 + $0x20] sm:$0xff]
    %v120 = vld [vmem:[%s1 + $0x28] sm:$0xff]
    %v121 = vld [vmem:[%s2] sm:$0xff]
    %v122 = vld [vmem:[%s2 + $0x8] sm:$0xff]
    %v123 = vld [vmem:[%s2 + $0x10] sm:$0xff]
    %v124 = vld [vmem:[%s2 + $0x18] sm:$0xff]
    %v125 = vld [vmem:[%s2 + $0x20] sm:$0xff]
    %v126 = vld [vmem:[%s2 + $0x28] sm:$0xff]
    %v127 = vld [vmem:[%s3] sm:$0xff]
    %v128 = vld [vmem:[%s3 + $0x8] sm:$0xff]
    %v129 = vld [vmem:[%s3 + $0x10] sm:$0xff]
    %v130 = vld [vmem:[%s3 + $0x18] sm:$0xff]
    %v131 = vld [vmem:[%s3 + $0x20] sm:$0xff]
    %v132 = vld [vmem:[%s3 + $0x28] sm:$0xff]
    %v133 = vld [vmem:[%s8] sm:$0xff]
    %v134 = vld [vmem:[%s8 + $0x8] sm:$0xff]
    %v135 = vld [vmem:[%s8 + $0x10] sm:$0xf]
    %v136 = vld [vmem:[%s8 + $0x14] sm:$0xff]
    %v137 = vld [vmem:[%s8 + $0x1c] sm:$0xff]
    %v138 = vld [vmem:[%s8 + $0x24] sm:$0xf]
    %v139 = vld [vmem:[%s8 + $0x28] sm:$0xff]
    %v140 = vld [vmem:[%s8 + $0x30] sm:$0xff]
    %v141 = vld [vmem:[%s8 + $0x38] sm:$0xf]
    %v142 = vld [vmem:[%s8 + $0x3c] sm:$0xff]
    %v143 = vld [vmem:[%s8 + $0x44] sm:$0xff]
    %v144 = vld [vmem:[%s8 + $0x4c] sm:$0xf]
    %v145 = vld [vmem:[%s8 + $0x50] sm:$0xff]
    %v146 = vld [vmem:[%s8 + $0x58] sm:$0xff]
    %v147 = vld [vmem:[%s8 + $0x60] sm:$0xf]
    %v148 = vld [vmem:[%s8 + $0x64] sm:$0xff]
    %v149 = vld [vmem:[%s8 + $0x6c] sm:$0xff]
    %v150 = vld [vmem:[%s8 + $0x74] sm:$0xf]
    %v151 = vld [vmem:[%s8 + $0x78] sm:$0xff]
    %v152 = vld [vmem:[%s8 + $0x80] sm:$0xff]
    %v153 = vld [vmem:[%s8 + $0x88] sm:$0xf]
    %v154 = vld [vmem:[%s8 + $0x8c] sm:$0xff]
    %v155 = vld [vmem:[%s8 + $0x94] sm:$0xff]
    %v156 = vld [vmem:[%s8 + $0x9c] sm:$0xf]
    %v157 = vld [vmem:[%s8 + $0xa0] sm:$0xff]
    %v158 = vld [vmem:[%s8 + $0xa8] sm:$0xff]
    %v159 = vld [vmem:[%s8 + $0xb0] sm:$0xf]
    %v160 = vld [vmem:[%s8 + $0xb4] sm:$0xff]
    %v161 = vld [vmem:[%s8 + $0xbc] sm:$0xff]
    %v162 = vld [vmem:[%s8 + $0xc4] sm:$0xf]
    %v163 = vld [vmem:[%s8 + $0xc8] sm:$0xff]
    %v164 = vld [vmem:[%s8 + $0xd0] sm:$0xff]
    %v165 = vld [vmem:[%s8 + $0xd8] sm:$0xf]
    %v166 = vld [vmem:[%s8 + $0xdc] sm:$0xff]
    %v167 = vld [vmem:[%s8 + $0xe4] sm:$0xff]
    %v168 = vld [vmem:[%s8 + $0xec] sm:$0xf]
    %v169 = vld [vmem:[%s8 + $0xf0] sm:$0xff]
    %v170 = vld [vmem:[%s8 + $0xf8] sm:$0xff]
    %v171 = vld [vmem:[%s8 + $0x100] sm:$0xf]
    %v172 = vld [vmem:[%s8 + $0x104] sm:$0xff]
    %v173 = vld [vmem:[%s8 + $0x10c] sm:$0xff]
    %v174 = vld [vmem:[%s8 + $0x114] sm:$0xf]
    %v175 = vld [vmem:[%s8 + $0x118] sm:$0xff]
    %v176 = vld [vmem:[%s8 + $0x120] sm:$0xff]
    %v177 = vld [vmem:[%s8 + $0x128] sm:$0xf]
    %v178 = vld [vmem:[%s8 + $0x12c] sm:$0xff]
    %v179 = vld [vmem:[%s8 + $0x134] sm:$0xff]
    %v180 = vld [vmem:[%s8 + $0x13c] sm:$0xf]
    %v181 = vld [vmem:[%s12] sm:$0x1]
    %v182 = vmul.f32 %v109, %v109
    %v183 = vmul.f32 %v110, %v110
    %v184 = vmul.f32 %v111, %v111
    %v185 = vmul.f32 %v112, %v112
    %v186 = vmul.f32 %v113, %v113
    %v187 = vmul.f32 %v114, %v114
    %188 = vadd.xlane.f32.xlu0 %v182
    %v189 = vpop.xlane.xlu0 %188
    %190 = vadd.xlane.f32.xlu0 %v183
    %v191 = vpop.xlane.xlu0 %190
    %192 = vadd.xlane.f32.xlu0 %v184
    %v193 = vpop.xlane.xlu0 %192
    %194 = vadd.xlane.f32.xlu0 %v185
    %v195 = vpop.xlane.xlu0 %194
    %196 = vadd.xlane.f32.xlu0 %v186
    %v197 = vpop.xlane.xlu0 %196
    %198 = vadd.xlane.f32.xlu0 %v187
    %v199 = vpop.xlane.xlu0 %198
    %v200 = vrcp.pop 128.0
    %v201 = vmul.f32 %v189, %v200
    %v202 = vmul.f32 %v191, %v200
    %v203 = vmul.f32 %v193, %v200
    %v204 = vmul.f32 %v195, %v200
    %v205 = vmul.f32 %v197, %v200
    %v206 = vmul.f32 %v199, %v200
    %v207 = vadd.f32 %v201, 1e-05
    %v208 = vadd.f32 %v202, 1e-05
    %v209 = vadd.f32 %v203, 1e-05
    %v210 = vadd.f32 %v204, 1e-05
    %v211 = vadd.f32 %v205, 1e-05
    %v212 = vadd.f32 %v206, 1e-05
    %v213 = vrsqrt.pop %v207
    %v214 = vrsqrt.pop %v208
    %v215 = vrsqrt.pop %v209
    %v216 = vrsqrt.pop %v210
    %v217 = vrsqrt.pop %v211
    %v218 = vrsqrt.pop %v212
    %v219 = vmul.f32 %v109, %v213
    %v220 = vmul.f32 %v110, %v214
    %v221 = vmul.f32 %v111, %v215
    %v222 = vmul.f32 %v112, %v216
    %v223 = vmul.f32 %v113, %v217
    %v224 = vmul.f32 %v114, %v218
    %v226 = vlaneseq
    %v227 = vshrl.u32 %v226, 7
    %v228 = vsub.s32 0, %v227
    %v229 = vrot.slane %v181, %v228
    %v231 = vmul.f32 %v219, %v229
    %v232 = vmul.f32 %v220, %v229
    %v233 = vmul.f32 %v221, %v229
    %v234 = vmul.f32 %v222, %v229
    %v235 = vmul.f32 %v223, %v229
    %v236 = vmul.f32 %v224, %v229
    %v237 = vpack.c.bf16 %v232, %v231
    %v238 = vpack.c.bf16 %v234, %v233
    %v239 = vpack.c.bf16 %v236, %v235
    %v288 = vunpack.c.l.b16 %v133
    %v289 = vunpack.c.h.b16 %v133
    %v290 = vunpack.c.l.b16 %v134
    %v291 = vunpack.c.h.b16 %v134
    %v292 = vunpack.c.l.b16 %v135
    %v293 = vunpack.c.l.b16 %v136
    %v294 = vunpack.c.h.b16 %v136
    %v295 = vunpack.c.l.b16 %v137
    %v296 = vunpack.c.h.b16 %v137
    %v297 = vunpack.c.l.b16 %v138
    %v298 = vunpack.c.l.b16 %v139
    %v299 = vunpack.c.h.b16 %v139
    %v300 = vunpack.c.l.b16 %v140
    %v301 = vunpack.c.h.b16 %v140
    %v302 = vunpack.c.l.b16 %v141
    %v303 = vunpack.c.l.b16 %v142
    %v304 = vunpack.c.h.b16 %v142
    %v305 = vunpack.c.l.b16 %v143
    %v306 = vunpack.c.h.b16 %v143
    %v307 = vunpack.c.l.b16 %v144
    %v308 = vunpack.c.l.b16 %v145
    %v309 = vunpack.c.h.b16 %v145
    %v310 = vunpack.c.l.b16 %v146
    %v311 = vunpack.c.h.b16 %v146
    %v312 = vunpack.c.l.b16 %v147
    %v313 = vunpack.c.l.b16 %v148
    %v314 = vunpack.c.h.b16 %v148
    %v315 = vunpack.c.l.b16 %v149
    %v316 = vunpack.c.h.b16 %v149
    %v317 = vunpack.c.l.b16 %v150
    %v318 = vunpack.c.l.b16 %v151
    %v319 = vunpack.c.h.b16 %v151
    %v320 = vunpack.c.l.b16 %v152
    %v321 = vunpack.c.h.b16 %v152
    %v322 = vunpack.c.l.b16 %v153
    %v323 = vunpack.c.l.b16 %v154
    %v324 = vunpack.c.h.b16 %v154
    %v325 = vunpack.c.l.b16 %v155
    %v326 = vunpack.c.h.b16 %v155
    %v327 = vunpack.c.l.b16 %v156
    %v328 = vunpack.c.l.b16 %v157
    %v329 = vunpack.c.h.b16 %v157
    %v330 = vunpack.c.l.b16 %v158
    %v331 = vunpack.c.h.b16 %v158
    %v332 = vunpack.c.l.b16 %v159
    %v333 = vunpack.c.l.b16 %v160
    %v334 = vunpack.c.h.b16 %v160
    %v335 = vunpack.c.l.b16 %v161
    %v336 = vunpack.c.h.b16 %v161
    %v337 = vunpack.c.l.b16 %v162
    %v338 = vunpack.c.l.b16 %v163
    %v339 = vunpack.c.h.b16 %v163
    %v340 = vunpack.c.l.b16 %v164
    %v341 = vunpack.c.h.b16 %v164
    %v342 = vunpack.c.l.b16 %v165
    %v343 = vunpack.c.l.b16 %v166
    %v344 = vunpack.c.h.b16 %v166
    %v345 = vunpack.c.l.b16 %v167
    %v346 = vunpack.c.h.b16 %v167
    %v347 = vunpack.c.l.b16 %v168
    %v348 = vunpack.c.l.b16 %v169
    %v349 = vunpack.c.h.b16 %v169
    %v350 = vunpack.c.l.b16 %v170
    %v351 = vunpack.c.h.b16 %v170
    %v352 = vunpack.c.l.b16 %v171
    %v353 = vunpack.c.l.b16 %v172
    %v354 = vunpack.c.h.b16 %v172
    %v355 = vunpack.c.l.b16 %v173
    %v356 = vunpack.c.h.b16 %v173
    %v357 = vunpack.c.l.b16 %v174
    %v358 = vunpack.c.l.b16 %v175
    %v359 = vunpack.c.h.b16 %v175
    %v360 = vunpack.c.l.b16 %v176
    %v361 = vunpack.c.h.b16 %v176
    %v362 = vunpack.c.l.b16 %v177
    %v363 = vunpack.c.l.b16 %v178
    %v364 = vunpack.c.h.b16 %v178
    %v365 = vunpack.c.l.b16 %v179
    %v366 = vunpack.c.h.b16 %v179
    %v367 = vunpack.c.l.b16 %v180
    %v368 = vpack.c.b16 %v293, %v288
    %v369 = vpack.c.b16 %v294, %v289
    %v370 = vpack.c.b16 %v295, %v290
    %v371 = vpack.c.b16 %v296, %v291
    %v372 = vpack.c.b16 %v297, %v292
    %v373 = vpack.c.b16 %v303, %v298
    %v374 = vpack.c.b16 %v304, %v299
    %v375 = vpack.c.b16 %v305, %v300
    %v376 = vpack.c.b16 %v306, %v301
    %v377 = vpack.c.b16 %v307, %v302
    %v378 = vpack.c.b16 %v313, %v308
    %v379 = vpack.c.b16 %v314, %v309
    %v380 = vpack.c.b16 %v315, %v310
    %v381 = vpack.c.b16 %v316, %v311
    %v382 = vpack.c.b16 %v317, %v312
    %v383 = vpack.c.b16 %v323, %v318
    %v384 = vpack.c.b16 %v324, %v319
    %v385 = vpack.c.b16 %v325, %v320
    %v386 = vpack.c.b16 %v326, %v321
    %v387 = vpack.c.b16 %v327, %v322
    %v388 = vpack.c.b16 %v333, %v328
    %v389 = vpack.c.b16 %v334, %v329
    %v390 = vpack.c.b16 %v335, %v330
    %v391 = vpack.c.b16 %v336, %v331
    %v392 = vpack.c.b16 %v337, %v332
    %v393 = vpack.c.b16 %v343, %v338
    %v394 = vpack.c.b16 %v344, %v339
    %v395 = vpack.c.b16 %v345, %v340
    %v396 = vpack.c.b16 %v346, %v341
    %v397 = vpack.c.b16 %v347, %v342
    %v398 = vpack.c.b16 %v353, %v348
    %v399 = vpack.c.b16 %v354, %v349
    %v400 = vpack.c.b16 %v355, %v350
    %v401 = vpack.c.b16 %v356, %v351
    %v402 = vpack.c.b16 %v357, %v352
    %v403 = vpack.c.b16 %v363, %v358
    %v404 = vpack.c.b16 %v364, %v359
    %v405 = vpack.c.b16 %v365, %v360
    %v406 = vpack.c.b16 %v366, %v361
    %v407 = vpack.c.b16 %v367, %v362
    %448 = vmatprep.subr.bf16.mxu0 %v369
    %449 = vmatpush1.bf16.msra.mxu0 %v368
    %450 = vmatprep.subr.bf16.mxu0 %v374
    %451 = vmatpush1.bf16.msra.mxu0 %v373
    %452 = vmatprep.subr.bf16.mxu0 %v379
    %453 = vmatpush1.bf16.msra.mxu0 %v378
    %454 = vmatprep.subr.bf16.mxu0 %v384
    %455 = vmatpush1.bf16.msra.mxu0 %v383
    %456 = vmatprep.subr.bf16.mxu0 %v389
    %457 = vmatpush1.bf16.msra.mxu0 %v388
    %458 = vmatprep.subr.bf16.mxu0 %v394
    %459 = vmatpush1.bf16.msra.mxu0 %v393
    %460 = vmatprep.subr.bf16.mxu0 %v399
    %461 = vmatpush1.bf16.msra.mxu0 %v398
    %462 = vmatprep.subr.bf16.mxu0 %v404
    %463 = vmatpush1.bf16.msra.mxu0 %v403
    %464 = vmatprep.subr.bf16.mxu0 0
    %465 = vmatpush1.bf16.msra.mxu0 0
    %466 = vmatprep.subr.bf16.mxu0 0
    %467 = vmatpush1.bf16.msra.mxu0 0
    %468 = vmatprep.subr.bf16.mxu0 0
    %469 = vmatpush1.bf16.msra.mxu0 0
    %470 = vmatprep.subr.bf16.mxu0 0
    %471 = vmatpush1.bf16.msra.mxu0 0
    %472 = vmatprep.subr.bf16.mxu0 0
    %473 = vmatpush1.bf16.msra.mxu0 0
    %474 = vmatprep.subr.bf16.mxu0 0
    %475 = vmatpush1.bf16.msra.mxu0 0
    %476 = vmatprep.subr.bf16.mxu0 0
    %477 = vmatpush1.bf16.msra.mxu0 0
    %478 = vmatprep.subr.bf16.mxu0 0
    %479 = vmatpush1.bf16.msra.mxu0 0
    %480 = vmatprep.mubr.bf16.mxu0 0
    %481 = vmatmul.mubr.bf16.gmra.mrb[0].mxu0 %v237
    %v482 = vpop.f32.mrb[0].mxu0
    %v483 = vadd.f32 0.0, %v482
    %v484 = vpop.f32.mrb[0].mxu0
    %v485 = vadd.f32 0.0, %v484
    %v486 = vpop.f32.mrb[0].mxu0
    %v487 = vadd.f32 0.0, %v486
    %v488 = vpop.f32.mrb[0].mxu0
    %v489 = vadd.f32 0.0, %v488
    %490 = vmatprep.mubr.bf16.mxu0 0
    %491 = vmatmul.mubr.bf16.gmra.mrb[0].mxu0 %v238
    %v492 = vpop.f32.mrb[0].mxu0
    %v493 = vadd.f32 0.0, %v492
    %v494 = vpop.f32.mrb[0].mxu0
    %v495 = vadd.f32 0.0, %v494
    %v496 = vpop.f32.mrb[0].mxu0
    %v497 = vadd.f32 0.0, %v496
    %v498 = vpop.f32.mrb[0].mxu0
    %v499 = vadd.f32 0.0, %v498
    %500 = vmatprep.mubr.bf16.mxu0 0
    %501 = vmatmul.mubr.bf16.gmra.mrb[0].mxu0 %v239
    %v502 = vpop.f32.mrb[0].mxu0
    %v503 = vadd.f32 0.0, %v502
    %v504 = vpop.f32.mrb[0].mxu0
    %v505 = vadd.f32 0.0, %v504
    %v506 = vpop.f32.mrb[0].mxu0
    %v507 = vadd.f32 0.0, %v506
    %v508 = vpop.f32.mrb[0].mxu0
    %v509 = vadd.f32 0.0, %v508
    %510 = vdwg.mxu0
    %511 = vmatprep.subr.bf16.mxu0 %v371
    %512 = vmatpush1.bf16.msra.mxu0 %v370
    %513 = vmatprep.subr.bf16.mxu0 %v376
    %514 = vmatpush1.bf16.msra.mxu0 %v375
    %515 = vmatprep.subr.bf16.mxu0 %v381
    %516 = vmatpush1.bf16.msra.mxu0 %v380
    %517 = vmatprep.subr.bf16.mxu0 %v386
    %518 = vmatpush1.bf16.msra.mxu0 %v385
    %519 = vmatprep.subr.bf16.mxu0 %v391
    %520 = vmatpush1.bf16.msra.mxu0 %v390
    %521 = vmatprep.subr.bf16.mxu0 %v396
    %522 = vmatpush1.bf16.msra.mxu0 %v395
    %523 = vmatprep.subr.bf16.mxu0 %v401
    %524 = vmatpush1.bf16.msra.mxu0 %v400
    %525 = vmatprep.subr.bf16.mxu0 %v406
    %526 = vmatpush1.bf16.msra.mxu0 %v405
    %527 = vmatprep.subr.bf16.mxu0 0
    %528 = vmatpush1.bf16.msra.mxu0 0
    %529 = vmatprep.subr.bf16.mxu0 0
    %530 = vmatpush1.bf16.msra.mxu0 0
    %531 = vmatprep.subr.bf16.mxu0 0
    %532 = vmatpush1.bf16.msra.mxu0 0
    %533 = vmatprep.subr.bf16.mxu0 0
    %534 = vmatpush1.bf16.msra.mxu0 0
    %535 = vmatprep.subr.bf16.mxu0 0
    %536 = vmatpush1.bf16.msra.mxu0 0
    %537 = vmatprep.subr.bf16.mxu0 0
    %538 = vmatpush1.bf16.msra.mxu0 0
    %539 = vmatprep.subr.bf16.mxu0 0
    %540 = vmatpush1.bf16.msra.mxu0 0
    %541 = vmatprep.subr.bf16.mxu0 0
    %542 = vmatpush1.bf16.msra.mxu0 0
    %543 = vmatprep.mubr.bf16.mxu0 0
    %544 = vmatmul.mubr.bf16.gmra.mrb[0].mxu0 %v237
    %v545 = vpop.f32.mrb[0].mxu0
    %v546 = vadd.f32 0.0, %v545
    %v547 = vpop.f32.mrb[0].mxu0
    %v548 = vadd.f32 0.0, %v547
    %v549 = vpop.f32.mrb[0].mxu0
    %v550 = vadd.f32 0.0, %v549
    %v551 = vpop.f32.mrb[0].mxu0
    %v552 = vadd.f32 0.0, %v551
    %553 = vmatprep.mubr.bf16.mxu0 0
    %554 = vmatmul.mubr.bf16.gmra.mrb[0].mxu0 %v238
    %v555 = vpop.f32.mrb[0].mxu0
    %v556 = vadd.f32 0.0, %v555
    %v557 = vpop.f32.mrb[0].mxu0
    %v558 = vadd.f32 0.0, %v557
    %v559 = vpop.f32.mrb[0].mxu0
    %v560 = vadd.f32 0.0, %v559
    %v561 = vpop.f32.mrb[0].mxu0
    %v562 = vadd.f32 0.0, %v561
    %563 = vmatprep.mubr.bf16.mxu0 0
    %564 = vmatmul.mubr.bf16.gmra.mrb[0].mxu0 %v239
    %v565 = vpop.f32.mrb[0].mxu0
    %v566 = vadd.f32 0.0, %v565
    %v567 = vpop.f32.mrb[0].mxu0
    %v568 = vadd.f32 0.0, %v567
    %v569 = vpop.f32.mrb[0].mxu0
    %v570 = vadd.f32 0.0, %v569
    %v571 = vpop.f32.mrb[0].mxu0
    %v572 = vadd.f32 0.0, %v571
    %573 = vdwg.mxu0
    %574 = vmatprep.subr.bf16.mxu0 0
    %575 = vmatpush1.bf16.msra.mxu0 %v372
    %576 = vmatprep.subr.bf16.mxu0 0
    %577 = vmatpush1.bf16.msra.mxu0 %v377
    %578 = vmatprep.subr.bf16.mxu0 0
    %579 = vmatpush1.bf16.msra.mxu0 %v382
    %580 = vmatprep.subr.bf16.mxu0 0
    %581 = vmatpush1.bf16.msra.mxu0 %v387
    %582 = vmatprep.subr.bf16.mxu0 0
    %583 = vmatpush1.bf16.msra.mxu0 %v392
    %584 = vmatprep.subr.bf16.mxu0 0
    %585 = vmatpush1.bf16.msra.mxu0 %v397
    %586 = vmatprep.subr.bf16.mxu0 0
    %587 = vmatpush1.bf16.msra.mxu0 %v402
    %588 = vmatprep.subr.bf16.mxu0 0
    %589 = vmatpush1.bf16.msra.mxu0 %v407
    %590 = vmatprep.subr.bf16.mxu0 0
    %591 = vmatpush1.bf16.msra.mxu0 0
    %592 = vmatprep.subr.bf16.mxu0 0
    %593 = vmatpush1.bf16.msra.mxu0 0
    %594 = vmatprep.subr.bf16.mxu0 0
    %595 = vmatpush1.bf16.msra.mxu0 0
    %596 = vmatprep.subr.bf16.mxu0 0
    %597 = vmatpush1.bf16.msra.mxu0 0
    %598 = vmatprep.subr.bf16.mxu0 0
    %599 = vmatpush1.bf16.msra.mxu0 0
    %600 = vmatprep.subr.bf16.mxu0 0
    %601 = vmatpush1.bf16.msra.mxu0 0
    %602 = vmatprep.subr.bf16.mxu0 0
    %603 = vmatpush1.bf16.msra.mxu0 0
    %604 = vmatprep.subr.bf16.mxu0 0
    %605 = vmatpush1.bf16.msra.mxu0 0
    %606 = vmatprep.mubr.bf16.mxu0 0
    %607 = vmatmul.mubr.bf16.gmra.mrb[0].mxu0 %v237
    %v608 = vpop.f32.mrb[0].mxu0
    %v609 = vadd.f32 0.0, %v608
    %v610 = vpop.f32.mrb[0].mxu0
    %v611 = vpop.f32.mrb[0].mxu0
    %v612 = vadd.f32 0.0, %v611
    %v613 = vpop.f32.mrb[0].mxu0
    %614 = vmatprep.mubr.bf16.mxu0 0
    %615 = vmatmul.mubr.bf16.gmra.mrb[0].mxu0 %v238
    %v616 = vpop.f32.mrb[0].mxu0
    %v617 = vadd.f32 0.0, %v616
    %v618 = vpop.f32.mrb[0].mxu0
    %v619 = vpop.f32.mrb[0].mxu0
    %v620 = vadd.f32 0.0, %v619
    %v621 = vpop.f32.mrb[0].mxu0
    %622 = vmatprep.mubr.bf16.mxu0 0
    %623 = vmatmul.mubr.bf16.gmra.mrb[0].mxu0 %v239
    %v624 = vpop.f32.mrb[0].mxu0
    %v625 = vadd.f32 0.0, %v624
    %v626 = vpop.f32.mrb[0].mxu0
    %v627 = vpop.f32.mrb[0].mxu0
    %v628 = vadd.f32 0.0, %v627
    %v629 = vpop.f32.mrb[0].mxu0
    %630 = vdwg.mxu0
    %v631 = vmul.f32 %v483, %v115
    %v632 = vmul.f32 %v487, %v116
    %v633 = vmul.f32 %v493, %v117
    %v634 = vmul.f32 %v497, %v118
    %v635 = vmul.f32 %v503, %v119
    %v636 = vmul.f32 %v507, %v120
    %v637 = vmul.f32 %v548, %v121
    %v638 = vmul.f32 %v552, %v122
    %v639 = vmul.f32 %v558, %v123
    %v640 = vmul.f32 %v562, %v124
    %v641 = vmul.f32 %v568, %v125
    %v642 = vmul.f32 %v572, %v126
    %v643 = vadd.f32 %v631, %v637
    %v644 = vadd.f32 %v632, %v638
    %v645 = vadd.f32 %v633, %v639
    %v646 = vadd.f32 %v634, %v640
    %v647 = vadd.f32 %v635, %v641
    %v648 = vadd.f32 %v636, %v642
    %v649 = vmul.f32 %v485, %v115
    %v650 = vmul.f32 %v489, %v116
    %v651 = vmul.f32 %v495, %v117
    %v652 = vmul.f32 %v499, %v118
    %v653 = vmul.f32 %v505, %v119
    %v654 = vmul.f32 %v509, %v120
    %v655 = vmul.f32 %v609, %v121
    %v656 = vmul.f32 %v612, %v122
    %v657 = vmul.f32 %v617, %v123
    %v658 = vmul.f32 %v620, %v124
    %v659 = vmul.f32 %v625, %v125
    %v660 = vmul.f32 %v628, %v126
    %v661 = vadd.f32 %v649, %v655
    %v662 = vadd.f32 %v650, %v656
    %v663 = vadd.f32 %v651, %v657
    %v664 = vadd.f32 %v652, %v658
    %v665 = vadd.f32 %v653, %v659
    %v666 = vadd.f32 %v654, %v660
    %v667 = vpack.c.bf16 %v644, %v643
    %v668 = vpack.c.bf16 %v646, %v645
    %v669 = vpack.c.bf16 %v648, %v647
    %v670 = vpack.c.bf16 %v662, %v661
    %v671 = vpack.c.bf16 %v664, %v663
    %v672 = vpack.c.bf16 %v666, %v665
    %v673 = vpack.c.bf16 %v550, %v546
    %v674 = vpack.c.bf16 %v560, %v556
    %v675 = vpack.c.bf16 %v570, %v566
    %vm676 = vcmask 261120
    %v678 = vsel %vm676, %v667, 0
    %v681 = vsel %vm676, %v668, 0
    %v684 = vsel %vm676, %v669, 0
    %v687 = vsel %vm676, %v670, 0
    %v690 = vsel %vm676, %v671, 0
    %v693 = vsel %vm676, %v672, 0
    %695 = vmatprep.subr.bf16.mxu0 0
    %696 = vmatpush1.bf16.xpose.msra.mxu0 %v687
    %697 = vmatprep.subr.bf16.mxu0 0
    %698 = vmatpush1.bf16.xpose.msra.mxu0 %v690
    %699 = vmatprep.subr.bf16.mxu0 0
    %700 = vmatpush1.bf16.xpose.msra.mxu0 %v693
    %701 = vmatprep.subr.bf16.mxu0 0
    %702 = vmatpush1.bf16.xpose.msra.mxu0 0
    %703 = vmatprep.subr.bf16.mxu0 0
    %704 = vmatpush1.bf16.xpose.msra.mxu0 0
    %705 = vmatprep.subr.bf16.mxu0 0
    %706 = vmatpush1.bf16.xpose.msra.mxu0 0
    %707 = vmatprep.subr.bf16.mxu0 0
    %708 = vmatpush1.bf16.xpose.msra.mxu0 0
    %709 = vmatprep.subr.bf16.mxu0 0
    %710 = vmatpush1.bf16.xpose.msra.mxu0 0
    %711 = vmatprep.subr.bf16.mxu0 0
    %712 = vmatpush1.bf16.xpose.msra.mxu0 0
    %713 = vmatprep.subr.bf16.mxu0 0
    %714 = vmatpush1.bf16.xpose.msra.mxu0 0
    %715 = vmatprep.subr.bf16.mxu0 0
    %716 = vmatpush1.bf16.xpose.msra.mxu0 0
    %717 = vmatprep.subr.bf16.mxu0 0
    %718 = vmatpush1.bf16.xpose.msra.mxu0 0
    %719 = vmatprep.subr.bf16.mxu0 0
    %720 = vmatpush1.bf16.xpose.msra.mxu0 0
    %721 = vmatprep.subr.bf16.mxu0 0
    %722 = vmatpush1.bf16.xpose.msra.mxu0 0
    %723 = vmatprep.subr.bf16.mxu0 0
    %724 = vmatpush1.bf16.xpose.msra.mxu0 0
    %725 = vmatprep.subr.bf16.mxu0 0
    %726 = vmatpush1.bf16.xpose.msra.mxu0 0
    %727 = vmatprep.mubr.bf16.mxu0 0
    %728 = vmatmul.mubr.bf16.gmra.mrb[0].mxu0 %v678
    %v729 = vpop.f32.mrb[0].mxu0
    %v730 = vadd.f32 %v127, %v729
    %v731 = vpop.f32.mrb[0].mxu0
    %v732 = vpop.f32.mrb[0].mxu0
    %v733 = vadd.f32 %v128, %v732
    %v734 = vpop.f32.mrb[0].mxu0
    %735 = vmatprep.mubr.bf16.mxu0 0
    %736 = vmatmul.mubr.bf16.gmra.mrb[0].mxu0 %v681
    %v737 = vpop.f32.mrb[0].mxu0
    %v738 = vadd.f32 %v129, %v737
    %v739 = vpop.f32.mrb[0].mxu0
    %v740 = vpop.f32.mrb[0].mxu0
    %v741 = vadd.f32 %v130, %v740
    %v742 = vpop.f32.mrb[0].mxu0
    %743 = vmatprep.mubr.bf16.mxu0 0
    %744 = vmatmul.mubr.bf16.gmra.mrb[0].mxu0 %v684
    %v745 = vpop.f32.mrb[0].mxu0
    %v746 = vadd.f32 %v131, %v745
    %v747 = vpop.f32.mrb[0].mxu0
    %v748 = vpop.f32.mrb[0].mxu0
    %v749 = vadd.f32 %v132, %v748
    %v750 = vpop.f32.mrb[0].mxu0
    %751 = vdwg.mxu0
    %vm752 = vcmask 392192
    %v753 = vsel %vm752, %v730, -inf
    %754 = vmax.xlane.f32.xlu0 %v753
    %v755 = vpop.xlane.xlu0 %754
    %v756 = vsel %vm752, %v733, -inf
    %757 = vmax.xlane.f32.xlu0 %v756
    %v758 = vpop.xlane.xlu0 %757
    %v759 = vsel %vm752, %v738, -inf
    %760 = vmax.xlane.f32.xlu0 %v759
    %v761 = vpop.xlane.xlu0 %760
    %v762 = vsel %vm752, %v741, -inf
    %763 = vmax.xlane.f32.xlu0 %v762
    %v764 = vpop.xlane.xlu0 %763
    %v765 = vsel %vm752, %v746, -inf
    %766 = vmax.xlane.f32.xlu0 %v765
    %v767 = vpop.xlane.xlu0 %766
    %v768 = vsel %vm752, %v749, -inf
    %769 = vmax.xlane.f32.xlu0 %v768
    %v770 = vpop.xlane.xlu0 %769
    %v771 = vsub.f32 %v730, %v755
    %v772 = vsub.f32 %v733, %v758
    %v773 = vsub.f32 %v738, %v761
    %v774 = vsub.f32 %v741, %v764
    %v775 = vsub.f32 %v746, %v767
    %v776 = vsub.f32 %v749, %v770
    %v777 = vmul.f32 %v771, 1.442695
    %v778 = vpow.pop %v777
    %v779 = vmul.f32 %v772, 1.442695
    %v780 = vpow.pop %v779
    %v781 = vmul.f32 %v773, 1.442695
    %v782 = vpow.pop %v781
    %v783 = vmul.f32 %v774, 1.442695
    %v784 = vpow.pop %v783
    %v785 = vmul.f32 %v775, 1.442695
    %v786 = vpow.pop %v785
    %v787 = vmul.f32 %v776, 1.442695
    %v788 = vpow.pop %v787
    %v789 = vsel %vm752, %v778, 0.0
    %790 = vadd.xlane.f32.xlu0 %v789
    %v791 = vpop.xlane.xlu0 %790
    %v792 = vsel %vm752, %v780, 0.0
    %793 = vadd.xlane.f32.xlu0 %v792
    %v794 = vpop.xlane.xlu0 %793
    %v795 = vsel %vm752, %v782, 0.0
    %796 = vadd.xlane.f32.xlu0 %v795
    %v797 = vpop.xlane.xlu0 %796
    %v798 = vsel %vm752, %v784, 0.0
    %799 = vadd.xlane.f32.xlu0 %v798
    %v800 = vpop.xlane.xlu0 %799
    %v801 = vsel %vm752, %v786, 0.0
    %802 = vadd.xlane.f32.xlu0 %v801
    %v803 = vpop.xlane.xlu0 %802
    %v804 = vsel %vm752, %v788, 0.0
    %805 = vadd.xlane.f32.xlu0 %v804
    %v806 = vpop.xlane.xlu0 %805
    %v807 = vrcp.pop %v791
    %v808 = vrcp.pop %v794
    %v809 = vrcp.pop %v797
    %v810 = vrcp.pop %v800
    %v811 = vrcp.pop %v803
    %v812 = vrcp.pop %v806
    %v813 = vmul.f32 %v778, %v807
    %v814 = vmul.f32 %v780, %v808
    %v815 = vmul.f32 %v782, %v809
    %v816 = vmul.f32 %v784, %v810
    %v817 = vmul.f32 %v786, %v811
    %v818 = vmul.f32 %v788, %v812
    %v819 = vpack.c.bf16 %v814, %v813
    %v820 = vpack.c.bf16 %v816, %v815
    %v821 = vpack.c.bf16 %v818, %v817
    %v823 = vsel %vm752, %v819, 0
    %v826 = vsel %vm752, %v820, 0
    %v829 = vsel %vm752, %v821, 0
    %831 = vmatprep.subr.bf16.mxu0 0
    %832 = vmatpush1.bf16.msra.mxu0 %v673
    %833 = vmatprep.subr.bf16.mxu0 0
    %834 = vmatpush1.bf16.msra.mxu0 %v674
    %835 = vmatprep.subr.bf16.mxu0 0
    %836 = vmatpush1.bf16.msra.mxu0 %v675
    %837 = vmatprep.subr.bf16.mxu0 0
    %838 = vmatpush1.bf16.msra.mxu0 0
    %839 = vmatprep.subr.bf16.mxu0 0
    %840 = vmatpush1.bf16.msra.mxu0 0
    %841 = vmatprep.subr.bf16.mxu0 0
    %842 = vmatpush1.bf16.msra.mxu0 0
    %843 = vmatprep.subr.bf16.mxu0 0
    %844 = vmatpush1.bf16.msra.mxu0 0
    %845 = vmatprep.subr.bf16.mxu0 0
    %846 = vmatpush1.bf16.msra.mxu0 0
    %847 = vmatprep.subr.bf16.mxu0 0
    %848 = vmatpush1.bf16.msra.mxu0 0
    %849 = vmatprep.subr.bf16.mxu0 0
    %850 = vmatpush1.bf16.msra.mxu0 0
    %851 = vmatprep.subr.bf16.mxu0 0
    %852 = vmatpush1.bf16.msra.mxu0 0
    %853 = vmatprep.subr.bf16.mxu0 0
    %854 = vmatpush1.bf16.msra.mxu0 0
    %855 = vmatprep.subr.bf16.mxu0 0
    %856 = vmatpush1.bf16.msra.mxu0 0
    %857 = vmatprep.subr.bf16.mxu0 0
    %858 = vmatpush1.bf16.msra.mxu0 0
    %859 = vmatprep.subr.bf16.mxu0 0
    %860 = vmatpush1.bf16.msra.mxu0 0
    %861 = vmatprep.subr.bf16.mxu0 0
    %862 = vmatpush1.bf16.msra.mxu0 0
    %863 = vmatprep.mubr.bf16.mxu0 0
    %864 = vmatmul.mubr.bf16.gmra.mrb[0].mxu0 %v823
    %v865 = vpop.f32.mrb[0].mxu0
    %v866 = vadd.f32 0.0, %v865
    %v867 = vpop.f32.mrb[0].mxu0
    %v868 = vpop.f32.mrb[0].mxu0
    %v869 = vadd.f32 0.0, %v868
    %v870 = vpop.f32.mrb[0].mxu0
    %871 = vmatprep.mubr.bf16.mxu0 0
    %872 = vmatmul.mubr.bf16.gmra.mrb[0].mxu0 %v826
    %v873 = vpop.f32.mrb[0].mxu0
    %v874 = vadd.f32 0.0, %v873
    %v875 = vpop.f32.mrb[0].mxu0
    %v876 = vpop.f32.mrb[0].mxu0
    %v877 = vadd.f32 0.0, %v876
    %v878 = vpop.f32.mrb[0].mxu0
    %879 = vmatprep.mubr.bf16.mxu0 0
    %880 = vmatmul.mubr.bf16.gmra.mrb[0].mxu0 %v829
    %v881 = vpop.f32.mrb[0].mxu0
    %v882 = vadd.f32 0.0, %v881
    %v883 = vpop.f32.mrb[0].mxu0
    %v884 = vpop.f32.mrb[0].mxu0
    %v885 = vadd.f32 0.0, %v884
    %v886 = vpop.f32.mrb[0].mxu0
    %887 = vdwg.mxu0
    %v888 = vld [vmem:[#allocation2] sm:$0xf]
    %v889 = vld [vmem:[#allocation2 + $0x4] sm:$0xf]
    %v890 = vld [vmem:[#allocation2 + $0x8] sm:$0xf]
    %v891 = vld [vmem:[#allocation2 + $0xc] sm:$0xf]
    %v892 = vld [vmem:[#allocation2 + $0x10] sm:$0xf]
    %v893 = vld [vmem:[#allocation2 + $0x14] sm:$0xf]
    %v894 = vld [vmem:[#allocation2 + $0x18] sm:$0xf]
    %v895 = vld [vmem:[#allocation2 + $0x1c] sm:$0xf]
    %v896 = vld [vmem:[#allocation2 + $0x20] sm:$0xf]
    %v897 = vld [vmem:[#allocation2 + $0x24] sm:$0xf]
    %v898 = vld [vmem:[#allocation2 + $0x28] sm:$0xf]
    %v899 = vld [vmem:[#allocation2 + $0x2c] sm:$0xf]
    %v900 = vld [vmem:[#allocation2 + $0x30] sm:$0xf]
    %v901 = vld [vmem:[#allocation2 + $0x34] sm:$0xf]
    %v902 = vld [vmem:[#allocation2 + $0x38] sm:$0xf]
    %v903 = vld [vmem:[#allocation2 + $0x3c] sm:$0xf]
    %v904 = vpack.c.bf16 %v869, %v866
    %v905 = vpack.c.bf16 %v877, %v874
    %v906 = vpack.c.bf16 %v885, %v882
    %910 = vrot.lane.b32.xlu0 %v667, 96
    %v911 = vpop.permute.xlu0 %910
    %912 = vrot.lane.b32.xlu0 %v668, 96
    %v913 = vpop.permute.xlu0 %912
    %914 = vrot.lane.b32.xlu0 %v669, 96
    %v915 = vpop.permute.xlu0 %914
    %919 = vrot.lane.b32.xlu0 %v670, 96
    %v920 = vpop.permute.xlu0 %919
    %921 = vrot.lane.b32.xlu0 %v671, 96
    %v922 = vpop.permute.xlu0 %921
    %923 = vrot.lane.b32.xlu0 %v672, 96
    %v924 = vpop.permute.xlu0 %923
    %v926 = vsel %vm676, %v911, 0
    %v929 = vsel %vm676, %v913, 0
    %v932 = vsel %vm676, %v915, 0
    %v935 = vsel %vm676, %v920, 0
    %v938 = vsel %vm676, %v922, 0
    %v941 = vsel %vm676, %v924, 0
    %943 = vmatprep.subr.bf16.mxu0 0
    %944 = vmatpush1.bf16.xpose.msra.mxu0 %v935
    %945 = vmatprep.subr.bf16.mxu0 0
    %946 = vmatpush1.bf16.xpose.msra.mxu0 %v938
    %947 = vmatprep.subr.bf16.mxu0 0
    %948 = vmatpush1.bf16.xpose.msra.mxu0 %v941
    %949 = vmatprep.subr.bf16.mxu0 0
    %950 = vmatpush1.bf16.xpose.msra.mxu0 0
    %951 = vmatprep.subr.bf16.mxu0 0
    %952 = vmatpush1.bf16.xpose.msra.mxu0 0
    %953 = vmatprep.subr.bf16.mxu0 0
    %954 = vmatpush1.bf16.xpose.msra.mxu0 0
    %955 = vmatprep.subr.bf16.mxu0 0
    %956 = vmatpush1.bf16.xpose.msra.mxu0 0
    %957 = vmatprep.subr.bf16.mxu0 0
    %958 = vmatpush1.bf16.xpose.msra.mxu0 0
    %959 = vmatprep.subr.bf16.mxu0 0
    %960 = vmatpush1.bf16.xpose.msra.mxu0 0
    %961 = vmatprep.subr.bf16.mxu0 0
    %962 = vmatpush1.bf16.xpose.msra.mxu0 0
    %963 = vmatprep.subr.bf16.mxu0 0
    %964 = vmatpush1.bf16.xpose.msra.mxu0 0
    %965 = vmatprep.subr.bf16.mxu0 0
    %966 = vmatpush1.bf16.xpose.msra.mxu0 0
    %967 = vmatprep.subr.bf16.mxu0 0
    %968 = vmatpush1.bf16.xpose.msra.mxu0 0
    %969 = vmatprep.subr.bf16.mxu0 0
    %970 = vmatpush1.bf16.xpose.msra.mxu0 0
    %971 = vmatprep.subr.bf16.mxu0 0
    %972 = vmatpush1.bf16.xpose.msra.mxu0 0
    %973 = vmatprep.subr.bf16.mxu0 0
    %974 = vmatpush1.bf16.xpose.msra.mxu0 0
    %975 = vmatprep.mubr.bf16.mxu0 0
    %976 = vmatmul.mubr.bf16.gmra.mrb[0].mxu0 %v926
    %v977 = vpop.f32.mrb[0].mxu0
    %v978 = vadd.f32 %v127, %v977
    %v979 = vpop.f32.mrb[0].mxu0
    %v980 = vpop.f32.mrb[0].mxu0
    %v981 = vadd.f32 %v128, %v980
    %v982 = vpop.f32.mrb[0].mxu0
    %983 = vmatprep.mubr.bf16.mxu0 0
    %984 = vmatmul.mubr.bf16.gmra.mrb[0].mxu0 %v929
    %v985 = vpop.f32.mrb[0].mxu0
    %v986 = vadd.f32 %v129, %v985
    %v987 = vpop.f32.mrb[0].mxu0
    %v988 = vpop.f32.mrb[0].mxu0
    %v989 = vadd.f32 %v130, %v988
    %v990 = vpop.f32.mrb[0].mxu0
    %991 = vmatprep.mubr.bf16.mxu0 0
    %992 = vmatmul.mubr.bf16.gmra.mrb[0].mxu0 %v932
    %v993 = vpop.f32.mrb[0].mxu0
    %v994 = vadd.f32 %v131, %v993
    %v995 = vpop.f32.mrb[0].mxu0
    %v996 = vpop.f32.mrb[0].mxu0
    %v997 = vadd.f32 %v132, %v996
    %v998 = vpop.f32.mrb[0].mxu0
    %999 = vdwg.mxu0
    %v1000 = vsel %vm752, %v978, -inf
    %1001 = vmax.xlane.f32.xlu0 %v1000
    %v1002 = vpop.xlane.xlu0 %1001
    %v1003 = vsel %vm752, %v981, -inf
    %1004 = vmax.xlane.f32.xlu0 %v1003
    %v1005 = vpop.xlane.xlu0 %1004
    %v1006 = vsel %vm752, %v986, -inf
    %1007 = vmax.xlane.f32.xlu0 %v1006
    %v1008 = vpop.xlane.xlu0 %1007
    %v1009 = vsel %vm752, %v989, -inf
    %1010 = vmax.xlane.f32.xlu0 %v1009
    %v1011 = vpop.xlane.xlu0 %1010
    %v1012 = vsel %vm752, %v994, -inf
    %1013 = vmax.xlane.f32.xlu0 %v1012
    %v1014 = vpop.xlane.xlu0 %1013
    %v1015 = vsel %vm752, %v997, -inf
    %1016 = vmax.xlane.f32.xlu0 %v1015
    %v1017 = vpop.xlane.xlu0 %1016
    %v1018 = vsub.f32 %v978, %v1002
    %v1019 = vsub.f32 %v981, %v1005
    %v1020 = vsub.f32 %v986, %v1008
    %v1021 = vsub.f32 %v989, %v1011
    %v1022 = vsub.f32 %v994, %v1014
    %v1023 = vsub.f32 %v997, %v1017
    %v1024 = vmul.f32 %v1018, 1.442695
    %v1025 = vpow.pop %v1024
    %v1026 = vmul.f32 %v1019, 1.442695
    %v1027 = vpow.pop %v1026
    %v1028 = vmul.f32 %v1020, 1.442695
    %v1029 = vpow.pop %v1028
    %v1030 = vmul.f32 %v1021, 1.442695
    %v1031 = vpow.pop %v1030
    %v1032 = vmul.f32 %v1022, 1.442695
    %v1033 = vpow.pop %v1032
    %v1034 = vmul.f32 %v1023, 1.442695
    %v1035 = vpow.pop %v1034
    %v1036 = vsel %vm752, %v1025, 0.0
    %1037 = vadd.xlane.f32.xlu0 %v1036
    %v1038 = vpop.xlane.xlu0 %1037
    %v1039 = vsel %vm752, %v1027, 0.0
    %1040 = vadd.xlane.f32.xlu0 %v1039
    %v1041 = vpop.xlane.xlu0 %1040
    %v1042 = vsel %vm752, %v1029, 0.0
    %1043 = vadd.xlane.f32.xlu0 %v1042
    %v1044 = vpop.xlane.xlu0 %1043
    %v1045 = vsel %vm752, %v1031, 0.0
    %1046 = vadd.xlane.f32.xlu0 %v1045
    %v1047 = vpop.xlane.xlu0 %1046
    %v1048 = vsel %vm752, %v1033, 0.0
    %1049 = vadd.xlane.f32.xlu0 %v1048
    %v1050 = vpop.xlane.xlu0 %1049
    %v1051 = vsel %vm752, %v1035, 0.0
    %1052 = vadd.xlane.f32.xlu0 %v1051
    %v1053 = vpop.xlane.xlu0 %1052
    %v1054 = vrcp.pop %v1038
    %v1055 = vrcp.pop %v1041
    %v1056 = vrcp.pop %v1044
    %v1057 = vrcp.pop %v1047
    %v1058 = vrcp.pop %v1050
    %v1059 = vrcp.pop %v1053
    %v1060 = vmul.f32 %v1025, %v1054
    %v1061 = vmul.f32 %v1027, %v1055
    %v1062 = vmul.f32 %v1029, %v1056
    %v1063 = vmul.f32 %v1031, %v1057
    %v1064 = vmul.f32 %v1033, %v1058
    %v1065 = vmul.f32 %v1035, %v1059
    %v1066 = vpack.c.bf16 %v1061, %v1060
    %v1067 = vpack.c.bf16 %v1063, %v1062
    %v1068 = vpack.c.bf16 %v1065, %v1064
    %1072 = vrot.lane.b32.xlu0 %v673, 96
    %v1073 = vpop.permute.xlu0 %1072
    %1074 = vrot.lane.b32.xlu0 %v674, 96
    %v1075 = vpop.permute.xlu0 %1074
    %1076 = vrot.lane.b32.xlu0 %v675, 96
    %v1077 = vpop.permute.xlu0 %1076
    %v1082 = vsel %vm752, %v1066, 0
    %v1085 = vsel %vm752, %v1067, 0
    %v1088 = vsel %vm752, %v1068, 0
    %1090 = vmatprep.subr.bf16.mxu0 0
    %1091 = vmatpush1.bf16.msra.mxu0 %v1073
    %1092 = vmatprep.subr.bf16.mxu0 0
    %1093 = vmatpush1.bf16.msra.mxu0 %v1075
    %1094 = vmatprep.subr.bf16.mxu0 0
    %1095 = vmatpush1.bf16.msra.mxu0 %v1077
    %1096 = vmatprep.subr.bf16.mxu0 0
    %1097 = vmatpush1.bf16.msra.mxu0 0
    %1098 = vmatprep.subr.bf16.mxu0 0
    %1099 = vmatpush1.bf16.msra.mxu0 0
    %1100 = vmatprep.subr.bf16.mxu0 0
    %1101 = vmatpush1.bf16.msra.mxu0 0
    %1102 = vmatprep.subr.bf16.mxu0 0
    %1103 = vmatpush1.bf16.msra.mxu0 0
    %1104 = vmatprep.subr.bf16.mxu0 0
    %1105 = vmatpush1.bf16.msra.mxu0 0
    %1106 = vmatprep.subr.bf16.mxu0 0
    %1107 = vmatpush1.bf16.msra.mxu0 0
    %1108 = vmatprep.subr.bf16.mxu0 0
    %1109 = vmatpush1.bf16.msra.mxu0 0
    %1110 = vmatprep.subr.bf16.mxu0 0
    %1111 = vmatpush1.bf16.msra.mxu0 0
    %1112 = vmatprep.subr.bf16.mxu0 0
    %1113 = vmatpush1.bf16.msra.mxu0 0
    %1114 = vmatprep.subr.bf16.mxu0 0
    %1115 = vmatpush1.bf16.msra.mxu0 0
    %1116 = vmatprep.subr.bf16.mxu0 0
    %1117 = vmatpush1.bf16.msra.mxu0 0
    %1118 = vmatprep.subr.bf16.mxu0 0
    %1119 = vmatpush1.bf16.msra.mxu0 0
    %1120 = vmatprep.subr.bf16.mxu0 0
    %1121 = vmatpush1.bf16.msra.mxu0 0
    %1122 = vmatprep.mubr.bf16.mxu0 0
    %1123 = vmatmul.mubr.bf16.gmra.mrb[0].mxu0 %v1082
    %v1124 = vpop.f32.mrb[0].mxu0
    %v1125 = vadd.f32 0.0, %v1124
    %v1126 = vpop.f32.mrb[0].mxu0
    %v1127 = vpop.f32.mrb[0].mxu0
    %v1128 = vadd.f32 0.0, %v1127
    %v1129 = vpop.f32.mrb[0].mxu0
    %1130 = vmatprep.mubr.bf16.mxu0 0
    %1131 = vmatmul.mubr.bf16.gmra.mrb[0].mxu0 %v1085
    %v1132 = vpop.f32.mrb[0].mxu0
    %v1133 = vadd.f32 0.0, %v1132
    %v1134 = vpop.f32.mrb[0].mxu0
    %v1135 = vpop.f32.mrb[0].mxu0
    %v1136 = vadd.f32 0.0, %v1135
    %v1137 = vpop.f32.mrb[0].mxu0
    %1138 = vmatprep.mubr.bf16.mxu0 0
    %1139 = vmatmul.mubr.bf16.gmra.mrb[0].mxu0 %v1088
    %v1140 = vpop.f32.mrb[0].mxu0
    %v1141 = vadd.f32 0.0, %v1140
    %v1142 = vpop.f32.mrb[0].mxu0
    %v1143 = vpop.f32.mrb[0].mxu0
    %v1144 = vadd.f32 0.0, %v1143
    %v1145 = vpop.f32.mrb[0].mxu0
    %1146 = vdwg.mxu0
    %v1147 = vpack.c.bf16 %v1128, %v1125
    %v1148 = vpack.c.bf16 %v1136, %v1133
    %v1149 = vpack.c.bf16 %v1144, %v1141
    %v1154 = vunpack.c.l.b16 %v892
    %v1155 = vunpack.c.l.b16 %v893
    %v1156 = vunpack.c.l.b16 %v894
    %v1157 = vunpack.c.l.b16 %v895
    %v1158 = vpack.c.b16 %v1155, %v1154
    %v1159 = vpack.c.b16 %v1157, %v1156
    %v1163 = vsel %vm676, %v1147, 0
    %v1166 = vsel %vm676, %v1148, 0
    %v1169 = vsel %vm676, %v1149, 0
    %1171 = vmatprep.subr.bf16.mxu0 0
    %1172 = vmatpush1.bf16.msra.mxu0 %v1158
    %1173 = vmatprep.subr.bf16.mxu0 0
    %1174 = vmatpush1.bf16.msra.mxu0 %v1159
    %1175 = vmatprep.subr.bf16.mxu0 0
    %1176 = vmatpush1.bf16.msra.mxu0 0
    %1177 = vmatprep.subr.bf16.mxu0 0
    %1178 = vmatpush1.bf16.msra.mxu0 0
    %1179 = vmatprep.subr.bf16.mxu0 0
    %1180 = vmatpush1.bf16.msra.mxu0 0
    %1181 = vmatprep.subr.bf16.mxu0 0
    %1182 = vmatpush1.bf16.msra.mxu0 0
    %1183 = vmatprep.subr.bf16.mxu0 0
    %1184 = vmatpush1.bf16.msra.mxu0 0
    %1185 = vmatprep.subr.bf16.mxu0 0
    %1186 = vmatpush1.bf16.msra.mxu0 0
    %1187 = vmatprep.subr.bf16.mxu0 0
    %1188 = vmatpush1.bf16.msra.mxu0 0
    %1189 = vmatprep.subr.bf16.mxu0 0
    %1190 = vmatpush1.bf16.msra.mxu0 0
    %1191 = vmatprep.subr.bf16.mxu0 0
    %1192 = vmatpush1.bf16.msra.mxu0 0
    %1193 = vmatprep.subr.bf16.mxu0 0
    %1194 = vmatpush1.bf16.msra.mxu0 0
    %1195 = vmatprep.subr.bf16.mxu0 0
    %1196 = vmatpush1.bf16.msra.mxu0 0
    %1197 = vmatprep.subr.bf16.mxu0 0
    %1198 = vmatpush1.bf16.msra.mxu0 0
    %1199 = vmatprep.subr.bf16.mxu0 0
    %1200 = vmatpush1.bf16.msra.mxu0 0
    %1201 = vmatprep.subr.bf16.mxu0 0
    %1202 = vmatpush1.bf16.msra.mxu0 0
    %1203 = vmatprep.mubr.bf16.mxu0 0
    %1204 = vmatmul.mubr.bf16.gmra.mrb[0].mxu0 %v1163
    %v1205 = vpop.f32.mrb[0].mxu0
    %v1206 = vadd.f32 0.0, %v1205
    %v1207 = vpop.f32.mrb[0].mxu0
    %v1208 = vpop.f32.mrb[0].mxu0
    %v1209 = vadd.f32 0.0, %v1208
    %v1210 = vpop.f32.mrb[0].mxu0
    %1211 = vmatprep.mubr.bf16.mxu0 0
    %1212 = vmatmul.mubr.bf16.gmra.mrb[0].mxu0 %v1166
    %v1213 = vpop.f32.mrb[0].mxu0
    %v1214 = vadd.f32 0.0, %v1213
    %v1215 = vpop.f32.mrb[0].mxu0
    %v1216 = vpop.f32.mrb[0].mxu0
    %v1217 = vadd.f32 0.0, %v1216
    %v1218 = vpop.f32.mrb[0].mxu0
    %1219 = vmatprep.mubr.bf16.mxu0 0
    %1220 = vmatmul.mubr.bf16.gmra.mrb[0].mxu0 %v1169
    %v1221 = vpop.f32.mrb[0].mxu0
    %v1222 = vadd.f32 0.0, %v1221
    %v1223 = vpop.f32.mrb[0].mxu0
    %v1224 = vpop.f32.mrb[0].mxu0
    %v1225 = vadd.f32 0.0, %v1224
    %v1226 = vpop.f32.mrb[0].mxu0
    %1227 = vdwg.mxu0
    %v1232 = vunpack.c.l.b16 %v888
    %v1233 = vunpack.c.l.b16 %v889
    %v1234 = vunpack.c.l.b16 %v890
    %v1235 = vunpack.c.l.b16 %v891
    %v1236 = vpack.c.b16 %v1233, %v1232
    %v1237 = vpack.c.b16 %v1235, %v1234
    %v1241 = vsel %vm676, %v904, 0
    %v1244 = vsel %vm676, %v905, 0
    %v1247 = vsel %vm676, %v906, 0
    %1249 = vmatprep.subr.bf16.mxu0 0
    %1250 = vmatpush1.bf16.msra.mxu0 %v1236
    %1251 = vmatprep.subr.bf16.mxu0 0
    %1252 = vmatpush1.bf16.msra.mxu0 %v1237
    %1253 = vmatprep.subr.bf16.mxu0 0
    %1254 = vmatpush1.bf16.msra.mxu0 0
    %1255 = vmatprep.subr.bf16.mxu0 0
    %1256 = vmatpush1.bf16.msra.mxu0 0
    %1257 = vmatprep.subr.bf16.mxu0 0
    %1258 = vmatpush1.bf16.msra.mxu0 0
    %1259 = vmatprep.subr.bf16.mxu0 0
    %1260 = vmatpush1.bf16.msra.mxu0 0
    %1261 = vmatprep.subr.bf16.mxu0 0
    %1262 = vmatpush1.bf16.msra.mxu0 0
    %1263 = vmatprep.subr.bf16.mxu0 0
    %1264 = vmatpush1.bf16.msra.mxu0 0
    %1265 = vmatprep.subr.bf16.mxu0 0
    %1266 = vmatpush1.bf16.msra.mxu0 0
    %1267 = vmatprep.subr.bf16.mxu0 0
    %1268 = vmatpush1.bf16.msra.mxu0 0
    %1269 = vmatprep.subr.bf16.mxu0 0
    %1270 = vmatpush1.bf16.msra.mxu0 0
    %1271 = vmatprep.subr.bf16.mxu0 0
    %1272 = vmatpush1.bf16.msra.mxu0 0
    %1273 = vmatprep.subr.bf16.mxu0 0
    %1274 = vmatpush1.bf16.msra.mxu0 0
    %1275 = vmatprep.subr.bf16.mxu0 0
    %1276 = vmatpush1.bf16.msra.mxu0 0
    %1277 = vmatprep.subr.bf16.mxu0 0
    %1278 = vmatpush1.bf16.msra.mxu0 0
    %1279 = vmatprep.subr.bf16.mxu0 0
    %1280 = vmatpush1.bf16.msra.mxu0 0
    %1281 = vmatprep.mubr.bf16.mxu0 0
    %1282 = vmatmul.mubr.bf16.gmra.mrb[0].mxu0 %v1241
    %v1283 = vpop.f32.mrb[0].mxu0
    %v1284 = vadd.f32 %v1206, %v1283
    %v1285 = vpop.f32.mrb[0].mxu0
    %v1286 = vpop.f32.mrb[0].mxu0
    %v1287 = vadd.f32 %v1209, %v1286
    %v1288 = vpop.f32.mrb[0].mxu0
    %1289 = vmatprep.mubr.bf16.mxu0 0
    %1290 = vmatmul.mubr.bf16.gmra.mrb[0].mxu0 %v1244
    %v1291 = vpop.f32.mrb[0].mxu0
    %v1292 = vadd.f32 %v1214, %v1291
    %v1293 = vpop.f32.mrb[0].mxu0
    %v1294 = vpop.f32.mrb[0].mxu0
    %v1295 = vadd.f32 %v1217, %v1294
    %v1296 = vpop.f32.mrb[0].mxu0
    %1297 = vmatprep.mubr.bf16.mxu0 0
    %1298 = vmatmul.mubr.bf16.gmra.mrb[0].mxu0 %v1247
    %v1299 = vpop.f32.mrb[0].mxu0
    %v1300 = vadd.f32 %v1222, %v1299
    %v1301 = vpop.f32.mrb[0].mxu0
    %v1302 = vpop.f32.mrb[0].mxu0
    %v1303 = vadd.f32 %v1225, %v1302
    %v1304 = vpop.f32.mrb[0].mxu0
    %1305 = vdwg.mxu0
    %1306 = vrot.lane.b32.xlu0 %v667, 64
    %v1307 = vpop.permute.xlu0 %1306
    %1308 = vrot.lane.b32.xlu0 %v668, 64
    %v1309 = vpop.permute.xlu0 %1308
    %1310 = vrot.lane.b32.xlu0 %v669, 64
    %v1311 = vpop.permute.xlu0 %1310
    %1312 = vrot.lane.b32.xlu0 %v670, 64
    %v1313 = vpop.permute.xlu0 %1312
    %1314 = vrot.lane.b32.xlu0 %v671, 64
    %v1315 = vpop.permute.xlu0 %1314
    %1316 = vrot.lane.b32.xlu0 %v672, 64
    %v1317 = vpop.permute.xlu0 %1316
    %v1319 = vsel %vm676, %v1307, 0
    %v1322 = vsel %vm676, %v1309, 0
    %v1325 = vsel %vm676, %v1311, 0
    %v1328 = vsel %vm676, %v1313, 0
    %v1331 = vsel %vm676, %v1315, 0
    %v1334 = vsel %vm676, %v1317, 0
    %1336 = vmatprep.subr.bf16.mxu0 0
    %1337 = vmatpush1.bf16.xpose.msra.mxu0 %v1328
    %1338 = vmatprep.subr.bf16.mxu0 0
    %1339 = vmatpush1.bf16.xpose.msra.mxu0 %v1331
    %1340 = vmatprep.subr.bf16.mxu0 0
    %1341 = vmatpush1.bf16.xpose.msra.mxu0 %v1334
    %1342 = vmatprep.subr.bf16.mxu0 0
    %1343 = vmatpush1.bf16.xpose.msra.mxu0 0
    %1344 = vmatprep.subr.bf16.mxu0 0
    %1345 = vmatpush1.bf16.xpose.msra.mxu0 0
    %1346 = vmatprep.subr.bf16.mxu0 0
    %1347 = vmatpush1.bf16.xpose.msra.mxu0 0
    %1348 = vmatprep.subr.bf16.mxu0 0
    %1349 = vmatpush1.bf16.xpose.msra.mxu0 0
    %1350 = vmatprep.subr.bf16.mxu0 0
    %1351 = vmatpush1.bf16.xpose.msra.mxu0 0
    %1352 = vmatprep.subr.bf16.mxu0 0
    %1353 = vmatpush1.bf16.xpose.msra.mxu0 0
    %1354 = vmatprep.subr.bf16.mxu0 0
    %1355 = vmatpush1.bf16.xpose.msra.mxu0 0
    %1356 = vmatprep.subr.bf16.mxu0 0
    %1357 = vmatpush1.bf16.xpose.msra.mxu0 0
    %1358 = vmatprep.subr.bf16.mxu0 0
    %1359 = vmatpush1.bf16.xpose.msra.mxu0 0
    %1360 = vmatprep.subr.bf16.mxu0 0
    %1361 = vmatpush1.bf16.xpose.msra.mxu0 0
    %1362 = vmatprep.subr.bf16.mxu0 0
    %1363 = vmatpush1.bf16.xpose.msra.mxu0 0
    %1364 = vmatprep.subr.bf16.mxu0 0
    %1365 = vmatpush1.bf16.xpose.msra.mxu0 0
    %1366 = vmatprep.subr.bf16.mxu0 0
    %1367 = vmatpush1.bf16.xpose.msra.mxu0 0
    %1368 = vmatprep.mubr.bf16.mxu0 0
    %1369 = vmatmul.mubr.bf16.gmra.mrb[0].mxu0 %v1319
    %v1370 = vpop.f32.mrb[0].mxu0
    %v1371 = vadd.f32 %v127, %v1370
    %v1372 = vpop.f32.mrb[0].mxu0
    %v1373 = vpop.f32.mrb[0].mxu0
    %v1374 = vadd.f32 %v128, %v1373
    %v1375 = vpop.f32.mrb[0].mxu0
    %1376 = vmatprep.mubr.bf16.mxu0 0
    %1377 = vmatmul.mubr.bf16.gmra.mrb[0].mxu0 %v1322
    %v1378 = vpop.f32.mrb[0].mxu0
    %v1379 = vadd.f32 %v129, %v1378
    %v1380 = vpop.f32.mrb[0].mxu0
    %v1381 = vpop.f32.mrb[0].mxu0
    %v1382 = vadd.f32 %v130, %v1381
    %v1383 = vpop.f32.mrb[0].mxu0
    %1384 = vmatprep.mubr.bf16.mxu0 0
    %1385 = vmatmul.mubr.bf16.gmra.mrb[0].mxu0 %v1325
    %v1386 = vpop.f32.mrb[0].mxu0
    %v1387 = vadd.f32 %v131, %v1386
    %v1388 = vpop.f32.mrb[0].mxu0
    %v1389 = vpop.f32.mrb[0].mxu0
    %v1390 = vadd.f32 %v132, %v1389
    %v1391 = vpop.f32.mrb[0].mxu0
    %1392 = vdwg.mxu0
    %v1393 = vsel %vm752, %v1371, -inf
    %1394 = vmax.xlane.f32.xlu0 %v1393
    %v1395 = vpop.xlane.xlu0 %1394
    %v1396 = vsel %vm752, %v1374, -inf
    %1397 = vmax.xlane.f32.xlu0 %v1396
    %v1398 = vpop.xlane.xlu0 %1397
    %v1399 = vsel %vm752, %v1379, -inf
    %1400 = vmax.xlane.f32.xlu0 %v1399
    %v1401 = vpop.xlane.xlu0 %1400
    %v1402 = vsel %vm752, %v1382, -inf
    %1403 = vmax.xlane.f32.xlu0 %v1402
    %v1404 = vpop.xlane.xlu0 %1403
    %v1405 = vsel %vm752, %v1387, -inf
    %1406 = vmax.xlane.f32.xlu0 %v1405
    %v1407 = vpop.xlane.xlu0 %1406
    %v1408 = vsel %vm752, %v1390, -inf
    %1409 = vmax.xlane.f32.xlu0 %v1408
    %v1410 = vpop.xlane.xlu0 %1409
    %v1411 = vsub.f32 %v1371, %v1395
    %v1412 = vsub.f32 %v1374, %v1398
    %v1413 = vsub.f32 %v1379, %v1401
    %v1414 = vsub.f32 %v1382, %v1404
    %v1415 = vsub.f32 %v1387, %v1407
    %v1416 = vsub.f32 %v1390, %v1410
    %v1417 = vmul.f32 %v1411, 1.442695
    %v1418 = vpow.pop %v1417
    %v1419 = vmul.f32 %v1412, 1.442695
    %v1420 = vpow.pop %v1419
    %v1421 = vmul.f32 %v1413, 1.442695
    %v1422 = vpow.pop %v1421
    %v1423 = vmul.f32 %v1414, 1.442695
    %v1424 = vpow.pop %v1423
    %v1425 = vmul.f32 %v1415, 1.442695
    %v1426 = vpow.pop %v1425
    %v1427 = vmul.f32 %v1416, 1.442695
    %v1428 = vpow.pop %v1427
    %v1429 = vsel %vm752, %v1418, 0.0
    %1430 = vadd.xlane.f32.xlu0 %v1429
    %v1431 = vpop.xlane.xlu0 %1430
    %v1432 = vsel %vm752, %v1420, 0.0
    %1433 = vadd.xlane.f32.xlu0 %v1432
    %v1434 = vpop.xlane.xlu0 %1433
    %v1435 = vsel %vm752, %v1422, 0.0
    %1436 = vadd.xlane.f32.xlu0 %v1435
    %v1437 = vpop.xlane.xlu0 %1436
    %v1438 = vsel %vm752, %v1424, 0.0
    %1439 = vadd.xlane.f32.xlu0 %v1438
    %v1440 = vpop.xlane.xlu0 %1439
    %v1441 = vsel %vm752, %v1426, 0.0
    %1442 = vadd.xlane.f32.xlu0 %v1441
    %v1443 = vpop.xlane.xlu0 %1442
    %v1444 = vsel %vm752, %v1428, 0.0
    %1445 = vadd.xlane.f32.xlu0 %v1444
    %v1446 = vpop.xlane.xlu0 %1445
    %v1447 = vrcp.pop %v1431
    %v1448 = vrcp.pop %v1434
    %v1449 = vrcp.pop %v1437
    %v1450 = vrcp.pop %v1440
    %v1451 = vrcp.pop %v1443
    %v1452 = vrcp.pop %v1446
    %v1453 = vmul.f32 %v1418, %v1447
    %v1454 = vmul.f32 %v1420, %v1448
    %v1455 = vmul.f32 %v1422, %v1449
    %v1456 = vmul.f32 %v1424, %v1450
    %v1457 = vmul.f32 %v1426, %v1451
    %v1458 = vmul.f32 %v1428, %v1452
    %v1459 = vpack.c.bf16 %v1454, %v1453
    %v1460 = vpack.c.bf16 %v1456, %v1455
    %v1461 = vpack.c.bf16 %v1458, %v1457
    %1462 = vrot.lane.b32.xlu0 %v673, 64
    %v1463 = vpop.permute.xlu0 %1462
    %1464 = vrot.lane.b32.xlu0 %v674, 64
    %v1465 = vpop.permute.xlu0 %1464
    %1466 = vrot.lane.b32.xlu0 %v675, 64
    %v1467 = vpop.permute.xlu0 %1466
    %v1472 = vsel %vm752, %v1459, 0
    %v1475 = vsel %vm752, %v1460, 0
    %v1478 = vsel %vm752, %v1461, 0
    %1480 = vmatprep.subr.bf16.mxu0 0
    %1481 = vmatpush1.bf16.msra.mxu0 %v1463
    %1482 = vmatprep.subr.bf16.mxu0 0
    %1483 = vmatpush1.bf16.msra.mxu0 %v1465
    %1484 = vmatprep.subr.bf16.mxu0 0
    %1485 = vmatpush1.bf16.msra.mxu0 %v1467
    %1486 = vmatprep.subr.bf16.mxu0 0
    %1487 = vmatpush1.bf16.msra.mxu0 0
    %1488 = vmatprep.subr.bf16.mxu0 0
    %1489 = vmatpush1.bf16.msra.mxu0 0
    %1490 = vmatprep.subr.bf16.mxu0 0
    %1491 = vmatpush1.bf16.msra.mxu0 0
    %1492 = vmatprep.subr.bf16.mxu0 0
    %1493 = vmatpush1.bf16.msra.mxu0 0
    %1494 = vmatprep.subr.bf16.mxu0 0
    %1495 = vmatpush1.bf16.msra.mxu0 0
    %1496 = vmatprep.subr.bf16.mxu0 0
    %1497 = vmatpush1.bf16.msra.mxu0 0
    %1498 = vmatprep.subr.bf16.mxu0 0
    %1499 = vmatpush1.bf16.msra.mxu0 0
    %1500 = vmatprep.subr.bf16.mxu0 0
    %1501 = vmatpush1.bf16.msra.mxu0 0
    %1502 = vmatprep.subr.bf16.mxu0 0
    %1503 = vmatpush1.bf16.msra.mxu0 0
    %1504 = vmatprep.subr.bf16.mxu0 0
    %1505 = vmatpush1.bf16.msra.mxu0 0
    %1506 = vmatprep.subr.bf16.mxu0 0
    %1507 = vmatpush1.bf16.msra.mxu0 0
    %1508 = vmatprep.subr.bf16.mxu0 0
    %1509 = vmatpush1.bf16.msra.mxu0 0
    %1510 = vmatprep.subr.bf16.mxu0 0
    %1511 = vmatpush1.bf16.msra.mxu0 0
    %1512 = vmatprep.mubr.bf16.mxu0 0
    %1513 = vmatmul.mubr.bf16.gmra.mrb[0].mxu0 %v1472
    %v1514 = vpop.f32.mrb[0].mxu0
    %v1515 = vadd.f32 0.0, %v1514
    %v1516 = vpop.f32.mrb[0].mxu0
    %v1517 = vpop.f32.mrb[0].mxu0
    %v1518 = vadd.f32 0.0, %v1517
    %v1519 = vpop.f32.mrb[0].mxu0
    %1520 = vmatprep.mubr.bf16.mxu0 0
    %1521 = vmatmul.mubr.bf16.gmra.mrb[0].mxu0 %v1475
    %v1522 = vpop.f32.mrb[0].mxu0
    %v1523 = vadd.f32 0.0, %v1522
    %v1524 = vpop.f32.mrb[0].mxu0
    %v1525 = vpop.f32.mrb[0].mxu0
    %v1526 = vadd.f32 0.0, %v1525
    %v1527 = vpop.f32.mrb[0].mxu0
    %1528 = vmatprep.mubr.bf16.mxu0 0
    %1529 = vmatmul.mubr.bf16.gmra.mrb[0].mxu0 %v1478
    %v1530 = vpop.f32.mrb[0].mxu0
    %v1531 = vadd.f32 0.0, %v1530
    %v1532 = vpop.f32.mrb[0].mxu0
    %v1533 = vpop.f32.mrb[0].mxu0
    %v1534 = vadd.f32 0.0, %v1533
    %v1535 = vpop.f32.mrb[0].mxu0
    %1536 = vdwg.mxu0
    %v1537 = vpack.c.bf16 %v1518, %v1515
    %v1538 = vpack.c.bf16 %v1526, %v1523
    %v1539 = vpack.c.bf16 %v1534, %v1531
    %v1544 = vunpack.c.l.b16 %v896
    %v1545 = vunpack.c.l.b16 %v897
    %v1546 = vunpack.c.l.b16 %v898
    %v1547 = vunpack.c.l.b16 %v899
    %v1548 = vpack.c.b16 %v1545, %v1544
    %v1549 = vpack.c.b16 %v1547, %v1546
    %v1553 = vsel %vm676, %v1537, 0
    %v1556 = vsel %vm676, %v1538, 0
    %v1559 = vsel %vm676, %v1539, 0
    %1561 = vmatprep.subr.bf16.mxu0 0
    %1562 = vmatpush1.bf16.msra.mxu0 %v1548
    %1563 = vmatprep.subr.bf16.mxu0 0
    %1564 = vmatpush1.bf16.msra.mxu0 %v1549
    %1565 = vmatprep.subr.bf16.mxu0 0
    %1566 = vmatpush1.bf16.msra.mxu0 0
    %1567 = vmatprep.subr.bf16.mxu0 0
    %1568 = vmatpush1.bf16.msra.mxu0 0
    %1569 = vmatprep.subr.bf16.mxu0 0
    %1570 = vmatpush1.bf16.msra.mxu0 0
    %1571 = vmatprep.subr.bf16.mxu0 0
    %1572 = vmatpush1.bf16.msra.mxu0 0
    %1573 = vmatprep.subr.bf16.mxu0 0
    %1574 = vmatpush1.bf16.msra.mxu0 0
    %1575 = vmatprep.subr.bf16.mxu0 0
    %1576 = vmatpush1.bf16.msra.mxu0 0
    %1577 = vmatprep.subr.bf16.mxu0 0
    %1578 = vmatpush1.bf16.msra.mxu0 0
    %1579 = vmatprep.subr.bf16.mxu0 0
    %1580 = vmatpush1.bf16.msra.mxu0 0
    %1581 = vmatprep.subr.bf16.mxu0 0
    %1582 = vmatpush1.bf16.msra.mxu0 0
    %1583 = vmatprep.subr.bf16.mxu0 0
    %1584 = vmatpush1.bf16.msra.mxu0 0
    %1585 = vmatprep.subr.bf16.mxu0 0
    %1586 = vmatpush1.bf16.msra.mxu0 0
    %1587 = vmatprep.subr.bf16.mxu0 0
    %1588 = vmatpush1.bf16.msra.mxu0 0
    %1589 = vmatprep.subr.bf16.mxu0 0
    %1590 = vmatpush1.bf16.msra.mxu0 0
    %1591 = vmatprep.subr.bf16.mxu0 0
    %1592 = vmatpush1.bf16.msra.mxu0 0
    %1593 = vmatprep.mubr.bf16.mxu0 0
    %1594 = vmatmul.mubr.bf16.gmra.mrb[0].mxu0 %v1553
    %v1595 = vpop.f32.mrb[0].mxu0
    %v1596 = vadd.f32 0.0, %v1595
    %v1597 = vpop.f32.mrb[0].mxu0
    %v1598 = vpop.f32.mrb[0].mxu0
    %v1599 = vadd.f32 0.0, %v1598
    %v1600 = vpop.f32.mrb[0].mxu0
    %1601 = vmatprep.mubr.bf16.mxu0 0
    %1602 = vmatmul.mubr.bf16.gmra.mrb[0].mxu0 %v1556
    %v1603 = vpop.f32.mrb[0].mxu0
    %v1604 = vadd.f32 0.0, %v1603
    %v1605 = vpop.f32.mrb[0].mxu0
    %v1606 = vpop.f32.mrb[0].mxu0
    %v1607 = vadd.f32 0.0, %v1606
    %v1608 = vpop.f32.mrb[0].mxu0
    %1609 = vmatprep.mubr.bf16.mxu0 0
    %1610 = vmatmul.mubr.bf16.gmra.mrb[0].mxu0 %v1559
    %v1611 = vpop.f32.mrb[0].mxu0
    %v1612 = vadd.f32 0.0, %v1611
    %v1613 = vpop.f32.mrb[0].mxu0
    %v1614 = vpop.f32.mrb[0].mxu0
    %v1615 = vadd.f32 0.0, %v1614
    %v1616 = vpop.f32.mrb[0].mxu0
    %1617 = vdwg.mxu0
    %v1618 = vadd.f32 %v1284, %v1596
    %v1619 = vadd.f32 %v1287, %v1599
    %v1620 = vadd.f32 %v1292, %v1604
    %v1621 = vadd.f32 %v1295, %v1607
    %v1622 = vadd.f32 %v1300, %v1612
    %v1623 = vadd.f32 %v1303, %v1615
    %1624 = vrot.lane.b32.xlu0 %v667, 32
    %v1625 = vpop.permute.xlu0 %1624
    %1626 = vrot.lane.b32.xlu0 %v668, 32
    %v1627 = vpop.permute.xlu0 %1626
    %1628 = vrot.lane.b32.xlu0 %v669, 32
    %v1629 = vpop.permute.xlu0 %1628
    %1630 = vrot.lane.b32.xlu0 %v670, 32
    %v1631 = vpop.permute.xlu0 %1630
    %1632 = vrot.lane.b32.xlu0 %v671, 32
    %v1633 = vpop.permute.xlu0 %1632
    %1634 = vrot.lane.b32.xlu0 %v672, 32
    %v1635 = vpop.permute.xlu0 %1634
    %v1637 = vsel %vm676, %v1625, 0
    %v1640 = vsel %vm676, %v1627, 0
    %v1643 = vsel %vm676, %v1629, 0
    %v1646 = vsel %vm676, %v1631, 0
    %v1649 = vsel %vm676, %v1633, 0
    %v1652 = vsel %vm676, %v1635, 0
    %1654 = vmatprep.subr.bf16.mxu0 0
    %1655 = vmatpush1.bf16.xpose.msra.mxu0 %v1646
    %1656 = vmatprep.subr.bf16.mxu0 0
    %1657 = vmatpush1.bf16.xpose.msra.mxu0 %v1649
    %1658 = vmatprep.subr.bf16.mxu0 0
    %1659 = vmatpush1.bf16.xpose.msra.mxu0 %v1652
    %1660 = vmatprep.subr.bf16.mxu0 0
    %1661 = vmatpush1.bf16.xpose.msra.mxu0 0
    %1662 = vmatprep.subr.bf16.mxu0 0
    %1663 = vmatpush1.bf16.xpose.msra.mxu0 0
    %1664 = vmatprep.subr.bf16.mxu0 0
    %1665 = vmatpush1.bf16.xpose.msra.mxu0 0
    %1666 = vmatprep.subr.bf16.mxu0 0
    %1667 = vmatpush1.bf16.xpose.msra.mxu0 0
    %1668 = vmatprep.subr.bf16.mxu0 0
    %1669 = vmatpush1.bf16.xpose.msra.mxu0 0
    %1670 = vmatprep.subr.bf16.mxu0 0
    %1671 = vmatpush1.bf16.xpose.msra.mxu0 0
    %1672 = vmatprep.subr.bf16.mxu0 0
    %1673 = vmatpush1.bf16.xpose.msra.mxu0 0
    %1674 = vmatprep.subr.bf16.mxu0 0
    %1675 = vmatpush1.bf16.xpose.msra.mxu0 0
    %1676 = vmatprep.subr.bf16.mxu0 0
    %1677 = vmatpush1.bf16.xpose.msra.mxu0 0
    %1678 = vmatprep.subr.bf16.mxu0 0
    %1679 = vmatpush1.bf16.xpose.msra.mxu0 0
    %1680 = vmatprep.subr.bf16.mxu0 0
    %1681 = vmatpush1.bf16.xpose.msra.mxu0 0
    %1682 = vmatprep.subr.bf16.mxu0 0
    %1683 = vmatpush1.bf16.xpose.msra.mxu0 0
    %1684 = vmatprep.subr.bf16.mxu0 0
    %1685 = vmatpush1.bf16.xpose.msra.mxu0 0
    %1686 = vmatprep.mubr.bf16.mxu0 0
    %1687 = vmatmul.mubr.bf16.gmra.mrb[0].mxu0 %v1637
    %v1688 = vpop.f32.mrb[0].mxu0
    %v1689 = vadd.f32 %v127, %v1688
    %v1690 = vpop.f32.mrb[0].mxu0
    %v1691 = vpop.f32.mrb[0].mxu0
    %v1692 = vadd.f32 %v128, %v1691
    %v1693 = vpop.f32.mrb[0].mxu0
    %1694 = vmatprep.mubr.bf16.mxu0 0
    %1695 = vmatmul.mubr.bf16.gmra.mrb[0].mxu0 %v1640
    %v1696 = vpop.f32.mrb[0].mxu0
    %v1697 = vadd.f32 %v129, %v1696
    %v1698 = vpop.f32.mrb[0].mxu0
    %v1699 = vpop.f32.mrb[0].mxu0
    %v1700 = vadd.f32 %v130, %v1699
    %v1701 = vpop.f32.mrb[0].mxu0
    %1702 = vmatprep.mubr.bf16.mxu0 0
    %1703 = vmatmul.mubr.bf16.gmra.mrb[0].mxu0 %v1643
    %v1704 = vpop.f32.mrb[0].mxu0
    %v1705 = vadd.f32 %v131, %v1704
    %v1706 = vpop.f32.mrb[0].mxu0
    %v1707 = vpop.f32.mrb[0].mxu0
    %v1708 = vadd.f32 %v132, %v1707
    %v1709 = vpop.f32.mrb[0].mxu0
    %1710 = vdwg.mxu0
    %v1711 = vsel %vm752, %v1689, -inf
    %1712 = vmax.xlane.f32.xlu0 %v1711
    %v1713 = vpop.xlane.xlu0 %1712
    %v1714 = vsel %vm752, %v1692, -inf
    %1715 = vmax.xlane.f32.xlu0 %v1714
    %v1716 = vpop.xlane.xlu0 %1715
    %v1717 = vsel %vm752, %v1697, -inf
    %1718 = vmax.xlane.f32.xlu0 %v1717
    %v1719 = vpop.xlane.xlu0 %1718
    %v1720 = vsel %vm752, %v1700, -inf
    %1721 = vmax.xlane.f32.xlu0 %v1720
    %v1722 = vpop.xlane.xlu0 %1721
    %v1723 = vsel %vm752, %v1705, -inf
    %1724 = vmax.xlane.f32.xlu0 %v1723
    %v1725 = vpop.xlane.xlu0 %1724
    %v1726 = vsel %vm752, %v1708, -inf
    %1727 = vmax.xlane.f32.xlu0 %v1726
    %v1728 = vpop.xlane.xlu0 %1727
    %v1729 = vsub.f32 %v1689, %v1713
    %v1730 = vsub.f32 %v1692, %v1716
    %v1731 = vsub.f32 %v1697, %v1719
    %v1732 = vsub.f32 %v1700, %v1722
    %v1733 = vsub.f32 %v1705, %v1725
    %v1734 = vsub.f32 %v1708, %v1728
    %v1735 = vmul.f32 %v1729, 1.442695
    %v1736 = vpow.pop %v1735
    %v1737 = vmul.f32 %v1730, 1.442695
    %v1738 = vpow.pop %v1737
    %v1739 = vmul.f32 %v1731, 1.442695
    %v1740 = vpow.pop %v1739
    %v1741 = vmul.f32 %v1732, 1.442695
    %v1742 = vpow.pop %v1741
    %v1743 = vmul.f32 %v1733, 1.442695
    %v1744 = vpow.pop %v1743
    %v1745 = vmul.f32 %v1734, 1.442695
    %v1746 = vpow.pop %v1745
    %v1747 = vsel %vm752, %v1736, 0.0
    %1748 = vadd.xlane.f32.xlu0 %v1747
    %v1749 = vpop.xlane.xlu0 %1748
    %v1750 = vsel %vm752, %v1738, 0.0
    %1751 = vadd.xlane.f32.xlu0 %v1750
    %v1752 = vpop.xlane.xlu0 %1751
    %v1753 = vsel %vm752, %v1740, 0.0
    %1754 = vadd.xlane.f32.xlu0 %v1753
    %v1755 = vpop.xlane.xlu0 %1754
    %v1756 = vsel %vm752, %v1742, 0.0
    %1757 = vadd.xlane.f32.xlu0 %v1756
    %v1758 = vpop.xlane.xlu0 %1757
    %v1759 = vsel %vm752, %v1744, 0.0
    %1760 = vadd.xlane.f32.xlu0 %v1759
    %v1761 = vpop.xlane.xlu0 %1760
    %v1762 = vsel %vm752, %v1746, 0.0
    %1763 = vadd.xlane.f32.xlu0 %v1762
    %v1764 = vpop.xlane.xlu0 %1763
    %v1765 = vrcp.pop %v1749
    %v1766 = vrcp.pop %v1752
    %v1767 = vrcp.pop %v1755
    %v1768 = vrcp.pop %v1758
    %v1769 = vrcp.pop %v1761
    %v1770 = vrcp.pop %v1764
    %v1771 = vmul.f32 %v1736, %v1765
    %v1772 = vmul.f32 %v1738, %v1766
    %v1773 = vmul.f32 %v1740, %v1767
    %v1774 = vmul.f32 %v1742, %v1768
    %v1775 = vmul.f32 %v1744, %v1769
    %v1776 = vmul.f32 %v1746, %v1770
    %v1777 = vpack.c.bf16 %v1772, %v1771
    %v1778 = vpack.c.bf16 %v1774, %v1773
    %v1779 = vpack.c.bf16 %v1776, %v1775
    %1780 = vrot.lane.b32.xlu0 %v673, 32
    %v1781 = vpop.permute.xlu0 %1780
    %1782 = vrot.lane.b32.xlu0 %v674, 32
    %v1783 = vpop.permute.xlu0 %1782
    %1784 = vrot.lane.b32.xlu0 %v675, 32
    %v1785 = vpop.permute.xlu0 %1784
    %v1790 = vsel %vm752, %v1777, 0
    %v1793 = vsel %vm752, %v1778, 0
    %v1796 = vsel %vm752, %v1779, 0
    %1798 = vmatprep.subr.bf16.mxu0 0
    %1799 = vmatpush1.bf16.msra.mxu0 %v1781
    %1800 = vmatprep.subr.bf16.mxu0 0
    %1801 = vmatpush1.bf16.msra.mxu0 %v1783
    %1802 = vmatprep.subr.bf16.mxu0 0
    %1803 = vmatpush1.bf16.msra.mxu0 %v1785
    %1804 = vmatprep.subr.bf16.mxu0 0
    %1805 = vmatpush1.bf16.msra.mxu0 0
    %1806 = vmatprep.subr.bf16.mxu0 0
    %1807 = vmatpush1.bf16.msra.mxu0 0
    %1808 = vmatprep.subr.bf16.mxu0 0
    %1809 = vmatpush1.bf16.msra.mxu0 0
    %1810 = vmatprep.subr.bf16.mxu0 0
    %1811 = vmatpush1.bf16.msra.mxu0 0
    %1812 = vmatprep.subr.bf16.mxu0 0
    %1813 = vmatpush1.bf16.msra.mxu0 0
    %1814 = vmatprep.subr.bf16.mxu0 0
    %1815 = vmatpush1.bf16.msra.mxu0 0
    %1816 = vmatprep.subr.bf16.mxu0 0
    %1817 = vmatpush1.bf16.msra.mxu0 0
    %1818 = vmatprep.subr.bf16.mxu0 0
    %1819 = vmatpush1.bf16.msra.mxu0 0
    %1820 = vmatprep.subr.bf16.mxu0 0
    %1821 = vmatpush1.bf16.msra.mxu0 0
    %1822 = vmatprep.subr.bf16.mxu0 0
    %1823 = vmatpush1.bf16.msra.mxu0 0
    %1824 = vmatprep.subr.bf16.mxu0 0
    %1825 = vmatpush1.bf16.msra.mxu0 0
    %1826 = vmatprep.subr.bf16.mxu0 0
    %1827 = vmatpush1.bf16.msra.mxu0 0
    %1828 = vmatprep.subr.bf16.mxu0 0
    %1829 = vmatpush1.bf16.msra.mxu0 0
    %1830 = vmatprep.mubr.bf16.mxu0 0
    %1831 = vmatmul.mubr.bf16.gmra.mrb[0].mxu0 %v1790
    %v1832 = vpop.f32.mrb[0].mxu0
    %v1833 = vadd.f32 0.0, %v1832
    %v1834 = vpop.f32.mrb[0].mxu0
    %v1835 = vpop.f32.mrb[0].mxu0
    %v1836 = vadd.f32 0.0, %v1835
    %v1837 = vpop.f32.mrb[0].mxu0
    %1838 = vmatprep.mubr.bf16.mxu0 0
    %1839 = vmatmul.mubr.bf16.gmra.mrb[0].mxu0 %v1793
    %v1840 = vpop.f32.mrb[0].mxu0
    %v1841 = vadd.f32 0.0, %v1840
    %v1842 = vpop.f32.mrb[0].mxu0
    %v1843 = vpop.f32.mrb[0].mxu0
    %v1844 = vadd.f32 0.0, %v1843
    %v1845 = vpop.f32.mrb[0].mxu0
    %1846 = vmatprep.mubr.bf16.mxu0 0
    %1847 = vmatmul.mubr.bf16.gmra.mrb[0].mxu0 %v1796
    %v1848 = vpop.f32.mrb[0].mxu0
    %v1849 = vadd.f32 0.0, %v1848
    %v1850 = vpop.f32.mrb[0].mxu0
    %v1851 = vpop.f32.mrb[0].mxu0
    %v1852 = vadd.f32 0.0, %v1851
    %v1853 = vpop.f32.mrb[0].mxu0
    %1854 = vdwg.mxu0
    %v1855 = vpack.c.bf16 %v1836, %v1833
    %v1856 = vpack.c.bf16 %v1844, %v1841
    %v1857 = vpack.c.bf16 %v1852, %v1849
    %v1862 = vunpack.c.l.b16 %v900
    %v1863 = vunpack.c.l.b16 %v901
    %v1864 = vunpack.c.l.b16 %v902
    %v1865 = vunpack.c.l.b16 %v903
    %v1866 = vpack.c.b16 %v1863, %v1862
    %v1867 = vpack.c.b16 %v1865, %v1864
    %v1871 = vsel %vm676, %v1855, 0
    %v1874 = vsel %vm676, %v1856, 0
    %v1877 = vsel %vm676, %v1857, 0
    %1879 = vmatprep.subr.bf16.mxu0 0
    %1880 = vmatpush1.bf16.msra.mxu0 %v1866
    %1881 = vmatprep.subr.bf16.mxu0 0
    %1882 = vmatpush1.bf16.msra.mxu0 %v1867
    %1883 = vmatprep.subr.bf16.mxu0 0
    %1884 = vmatpush1.bf16.msra.mxu0 0
    %1885 = vmatprep.subr.bf16.mxu0 0
    %1886 = vmatpush1.bf16.msra.mxu0 0
    %1887 = vmatprep.subr.bf16.mxu0 0
    %1888 = vmatpush1.bf16.msra.mxu0 0
    %1889 = vmatprep.subr.bf16.mxu0 0
    %1890 = vmatpush1.bf16.msra.mxu0 0
    %1891 = vmatprep.subr.bf16.mxu0 0
    %1892 = vmatpush1.bf16.msra.mxu0 0
    %1893 = vmatprep.subr.bf16.mxu0 0
    %1894 = vmatpush1.bf16.msra.mxu0 0
    %1895 = vmatprep.subr.bf16.mxu0 0
    %1896 = vmatpush1.bf16.msra.mxu0 0
    %1897 = vmatprep.subr.bf16.mxu0 0
    %1898 = vmatpush1.bf16.msra.mxu0 0
    %1899 = vmatprep.subr.bf16.mxu0 0
    %1900 = vmatpush1.bf16.msra.mxu0 0
    %1901 = vmatprep.subr.bf16.mxu0 0
    %1902 = vmatpush1.bf16.msra.mxu0 0
    %1903 = vmatprep.subr.bf16.mxu0 0
    %1904 = vmatpush1.bf16.msra.mxu0 0
    %1905 = vmatprep.subr.bf16.mxu0 0
    %1906 = vmatpush1.bf16.msra.mxu0 0
    %1907 = vmatprep.subr.bf16.mxu0 0
    %1908 = vmatpush1.bf16.msra.mxu0 0
    %1909 = vmatprep.subr.bf16.mxu0 0
    %1910 = vmatpush1.bf16.msra.mxu0 0
    %1911 = vmatprep.mubr.bf16.mxu0 0
    %1912 = vmatmul.mubr.bf16.gmra.mrb[0].mxu0 %v1871
    %v1913 = vpop.f32.mrb[0].mxu0
    %v1914 = vadd.f32 0.0, %v1913
    %v1915 = vpop.f32.mrb[0].mxu0
    %v1916 = vpop.f32.mrb[0].mxu0
    %v1917 = vadd.f32 0.0, %v1916
    %v1918 = vpop.f32.mrb[0].mxu0
    %1919 = vmatprep.mubr.bf16.mxu0 0
    %1920 = vmatmul.mubr.bf16.gmra.mrb[0].mxu0 %v1874
    %v1921 = vpop.f32.mrb[0].mxu0
    %v1922 = vadd.f32 0.0, %v1921
    %v1923 = vpop.f32.mrb[0].mxu0
    %v1924 = vpop.f32.mrb[0].mxu0
    %v1925 = vadd.f32 0.0, %v1924
    %v1926 = vpop.f32.mrb[0].mxu0
    %1927 = vmatprep.mubr.bf16.mxu0 0
    %1928 = vmatmul.mubr.bf16.gmra.mrb[0].mxu0 %v1877
    %v1929 = vpop.f32.mrb[0].mxu0
    %v1930 = vadd.f32 0.0, %v1929
    %v1931 = vpop.f32.mrb[0].mxu0
    %v1932 = vpop.f32.mrb[0].mxu0
    %v1933 = vadd.f32 0.0, %v1932
    %v1934 = vpop.f32.mrb[0].mxu0
    %1935 = vdwg.mxu0
    %v1936 = vadd.f32 %v1618, %v1914
    %v1937 = vadd.f32 %v1619, %v1917
    %v1938 = vadd.f32 %v1620, %v1922
    %v1939 = vadd.f32 %v1621, %v1925
    %v1940 = vadd.f32 %v1622, %v1930
    %v1941 = vadd.f32 %v1623, %v1933
    %v1942 = vadd.f32 %v109, %v1936
    %v1943 = vadd.f32 %v110, %v1937
    %v1944 = vadd.f32 %v111, %v1938
    %v1945 = vadd.f32 %v112, %v1939
    %v1946 = vadd.f32 %v113, %v1940
    %v1947 = vadd.f32 %v114, %v1941
    %v1948 = vld [vmem:[%s13] sm:$0x1]
    %v1949 = vmul.f32 %v1942, %v1942
    %v1950 = vmul.f32 %v1943, %v1943
    %v1951 = vmul.f32 %v1944, %v1944
    %v1952 = vmul.f32 %v1945, %v1945
    %v1953 = vmul.f32 %v1946, %v1946
    %v1954 = vmul.f32 %v1947, %v1947
    %1955 = vadd.xlane.f32.xlu0 %v1949
    %v1956 = vpop.xlane.xlu0 %1955
    %1957 = vadd.xlane.f32.xlu0 %v1950
    %v1958 = vpop.xlane.xlu0 %1957
    %1959 = vadd.xlane.f32.xlu0 %v1951
    %v1960 = vpop.xlane.xlu0 %1959
    %1961 = vadd.xlane.f32.xlu0 %v1952
    %v1962 = vpop.xlane.xlu0 %1961
    %1963 = vadd.xlane.f32.xlu0 %v1953
    %v1964 = vpop.xlane.xlu0 %1963
    %1965 = vadd.xlane.f32.xlu0 %v1954
    %v1966 = vpop.xlane.xlu0 %1965
    %v1967 = vmul.f32 %v1956, %v200
    %v1968 = vmul.f32 %v1958, %v200
    %v1969 = vmul.f32 %v1960, %v200
    %v1970 = vmul.f32 %v1962, %v200
    %v1971 = vmul.f32 %v1964, %v200
    %v1972 = vmul.f32 %v1966, %v200
    %v1973 = vadd.f32 %v1967, 1e-05
    %v1974 = vadd.f32 %v1968, 1e-05
    %v1975 = vadd.f32 %v1969, 1e-05
    %v1976 = vadd.f32 %v1970, 1e-05
    %v1977 = vadd.f32 %v1971, 1e-05
    %v1978 = vadd.f32 %v1972, 1e-05
    %v1979 = vrsqrt.pop %v1973
    %v1980 = vrsqrt.pop %v1974
    %v1981 = vrsqrt.pop %v1975
    %v1982 = vrsqrt.pop %v1976
    %v1983 = vrsqrt.pop %v1977
    %v1984 = vrsqrt.pop %v1978
    %v1985 = vmul.f32 %v1942, %v1979
    %v1986 = vmul.f32 %v1943, %v1980
    %v1987 = vmul.f32 %v1944, %v1981
    %v1988 = vmul.f32 %v1945, %v1982
    %v1989 = vmul.f32 %v1946, %v1983
    %v1990 = vmul.f32 %v1947, %v1984
    %v1992 = vlaneseq
    %v1993 = vshrl.u32 %v1992, 7
    %v1994 = vsub.s32 0, %v1993
    %v1995 = vrot.slane %v1948, %v1994
    %v1997 = vmul.f32 %v1985, %v1995
    %v1998 = vmul.f32 %v1986, %v1995
    %v1999 = vmul.f32 %v1987, %v1995
    %v2000 = vmul.f32 %v1988, %v1995
    %v2001 = vmul.f32 %v1989, %v1995
    %v2002 = vmul.f32 %v1990, %v1995
    %v2003 = vld [vmem:[#allocation4] sm:$0xff]
    %v2004 = vld [vmem:[#allocation4 + $0x8] sm:$0xff]
    %v2005 = vld [vmem:[#allocation4 + $0x10] sm:$0xff]
    %v2006 = vld [vmem:[#allocation4 + $0x18] sm:$0xff]
    %v2007 = vld [vmem:[#allocation4 + $0x20] sm:$0xff]
    %v2008 = vld [vmem:[#allocation4 + $0x28] sm:$0xff]
    %v2009 = vld [vmem:[#allocation4 + $0x30] sm:$0xff]
    %v2010 = vld [vmem:[#allocation4 + $0x38] sm:$0xff]
    %v2011 = vld [vmem:[#allocation4 + $0x40] sm:$0xff]
    %v2012 = vld [vmem:[#allocation4 + $0x48] sm:$0xff]
    %v2013 = vld [vmem:[#allocation4 + $0x50] sm:$0xff]
    %v2014 = vld [vmem:[#allocation4 + $0x58] sm:$0xff]
    %v2015 = vld [vmem:[#allocation4 + $0x60] sm:$0xff]
    %v2016 = vld [vmem:[#allocation4 + $0x68] sm:$0xff]
    %v2017 = vld [vmem:[#allocation4 + $0x70] sm:$0xff]
    %v2018 = vld [vmem:[#allocation4 + $0x78] sm:$0xff]
    %v2019 = vld [vmem:[#allocation4 + $0x80] sm:$0xff]
    %v2020 = vld [vmem:[#allocation4 + $0x88] sm:$0xff]
    %v2021 = vld [vmem:[#allocation4 + $0x90] sm:$0xff]
    %v2022 = vld [vmem:[#allocation4 + $0x98] sm:$0xff]
    %v2023 = vld [vmem:[#allocation4 + $0xa0] sm:$0xff]
    %v2024 = vld [vmem:[#allocation4 + $0xa8] sm:$0xff]
    %v2025 = vld [vmem:[#allocation4 + $0xb0] sm:$0xff]
    %v2026 = vld [vmem:[#allocation4 + $0xb8] sm:$0xff]
    %v2027 = vld [vmem:[#allocation4 + $0xc0] sm:$0xff]
    %v2028 = vld [vmem:[#allocation4 + $0xc8] sm:$0xff]
    %v2029 = vld [vmem:[#allocation4 + $0xd0] sm:$0xff]
    %v2030 = vld [vmem:[#allocation4 + $0xd8] sm:$0xff]
    %v2031 = vld [vmem:[#allocation4 + $0xe0] sm:$0xff]
    %v2032 = vld [vmem:[#allocation4 + $0xe8] sm:$0xff]
    %v2033 = vld [vmem:[#allocation4 + $0xf0] sm:$0xff]
    %v2034 = vld [vmem:[#allocation4 + $0xf8] sm:$0xff]
    %v2035 = vpack.c.bf16 %v1998, %v1997
    %v2036 = vpack.c.bf16 %v2000, %v1999
    %v2037 = vpack.c.bf16 %v2002, %v2001
    %v2070 = vunpack.c.l.b16 %v2003
    %v2071 = vunpack.c.h.b16 %v2003
    %v2072 = vunpack.c.l.b16 %v2004
    %v2073 = vunpack.c.h.b16 %v2004
    %v2074 = vunpack.c.l.b16 %v2005
    %v2075 = vunpack.c.h.b16 %v2005
    %v2076 = vunpack.c.l.b16 %v2006
    %v2077 = vunpack.c.h.b16 %v2006
    %v2078 = vunpack.c.l.b16 %v2007
    %v2079 = vunpack.c.h.b16 %v2007
    %v2080 = vunpack.c.l.b16 %v2008
    %v2081 = vunpack.c.h.b16 %v2008
    %v2082 = vunpack.c.l.b16 %v2009
    %v2083 = vunpack.c.h.b16 %v2009
    %v2084 = vunpack.c.l.b16 %v2010
    %v2085 = vunpack.c.h.b16 %v2010
    %v2086 = vunpack.c.l.b16 %v2011
    %v2087 = vunpack.c.h.b16 %v2011
    %v2088 = vunpack.c.l.b16 %v2012
    %v2089 = vunpack.c.h.b16 %v2012
    %v2090 = vunpack.c.l.b16 %v2013
    %v2091 = vunpack.c.h.b16 %v2013
    %v2092 = vunpack.c.l.b16 %v2014
    %v2093 = vunpack.c.h.b16 %v2014
    %v2094 = vunpack.c.l.b16 %v2015
    %v2095 = vunpack.c.h.b16 %v2015
    %v2096 = vunpack.c.l.b16 %v2016
    %v2097 = vunpack.c.h.b16 %v2016
    %v2098 = vunpack.c.l.b16 %v2017
    %v2099 = vunpack.c.h.b16 %v2017
    %v2100 = vunpack.c.l.b16 %v2018
    %v2101 = vunpack.c.h.b16 %v2018
    %v2102 = vunpack.c.l.b16 %v2019
    %v2103 = vunpack.c.h.b16 %v2019
    %v2104 = vunpack.c.l.b16 %v2020
    %v2105 = vunpack.c.h.b16 %v2020
    %v2106 = vunpack.c.l.b16 %v2021
    %v2107 = vunpack.c.h.b16 %v2021
    %v2108 = vunpack.c.l.b16 %v2022
    %v2109 = vunpack.c.h.b16 %v2022
    %v2110 = vunpack.c.l.b16 %v2023
    %v2111 = vunpack.c.h.b16 %v2023
    %v2112 = vunpack.c.l.b16 %v2024
    %v2113 = vunpack.c.h.b16 %v2024
    %v2114 = vunpack.c.l.b16 %v2025
    %v2115 = vunpack.c.h.b16 %v2025
    %v2116 = vunpack.c.l.b16 %v2026
    %v2117 = vunpack.c.h.b16 %v2026
    %v2118 = vunpack.c.l.b16 %v2027
    %v2119 = vunpack.c.h.b16 %v2027
    %v2120 = vunpack.c.l.b16 %v2028
    %v2121 = vunpack.c.h.b16 %v2028
    %v2122 = vunpack.c.l.b16 %v2029
    %v2123 = vunpack.c.h.b16 %v2029
    %v2124 = vunpack.c.l.b16 %v2030
    %v2125 = vunpack.c.h.b16 %v2030
    %v2126 = vunpack.c.l.b16 %v2031
    %v2127 = vunpack.c.h.b16 %v2031
    %v2128 = vunpack.c.l.b16 %v2032
    %v2129 = vunpack.c.h.b16 %v2032
    %v2130 = vunpack.c.l.b16 %v2033
    %v2131 = vunpack.c.h.b16 %v2033
    %v2132 = vunpack.c.l.b16 %v2034
    %v2133 = vunpack.c.h.b16 %v2034
    %v2134 = vpack.c.b16 %v2074, %v2070
    %v2135 = vpack.c.b16 %v2075, %v2071
    %v2136 = vpack.c.b16 %v2076, %v2072
    %v2137 = vpack.c.b16 %v2077, %v2073
    %v2138 = vpack.c.b16 %v2082, %v2078
    %v2139 = vpack.c.b16 %v2083, %v2079
    %v2140 = vpack.c.b16 %v2084, %v2080
    %v2141 = vpack.c.b16 %v2085, %v2081
    %v2142 = vpack.c.b16 %v2090, %v2086
    %v2143 = vpack.c.b16 %v2091, %v2087
    %v2144 = vpack.c.b16 %v2092, %v2088
    %v2145 = vpack.c.b16 %v2093, %v2089
    %v2146 = vpack.c.b16 %v2098, %v2094
    %v2147 = vpack.c.b16 %v2099, %v2095
    %v2148 = vpack.c.b16 %v2100, %v2096
    %v2149 = vpack.c.b16 %v2101, %v2097
    %v2150 = vpack.c.b16 %v2106, %v2102
    %v2151 = vpack.c.b16 %v2107, %v2103
    %v2152 = vpack.c.b16 %v2108, %v2104
    %v2153 = vpack.c.b16 %v2109, %v2105
    %v2154 = vpack.c.b16 %v2114, %v2110
    %v2155 = vpack.c.b16 %v2115, %v2111
    %v2156 = vpack.c.b16 %v2116, %v2112
    %v2157 = vpack.c.b16 %v2117, %v2113
    %v2158 = vpack.c.b16 %v2122, %v2118
    %v2159 = vpack.c.b16 %v2123, %v2119
    %v2160 = vpack.c.b16 %v2124, %v2120
    %v2161 = vpack.c.b16 %v2125, %v2121
    %v2162 = vpack.c.b16 %v2130, %v2126
    %v2163 = vpack.c.b16 %v2131, %v2127
    %v2164 = vpack.c.b16 %v2132, %v2128
    %v2165 = vpack.c.b16 %v2133, %v2129
    %2198 = vmatprep.subr.bf16.mxu0 %v2135
    %2199 = vmatpush1.bf16.msra.mxu0 %v2134
    %2200 = vmatprep.subr.bf16.mxu0 %v2139
    %2201 = vmatpush1.bf16.msra.mxu0 %v2138
    %2202 = vmatprep.subr.bf16.mxu0 %v2143
    %2203 = vmatpush1.bf16.msra.mxu0 %v2142
    %2204 = vmatprep.subr.bf16.mxu0 %v2147
    %2205 = vmatpush1.bf16.msra.mxu0 %v2146
    %2206 = vmatprep.subr.bf16.mxu0 %v2151
    %2207 = vmatpush1.bf16.msra.mxu0 %v2150
    %2208 = vmatprep.subr.bf16.mxu0 %v2155
    %2209 = vmatpush1.bf16.msra.mxu0 %v2154
    %2210 = vmatprep.subr.bf16.mxu0 %v2159
    %2211 = vmatpush1.bf16.msra.mxu0 %v2158
    %2212 = vmatprep.subr.bf16.mxu0 %v2163
    %2213 = vmatpush1.bf16.msra.mxu0 %v2162
    %2214 = vmatprep.subr.bf16.mxu0 0
    %2215 = vmatpush1.bf16.msra.mxu0 0
    %2216 = vmatprep.subr.bf16.mxu0 0
    %2217 = vmatpush1.bf16.msra.mxu0 0
    %2218 = vmatprep.subr.bf16.mxu0 0
    %2219 = vmatpush1.bf16.msra.mxu0 0
    %2220 = vmatprep.subr.bf16.mxu0 0
    %2221 = vmatpush1.bf16.msra.mxu0 0
    %2222 = vmatprep.subr.bf16.mxu0 0
    %2223 = vmatpush1.bf16.msra.mxu0 0
    %2224 = vmatprep.subr.bf16.mxu0 0
    %2225 = vmatpush1.bf16.msra.mxu0 0
    %2226 = vmatprep.subr.bf16.mxu0 0
    %2227 = vmatpush1.bf16.msra.mxu0 0
    %2228 = vmatprep.subr.bf16.mxu0 0
    %2229 = vmatpush1.bf16.msra.mxu0 0
    %2230 = vmatprep.mubr.bf16.mxu0 0
    %2231 = vmatmul.mubr.bf16.gmra.mrb[0].mxu0 %v2035
    %v2232 = vpop.f32.mrb[0].mxu0
    %v2233 = vadd.f32 0.0, %v2232
    %v2234 = vpop.f32.mrb[0].mxu0
    %v2235 = vadd.f32 0.0, %v2234
    %v2236 = vpop.f32.mrb[0].mxu0
    %v2237 = vadd.f32 0.0, %v2236
    %v2238 = vpop.f32.mrb[0].mxu0
    %v2239 = vadd.f32 0.0, %v2238
    %2240 = vmatprep.mubr.bf16.mxu0 0
    %2241 = vmatmul.mubr.bf16.gmra.mrb[0].mxu0 %v2036
    %v2242 = vpop.f32.mrb[0].mxu0
    %v2243 = vadd.f32 0.0, %v2242
    %v2244 = vpop.f32.mrb[0].mxu0
    %v2245 = vadd.f32 0.0, %v2244
    %v2246 = vpop.f32.mrb[0].mxu0
    %v2247 = vadd.f32 0.0, %v2246
    %v2248 = vpop.f32.mrb[0].mxu0
    %v2249 = vadd.f32 0.0, %v2248
    %2250 = vmatprep.mubr.bf16.mxu0 0
    %2251 = vmatmul.mubr.bf16.gmra.mrb[0].mxu0 %v2037
    %v2252 = vpop.f32.mrb[0].mxu0
    %v2253 = vadd.f32 0.0, %v2252
    %v2254 = vpop.f32.mrb[0].mxu0
    %v2255 = vadd.f32 0.0, %v2254
    %v2256 = vpop.f32.mrb[0].mxu0
    %v2257 = vadd.f32 0.0, %v2256
    %v2258 = vpop.f32.mrb[0].mxu0
    %v2259 = vadd.f32 0.0, %v2258
    %2260 = vdwg.mxu0
    %2261 = vmatprep.subr.bf16.mxu0 %v2137
    %2262 = vmatpush1.bf16.msra.mxu0 %v2136
    %2263 = vmatprep.subr.bf16.mxu0 %v2141
    %2264 = vmatpush1.bf16.msra.mxu0 %v2140
    %2265 = vmatprep.subr.bf16.mxu0 %v2145
    %2266 = vmatpush1.bf16.msra.mxu0 %v2144
    %2267 = vmatprep.subr.bf16.mxu0 %v2149
    %2268 = vmatpush1.bf16.msra.mxu0 %v2148
    %2269 = vmatprep.subr.bf16.mxu0 %v2153
    %2270 = vmatpush1.bf16.msra.mxu0 %v2152
    %2271 = vmatprep.subr.bf16.mxu0 %v2157
    %2272 = vmatpush1.bf16.msra.mxu0 %v2156
    %2273 = vmatprep.subr.bf16.mxu0 %v2161
    %2274 = vmatpush1.bf16.msra.mxu0 %v2160
    %2275 = vmatprep.subr.bf16.mxu0 %v2165
    %2276 = vmatpush1.bf16.msra.mxu0 %v2164
    %2277 = vmatprep.subr.bf16.mxu0 0
    %2278 = vmatpush1.bf16.msra.mxu0 0
    %2279 = vmatprep.subr.bf16.mxu0 0
    %2280 = vmatpush1.bf16.msra.mxu0 0
    %2281 = vmatprep.subr.bf16.mxu0 0
    %2282 = vmatpush1.bf16.msra.mxu0 0
    %2283 = vmatprep.subr.bf16.mxu0 0
    %2284 = vmatpush1.bf16.msra.mxu0 0
    %2285 = vmatprep.subr.bf16.mxu0 0
    %2286 = vmatpush1.bf16.msra.mxu0 0
    %2287 = vmatprep.subr.bf16.mxu0 0
    %2288 = vmatpush1.bf16.msra.mxu0 0
    %2289 = vmatprep.subr.bf16.mxu0 0
    %2290 = vmatpush1.bf16.msra.mxu0 0
    %2291 = vmatprep.subr.bf16.mxu0 0
    %2292 = vmatpush1.bf16.msra.mxu0 0
    %2293 = vmatprep.mubr.bf16.mxu0 0
    %2294 = vmatmul.mubr.bf16.gmra.mrb[0].mxu0 %v2035
    %v2295 = vpop.f32.mrb[0].mxu0
    %v2296 = vadd.f32 0.0, %v2295
    %v2297 = vpop.f32.mrb[0].mxu0
    %v2298 = vadd.f32 0.0, %v2297
    %v2299 = vpop.f32.mrb[0].mxu0
    %v2300 = vadd.f32 0.0, %v2299
    %v2301 = vpop.f32.mrb[0].mxu0
    %v2302 = vadd.f32 0.0, %v2301
    %2303 = vmatprep.mubr.bf16.mxu0 0
    %2304 = vmatmul.mubr.bf16.gmra.mrb[0].mxu0 %v2036
    %v2305 = vpop.f32.mrb[0].mxu0
    %v2306 = vadd.f32 0.0, %v2305
    %v2307 = vpop.f32.mrb[0].mxu0
    %v2308 = vadd.f32 0.0, %v2307
    %v2309 = vpop.f32.mrb[0].mxu0
    %v2310 = vadd.f32 0.0, %v2309
    %v2311 = vpop.f32.mrb[0].mxu0
    %v2312 = vadd.f32 0.0, %v2311
    %2313 = vmatprep.mubr.bf16.mxu0 0
    %2314 = vmatmul.mubr.bf16.gmra.mrb[0].mxu0 %v2037
    %v2315 = vpop.f32.mrb[0].mxu0
    %v2316 = vadd.f32 0.0, %v2315
    %v2317 = vpop.f32.mrb[0].mxu0
    %v2318 = vadd.f32 0.0, %v2317
    %v2319 = vpop.f32.mrb[0].mxu0
    %v2320 = vadd.f32 0.0, %v2319
    %v2321 = vpop.f32.mrb[0].mxu0
    %v2322 = vadd.f32 0.0, %v2321
    %2323 = vdwg.mxu0
    %v2324 = vsub.f32 0.0, %v2233
    %v2325 = vsub.f32 0.0, %v2235
    %v2326 = vsub.f32 0.0, %v2237
    %v2327 = vsub.f32 0.0, %v2239
    %v2328 = vsub.f32 0.0, %v2243
    %v2329 = vsub.f32 0.0, %v2245
    %v2330 = vsub.f32 0.0, %v2247
    %v2331 = vsub.f32 0.0, %v2249
    %v2332 = vsub.f32 0.0, %v2253
    %v2333 = vsub.f32 0.0, %v2255
    %v2334 = vsub.f32 0.0, %v2257
    %v2335 = vsub.f32 0.0, %v2259
    %v2336 = vmul.f32 %v2324, 1.442695
    %v2337 = vpow.pop %v2336
    %v2338 = vmul.f32 %v2325, 1.442695
    %v2339 = vpow.pop %v2338
    %v2340 = vmul.f32 %v2326, 1.442695
    %v2341 = vpow.pop %v2340
    %v2342 = vmul.f32 %v2327, 1.442695
    %v2343 = vpow.pop %v2342
    %v2344 = vmul.f32 %v2328, 1.442695
    %v2345 = vpow.pop %v2344
    %v2346 = vmul.f32 %v2329, 1.442695
    %v2347 = vpow.pop %v2346
    %v2348 = vmul.f32 %v2330, 1.442695
    %v2349 = vpow.pop %v2348
    %v2350 = vmul.f32 %v2331, 1.442695
    %v2351 = vpow.pop %v2350
    %v2352 = vmul.f32 %v2332, 1.442695
    %v2353 = vpow.pop %v2352
    %v2354 = vmul.f32 %v2333, 1.442695
    %v2355 = vpow.pop %v2354
    %v2356 = vmul.f32 %v2334, 1.442695
    %v2357 = vpow.pop %v2356
    %v2358 = vmul.f32 %v2335, 1.442695
    %v2359 = vpow.pop %v2358
    %v2360 = vadd.f32 %v2337, 1.0
    %v2361 = vadd.f32 %v2339, 1.0
    %v2362 = vadd.f32 %v2341, 1.0
    %v2363 = vadd.f32 %v2343, 1.0
    %v2364 = vadd.f32 %v2345, 1.0
    %v2365 = vadd.f32 %v2347, 1.0
    %v2366 = vadd.f32 %v2349, 1.0
    %v2367 = vadd.f32 %v2351, 1.0
    %v2368 = vadd.f32 %v2353, 1.0
    %v2369 = vadd.f32 %v2355, 1.0
    %v2370 = vadd.f32 %v2357, 1.0
    %v2371 = vadd.f32 %v2359, 1.0
    %v2372 = vrcp.pop %v2360
    %v2373 = vrcp.pop %v2361
    %v2374 = vrcp.pop %v2362
    %v2375 = vrcp.pop %v2363
    %v2376 = vrcp.pop %v2364
    %v2377 = vrcp.pop %v2365
    %v2378 = vrcp.pop %v2366
    %v2379 = vrcp.pop %v2367
    %v2380 = vrcp.pop %v2368
    %v2381 = vrcp.pop %v2369
    %v2382 = vrcp.pop %v2370
    %v2383 = vrcp.pop %v2371
    %v2384 = vmul.f32 %v2233, %v2372
    %v2385 = vmul.f32 %v2235, %v2373
    %v2386 = vmul.f32 %v2237, %v2374
    %v2387 = vmul.f32 %v2239, %v2375
    %v2388 = vmul.f32 %v2243, %v2376
    %v2389 = vmul.f32 %v2245, %v2377
    %v2390 = vmul.f32 %v2247, %v2378
    %v2391 = vmul.f32 %v2249, %v2379
    %v2392 = vmul.f32 %v2253, %v2380
    %v2393 = vmul.f32 %v2255, %v2381
    %v2394 = vmul.f32 %v2257, %v2382
    %v2395 = vmul.f32 %v2259, %v2383
    %v2396 = vmul.f32 %v2384, %v2296
    %v2397 = vmul.f32 %v2385, %v2298
    %v2398 = vmul.f32 %v2386, %v2300
    %v2399 = vmul.f32 %v2387, %v2302
    %v2400 = vmul.f32 %v2388, %v2306
    %v2401 = vmul.f32 %v2389, %v2308
    %v2402 = vmul.f32 %v2390, %v2310
    %v2403 = vmul.f32 %v2391, %v2312
    %v2404 = vmul.f32 %v2392, %v2316
    %v2405 = vmul.f32 %v2393, %v2318
    %v2406 = vmul.f32 %v2394, %v2320
    %v2407 = vmul.f32 %v2395, %v2322
    %v2408 = vld [vmem:[#allocation6] sm:$0xf]
    %v2409 = vld [vmem:[#allocation6 + $0x4] sm:$0xf]
    %v2410 = vld [vmem:[#allocation6 + $0x8] sm:$0xf]
    %v2411 = vld [vmem:[#allocation6 + $0xc] sm:$0xf]
    %v2412 = vld [vmem:[#allocation6 + $0x10] sm:$0xf]
    %v2413 = vld [vmem:[#allocation6 + $0x14] sm:$0xf]
    %v2414 = vld [vmem:[#allocation6 + $0x18] sm:$0xf]
    %v2415 = vld [vmem:[#allocation6 + $0x1c] sm:$0xf]
    %v2416 = vld [vmem:[#allocation6 + $0x20] sm:$0xf]
    %v2417 = vld [vmem:[#allocation6 + $0x24] sm:$0xf]
    %v2418 = vld [vmem:[#allocation6 + $0x28] sm:$0xf]
    %v2419 = vld [vmem:[#allocation6 + $0x2c] sm:$0xf]
    %v2420 = vld [vmem:[#allocation6 + $0x30] sm:$0xf]
    %v2421 = vld [vmem:[#allocation6 + $0x34] sm:$0xf]
    %v2422 = vld [vmem:[#allocation6 + $0x38] sm:$0xf]
    %v2423 = vld [vmem:[#allocation6 + $0x3c] sm:$0xf]
    %v2424 = vld [vmem:[#allocation6 + $0x40] sm:$0xf]
    %v2425 = vld [vmem:[#allocation6 + $0x44] sm:$0xf]
    %v2426 = vld [vmem:[#allocation6 + $0x48] sm:$0xf]
    %v2427 = vld [vmem:[#allocation6 + $0x4c] sm:$0xf]
    %v2428 = vld [vmem:[#allocation6 + $0x50] sm:$0xf]
    %v2429 = vld [vmem:[#allocation6 + $0x54] sm:$0xf]
    %v2430 = vld [vmem:[#allocation6 + $0x58] sm:$0xf]
    %v2431 = vld [vmem:[#allocation6 + $0x5c] sm:$0xf]
    %v2432 = vld [vmem:[#allocation6 + $0x60] sm:$0xf]
    %v2433 = vld [vmem:[#allocation6 + $0x64] sm:$0xf]
    %v2434 = vld [vmem:[#allocation6 + $0x68] sm:$0xf]
    %v2435 = vld [vmem:[#allocation6 + $0x6c] sm:$0xf]
    %v2436 = vld [vmem:[#allocation6 + $0x70] sm:$0xf]
    %v2437 = vld [vmem:[#allocation6 + $0x74] sm:$0xf]
    %v2438 = vld [vmem:[#allocation6 + $0x78] sm:$0xf]
    %v2439 = vld [vmem:[#allocation6 + $0x7c] sm:$0xf]
    %v2440 = vpack.c.bf16 %v2398, %v2396
    %v2441 = vpack.c.bf16 %v2399, %v2397
    %v2442 = vpack.c.bf16 %v2402, %v2400
    %v2443 = vpack.c.bf16 %v2403, %v2401
    %v2444 = vpack.c.bf16 %v2406, %v2404
    %v2445 = vpack.c.bf16 %v2407, %v2405
    %v2478 = vunpack.c.l.b16 %v2408
    %v2479 = vunpack.c.l.b16 %v2409
    %v2480 = vunpack.c.l.b16 %v2410
    %v2481 = vunpack.c.l.b16 %v2411
    %v2482 = vunpack.c.l.b16 %v2412
    %v2483 = vunpack.c.l.b16 %v2413
    %v2484 = vunpack.c.l.b16 %v2414
    %v2485 = vunpack.c.l.b16 %v2415
    %v2486 = vunpack.c.l.b16 %v2416
    %v2487 = vunpack.c.l.b16 %v2417
    %v2488 = vunpack.c.l.b16 %v2418
    %v2489 = vunpack.c.l.b16 %v2419
    %v2490 = vunpack.c.l.b16 %v2420
    %v2491 = vunpack.c.l.b16 %v2421
    %v2492 = vunpack.c.l.b16 %v2422
    %v2493 = vunpack.c.l.b16 %v2423
    %v2494 = vunpack.c.l.b16 %v2424
    %v2495 = vunpack.c.l.b16 %v2425
    %v2496 = vunpack.c.l.b16 %v2426
    %v2497 = vunpack.c.l.b16 %v2427
    %v2498 = vunpack.c.l.b16 %v2428
    %v2499 = vunpack.c.l.b16 %v2429
    %v2500 = vunpack.c.l.b16 %v2430
    %v2501 = vunpack.c.l.b16 %v2431
    %v2502 = vunpack.c.l.b16 %v2432
    %v2503 = vunpack.c.l.b16 %v2433
    %v2504 = vunpack.c.l.b16 %v2434
    %v2505 = vunpack.c.l.b16 %v2435
    %v2506 = vunpack.c.l.b16 %v2436
    %v2507 = vunpack.c.l.b16 %v2437
    %v2508 = vunpack.c.l.b16 %v2438
    %v2509 = vunpack.c.l.b16 %v2439
    %v2510 = vpack.c.b16 %v2479, %v2478
    %v2511 = vpack.c.b16 %v2481, %v2480
    %v2512 = vpack.c.b16 %v2483, %v2482
    %v2513 = vpack.c.b16 %v2485, %v2484
    %v2514 = vpack.c.b16 %v2487, %v2486
    %v2515 = vpack.c.b16 %v2489, %v2488
    %v2516 = vpack.c.b16 %v2491, %v2490
    %v2517 = vpack.c.b16 %v2493, %v2492
    %v2518 = vpack.c.b16 %v2495, %v2494
    %v2519 = vpack.c.b16 %v2497, %v2496
    %v2520 = vpack.c.b16 %v2499, %v2498
    %v2521 = vpack.c.b16 %v2501, %v2500
    %v2522 = vpack.c.b16 %v2503, %v2502
    %v2523 = vpack.c.b16 %v2505, %v2504
    %v2524 = vpack.c.b16 %v2507, %v2506
    %v2525 = vpack.c.b16 %v2509, %v2508
    %2542 = vmatprep.subr.bf16.mxu0 0
    %2543 = vmatpush1.bf16.msra.mxu0 %v2510
    %2544 = vmatprep.subr.bf16.mxu0 0
    %2545 = vmatpush1.bf16.msra.mxu0 %v2511
    %2546 = vmatprep.subr.bf16.mxu0 0
    %2547 = vmatpush1.bf16.msra.mxu0 %v2512
    %2548 = vmatprep.subr.bf16.mxu0 0
    %2549 = vmatpush1.bf16.msra.mxu0 %v2513
    %2550 = vmatprep.subr.bf16.mxu0 0
    %2551 = vmatpush1.bf16.msra.mxu0 %v2514
    %2552 = vmatprep.subr.bf16.mxu0 0
    %2553 = vmatpush1.bf16.msra.mxu0 %v2515
    %2554 = vmatprep.subr.bf16.mxu0 0
    %2555 = vmatpush1.bf16.msra.mxu0 %v2516
    %2556 = vmatprep.subr.bf16.mxu0 0
    %2557 = vmatpush1.bf16.msra.mxu0 %v2517
    %2558 = vmatprep.subr.bf16.mxu0 0
    %2559 = vmatpush1.bf16.msra.mxu0 %v2518
    %2560 = vmatprep.subr.bf16.mxu0 0
    %2561 = vmatpush1.bf16.msra.mxu0 %v2519
    %2562 = vmatprep.subr.bf16.mxu0 0
    %2563 = vmatpush1.bf16.msra.mxu0 %v2520
    %2564 = vmatprep.subr.bf16.mxu0 0
    %2565 = vmatpush1.bf16.msra.mxu0 %v2521
    %2566 = vmatprep.subr.bf16.mxu0 0
    %2567 = vmatpush1.bf16.msra.mxu0 %v2522
    %2568 = vmatprep.subr.bf16.mxu0 0
    %2569 = vmatpush1.bf16.msra.mxu0 %v2523
    %2570 = vmatprep.subr.bf16.mxu0 0
    %2571 = vmatpush1.bf16.msra.mxu0 %v2524
    %2572 = vmatprep.subr.bf16.mxu0 0
    %2573 = vmatpush1.bf16.msra.mxu0 %v2525
    %2574 = vmatprep.mubr.bf16.mxu0 %v2441
    %2575 = vmatmul.mubr.bf16.gmra.mrb[0].mxu0 %v2440
    %v2576 = vpop.f32.mrb[0].mxu0
    %v2577 = vadd.f32 0.0, %v2576
    %v2578 = vpop.f32.mrb[0].mxu0
    %v2579 = vpop.f32.mrb[0].mxu0
    %v2580 = vadd.f32 0.0, %v2579
    %v2581 = vpop.f32.mrb[0].mxu0
    %2582 = vmatprep.mubr.bf16.mxu0 %v2443
    %2583 = vmatmul.mubr.bf16.gmra.mrb[0].mxu0 %v2442
    %v2584 = vpop.f32.mrb[0].mxu0
    %v2585 = vadd.f32 0.0, %v2584
    %v2586 = vpop.f32.mrb[0].mxu0
    %v2587 = vpop.f32.mrb[0].mxu0
    %v2588 = vadd.f32 0.0, %v2587
    %v2589 = vpop.f32.mrb[0].mxu0
    %2590 = vmatprep.mubr.bf16.mxu0 %v2445
    %2591 = vmatmul.mubr.bf16.gmra.mrb[0].mxu0 %v2444
    %v2592 = vpop.f32.mrb[0].mxu0
    %v2593 = vadd.f32 0.0, %v2592
    %v2594 = vpop.f32.mrb[0].mxu0
    %v2595 = vpop.f32.mrb[0].mxu0
    %v2596 = vadd.f32 0.0, %v2595
    %v2597 = vpop.f32.mrb[0].mxu0
    %2598 = vdwg.mxu0
    %v2599 = vadd.f32 %v1942, %v2577
    %v2600 = vadd.f32 %v1943, %v2580
    %v2601 = vadd.f32 %v1944, %v2585
    %v2602 = vadd.f32 %v1945, %v2588
    %v2603 = vadd.f32 %v1946, %v2593
    %v2604 = vadd.f32 %v1947, %v2596
    %s2605 = scalar_lea.vmem %s8, 320
    %v2606 = vld [vmem:[%s2605] sm:$0xff]
    %v2607 = vld [vmem:[%s2605 + $0x8] sm:$0xff]
    %v2608 = vld [vmem:[%s2605 + $0x10] sm:$0xf]
    %v2609 = vld [vmem:[%s2605 + $0x14] sm:$0xff]
    %v2610 = vld [vmem:[%s2605 + $0x1c] sm:$0xff]
    %v2611 = vld [vmem:[%s2605 + $0x24] sm:$0xf]
    %v2612 = vld [vmem:[%s2605 + $0x28] sm:$0xff]
    %v2613 = vld [vmem:[%s2605 + $0x30] sm:$0xff]
    %v2614 = vld [vmem:[%s2605 + $0x38] sm:$0xf]
    %v2615 = vld [vmem:[%s2605 + $0x3c] sm:$0xff]
    %v2616 = vld [vmem:[%s2605 + $0x44] sm:$0xff]
    %v2617 = vld [vmem:[%s2605 + $0x4c] sm:$0xf]
    %v2618 = vld [vmem:[%s2605 + $0x50] sm:$0xff]
    %v2619 = vld [vmem:[%s2605 + $0x58] sm:$0xff]
    %v2620 = vld [vmem:[%s2605 + $0x60] sm:$0xf]
    %v2621 = vld [vmem:[%s2605 + $0x64] sm:$0xff]
    %v2622 = vld [vmem:[%s2605 + $0x6c] sm:$0xff]
    %v2623 = vld [vmem:[%s2605 + $0x74] sm:$0xf]
    %v2624 = vld [vmem:[%s2605 + $0x78] sm:$0xff]
    %v2625 = vld [vmem:[%s2605 + $0x80] sm:$0xff]
    %v2626 = vld [vmem:[%s2605 + $0x88] sm:$0xf]
    %v2627 = vld [vmem:[%s2605 + $0x8c] sm:$0xff]
    %v2628 = vld [vmem:[%s2605 + $0x94] sm:$0xff]
    %v2629 = vld [vmem:[%s2605 + $0x9c] sm:$0xf]
    %v2630 = vld [vmem:[%s2605 + $0xa0] sm:$0xff]
    %v2631 = vld [vmem:[%s2605 + $0xa8] sm:$0xff]
    %v2632 = vld [vmem:[%s2605 + $0xb0] sm:$0xf]
    %v2633 = vld [vmem:[%s2605 + $0xb4] sm:$0xff]
    %v2634 = vld [vmem:[%s2605 + $0xbc] sm:$0xff]
    %v2635 = vld [vmem:[%s2605 + $0xc4] sm:$0xf]
    %v2636 = vld [vmem:[%s2605 + $0xc8] sm:$0xff]
    %v2637 = vld [vmem:[%s2605 + $0xd0] sm:$0xff]
    %v2638 = vld [vmem:[%s2605 + $0xd8] sm:$0xf]
    %v2639 = vld [vmem:[%s2605 + $0xdc] sm:$0xff]
    %v2640 = vld [vmem:[%s2605 + $0xe4] sm:$0xff]
    %v2641 = vld [vmem:[%s2605 + $0xec] sm:$0xf]
    %v2642 = vld [vmem:[%s2605 + $0xf0] sm:$0xff]
    %v2643 = vld [vmem:[%s2605 + $0xf8] sm:$0xff]
    %v2644 = vld [vmem:[%s2605 + $0x100] sm:$0xf]
    %v2645 = vld [vmem:[%s2605 + $0x104] sm:$0xff]
    %v2646 = vld [vmem:[%s2605 + $0x10c] sm:$0xff]
    %v2647 = vld [vmem:[%s2605 + $0x114] sm:$0xf]
    %v2648 = vld [vmem:[%s2605 + $0x118] sm:$0xff]
    %v2649 = vld [vmem:[%s2605 + $0x120] sm:$0xff]
    %v2650 = vld [vmem:[%s2605 + $0x128] sm:$0xf]
    %v2651 = vld [vmem:[%s2605 + $0x12c] sm:$0xff]
    %v2652 = vld [vmem:[%s2605 + $0x134] sm:$0xff]
    %v2653 = vld [vmem:[%s2605 + $0x13c] sm:$0xf]
    %s2654 = scalar_lea.vmem %s12, 1
    %v2655 = vld [vmem:[%s2654] sm:$0x1]
    %v2656 = vmul.f32 %v2599, %v2599
    %v2657 = vmul.f32 %v2600, %v2600
    %v2658 = vmul.f32 %v2601, %v2601
    %v2659 = vmul.f32 %v2602, %v2602
    %v2660 = vmul.f32 %v2603, %v2603
    %v2661 = vmul.f32 %v2604, %v2604
    %2662 = vadd.xlane.f32.xlu0 %v2656
    %v2663 = vpop.xlane.xlu0 %2662
    %2664 = vadd.xlane.f32.xlu0 %v2657
    %v2665 = vpop.xlane.xlu0 %2664
    %2666 = vadd.xlane.f32.xlu0 %v2658
    %v2667 = vpop.xlane.xlu0 %2666
    %2668 = vadd.xlane.f32.xlu0 %v2659
    %v2669 = vpop.xlane.xlu0 %2668
    %2670 = vadd.xlane.f32.xlu0 %v2660
    %v2671 = vpop.xlane.xlu0 %2670
    %2672 = vadd.xlane.f32.xlu0 %v2661
    %v2673 = vpop.xlane.xlu0 %2672
    %v2674 = vmul.f32 %v2663, %v200
    %v2675 = vmul.f32 %v2665, %v200
    %v2676 = vmul.f32 %v2667, %v200
    %v2677 = vmul.f32 %v2669, %v200
    %v2678 = vmul.f32 %v2671, %v200
    %v2679 = vmul.f32 %v2673, %v200
    %v2680 = vadd.f32 %v2674, 1e-05
    %v2681 = vadd.f32 %v2675, 1e-05
    %v2682 = vadd.f32 %v2676, 1e-05
    %v2683 = vadd.f32 %v2677, 1e-05
    %v2684 = vadd.f32 %v2678, 1e-05
    %v2685 = vadd.f32 %v2679, 1e-05
    %v2686 = vrsqrt.pop %v2680
    %v2687 = vrsqrt.pop %v2681
    %v2688 = vrsqrt.pop %v2682
    %v2689 = vrsqrt.pop %v2683
    %v2690 = vrsqrt.pop %v2684
    %v2691 = vrsqrt.pop %v2685
    %v2692 = vmul.f32 %v2599, %v2686
    %v2693 = vmul.f32 %v2600, %v2687
    %v2694 = vmul.f32 %v2601, %v2688
    %v2695 = vmul.f32 %v2602, %v2689
    %v2696 = vmul.f32 %v2603, %v2690
    %v2697 = vmul.f32 %v2604, %v2691
    %v2699 = vlaneseq
    %v2700 = vshrl.u32 %v2699, 7
    %v2701 = vsub.s32 0, %v2700
    %v2702 = vrot.slane %v2655, %v2701
    %v2704 = vmul.f32 %v2692, %v2702
    %v2705 = vmul.f32 %v2693, %v2702
    %v2706 = vmul.f32 %v2694, %v2702
    %v2707 = vmul.f32 %v2695, %v2702
    %v2708 = vmul.f32 %v2696, %v2702
    %v2709 = vmul.f32 %v2697, %v2702
    %v2710 = vpack.c.bf16 %v2705, %v2704
    %v2711 = vpack.c.bf16 %v2707, %v2706
    %v2712 = vpack.c.bf16 %v2709, %v2708
    %v2761 = vunpack.c.l.b16 %v2606
    %v2762 = vunpack.c.h.b16 %v2606
    %v2763 = vunpack.c.l.b16 %v2607
    %v2764 = vunpack.c.h.b16 %v2607
    %v2765 = vunpack.c.l.b16 %v2608
    %v2766 = vunpack.c.l.b16 %v2609
    %v2767 = vunpack.c.h.b16 %v2609
    %v2768 = vunpack.c.l.b16 %v2610
    %v2769 = vunpack.c.h.b16 %v2610
    %v2770 = vunpack.c.l.b16 %v2611
    %v2771 = vunpack.c.l.b16 %v2612
    %v2772 = vunpack.c.h.b16 %v2612
    %v2773 = vunpack.c.l.b16 %v2613
    %v2774 = vunpack.c.h.b16 %v2613
    %v2775 = vunpack.c.l.b16 %v2614
    %v2776 = vunpack.c.l.b16 %v2615
    %v2777 = vunpack.c.h.b16 %v2615
    %v2778 = vunpack.c.l.b16 %v2616
    %v2779 = vunpack.c.h.b16 %v2616
    %v2780 = vunpack.c.l.b16 %v2617
    %v2781 = vunpack.c.l.b16 %v2618
    %v2782 = vunpack.c.h.b16 %v2618
    %v2783 = vunpack.c.l.b16 %v2619
    %v2784 = vunpack.c.h.b16 %v2619
    %v2785 = vunpack.c.l.b16 %v2620
    %v2786 = vunpack.c.l.b16 %v2621
    %v2787 = vunpack.c.h.b16 %v2621
    %v2788 = vunpack.c.l.b16 %v2622
    %v2789 = vunpack.c.h.b16 %v2622
    %v2790 = vunpack.c.l.b16 %v2623
    %v2791 = vunpack.c.l.b16 %v2624
    %v2792 = vunpack.c.h.b16 %v2624
    %v2793 = vunpack.c.l.b16 %v2625
    %v2794 = vunpack.c.h.b16 %v2625
    %v2795 = vunpack.c.l.b16 %v2626
    %v2796 = vunpack.c.l.b16 %v2627
    %v2797 = vunpack.c.h.b16 %v2627
    %v2798 = vunpack.c.l.b16 %v2628
    %v2799 = vunpack.c.h.b16 %v2628
    %v2800 = vunpack.c.l.b16 %v2629
    %v2801 = vunpack.c.l.b16 %v2630
    %v2802 = vunpack.c.h.b16 %v2630
    %v2803 = vunpack.c.l.b16 %v2631
    %v2804 = vunpack.c.h.b16 %v2631
    %v2805 = vunpack.c.l.b16 %v2632
    %v2806 = vunpack.c.l.b16 %v2633
    %v2807 = vunpack.c.h.b16 %v2633
    %v2808 = vunpack.c.l.b16 %v2634
    %v2809 = vunpack.c.h.b16 %v2634
    %v2810 = vunpack.c.l.b16 %v2635
    %v2811 = vunpack.c.l.b16 %v2636
    %v2812 = vunpack.c.h.b16 %v2636
    %v2813 = vunpack.c.l.b16 %v2637
    %v2814 = vunpack.c.h.b16 %v2637
    %v2815 = vunpack.c.l.b16 %v2638
    %v2816 = vunpack.c.l.b16 %v2639
    %v2817 = vunpack.c.h.b16 %v2639
    %v2818 = vunpack.c.l.b16 %v2640
    %v2819 = vunpack.c.h.b16 %v2640
    %v2820 = vunpack.c.l.b16 %v2641
    %v2821 = vunpack.c.l.b16 %v2642
    %v2822 = vunpack.c.h.b16 %v2642
    %v2823 = vunpack.c.l.b16 %v2643
    %v2824 = vunpack.c.h.b16 %v2643
    %v2825 = vunpack.c.l.b16 %v2644
    %v2826 = vunpack.c.l.b16 %v2645
    %v2827 = vunpack.c.h.b16 %v2645
    %v2828 = vunpack.c.l.b16 %v2646
    %v2829 = vunpack.c.h.b16 %v2646
    %v2830 = vunpack.c.l.b16 %v2647
    %v2831 = vunpack.c.l.b16 %v2648
    %v2832 = vunpack.c.h.b16 %v2648
    %v2833 = vunpack.c.l.b16 %v2649
    %v2834 = vunpack.c.h.b16 %v2649
    %v2835 = vunpack.c.l.b16 %v2650
    %v2836 = vunpack.c.l.b16 %v2651
    %v2837 = vunpack.c.h.b16 %v2651
    %v2838 = vunpack.c.l.b16 %v2652
    %v2839 = vunpack.c.h.b16 %v2652
    %v2840 = vunpack.c.l.b16 %v2653
    %v2841 = vpack.c.b16 %v2766, %v2761
    %v2842 = vpack.c.b16 %v2767, %v2762
    %v2843 = vpack.c.b16 %v2768, %v2763
    %v2844 = vpack.c.b16 %v2769, %v2764
    %v2845 = vpack.c.b16 %v2770, %v2765
    %v2846 = vpack.c.b16 %v2776, %v2771
    %v2847 = vpack.c.b16 %v2777, %v2772
    %v2848 = vpack.c.b16 %v2778, %v2773
    %v2849 = vpack.c.b16 %v2779, %v2774
    %v2850 = vpack.c.b16 %v2780, %v2775
    %v2851 = vpack.c.b16 %v2786, %v2781
    %v2852 = vpack.c.b16 %v2787, %v2782
    %v2853 = vpack.c.b16 %v2788, %v2783
    %v2854 = vpack.c.b16 %v2789, %v2784
    %v2855 = vpack.c.b16 %v2790, %v2785
    %v2856 = vpack.c.b16 %v2796, %v2791
    %v2857 = vpack.c.b16 %v2797, %v2792
    %v2858 = vpack.c.b16 %v2798, %v2793
    %v2859 = vpack.c.b16 %v2799, %v2794
    %v2860 = vpack.c.b16 %v2800, %v2795
    %v2861 = vpack.c.b16 %v2806, %v2801
    %v2862 = vpack.c.b16 %v2807, %v2802
    %v2863 = vpack.c.b16 %v2808, %v2803
    %v2864 = vpack.c.b16 %v2809, %v2804
    %v2865 = vpack.c.b16 %v2810, %v2805
    %v2866 = vpack.c.b16 %v2816, %v2811
    %v2867 = vpack.c.b16 %v2817, %v2812
    %v2868 = vpack.c.b16 %v2818, %v2813
    %v2869 = vpack.c.b16 %v2819, %v2814
    %v2870 = vpack.c.b16 %v2820, %v2815
    %v2871 = vpack.c.b16 %v2826, %v2821
    %v2872 = vpack.c.b16 %v2827, %v2822
    %v2873 = vpack.c.b16 %v2828, %v2823
    %v2874 = vpack.c.b16 %v2829, %v2824
    %v2875 = vpack.c.b16 %v2830, %v2825
    %v2876 = vpack.c.b16 %v2836, %v2831
    %v2877 = vpack.c.b16 %v2837, %v2832
    %v2878 = vpack.c.b16 %v2838, %v2833
    %v2879 = vpack.c.b16 %v2839, %v2834
    %v2880 = vpack.c.b16 %v2840, %v2835
    %2921 = vmatprep.subr.bf16.mxu0 %v2842
    %2922 = vmatpush1.bf16.msra.mxu0 %v2841
    %2923 = vmatprep.subr.bf16.mxu0 %v2847
    %2924 = vmatpush1.bf16.msra.mxu0 %v2846
    %2925 = vmatprep.subr.bf16.mxu0 %v2852
    %2926 = vmatpush1.bf16.msra.mxu0 %v2851
    %2927 = vmatprep.subr.bf16.mxu0 %v2857
    %2928 = vmatpush1.bf16.msra.mxu0 %v2856
    %2929 = vmatprep.subr.bf16.mxu0 %v2862
    %2930 = vmatpush1.bf16.msra.mxu0 %v2861
    %2931 = vmatprep.subr.bf16.mxu0 %v2867
    %2932 = vmatpush1.bf16.msra.mxu0 %v2866
    %2933 = vmatprep.subr.bf16.mxu0 %v2872
    %2934 = vmatpush1.bf16.msra.mxu0 %v2871
    %2935 = vmatprep.subr.bf16.mxu0 %v2877
    %2936 = vmatpush1.bf16.msra.mxu0 %v2876
    %2937 = vmatprep.subr.bf16.mxu0 0
    %2938 = vmatpush1.bf16.msra.mxu0 0
    %2939 = vmatprep.subr.bf16.mxu0 0
    %2940 = vmatpush1.bf16.msra.mxu0 0
    %2941 = vmatprep.subr.bf16.mxu0 0
    %2942 = vmatpush1.bf16.msra.mxu0 0
    %2943 = vmatprep.subr.bf16.mxu0 0
    %2944 = vmatpush1.bf16.msra.mxu0 0
    %2945 = vmatprep.subr.bf16.mxu0 0
    %2946 = vmatpush1.bf16.msra.mxu0 0
    %2947 = vmatprep.subr.bf16.mxu0 0
    %2948 = vmatpush1.bf16.msra.mxu0 0
    %2949 = vmatprep.subr.bf16.mxu0 0
    %2950 = vmatpush1.bf16.msra.mxu0 0
    %2951 = vmatprep.subr.bf16.mxu0 0
    %2952 = vmatpush1.bf16.msra.mxu0 0
    %2953 = vmatprep.mubr.bf16.mxu0 0
    %2954 = vmatmul.mubr.bf16.gmra.mrb[0].mxu0 %v2710
    %v2955 = vpop.f32.mrb[0].mxu0
    %v2956 = vadd.f32 0.0, %v2955
    %v2957 = vpop.f32.mrb[0].mxu0
    %v2958 = vadd.f32 0.0, %v2957
    %v2959 = vpop.f32.mrb[0].mxu0
    %v2960 = vadd.f32 0.0, %v2959
    %v2961 = vpop.f32.mrb[0].mxu0
    %v2962 = vadd.f32 0.0, %v2961
    %2963 = vmatprep.mubr.bf16.mxu0 0
    %2964 = vmatmul.mubr.bf16.gmra.mrb[0].mxu0 %v2711
    %v2965 = vpop.f32.mrb[0].mxu0
    %v2966 = vadd.f32 0.0, %v2965
    %v2967 = vpop.f32.mrb[0].mxu0
    %v2968 = vadd.f32 0.0, %v2967
    %v2969 = vpop.f32.mrb[0].mxu0
    %v2970 = vadd.f32 0.0, %v2969
    %v2971 = vpop.f32.mrb[0].mxu0
    %v2972 = vadd.f32 0.0, %v2971
    %2973 = vmatprep.mubr.bf16.mxu0 0
    %2974 = vmatmul.mubr.bf16.gmra.mrb[0].mxu0 %v2712
    %v2975 = vpop.f32.mrb[0].mxu0
    %v2976 = vadd.f32 0.0, %v2975
    %v2977 = vpop.f32.mrb[0].mxu0
    %v2978 = vadd.f32 0.0, %v2977
    %v2979 = vpop.f32.mrb[0].mxu0
    %v2980 = vadd.f32 0.0, %v2979
    %v2981 = vpop.f32.mrb[0].mxu0
    %v2982 = vadd.f32 0.0, %v2981
    %2983 = vdwg.mxu0
    %2984 = vmatprep.subr.bf16.mxu0 %v2844
    %2985 = vmatpush1.bf16.msra.mxu0 %v2843
    %2986 = vmatprep.subr.bf16.mxu0 %v2849
    %2987 = vmatpush1.bf16.msra.mxu0 %v2848
    %2988 = vmatprep.subr.bf16.mxu0 %v2854
    %2989 = vmatpush1.bf16.msra.mxu0 %v2853
    %2990 = vmatprep.subr.bf16.mxu0 %v2859
    %2991 = vmatpush1.bf16.msra.mxu0 %v2858
    %2992 = vmatprep.subr.bf16.mxu0 %v2864
    %2993 = vmatpush1.bf16.msra.mxu0 %v2863
    %2994 = vmatprep.subr.bf16.mxu0 %v2869
    %2995 = vmatpush1.bf16.msra.mxu0 %v2868
    %2996 = vmatprep.subr.bf16.mxu0 %v2874
    %2997 = vmatpush1.bf16.msra.mxu0 %v2873
    %2998 = vmatprep.subr.bf16.mxu0 %v2879
    %2999 = vmatpush1.bf16.msra.mxu0 %v2878
    %3000 = vmatprep.subr.bf16.mxu0 0
    %3001 = vmatpush1.bf16.msra.mxu0 0
    %3002 = vmatprep.subr.bf16.mxu0 0
    %3003 = vmatpush1.bf16.msra.mxu0 0
    %3004 = vmatprep.subr.bf16.mxu0 0
    %3005 = vmatpush1.bf16.msra.mxu0 0
    %3006 = vmatprep.subr.bf16.mxu0 0
    %3007 = vmatpush1.bf16.msra.mxu0 0
    %3008 = vmatprep.subr.bf16.mxu0 0
    %3009 = vmatpush1.bf16.msra.mxu0 0
    %3010 = vmatprep.subr.bf16.mxu0 0
    %3011 = vmatpush1.bf16.msra.mxu0 0
    %3012 = vmatprep.subr.bf16.mxu0 0
    %3013 = vmatpush1.bf16.msra.mxu0 0
    %3014 = vmatprep.subr.bf16.mxu0 0
    %3015 = vmatpush1.bf16.msra.mxu0 0
    %3016 = vmatprep.mubr.bf16.mxu0 0
    %3017 = vmatmul.mubr.bf16.gmra.mrb[0].mxu0 %v2710
    %v3018 = vpop.f32.mrb[0].mxu0
    %v3019 = vadd.f32 0.0, %v3018
    %v3020 = vpop.f32.mrb[0].mxu0
    %v3021 = vadd.f32 0.0, %v3020
    %v3022 = vpop.f32.mrb[0].mxu0
    %v3023 = vadd.f32 0.0, %v3022
    %v3024 = vpop.f32.mrb[0].mxu0
    %v3025 = vadd.f32 0.0, %v3024
    %3026 = vmatprep.mubr.bf16.mxu0 0
    %3027 = vmatmul.mubr.bf16.gmra.mrb[0].mxu0 %v2711
    %v3028 = vpop.f32.mrb[0].mxu0
    %v3029 = vadd.f32 0.0, %v3028
    %v3030 = vpop.f32.mrb[0].mxu0
    %v3031 = vadd.f32 0.0, %v3030
    %v3032 = vpop.f32.mrb[0].mxu0
    %v3033 = vadd.f32 0.0, %v3032
    %v3034 = vpop.f32.mrb[0].mxu0
    %v3035 = vadd.f32 0.0, %v3034
    %3036 = vmatprep.mubr.bf16.mxu0 0
    %3037 = vmatmul.mubr.bf16.gmra.mrb[0].mxu0 %v2712
    %v3038 = vpop.f32.mrb[0].mxu0
    %v3039 = vadd.f32 0.0, %v3038
    %v3040 = vpop.f32.mrb[0].mxu0
    %v3041 = vadd.f32 0.0, %v3040
    %v3042 = vpop.f32.mrb[0].mxu0
    %v3043 = vadd.f32 0.0, %v3042
    %v3044 = vpop.f32.mrb[0].mxu0
    %v3045 = vadd.f32 0.0, %v3044
    %3046 = vdwg.mxu0
    %3047 = vmatprep.subr.bf16.mxu0 0
    %3048 = vmatpush1.bf16.msra.mxu0 %v2845
    %3049 = vmatprep.subr.bf16.mxu0 0
    %3050 = vmatpush1.bf16.msra.mxu0 %v2850
    %3051 = vmatprep.subr.bf16.mxu0 0
    %3052 = vmatpush1.bf16.msra.mxu0 %v2855
    %3053 = vmatprep.subr.bf16.mxu0 0
    %3054 = vmatpush1.bf16.msra.mxu0 %v2860
    %3055 = vmatprep.subr.bf16.mxu0 0
    %3056 = vmatpush1.bf16.msra.mxu0 %v2865
    %3057 = vmatprep.subr.bf16.mxu0 0
    %3058 = vmatpush1.bf16.msra.mxu0 %v2870
    %3059 = vmatprep.subr.bf16.mxu0 0
    %3060 = vmatpush1.bf16.msra.mxu0 %v2875
    %3061 = vmatprep.subr.bf16.mxu0 0
    %3062 = vmatpush1.bf16.msra.mxu0 %v2880
    %3063 = vmatprep.subr.bf16.mxu0 0
    %3064 = vmatpush1.bf16.msra.mxu0 0
    %3065 = vmatprep.subr.bf16.mxu0 0
    %3066 = vmatpush1.bf16.msra.mxu0 0
    %3067 = vmatprep.subr.bf16.mxu0 0
    %3068 = vmatpush1.bf16.msra.mxu0 0
    %3069 = vmatprep.subr.bf16.mxu0 0
    %3070 = vmatpush1.bf16.msra.mxu0 0
    %3071 = vmatprep.subr.bf16.mxu0 0
    %3072 = vmatpush1.bf16.msra.mxu0 0
    %3073 = vmatprep.subr.bf16.mxu0 0
    %3074 = vmatpush1.bf16.msra.mxu0 0
    %3075 = vmatprep.subr.bf16.mxu0 0
    %3076 = vmatpush1.bf16.msra.mxu0 0
    %3077 = vmatprep.subr.bf16.mxu0 0
    %3078 = vmatpush1.bf16.msra.mxu0 0
    %3079 = vmatprep.mubr.bf16.mxu0 0
    %3080 = vmatmul.mubr.bf16.gmra.mrb[0].mxu0 %v2710
    %v3081 = vpop.f32.mrb[0].mxu0
    %v3082 = vadd.f32 0.0, %v3081
    %v3083 = vpop.f32.mrb[0].mxu0
    %v3084 = vpop.f32.mrb[0].mxu0
    %v3085 = vadd.f32 0.0, %v3084
    %v3086 = vpop.f32.mrb[0].mxu0
    %3087 = vmatprep.mubr.bf16.mxu0 0
    %3088 = vmatmul.mubr.bf16.gmra.mrb[0].mxu0 %v2711
    %v3089 = vpop.f32.mrb[0].mxu0
    %v3090 = vadd.f32 0.0, %v3089
    %v3091 = vpop.f32.mrb[0].mxu0
    %v3092 = vpop.f32.mrb[0].mxu0
    %v3093 = vadd.f32 0.0, %v3092
    %v3094 = vpop.f32.mrb[0].mxu0
    %3095 = vmatprep.mubr.bf16.mxu0 0
    %3096 = vmatmul.mubr.bf16.gmra.mrb[0].mxu0 %v2712
    %v3097 = vpop.f32.mrb[0].mxu0
    %v3098 = vadd.f32 0.0, %v3097
    %v3099 = vpop.f32.mrb[0].mxu0
    %v3100 = vpop.f32.mrb[0].mxu0
    %v3101 = vadd.f32 0.0, %v3100
    %v3102 = vpop.f32.mrb[0].mxu0
    %3103 = vdwg.mxu0
    %v3104 = vmul.f32 %v2956, %v115
    %v3105 = vmul.f32 %v2960, %v116
    %v3106 = vmul.f32 %v2966, %v117
    %v3107 = vmul.f32 %v2970, %v118
    %v3108 = vmul.f32 %v2976, %v119
    %v3109 = vmul.f32 %v2980, %v120
    %v3110 = vmul.f32 %v3021, %v121
    %v3111 = vmul.f32 %v3025, %v122
    %v3112 = vmul.f32 %v3031, %v123
    %v3113 = vmul.f32 %v3035, %v124
    %v3114 = vmul.f32 %v3041, %v125
    %v3115 = vmul.f32 %v3045, %v126
    %v3116 = vadd.f32 %v3104, %v3110
    %v3117 = vadd.f32 %v3105, %v3111
    %v3118 = vadd.f32 %v3106, %v3112
    %v3119 = vadd.f32 %v3107, %v3113
    %v3120 = vadd.f32 %v3108, %v3114
    %v3121 = vadd.f32 %v3109, %v3115
    %v3122 = vmul.f32 %v2958, %v115
    %v3123 = vmul.f32 %v2962, %v116
    %v3124 = vmul.f32 %v2968, %v117
    %v3125 = vmul.f32 %v2972, %v118
    %v3126 = vmul.f32 %v2978, %v119
    %v3127 = vmul.f32 %v2982, %v120
    %v3128 = vmul.f32 %v3082, %v121
    %v3129 = vmul.f32 %v3085, %v122
    %v3130 = vmul.f32 %v3090, %v123
    %v3131 = vmul.f32 %v3093, %v124
    %v3132 = vmul.f32 %v3098, %v125
    %v3133 = vmul.f32 %v3101, %v126
    %v3134 = vadd.f32 %v3122, %v3128
    %v3135 = vadd.f32 %v3123, %v3129
    %v3136 = vadd.f32 %v3124, %v3130
    %v3137 = vadd.f32 %v3125, %v3131
    %v3138 = vadd.f32 %v3126, %v3132
    %v3139 = vadd.f32 %v3127, %v3133
    %v3140 = vpack.c.bf16 %v3117, %v3116
    %v3141 = vpack.c.bf16 %v3119, %v3118
    %v3142 = vpack.c.bf16 %v3121, %v3120
    %v3143 = vpack.c.bf16 %v3135, %v3134
    %v3144 = vpack.c.bf16 %v3137, %v3136
    %v3145 = vpack.c.bf16 %v3139, %v3138
    %v3146 = vpack.c.bf16 %v3023, %v3019
    %v3147 = vpack.c.bf16 %v3033, %v3029
    %v3148 = vpack.c.bf16 %v3043, %v3039
    %v3150 = vsel %vm676, %v3140, 0
    %v3153 = vsel %vm676, %v3141, 0
    %v3156 = vsel %vm676, %v3142, 0
    %v3159 = vsel %vm676, %v3143, 0
    %v3162 = vsel %vm676, %v3144, 0
    %v3165 = vsel %vm676, %v3145, 0
    %3167 = vmatprep.subr.bf16.mxu0 0
    %3168 = vmatpush1.bf16.xpose.msra.mxu0 %v3159
    %3169 = vmatprep.subr.bf16.mxu0 0
    %3170 = vmatpush1.bf16.xpose.msra.mxu0 %v3162
    %3171 = vmatprep.subr.bf16.mxu0 0
    %3172 = vmatpush1.bf16.xpose.msra.mxu0 %v3165
    %3173 = vmatprep.subr.bf16.mxu0 0
    %3174 = vmatpush1.bf16.xpose.msra.mxu0 0
    %3175 = vmatprep.subr.bf16.mxu0 0
    %3176 = vmatpush1.bf16.xpose.msra.mxu0 0
    %3177 = vmatprep.subr.bf16.mxu0 0
    %3178 = vmatpush1.bf16.xpose.msra.mxu0 0
    %3179 = vmatprep.subr.bf16.mxu0 0
    %3180 = vmatpush1.bf16.xpose.msra.mxu0 0
    %3181 = vmatprep.subr.bf16.mxu0 0
    %3182 = vmatpush1.bf16.xpose.msra.mxu0 0
    %3183 = vmatprep.subr.bf16.mxu0 0
    %3184 = vmatpush1.bf16.xpose.msra.mxu0 0
    %3185 = vmatprep.subr.bf16.mxu0 0
    %3186 = vmatpush1.bf16.xpose.msra.mxu0 0
    %3187 = vmatprep.subr.bf16.mxu0 0
    %3188 = vmatpush1.bf16.xpose.msra.mxu0 0
    %3189 = vmatprep.subr.bf16.mxu0 0
    %3190 = vmatpush1.bf16.xpose.msra.mxu0 0
    %3191 = vmatprep.subr.bf16.mxu0 0
    %3192 = vmatpush1.bf16.xpose.msra.mxu0 0
    %3193 = vmatprep.subr.bf16.mxu0 0
    %3194 = vmatpush1.bf16.xpose.msra.mxu0 0
    %3195 = vmatprep.subr.bf16.mxu0 0
    %3196 = vmatpush1.bf16.xpose.msra.mxu0 0
    %3197 = vmatprep.subr.bf16.mxu0 0
    %3198 = vmatpush1.bf16.xpose.msra.mxu0 0
    %3199 = vmatprep.mubr.bf16.mxu0 0
    %3200 = vmatmul.mubr.bf16.gmra.mrb[0].mxu0 %v3150
    %v3201 = vpop.f32.mrb[0].mxu0
    %v3202 = vadd.f32 %v127, %v3201
    %v3203 = vpop.f32.mrb[0].mxu0
    %v3204 = vpop.f32.mrb[0].mxu0
    %v3205 = vadd.f32 %v128, %v3204
    %v3206 = vpop.f32.mrb[0].mxu0
    %3207 = vmatprep.mubr.bf16.mxu0 0
    %3208 = vmatmul.mubr.bf16.gmra.mrb[0].mxu0 %v3153
    %v3209 = vpop.f32.mrb[0].mxu0
    %v3210 = vadd.f32 %v129, %v3209
    %v3211 = vpop.f32.mrb[0].mxu0
    %v3212 = vpop.f32.mrb[0].mxu0
    %v3213 = vadd.f32 %v130, %v3212
    %v3214 = vpop.f32.mrb[0].mxu0
    %3215 = vmatprep.mubr.bf16.mxu0 0
    %3216 = vmatmul.mubr.bf16.gmra.mrb[0].mxu0 %v3156
    %v3217 = vpop.f32.mrb[0].mxu0
    %v3218 = vadd.f32 %v131, %v3217
    %v3219 = vpop.f32.mrb[0].mxu0
    %v3220 = vpop.f32.mrb[0].mxu0
    %v3221 = vadd.f32 %v132, %v3220
    %v3222 = vpop.f32.mrb[0].mxu0
    %3223 = vdwg.mxu0
    %v3224 = vsel %vm752, %v3202, -inf
    %3225 = vmax.xlane.f32.xlu0 %v3224
    %v3226 = vpop.xlane.xlu0 %3225
    %v3227 = vsel %vm752, %v3205, -inf
    %3228 = vmax.xlane.f32.xlu0 %v3227
    %v3229 = vpop.xlane.xlu0 %3228
    %v3230 = vsel %vm752, %v3210, -inf
    %3231 = vmax.xlane.f32.xlu0 %v3230
    %v3232 = vpop.xlane.xlu0 %3231
    %v3233 = vsel %vm752, %v3213, -inf
    %3234 = vmax.xlane.f32.xlu0 %v3233
    %v3235 = vpop.xlane.xlu0 %3234
    %v3236 = vsel %vm752, %v3218, -inf
    %3237 = vmax.xlane.f32.xlu0 %v3236
    %v3238 = vpop.xlane.xlu0 %3237
    %v3239 = vsel %vm752, %v3221, -inf
    %3240 = vmax.xlane.f32.xlu0 %v3239
    %v3241 = vpop.xlane.xlu0 %3240
    %v3242 = vsub.f32 %v3202, %v3226
    %v3243 = vsub.f32 %v3205, %v3229
    %v3244 = vsub.f32 %v3210, %v3232
    %v3245 = vsub.f32 %v3213, %v3235
    %v3246 = vsub.f32 %v3218, %v3238
    %v3247 = vsub.f32 %v3221, %v3241
    %v3248 = vmul.f32 %v3242, 1.442695
    %v3249 = vpow.pop %v3248
    %v3250 = vmul.f32 %v3243, 1.442695
    %v3251 = vpow.pop %v3250
    %v3252 = vmul.f32 %v3244, 1.442695
    %v3253 = vpow.pop %v3252
    %v3254 = vmul.f32 %v3245, 1.442695
    %v3255 = vpow.pop %v3254
    %v3256 = vmul.f32 %v3246, 1.442695
    %v3257 = vpow.pop %v3256
    %v3258 = vmul.f32 %v3247, 1.442695
    %v3259 = vpow.pop %v3258
    %v3260 = vsel %vm752, %v3249, 0.0
    %3261 = vadd.xlane.f32.xlu0 %v3260
    %v3262 = vpop.xlane.xlu0 %3261
    %v3263 = vsel %vm752, %v3251, 0.0
    %3264 = vadd.xlane.f32.xlu0 %v3263
    %v3265 = vpop.xlane.xlu0 %3264
    %v3266 = vsel %vm752, %v3253, 0.0
    %3267 = vadd.xlane.f32.xlu0 %v3266
    %v3268 = vpop.xlane.xlu0 %3267
    %v3269 = vsel %vm752, %v3255, 0.0
    %3270 = vadd.xlane.f32.xlu0 %v3269
    %v3271 = vpop.xlane.xlu0 %3270
    %v3272 = vsel %vm752, %v3257, 0.0
    %3273 = vadd.xlane.f32.xlu0 %v3272
    %v3274 = vpop.xlane.xlu0 %3273
    %v3275 = vsel %vm752, %v3259, 0.0
    %3276 = vadd.xlane.f32.xlu0 %v3275
    %v3277 = vpop.xlane.xlu0 %3276
    %v3278 = vrcp.pop %v3262
    %v3279 = vrcp.pop %v3265
    %v3280 = vrcp.pop %v3268
    %v3281 = vrcp.pop %v3271
    %v3282 = vrcp.pop %v3274
    %v3283 = vrcp.pop %v3277
    %v3284 = vmul.f32 %v3249, %v3278
    %v3285 = vmul.f32 %v3251, %v3279
    %v3286 = vmul.f32 %v3253, %v3280
    %v3287 = vmul.f32 %v3255, %v3281
    %v3288 = vmul.f32 %v3257, %v3282
    %v3289 = vmul.f32 %v3259, %v3283
    %v3290 = vpack.c.bf16 %v3285, %v3284
    %v3291 = vpack.c.bf16 %v3287, %v3286
    %v3292 = vpack.c.bf16 %v3289, %v3288
    %v3294 = vsel %vm752, %v3290, 0
    %v3297 = vsel %vm752, %v3291, 0
    %v3300 = vsel %vm752, %v3292, 0
    %3302 = vmatprep.subr.bf16.mxu0 0
    %3303 = vmatpush1.bf16.msra.mxu0 %v3146
    %3304 = vmatprep.subr.bf16.mxu0 0
    %3305 = vmatpush1.bf16.msra.mxu0 %v3147
    %3306 = vmatprep.subr.bf16.mxu0 0
    %3307 = vmatpush1.bf16.msra.mxu0 %v3148
    %3308 = vmatprep.subr.bf16.mxu0 0
    %3309 = vmatpush1.bf16.msra.mxu0 0
    %3310 = vmatprep.subr.bf16.mxu0 0
    %3311 = vmatpush1.bf16.msra.mxu0 0
    %3312 = vmatprep.subr.bf16.mxu0 0
    %3313 = vmatpush1.bf16.msra.mxu0 0
    %3314 = vmatprep.subr.bf16.mxu0 0
    %3315 = vmatpush1.bf16.msra.mxu0 0
    %3316 = vmatprep.subr.bf16.mxu0 0
    %3317 = vmatpush1.bf16.msra.mxu0 0
    %3318 = vmatprep.subr.bf16.mxu0 0
    %3319 = vmatpush1.bf16.msra.mxu0 0
    %3320 = vmatprep.subr.bf16.mxu0 0
    %3321 = vmatpush1.bf16.msra.mxu0 0
    %3322 = vmatprep.subr.bf16.mxu0 0
    %3323 = vmatpush1.bf16.msra.mxu0 0
    %3324 = vmatprep.subr.bf16.mxu0 0
    %3325 = vmatpush1.bf16.msra.mxu0 0
    %3326 = vmatprep.subr.bf16.mxu0 0
    %3327 = vmatpush1.bf16.msra.mxu0 0
    %3328 = vmatprep.subr.bf16.mxu0 0
    %3329 = vmatpush1.bf16.msra.mxu0 0
    %3330 = vmatprep.subr.bf16.mxu0 0
    %3331 = vmatpush1.bf16.msra.mxu0 0
    %3332 = vmatprep.subr.bf16.mxu0 0
    %3333 = vmatpush1.bf16.msra.mxu0 0
    %3334 = vmatprep.mubr.bf16.mxu0 0
    %3335 = vmatmul.mubr.bf16.gmra.mrb[0].mxu0 %v3294
    %v3336 = vpop.f32.mrb[0].mxu0
    %v3337 = vadd.f32 0.0, %v3336
    %v3338 = vpop.f32.mrb[0].mxu0
    %v3339 = vpop.f32.mrb[0].mxu0
    %v3340 = vadd.f32 0.0, %v3339
    %v3341 = vpop.f32.mrb[0].mxu0
    %3342 = vmatprep.mubr.bf16.mxu0 0
    %3343 = vmatmul.mubr.bf16.gmra.mrb[0].mxu0 %v3297
    %v3344 = vpop.f32.mrb[0].mxu0
    %v3345 = vadd.f32 0.0, %v3344
    %v3346 = vpop.f32.mrb[0].mxu0
    %v3347 = vpop.f32.mrb[0].mxu0
    %v3348 = vadd.f32 0.0, %v3347
    %v3349 = vpop.f32.mrb[0].mxu0
    %3350 = vmatprep.mubr.bf16.mxu0 0
    %3351 = vmatmul.mubr.bf16.gmra.mrb[0].mxu0 %v3300
    %v3352 = vpop.f32.mrb[0].mxu0
    %v3353 = vadd.f32 0.0, %v3352
    %v3354 = vpop.f32.mrb[0].mxu0
    %v3355 = vpop.f32.mrb[0].mxu0
    %v3356 = vadd.f32 0.0, %v3355
    %v3357 = vpop.f32.mrb[0].mxu0
    %3358 = vdwg.mxu0
    %s3359 = scalar_lea.vmem [#allocation2], 64
    %v3360 = vld [vmem:[%s3359] sm:$0xf]
    %v3361 = vld [vmem:[%s3359 + $0x4] sm:$0xf]
    %v3362 = vld [vmem:[%s3359 + $0x8] sm:$0xf]
    %v3363 = vld [vmem:[%s3359 + $0xc] sm:$0xf]
    %v3364 = vld [vmem:[%s3359 + $0x10] sm:$0xf]
    %v3365 = vld [vmem:[%s3359 + $0x14] sm:$0xf]
    %v3366 = vld [vmem:[%s3359 + $0x18] sm:$0xf]
    %v3367 = vld [vmem:[%s3359 + $0x1c] sm:$0xf]
    %v3368 = vld [vmem:[%s3359 + $0x20] sm:$0xf]
    %v3369 = vld [vmem:[%s3359 + $0x24] sm:$0xf]
    %v3370 = vld [vmem:[%s3359 + $0x28] sm:$0xf]
    %v3371 = vld [vmem:[%s3359 + $0x2c] sm:$0xf]
    %v3372 = vld [vmem:[%s3359 + $0x30] sm:$0xf]
    %v3373 = vld [vmem:[%s3359 + $0x34] sm:$0xf]
    %v3374 = vld [vmem:[%s3359 + $0x38] sm:$0xf]
    %v3375 = vld [vmem:[%s3359 + $0x3c] sm:$0xf]
    %v3376 = vpack.c.bf16 %v3340, %v3337
    %v3377 = vpack.c.bf16 %v3348, %v3345
    %v3378 = vpack.c.bf16 %v3356, %v3353
    %3382 = vrot.lane.b32.xlu0 %v3140, 96
    %v3383 = vpop.permute.xlu0 %3382
    %3384 = vrot.lane.b32.xlu0 %v3141, 96
    %v3385 = vpop.permute.xlu0 %3384
    %3386 = vrot.lane.b32.xlu0 %v3142, 96
    %v3387 = vpop.permute.xlu0 %3386
    %3391 = vrot.lane.b32.xlu0 %v3143, 96
    %v3392 = vpop.permute.xlu0 %3391
    %3393 = vrot.lane.b32.xlu0 %v3144, 96
    %v3394 = vpop.permute.xlu0 %3393
    %3395 = vrot.lane.b32.xlu0 %v3145, 96
    %v3396 = vpop.permute.xlu0 %3395
    %v3398 = vsel %vm676, %v3383, 0
    %v3401 = vsel %vm676, %v3385, 0
    %v3404 = vsel %vm676, %v3387, 0
    %v3407 = vsel %vm676, %v3392, 0
    %v3410 = vsel %vm676, %v3394, 0
    %v3413 = vsel %vm676, %v3396, 0
    %3415 = vmatprep.subr.bf16.mxu0 0
    %3416 = vmatpush1.bf16.xpose.msra.mxu0 %v3407
    %3417 = vmatprep.subr.bf16.mxu0 0
    %3418 = vmatpush1.bf16.xpose.msra.mxu0 %v3410
    %3419 = vmatprep.subr.bf16.mxu0 0
    %3420 = vmatpush1.bf16.xpose.msra.mxu0 %v3413
    %3421 = vmatprep.subr.bf16.mxu0 0
    %3422 = vmatpush1.bf16.xpose.msra.mxu0 0
    %3423 = vmatprep.subr.bf16.mxu0 0
    %3424 = vmatpush1.bf16.xpose.msra.mxu0 0
    %3425 = vmatprep.subr.bf16.mxu0 0
    %3426 = vmatpush1.bf16.xpose.msra.mxu0 0
    %3427 = vmatprep.subr.bf16.mxu0 0
    %3428 = vmatpush1.bf16.xpose.msra.mxu0 0
    %3429 = vmatprep.subr.bf16.mxu0 0
    %3430 = vmatpush1.bf16.xpose.msra.mxu0 0
    %3431 = vmatprep.subr.bf16.mxu0 0
    %3432 = vmatpush1.bf16.xpose.msra.mxu0 0
    %3433 = vmatprep.subr.bf16.mxu0 0
    %3434 = vmatpush1.bf16.xpose.msra.mxu0 0
    %3435 = vmatprep.subr.bf16.mxu0 0
    %3436 = vmatpush1.bf16.xpose.msra.mxu0 0
    %3437 = vmatprep.subr.bf16.mxu0 0
    %3438 = vmatpush1.bf16.xpose.msra.mxu0 0
    %3439 = vmatprep.subr.bf16.mxu0 0
    %3440 = vmatpush1.bf16.xpose.msra.mxu0 0
    %3441 = vmatprep.subr.bf16.mxu0 0
    %3442 = vmatpush1.bf16.xpose.msra.mxu0 0
    %3443 = vmatprep.subr.bf16.mxu0 0
    %3444 = vmatpush1.bf16.xpose.msra.mxu0 0
    %3445 = vmatprep.subr.bf16.mxu0 0
    %3446 = vmatpush1.bf16.xpose.msra.mxu0 0
    %3447 = vmatprep.mubr.bf16.mxu0 0
    %3448 = vmatmul.mubr.bf16.gmra.mrb[0].mxu0 %v3398
    %v3449 = vpop.f32.mrb[0].mxu0
    %v3450 = vadd.f32 %v127, %v3449
    %v3451 = vpop.f32.mrb[0].mxu0
    %v3452 = vpop.f32.mrb[0].mxu0
    %v3453 = vadd.f32 %v128, %v3452
    %v3454 = vpop.f32.mrb[0].mxu0
    %3455 = vmatprep.mubr.bf16.mxu0 0
    %3456 = vmatmul.mubr.bf16.gmra.mrb[0].mxu0 %v3401
    %v3457 = vpop.f32.mrb[0].mxu0
    %v3458 = vadd.f32 %v129, %v3457
    %v3459 = vpop.f32.mrb[0].mxu0
    %v3460 = vpop.f32.mrb[0].mxu0
    %v3461 = vadd.f32 %v130, %v3460
    %v3462 = vpop.f32.mrb[0].mxu0
    %3463 = vmatprep.mubr.bf16.mxu0 0
    %3464 = vmatmul.mubr.bf16.gmra.mrb[0].mxu0 %v3404
    %v3465 = vpop.f32.mrb[0].mxu0
    %v3466 = vadd.f32 %v131, %v3465
    %v3467 = vpop.f32.mrb[0].mxu0
    %v3468 = vpop.f32.mrb[0].mxu0
    %v3469 = vadd.f32 %v132, %v3468
    %v3470 = vpop.f32.mrb[0].mxu0
    %3471 = vdwg.mxu0
    %v3472 = vsel %vm752, %v3450, -inf
    %3473 = vmax.xlane.f32.xlu0 %v3472
    %v3474 = vpop.xlane.xlu0 %3473
    %v3475 = vsel %vm752, %v3453, -inf
    %3476 = vmax.xlane.f32.xlu0 %v3475
    %v3477 = vpop.xlane.xlu0 %3476
    %v3478 = vsel %vm752, %v3458, -inf
    %3479 = vmax.xlane.f32.xlu0 %v3478
    %v3480 = vpop.xlane.xlu0 %3479
    %v3481 = vsel %vm752, %v3461, -inf
    %3482 = vmax.xlane.f32.xlu0 %v3481
    %v3483 = vpop.xlane.xlu0 %3482
    %v3484 = vsel %vm752, %v3466, -inf
    %3485 = vmax.xlane.f32.xlu0 %v3484
    %v3486 = vpop.xlane.xlu0 %3485
    %v3487 = vsel %vm752, %v3469, -inf
    %3488 = vmax.xlane.f32.xlu0 %v3487
    %v3489 = vpop.xlane.xlu0 %3488
    %v3490 = vsub.f32 %v3450, %v3474
    %v3491 = vsub.f32 %v3453, %v3477
    %v3492 = vsub.f32 %v3458, %v3480
    %v3493 = vsub.f32 %v3461, %v3483
    %v3494 = vsub.f32 %v3466, %v3486
    %v3495 = vsub.f32 %v3469, %v3489
    %v3496 = vmul.f32 %v3490, 1.442695
    %v3497 = vpow.pop %v3496
    %v3498 = vmul.f32 %v3491, 1.442695
    %v3499 = vpow.pop %v3498
    %v3500 = vmul.f32 %v3492, 1.442695
    %v3501 = vpow.pop %v3500
    %v3502 = vmul.f32 %v3493, 1.442695
    %v3503 = vpow.pop %v3502
    %v3504 = vmul.f32 %v3494, 1.442695
    %v3505 = vpow.pop %v3504
    %v3506 = vmul.f32 %v3495, 1.442695
    %v3507 = vpow.pop %v3506
    %v3508 = vsel %vm752, %v3497, 0.0
    %3509 = vadd.xlane.f32.xlu0 %v3508
    %v3510 = vpop.xlane.xlu0 %3509
    %v3511 = vsel %vm752, %v3499, 0.0
    %3512 = vadd.xlane.f32.xlu0 %v3511
    %v3513 = vpop.xlane.xlu0 %3512
    %v3514 = vsel %vm752, %v3501, 0.0
    %3515 = vadd.xlane.f32.xlu0 %v3514
    %v3516 = vpop.xlane.xlu0 %3515
    %v3517 = vsel %vm752, %v3503, 0.0
    %3518 = vadd.xlane.f32.xlu0 %v3517
    %v3519 = vpop.xlane.xlu0 %3518
    %v3520 = vsel %vm752, %v3505, 0.0
    %3521 = vadd.xlane.f32.xlu0 %v3520
    %v3522 = vpop.xlane.xlu0 %3521
    %v3523 = vsel %vm752, %v3507, 0.0
    %3524 = vadd.xlane.f32.xlu0 %v3523
    %v3525 = vpop.xlane.xlu0 %3524
    %v3526 = vrcp.pop %v3510
    %v3527 = vrcp.pop %v3513
    %v3528 = vrcp.pop %v3516
    %v3529 = vrcp.pop %v3519
    %v3530 = vrcp.pop %v3522
    %v3531 = vrcp.pop %v3525
    %v3532 = vmul.f32 %v3497, %v3526
    %v3533 = vmul.f32 %v3499, %v3527
    %v3534 = vmul.f32 %v3501, %v3528
    %v3535 = vmul.f32 %v3503, %v3529
    %v3536 = vmul.f32 %v3505, %v3530
    %v3537 = vmul.f32 %v3507, %v3531
    %v3538 = vpack.c.bf16 %v3533, %v3532
    %v3539 = vpack.c.bf16 %v3535, %v3534
    %v3540 = vpack.c.bf16 %v3537, %v3536
    %3544 = vrot.lane.b32.xlu0 %v3146, 96
    %v3545 = vpop.permute.xlu0 %3544
    %3546 = vrot.lane.b32.xlu0 %v3147, 96
    %v3547 = vpop.permute.xlu0 %3546
    %3548 = vrot.lane.b32.xlu0 %v3148, 96
    %v3549 = vpop.permute.xlu0 %3548
    %v3554 = vsel %vm752, %v3538, 0
    %v3557 = vsel %vm752, %v3539, 0
    %v3560 = vsel %vm752, %v3540, 0
    %3562 = vmatprep.subr.bf16.mxu0 0
    %3563 = vmatpush1.bf16.msra.mxu0 %v3545
    %3564 = vmatprep.subr.bf16.mxu0 0
    %3565 = vmatpush1.bf16.msra.mxu0 %v3547
    %3566 = vmatprep.subr.bf16.mxu0 0
    %3567 = vmatpush1.bf16.msra.mxu0 %v3549
    %3568 = vmatprep.subr.bf16.mxu0 0
    %3569 = vmatpush1.bf16.msra.mxu0 0
    %3570 = vmatprep.subr.bf16.mxu0 0
    %3571 = vmatpush1.bf16.msra.mxu0 0
    %3572 = vmatprep.subr.bf16.mxu0 0
    %3573 = vmatpush1.bf16.msra.mxu0 0
    %3574 = vmatprep.subr.bf16.mxu0 0
    %3575 = vmatpush1.bf16.msra.mxu0 0
    %3576 = vmatprep.subr.bf16.mxu0 0
    %3577 = vmatpush1.bf16.msra.mxu0 0
    %3578 = vmatprep.subr.bf16.mxu0 0
    %3579 = vmatpush1.bf16.msra.mxu0 0
    %3580 = vmatprep.subr.bf16.mxu0 0
    %3581 = vmatpush1.bf16.msra.mxu0 0
    %3582 = vmatprep.subr.bf16.mxu0 0
    %3583 = vmatpush1.bf16.msra.mxu0 0
    %3584 = vmatprep.subr.bf16.mxu0 0
    %3585 = vmatpush1.bf16.msra.mxu0 0
    %3586 = vmatprep.subr.bf16.mxu0 0
    %3587 = vmatpush1.bf16.msra.mxu0 0
    %3588 = vmatprep.subr.bf16.mxu0 0
    %3589 = vmatpush1.bf16.msra.mxu0 0
    %3590 = vmatprep.subr.bf16.mxu0 0
    %3591 = vmatpush1.bf16.msra.mxu0 0
    %3592 = vmatprep.subr.bf16.mxu0 0
    %3593 = vmatpush1.bf16.msra.mxu0 0
    %3594 = vmatprep.mubr.bf16.mxu0 0
    %3595 = vmatmul.mubr.bf16.gmra.mrb[0].mxu0 %v3554
    %v3596 = vpop.f32.mrb[0].mxu0
    %v3597 = vadd.f32 0.0, %v3596
    %v3598 = vpop.f32.mrb[0].mxu0
    %v3599 = vpop.f32.mrb[0].mxu0
    %v3600 = vadd.f32 0.0, %v3599
    %v3601 = vpop.f32.mrb[0].mxu0
    %3602 = vmatprep.mubr.bf16.mxu0 0
    %3603 = vmatmul.mubr.bf16.gmra.mrb[0].mxu0 %v3557
    %v3604 = vpop.f32.mrb[0].mxu0
    %v3605 = vadd.f32 0.0, %v3604
    %v3606 = vpop.f32.mrb[0].mxu0
    %v3607 = vpop.f32.mrb[0].mxu0
    %v3608 = vadd.f32 0.0, %v3607
    %v3609 = vpop.f32.mrb[0].mxu0
    %3610 = vmatprep.mubr.bf16.mxu0 0
    %3611 = vmatmul.mubr.bf16.gmra.mrb[0].mxu0 %v3560
    %v3612 = vpop.f32.mrb[0].mxu0
    %v3613 = vadd.f32 0.0, %v3612
    %v3614 = vpop.f32.mrb[0].mxu0
    %v3615 = vpop.f32.mrb[0].mxu0
    %v3616 = vadd.f32 0.0, %v3615
    %v3617 = vpop.f32.mrb[0].mxu0
    %3618 = vdwg.mxu0
    %v3619 = vpack.c.bf16 %v3600, %v3597
    %v3620 = vpack.c.bf16 %v3608, %v3605
    %v3621 = vpack.c.bf16 %v3616, %v3613
    %v3626 = vunpack.c.l.b16 %v3364
    %v3627 = vunpack.c.l.b16 %v3365
    %v3628 = vunpack.c.l.b16 %v3366
    %v3629 = vunpack.c.l.b16 %v3367
    %v3630 = vpack.c.b16 %v3627, %v3626
    %v3631 = vpack.c.b16 %v3629, %v3628
    %v3635 = vsel %vm676, %v3619, 0
    %v3638 = vsel %vm676, %v3620, 0
    %v3641 = vsel %vm676, %v3621, 0
    %3643 = vmatprep.subr.bf16.mxu0 0
    %3644 = vmatpush1.bf16.msra.mxu0 %v3630
    %3645 = vmatprep.subr.bf16.mxu0 0
    %3646 = vmatpush1.bf16.msra.mxu0 %v3631
    %3647 = vmatprep.subr.bf16.mxu0 0
    %3648 = vmatpush1.bf16.msra.mxu0 0
    %3649 = vmatprep.subr.bf16.mxu0 0
    %3650 = vmatpush1.bf16.msra.mxu0 0
    %3651 = vmatprep.subr.bf16.mxu0 0
    %3652 = vmatpush1.bf16.msra.mxu0 0
    %3653 = vmatprep.subr.bf16.mxu0 0
    %3654 = vmatpush1.bf16.msra.mxu0 0
    %3655 = vmatprep.subr.bf16.mxu0 0
    %3656 = vmatpush1.bf16.msra.mxu0 0
    %3657 = vmatprep.subr.bf16.mxu0 0
    %3658 = vmatpush1.bf16.msra.mxu0 0
    %3659 = vmatprep.subr.bf16.mxu0 0
    %3660 = vmatpush1.bf16.msra.mxu0 0
    %3661 = vmatprep.subr.bf16.mxu0 0
    %3662 = vmatpush1.bf16.msra.mxu0 0
    %3663 = vmatprep.subr.bf16.mxu0 0
    %3664 = vmatpush1.bf16.msra.mxu0 0
    %3665 = vmatprep.subr.bf16.mxu0 0
    %3666 = vmatpush1.bf16.msra.mxu0 0
    %3667 = vmatprep.subr.bf16.mxu0 0
    %3668 = vmatpush1.bf16.msra.mxu0 0
    %3669 = vmatprep.subr.bf16.mxu0 0
    %3670 = vmatpush1.bf16.msra.mxu0 0
    %3671 = vmatprep.subr.bf16.mxu0 0
    %3672 = vmatpush1.bf16.msra.mxu0 0
    %3673 = vmatprep.subr.bf16.mxu0 0
    %3674 = vmatpush1.bf16.msra.mxu0 0
    %3675 = vmatprep.mubr.bf16.mxu0 0
    %3676 = vmatmul.mubr.bf16.gmra.mrb[0].mxu0 %v3635
    %v3677 = vpop.f32.mrb[0].mxu0
    %v3678 = vadd.f32 0.0, %v3677
    %v3679 = vpop.f32.mrb[0].mxu0
    %v3680 = vpop.f32.mrb[0].mxu0
    %v3681 = vadd.f32 0.0, %v3680
    %v3682 = vpop.f32.mrb[0].mxu0
    %3683 = vmatprep.mubr.bf16.mxu0 0
    %3684 = vmatmul.mubr.bf16.gmra.mrb[0].mxu0 %v3638
    %v3685 = vpop.f32.mrb[0].mxu0
    %v3686 = vadd.f32 0.0, %v3685
    %v3687 = vpop.f32.mrb[0].mxu0
    %v3688 = vpop.f32.mrb[0].mxu0
    %v3689 = vadd.f32 0.0, %v3688
    %v3690 = vpop.f32.mrb[0].mxu0
    %3691 = vmatprep.mubr.bf16.mxu0 0
    %3692 = vmatmul.mubr.bf16.gmra.mrb[0].mxu0 %v3641
    %v3693 = vpop.f32.mrb[0].mxu0
    %v3694 = vadd.f32 0.0, %v3693
    %v3695 = vpop.f32.mrb[0].mxu0
    %v3696 = vpop.f32.mrb[0].mxu0
    %v3697 = vadd.f32 0.0, %v3696
    %v3698 = vpop.f32.mrb[0].mxu0
    %3699 = vdwg.mxu0
    %v3704 = vunpack.c.l.b16 %v3360
    %v3705 = vunpack.c.l.b16 %v3361
    %v3706 = vunpack.c.l.b16 %v3362
    %v3707 = vunpack.c.l.b16 %v3363
    %v3708 = vpack.c.b16 %v3705, %v3704
    %v3709 = vpack.c.b16 %v3707, %v3706
    %v3713 = vsel %vm676, %v3376, 0
    %v3716 = vsel %vm676, %v3377, 0
    %v3719 = vsel %vm676, %v3378, 0
    %3721 = vmatprep.subr.bf16.mxu0 0
    %3722 = vmatpush1.bf16.msra.mxu0 %v3708
    %3723 = vmatprep.subr.bf16.mxu0 0
    %3724 = vmatpush1.bf16.msra.mxu0 %v3709
    %3725 = vmatprep.subr.bf16.mxu0 0
    %3726 = vmatpush1.bf16.msra.mxu0 0
    %3727 = vmatprep.subr.bf16.mxu0 0
    %3728 = vmatpush1.bf16.msra.mxu0 0
    %3729 = vmatprep.subr.bf16.mxu0 0
    %3730 = vmatpush1.bf16.msra.mxu0 0
    %3731 = vmatprep.subr.bf16.mxu0 0
    %3732 = vmatpush1.bf16.msra.mxu0 0
    %3733 = vmatprep.subr.bf16.mxu0 0
    %3734 = vmatpush1.bf16.msra.mxu0 0
    %3735 = vmatprep.subr.bf16.mxu0 0
    %3736 = vmatpush1.bf16.msra.mxu0 0
    %3737 = vmatprep.subr.bf16.mxu0 0
    %3738 = vmatpush1.bf16.msra.mxu0 0
    %3739 = vmatprep.subr.bf16.mxu0 0
    %3740 = vmatpush1.bf16.msra.mxu0 0
    %3741 = vmatprep.subr.bf16.mxu0 0
    %3742 = vmatpush1.bf16.msra.mxu0 0
    %3743 = vmatprep.subr.bf16.mxu0 0
    %3744 = vmatpush1.bf16.msra.mxu0 0
    %3745 = vmatprep.subr.bf16.mxu0 0
    %3746 = vmatpush1.bf16.msra.mxu0 0
    %3747 = vmatprep.subr.bf16.mxu0 0
    %3748 = vmatpush1.bf16.msra.mxu0 0
    %3749 = vmatprep.subr.bf16.mxu0 0
    %3750 = vmatpush1.bf16.msra.mxu0 0
    %3751 = vmatprep.subr.bf16.mxu0 0
    %3752 = vmatpush1.bf16.msra.mxu0 0
    %3753 = vmatprep.mubr.bf16.mxu0 0
    %3754 = vmatmul.mubr.bf16.gmra.mrb[0].mxu0 %v3713
    %v3755 = vpop.f32.mrb[0].mxu0
    %v3756 = vadd.f32 %v3678, %v3755
    %v3757 = vpop.f32.mrb[0].mxu0
    %v3758 = vpop.f32.mrb[0].mxu0
    %v3759 = vadd.f32 %v3681, %v3758
    %v3760 = vpop.f32.mrb[0].mxu0
    %3761 = vmatprep.mubr.bf16.mxu0 0
    %3762 = vmatmul.mubr.bf16.gmra.mrb[0].mxu0 %v3716
    %v3763 = vpop.f32.mrb[0].mxu0
    %v3764 = vadd.f32 %v3686, %v3763
    %v3765 = vpop.f32.mrb[0].mxu0
    %v3766 = vpop.f32.mrb[0].mxu0
    %v3767 = vadd.f32 %v3689, %v3766
    %v3768 = vpop.f32.mrb[0].mxu0
    %3769 = vmatprep.mubr.bf16.mxu0 0
    %3770 = vmatmul.mubr.bf16.gmra.mrb[0].mxu0 %v3719
    %v3771 = vpop.f32.mrb[0].mxu0
    %v3772 = vadd.f32 %v3694, %v3771
    %v3773 = vpop.f32.mrb[0].mxu0
    %v3774 = vpop.f32.mrb[0].mxu0
    %v3775 = vadd.f32 %v3697, %v3774
    %v3776 = vpop.f32.mrb[0].mxu0
    %3777 = vdwg.mxu0
    %3778 = vrot.lane.b32.xlu0 %v3140, 64
    %v3779 = vpop.permute.xlu0 %3778
    %3780 = vrot.lane.b32.xlu0 %v3141, 64
    %v3781 = vpop.permute.xlu0 %3780
    %3782 = vrot.lane.b32.xlu0 %v3142, 64
    %v3783 = vpop.permute.xlu0 %3782
    %3784 = vrot.lane.b32.xlu0 %v3143, 64
    %v3785 = vpop.permute.xlu0 %3784
    %3786 = vrot.lane.b32.xlu0 %v3144, 64
    %v3787 = vpop.permute.xlu0 %3786
    %3788 = vrot.lane.b32.xlu0 %v3145, 64
    %v3789 = vpop.permute.xlu0 %3788
    %v3791 = vsel %vm676, %v3779, 0
    %v3794 = vsel %vm676, %v3781, 0
    %v3797 = vsel %vm676, %v3783, 0
    %v3800 = vsel %vm676, %v3785, 0
    %v3803 = vsel %vm676, %v3787, 0
    %v3806 = vsel %vm676, %v3789, 0
    %3808 = vmatprep.subr.bf16.mxu0 0
    %3809 = vmatpush1.bf16.xpose.msra.mxu0 %v3800
    %3810 = vmatprep.subr.bf16.mxu0 0
    %3811 = vmatpush1.bf16.xpose.msra.mxu0 %v3803
    %3812 = vmatprep.subr.bf16.mxu0 0
    %3813 = vmatpush1.bf16.xpose.msra.mxu0 %v3806
    %3814 = vmatprep.subr.bf16.mxu0 0
    %3815 = vmatpush1.bf16.xpose.msra.mxu0 0
    %3816 = vmatprep.subr.bf16.mxu0 0
    %3817 = vmatpush1.bf16.xpose.msra.mxu0 0
    %3818 = vmatprep.subr.bf16.mxu0 0
    %3819 = vmatpush1.bf16.xpose.msra.mxu0 0
    %3820 = vmatprep.subr.bf16.mxu0 0
    %3821 = vmatpush1.bf16.xpose.msra.mxu0 0
    %3822 = vmatprep.subr.bf16.mxu0 0
    %3823 = vmatpush1.bf16.xpose.msra.mxu0 0
    %3824 = vmatprep.subr.bf16.mxu0 0
    %3825 = vmatpush1.bf16.xpose.msra.mxu0 0
    %3826 = vmatprep.subr.bf16.mxu0 0
    %3827 = vmatpush1.bf16.xpose.msra.mxu0 0
    %3828 = vmatprep.subr.bf16.mxu0 0
    %3829 = vmatpush1.bf16.xpose.msra.mxu0 0
    %3830 = vmatprep.subr.bf16.mxu0 0
    %3831 = vmatpush1.bf16.xpose.msra.mxu0 0
    %3832 = vmatprep.subr.bf16.mxu0 0
    %3833 = vmatpush1.bf16.xpose.msra.mxu0 0
    %3834 = vmatprep.subr.bf16.mxu0 0
    %3835 = vmatpush1.bf16.xpose.msra.mxu0 0
    %3836 = vmatprep.subr.bf16.mxu0 0
    %3837 = vmatpush1.bf16.xpose.msra.mxu0 0
    %3838 = vmatprep.subr.bf16.mxu0 0
    %3839 = vmatpush1.bf16.xpose.msra.mxu0 0
    %3840 = vmatprep.mubr.bf16.mxu0 0
    %3841 = vmatmul.mubr.bf16.gmra.mrb[0].mxu0 %v3791
    %v3842 = vpop.f32.mrb[0].mxu0
    %v3843 = vadd.f32 %v127, %v3842
    %v3844 = vpop.f32.mrb[0].mxu0
    %v3845 = vpop.f32.mrb[0].mxu0
    %v3846 = vadd.f32 %v128, %v3845
    %v3847 = vpop.f32.mrb[0].mxu0
    %3848 = vmatprep.mubr.bf16.mxu0 0
    %3849 = vmatmul.mubr.bf16.gmra.mrb[0].mxu0 %v3794
    %v3850 = vpop.f32.mrb[0].mxu0
    %v3851 = vadd.f32 %v129, %v3850
    %v3852 = vpop.f32.mrb[0].mxu0
    %v3853 = vpop.f32.mrb[0].mxu0
    %v3854 = vadd.f32 %v130, %v3853
    %v3855 = vpop.f32.mrb[0].mxu0
    %3856 = vmatprep.mubr.bf16.mxu0 0
    %3857 = vmatmul.mubr.bf16.gmra.mrb[0].mxu0 %v3797
    %v3858 = vpop.f32.mrb[0].mxu0
    %v3859 = vadd.f32 %v131, %v3858
    %v3860 = vpop.f32.mrb[0].mxu0
    %v3861 = vpop.f32.mrb[0].mxu0
    %v3862 = vadd.f32 %v132, %v3861
    %v3863 = vpop.f32.mrb[0].mxu0
    %3864 = vdwg.mxu0
    %v3865 = vsel %vm752, %v3843, -inf
    %3866 = vmax.xlane.f32.xlu0 %v3865
    %v3867 = vpop.xlane.xlu0 %3866
    %v3868 = vsel %vm752, %v3846, -inf
    %3869 = vmax.xlane.f32.xlu0 %v3868
    %v3870 = vpop.xlane.xlu0 %3869
    %v3871 = vsel %vm752, %v3851, -inf
    %3872 = vmax.xlane.f32.xlu0 %v3871
    %v3873 = vpop.xlane.xlu0 %3872
    %v3874 = vsel %vm752, %v3854, -inf
    %3875 = vmax.xlane.f32.xlu0 %v3874
    %v3876 = vpop.xlane.xlu0 %3875
    %v3877 = vsel %vm752, %v3859, -inf
    %3878 = vmax.xlane.f32.xlu0 %v3877
    %v3879 = vpop.xlane.xlu0 %3878
    %v3880 = vsel %vm752, %v3862, -inf
    %3881 = vmax.xlane.f32.xlu0 %v3880
    %v3882 = vpop.xlane.xlu0 %3881
    %v3883 = vsub.f32 %v3843, %v3867
    %v3884 = vsub.f32 %v3846, %v3870
    %v3885 = vsub.f32 %v3851, %v3873
    %v3886 = vsub.f32 %v3854, %v3876
    %v3887 = vsub.f32 %v3859, %v3879
    %v3888 = vsub.f32 %v3862, %v3882
    %v3889 = vmul.f32 %v3883, 1.442695
    %v3890 = vpow.pop %v3889
    %v3891 = vmul.f32 %v3884, 1.442695
    %v3892 = vpow.pop %v3891
    %v3893 = vmul.f32 %v3885, 1.442695
    %v3894 = vpow.pop %v3893
    %v3895 = vmul.f32 %v3886, 1.442695
    %v3896 = vpow.pop %v3895
    %v3897 = vmul.f32 %v3887, 1.442695
    %v3898 = vpow.pop %v3897
    %v3899 = vmul.f32 %v3888, 1.442695
    %v3900 = vpow.pop %v3899
    %v3901 = vsel %vm752, %v3890, 0.0
    %3902 = vadd.xlane.f32.xlu0 %v3901
    %v3903 = vpop.xlane.xlu0 %3902
    %v3904 = vsel %vm752, %v3892, 0.0
    %3905 = vadd.xlane.f32.xlu0 %v3904
    %v3906 = vpop.xlane.xlu0 %3905
    %v3907 = vsel %vm752, %v3894, 0.0
    %3908 = vadd.xlane.f32.xlu0 %v3907
    %v3909 = vpop.xlane.xlu0 %3908
    %v3910 = vsel %vm752, %v3896, 0.0
    %3911 = vadd.xlane.f32.xlu0 %v3910
    %v3912 = vpop.xlane.xlu0 %3911
    %v3913 = vsel %vm752, %v3898, 0.0
    %3914 = vadd.xlane.f32.xlu0 %v3913
    %v3915 = vpop.xlane.xlu0 %3914
    %v3916 = vsel %vm752, %v3900, 0.0
    %3917 = vadd.xlane.f32.xlu0 %v3916
    %v3918 = vpop.xlane.xlu0 %3917
    %v3919 = vrcp.pop %v3903
    %v3920 = vrcp.pop %v3906
    %v3921 = vrcp.pop %v3909
    %v3922 = vrcp.pop %v3912
    %v3923 = vrcp.pop %v3915
    %v3924 = vrcp.pop %v3918
    %v3925 = vmul.f32 %v3890, %v3919
    %v3926 = vmul.f32 %v3892, %v3920
    %v3927 = vmul.f32 %v3894, %v3921
    %v3928 = vmul.f32 %v3896, %v3922
    %v3929 = vmul.f32 %v3898, %v3923
    %v3930 = vmul.f32 %v3900, %v3924
    %v3931 = vpack.c.bf16 %v3926, %v3925
    %v3932 = vpack.c.bf16 %v3928, %v3927
    %v3933 = vpack.c.bf16 %v3930, %v3929
    %3934 = vrot.lane.b32.xlu0 %v3146, 64
    %v3935 = vpop.permute.xlu0 %3934
    %3936 = vrot.lane.b32.xlu0 %v3147, 64
    %v3937 = vpop.permute.xlu0 %3936
    %3938 = vrot.lane.b32.xlu0 %v3148, 64
    %v3939 = vpop.permute.xlu0 %3938
    %v3944 = vsel %vm752, %v3931, 0
    %v3947 = vsel %vm752, %v3932, 0
    %v3950 = vsel %vm752, %v3933, 0
    %3952 = vmatprep.subr.bf16.mxu0 0
    %3953 = vmatpush1.bf16.msra.mxu0 %v3935
    %3954 = vmatprep.subr.bf16.mxu0 0
    %3955 = vmatpush1.bf16.msra.mxu0 %v3937
    %3956 = vmatprep.subr.bf16.mxu0 0
    %3957 = vmatpush1.bf16.msra.mxu0 %v3939
    %3958 = vmatprep.subr.bf16.mxu0 0
    %3959 = vmatpush1.bf16.msra.mxu0 0
    %3960 = vmatprep.subr.bf16.mxu0 0
    %3961 = vmatpush1.bf16.msra.mxu0 0
    %3962 = vmatprep.subr.bf16.mxu0 0
    %3963 = vmatpush1.bf16.msra.mxu0 0
    %3964 = vmatprep.subr.bf16.mxu0 0
    %3965 = vmatpush1.bf16.msra.mxu0 0
    %3966 = vmatprep.subr.bf16.mxu0 0
    %3967 = vmatpush1.bf16.msra.mxu0 0
    %3968 = vmatprep.subr.bf16.mxu0 0
    %3969 = vmatpush1.bf16.msra.mxu0 0
    %3970 = vmatprep.subr.bf16.mxu0 0
    %3971 = vmatpush1.bf16.msra.mxu0 0
    %3972 = vmatprep.subr.bf16.mxu0 0
    %3973 = vmatpush1.bf16.msra.mxu0 0
    %3974 = vmatprep.subr.bf16.mxu0 0
    %3975 = vmatpush1.bf16.msra.mxu0 0
    %3976 = vmatprep.subr.bf16.mxu0 0
    %3977 = vmatpush1.bf16.msra.mxu0 0
    %3978 = vmatprep.subr.bf16.mxu0 0
    %3979 = vmatpush1.bf16.msra.mxu0 0
    %3980 = vmatprep.subr.bf16.mxu0 0
    %3981 = vmatpush1.bf16.msra.mxu0 0
    %3982 = vmatprep.subr.bf16.mxu0 0
    %3983 = vmatpush1.bf16.msra.mxu0 0
    %3984 = vmatprep.mubr.bf16.mxu0 0
    %3985 = vmatmul.mubr.bf16.gmra.mrb[0].mxu0 %v3944
    %v3986 = vpop.f32.mrb[0].mxu0
    %v3987 = vadd.f32 0.0, %v3986
    %v3988 = vpop.f32.mrb[0].mxu0
    %v3989 = vpop.f32.mrb[0].mxu0
    %v3990 = vadd.f32 0.0, %v3989
    %v3991 = vpop.f32.mrb[0].mxu0
    %3992 = vmatprep.mubr.bf16.mxu0 0
    %3993 = vmatmul.mubr.bf16.gmra.mrb[0].mxu0 %v3947
    %v3994 = vpop.f32.mrb[0].mxu0
    %v3995 = vadd.f32 0.0, %v3994
    %v3996 = vpop.f32.mrb[0].mxu0
    %v3997 = vpop.f32.mrb[0].mxu0
    %v3998 = vadd.f32 0.0, %v3997
    %v3999 = vpop.f32.mrb[0].mxu0
    %4000 = vmatprep.mubr.bf16.mxu0 0
    %4001 = vmatmul.mubr.bf16.gmra.mrb[0].mxu0 %v3950
    %v4002 = vpop.f32.mrb[0].mxu0
    %v4003 = vadd.f32 0.0, %v4002
    %v4004 = vpop.f32.mrb[0].mxu0
    %v4005 = vpop.f32.mrb[0].mxu0
    %v4006 = vadd.f32 0.0, %v4005
    %v4007 = vpop.f32.mrb[0].mxu0
    %4008 = vdwg.mxu0
    %v4009 = vpack.c.bf16 %v3990, %v3987
    %v4010 = vpack.c.bf16 %v3998, %v3995
    %v4011 = vpack.c.bf16 %v4006, %v4003
    %v4016 = vunpack.c.l.b16 %v3368
    %v4017 = vunpack.c.l.b16 %v3369
    %v4018 = vunpack.c.l.b16 %v3370
    %v4019 = vunpack.c.l.b16 %v3371
    %v4020 = vpack.c.b16 %v4017, %v4016
    %v4021 = vpack.c.b16 %v4019, %v4018
    %v4025 = vsel %vm676, %v4009, 0
    %v4028 = vsel %vm676, %v4010, 0
    %v4031 = vsel %vm676, %v4011, 0
    %4033 = vmatprep.subr.bf16.mxu0 0
    %4034 = vmatpush1.bf16.msra.mxu0 %v4020
    %4035 = vmatprep.subr.bf16.mxu0 0
    %4036 = vmatpush1.bf16.msra.mxu0 %v4021
    %4037 = vmatprep.subr.bf16.mxu0 0
    %4038 = vmatpush1.bf16.msra.mxu0 0
    %4039 = vmatprep.subr.bf16.mxu0 0
    %4040 = vmatpush1.bf16.msra.mxu0 0
    %4041 = vmatprep.subr.bf16.mxu0 0
    %4042 = vmatpush1.bf16.msra.mxu0 0
    %4043 = vmatprep.subr.bf16.mxu0 0
    %4044 = vmatpush1.bf16.msra.mxu0 0
    %4045 = vmatprep.subr.bf16.mxu0 0
    %4046 = vmatpush1.bf16.msra.mxu0 0
    %4047 = vmatprep.subr.bf16.mxu0 0
    %4048 = vmatpush1.bf16.msra.mxu0 0
    %4049 = vmatprep.subr.bf16.mxu0 0
    %4050 = vmatpush1.bf16.msra.mxu0 0
    %4051 = vmatprep.subr.bf16.mxu0 0
    %4052 = vmatpush1.bf16.msra.mxu0 0
    %4053 = vmatprep.subr.bf16.mxu0 0
    %4054 = vmatpush1.bf16.msra.mxu0 0
    %4055 = vmatprep.subr.bf16.mxu0 0
    %4056 = vmatpush1.bf16.msra.mxu0 0
    %4057 = vmatprep.subr.bf16.mxu0 0
    %4058 = vmatpush1.bf16.msra.mxu0 0
    %4059 = vmatprep.subr.bf16.mxu0 0
    %4060 = vmatpush1.bf16.msra.mxu0 0
    %4061 = vmatprep.subr.bf16.mxu0 0
    %4062 = vmatpush1.bf16.msra.mxu0 0
    %4063 = vmatprep.subr.bf16.mxu0 0
    %4064 = vmatpush1.bf16.msra.mxu0 0
    %4065 = vmatprep.mubr.bf16.mxu0 0
    %4066 = vmatmul.mubr.bf16.gmra.mrb[0].mxu0 %v4025
    %v4067 = vpop.f32.mrb[0].mxu0
    %v4068 = vadd.f32 0.0, %v4067
    %v4069 = vpop.f32.mrb[0].mxu0
    %v4070 = vpop.f32.mrb[0].mxu0
    %v4071 = vadd.f32 0.0, %v4070
    %v4072 = vpop.f32.mrb[0].mxu0
    %4073 = vmatprep.mubr.bf16.mxu0 0
    %4074 = vmatmul.mubr.bf16.gmra.mrb[0].mxu0 %v4028
    %v4075 = vpop.f32.mrb[0].mxu0
    %v4076 = vadd.f32 0.0, %v4075
    %v4077 = vpop.f32.mrb[0].mxu0
    %v4078 = vpop.f32.mrb[0].mxu0
    %v4079 = vadd.f32 0.0, %v4078
    %v4080 = vpop.f32.mrb[0].mxu0
    %4081 = vmatprep.mubr.bf16.mxu0 0
    %4082 = vmatmul.mubr.bf16.gmra.mrb[0].mxu0 %v4031
    %v4083 = vpop.f32.mrb[0].mxu0
    %v4084 = vadd.f32 0.0, %v4083
    %v4085 = vpop.f32.mrb[0].mxu0
    %v4086 = vpop.f32.mrb[0].mxu0
    %v4087 = vadd.f32 0.0, %v4086
    %v4088 = vpop.f32.mrb[0].mxu0
    %4089 = vdwg.mxu0
    %v4090 = vadd.f32 %v3756, %v4068
    %v4091 = vadd.f32 %v3759, %v4071
    %v4092 = vadd.f32 %v3764, %v4076
    %v4093 = vadd.f32 %v3767, %v4079
    %v4094 = vadd.f32 %v3772, %v4084
    %v4095 = vadd.f32 %v3775, %v4087
    %4096 = vrot.lane.b32.xlu0 %v3140, 32
    %v4097 = vpop.permute.xlu0 %4096
    %4098 = vrot.lane.b32.xlu0 %v3141, 32
    %v4099 = vpop.permute.xlu0 %4098
    %4100 = vrot.lane.b32.xlu0 %v3142, 32
    %v4101 = vpop.permute.xlu0 %4100
    %4102 = vrot.lane.b32.xlu0 %v3143, 32
    %v4103 = vpop.permute.xlu0 %4102
    %4104 = vrot.lane.b32.xlu0 %v3144, 32
    %v4105 = vpop.permute.xlu0 %4104
    %4106 = vrot.lane.b32.xlu0 %v3145, 32
    %v4107 = vpop.permute.xlu0 %4106
    %v4109 = vsel %vm676, %v4097, 0
    %v4112 = vsel %vm676, %v4099, 0
    %v4115 = vsel %vm676, %v4101, 0
    %v4118 = vsel %vm676, %v4103, 0
    %v4121 = vsel %vm676, %v4105, 0
    %v4124 = vsel %vm676, %v4107, 0
    %4126 = vmatprep.subr.bf16.mxu0 0
    %4127 = vmatpush1.bf16.xpose.msra.mxu0 %v4118
    %4128 = vmatprep.subr.bf16.mxu0 0
    %4129 = vmatpush1.bf16.xpose.msra.mxu0 %v4121
    %4130 = vmatprep.subr.bf16.mxu0 0
    %4131 = vmatpush1.bf16.xpose.msra.mxu0 %v4124
    %4132 = vmatprep.subr.bf16.mxu0 0
    %4133 = vmatpush1.bf16.xpose.msra.mxu0 0
    %4134 = vmatprep.subr.bf16.mxu0 0
    %4135 = vmatpush1.bf16.xpose.msra.mxu0 0
    %4136 = vmatprep.subr.bf16.mxu0 0
    %4137 = vmatpush1.bf16.xpose.msra.mxu0 0
    %4138 = vmatprep.subr.bf16.mxu0 0
    %4139 = vmatpush1.bf16.xpose.msra.mxu0 0
    %4140 = vmatprep.subr.bf16.mxu0 0
    %4141 = vmatpush1.bf16.xpose.msra.mxu0 0
    %4142 = vmatprep.subr.bf16.mxu0 0
    %4143 = vmatpush1.bf16.xpose.msra.mxu0 0
    %4144 = vmatprep.subr.bf16.mxu0 0
    %4145 = vmatpush1.bf16.xpose.msra.mxu0 0
    %4146 = vmatprep.subr.bf16.mxu0 0
    %4147 = vmatpush1.bf16.xpose.msra.mxu0 0
    %4148 = vmatprep.subr.bf16.mxu0 0
    %4149 = vmatpush1.bf16.xpose.msra.mxu0 0
    %4150 = vmatprep.subr.bf16.mxu0 0
    %4151 = vmatpush1.bf16.xpose.msra.mxu0 0
    %4152 = vmatprep.subr.bf16.mxu0 0
    %4153 = vmatpush1.bf16.xpose.msra.mxu0 0
    %4154 = vmatprep.subr.bf16.mxu0 0
    %4155 = vmatpush1.bf16.xpose.msra.mxu0 0
    %4156 = vmatprep.subr.bf16.mxu0 0
    %4157 = vmatpush1.bf16.xpose.msra.mxu0 0
    %4158 = vmatprep.mubr.bf16.mxu0 0
    %4159 = vmatmul.mubr.bf16.gmra.mrb[0].mxu0 %v4109
    %v4160 = vpop.f32.mrb[0].mxu0
    %v4161 = vadd.f32 %v127, %v4160
    %v4162 = vpop.f32.mrb[0].mxu0
    %v4163 = vpop.f32.mrb[0].mxu0
    %v4164 = vadd.f32 %v128, %v4163
    %v4165 = vpop.f32.mrb[0].mxu0
    %4166 = vmatprep.mubr.bf16.mxu0 0
    %4167 = vmatmul.mubr.bf16.gmra.mrb[0].mxu0 %v4112
    %v4168 = vpop.f32.mrb[0].mxu0
    %v4169 = vadd.f32 %v129, %v4168
    %v4170 = vpop.f32.mrb[0].mxu0
    %v4171 = vpop.f32.mrb[0].mxu0
    %v4172 = vadd.f32 %v130, %v4171
    %v4173 = vpop.f32.mrb[0].mxu0
    %4174 = vmatprep.mubr.bf16.mxu0 0
    %4175 = vmatmul.mubr.bf16.gmra.mrb[0].mxu0 %v4115
    %v4176 = vpop.f32.mrb[0].mxu0
    %v4177 = vadd.f32 %v131, %v4176
    %v4178 = vpop.f32.mrb[0].mxu0
    %v4179 = vpop.f32.mrb[0].mxu0
    %v4180 = vadd.f32 %v132, %v4179
    %v4181 = vpop.f32.mrb[0].mxu0
    %4182 = vdwg.mxu0
    %v4183 = vsel %vm752, %v4161, -inf
    %4184 = vmax.xlane.f32.xlu0 %v4183
    %v4185 = vpop.xlane.xlu0 %4184
    %v4186 = vsel %vm752, %v4164, -inf
    %4187 = vmax.xlane.f32.xlu0 %v4186
    %v4188 = vpop.xlane.xlu0 %4187
    %v4189 = vsel %vm752, %v4169, -inf
    %4190 = vmax.xlane.f32.xlu0 %v4189
    %v4191 = vpop.xlane.xlu0 %4190
    %v4192 = vsel %vm752, %v4172, -inf
    %4193 = vmax.xlane.f32.xlu0 %v4192
    %v4194 = vpop.xlane.xlu0 %4193
    %v4195 = vsel %vm752, %v4177, -inf
    %4196 = vmax.xlane.f32.xlu0 %v4195
    %v4197 = vpop.xlane.xlu0 %4196
    %v4198 = vsel %vm752, %v4180, -inf
    %4199 = vmax.xlane.f32.xlu0 %v4198
    %v4200 = vpop.xlane.xlu0 %4199
    %v4201 = vsub.f32 %v4161, %v4185
    %v4202 = vsub.f32 %v4164, %v4188
    %v4203 = vsub.f32 %v4169, %v4191
    %v4204 = vsub.f32 %v4172, %v4194
    %v4205 = vsub.f32 %v4177, %v4197
    %v4206 = vsub.f32 %v4180, %v4200
    %v4207 = vmul.f32 %v4201, 1.442695
    %v4208 = vpow.pop %v4207
    %v4209 = vmul.f32 %v4202, 1.442695
    %v4210 = vpow.pop %v4209
    %v4211 = vmul.f32 %v4203, 1.442695
    %v4212 = vpow.pop %v4211
    %v4213 = vmul.f32 %v4204, 1.442695
    %v4214 = vpow.pop %v4213
    %v4215 = vmul.f32 %v4205, 1.442695
    %v4216 = vpow.pop %v4215
    %v4217 = vmul.f32 %v4206, 1.442695
    %v4218 = vpow.pop %v4217
    %v4219 = vsel %vm752, %v4208, 0.0
    %4220 = vadd.xlane.f32.xlu0 %v4219
    %v4221 = vpop.xlane.xlu0 %4220
    %v4222 = vsel %vm752, %v4210, 0.0
    %4223 = vadd.xlane.f32.xlu0 %v4222
    %v4224 = vpop.xlane.xlu0 %4223
    %v4225 = vsel %vm752, %v4212, 0.0
    %4226 = vadd.xlane.f32.xlu0 %v4225
    %v4227 = vpop.xlane.xlu0 %4226
    %v4228 = vsel %vm752, %v4214, 0.0
    %4229 = vadd.xlane.f32.xlu0 %v4228
    %v4230 = vpop.xlane.xlu0 %4229
    %v4231 = vsel %vm752, %v4216, 0.0
    %4232 = vadd.xlane.f32.xlu0 %v4231
    %v4233 = vpop.xlane.xlu0 %4232
    %v4234 = vsel %vm752, %v4218, 0.0
    %4235 = vadd.xlane.f32.xlu0 %v4234
    %v4236 = vpop.xlane.xlu0 %4235
    %v4237 = vrcp.pop %v4221
    %v4238 = vrcp.pop %v4224
    %v4239 = vrcp.pop %v4227
    %v4240 = vrcp.pop %v4230
    %v4241 = vrcp.pop %v4233
    %v4242 = vrcp.pop %v4236
    %v4243 = vmul.f32 %v4208, %v4237
    %v4244 = vmul.f32 %v4210, %v4238
    %v4245 = vmul.f32 %v4212, %v4239
    %v4246 = vmul.f32 %v4214, %v4240
    %v4247 = vmul.f32 %v4216, %v4241
    %v4248 = vmul.f32 %v4218, %v4242
    %v4249 = vpack.c.bf16 %v4244, %v4243
    %v4250 = vpack.c.bf16 %v4246, %v4245
    %v4251 = vpack.c.bf16 %v4248, %v4247
    %4252 = vrot.lane.b32.xlu0 %v3146, 32
    %v4253 = vpop.permute.xlu0 %4252
    %4254 = vrot.lane.b32.xlu0 %v3147, 32
    %v4255 = vpop.permute.xlu0 %4254
    %4256 = vrot.lane.b32.xlu0 %v3148, 32
    %v4257 = vpop.permute.xlu0 %4256
    %v4262 = vsel %vm752, %v4249, 0
    %v4265 = vsel %vm752, %v4250, 0
    %v4268 = vsel %vm752, %v4251, 0
    %4270 = vmatprep.subr.bf16.mxu0 0
    %4271 = vmatpush1.bf16.msra.mxu0 %v4253
    %4272 = vmatprep.subr.bf16.mxu0 0
    %4273 = vmatpush1.bf16.msra.mxu0 %v4255
    %4274 = vmatprep.subr.bf16.mxu0 0
    %4275 = vmatpush1.bf16.msra.mxu0 %v4257
    %4276 = vmatprep.subr.bf16.mxu0 0
    %4277 = vmatpush1.bf16.msra.mxu0 0
    %4278 = vmatprep.subr.bf16.mxu0 0
    %4279 = vmatpush1.bf16.msra.mxu0 0
    %4280 = vmatprep.subr.bf16.mxu0 0
    %4281 = vmatpush1.bf16.msra.mxu0 0
    %4282 = vmatprep.subr.bf16.mxu0 0
    %4283 = vmatpush1.bf16.msra.mxu0 0
    %4284 = vmatprep.subr.bf16.mxu0 0
    %4285 = vmatpush1.bf16.msra.mxu0 0
    %4286 = vmatprep.subr.bf16.mxu0 0
    %4287 = vmatpush1.bf16.msra.mxu0 0
    %4288 = vmatprep.subr.bf16.mxu0 0
    %4289 = vmatpush1.bf16.msra.mxu0 0
    %4290 = vmatprep.subr.bf16.mxu0 0
    %4291 = vmatpush1.bf16.msra.mxu0 0
    %4292 = vmatprep.subr.bf16.mxu0 0
    %4293 = vmatpush1.bf16.msra.mxu0 0
    %4294 = vmatprep.subr.bf16.mxu0 0
    %4295 = vmatpush1.bf16.msra.mxu0 0
    %4296 = vmatprep.subr.bf16.mxu0 0
    %4297 = vmatpush1.bf16.msra.mxu0 0
    %4298 = vmatprep.subr.bf16.mxu0 0
    %4299 = vmatpush1.bf16.msra.mxu0 0
    %4300 = vmatprep.subr.bf16.mxu0 0
    %4301 = vmatpush1.bf16.msra.mxu0 0
    %4302 = vmatprep.mubr.bf16.mxu0 0
    %4303 = vmatmul.mubr.bf16.gmra.mrb[0].mxu0 %v4262
    %v4304 = vpop.f32.mrb[0].mxu0
    %v4305 = vadd.f32 0.0, %v4304
    %v4306 = vpop.f32.mrb[0].mxu0
    %v4307 = vpop.f32.mrb[0].mxu0
    %v4308 = vadd.f32 0.0, %v4307
    %v4309 = vpop.f32.mrb[0].mxu0
    %4310 = vmatprep.mubr.bf16.mxu0 0
    %4311 = vmatmul.mubr.bf16.gmra.mrb[0].mxu0 %v4265
    %v4312 = vpop.f32.mrb[0].mxu0
    %v4313 = vadd.f32 0.0, %v4312
    %v4314 = vpop.f32.mrb[0].mxu0
    %v4315 = vpop.f32.mrb[0].mxu0
    %v4316 = vadd.f32 0.0, %v4315
    %v4317 = vpop.f32.mrb[0].mxu0
    %4318 = vmatprep.mubr.bf16.mxu0 0
    %4319 = vmatmul.mubr.bf16.gmra.mrb[0].mxu0 %v4268
    %v4320 = vpop.f32.mrb[0].mxu0
    %v4321 = vadd.f32 0.0, %v4320
    %v4322 = vpop.f32.mrb[0].mxu0
    %v4323 = vpop.f32.mrb[0].mxu0
    %v4324 = vadd.f32 0.0, %v4323
    %v4325 = vpop.f32.mrb[0].mxu0
    %4326 = vdwg.mxu0
    %v4327 = vpack.c.bf16 %v4308, %v4305
    %v4328 = vpack.c.bf16 %v4316, %v4313
    %v4329 = vpack.c.bf16 %v4324, %v4321
    %v4334 = vunpack.c.l.b16 %v3372
    %v4335 = vunpack.c.l.b16 %v3373
    %v4336 = vunpack.c.l.b16 %v3374
    %v4337 = vunpack.c.l.b16 %v3375
    %v4338 = vpack.c.b16 %v4335, %v4334
    %v4339 = vpack.c.b16 %v4337, %v4336
    %v4343 = vsel %vm676, %v4327, 0
    %v4346 = vsel %vm676, %v4328, 0
    %v4349 = vsel %vm676, %v4329, 0
    %4351 = vmatprep.subr.bf16.mxu0 0
    %4352 = vmatpush1.bf16.msra.mxu0 %v4338
    %4353 = vmatprep.subr.bf16.mxu0 0
    %4354 = vmatpush1.bf16.msra.mxu0 %v4339
    %4355 = vmatprep.subr.bf16.mxu0 0
    %4356 = vmatpush1.bf16.msra.mxu0 0
    %4357 = vmatprep.subr.bf16.mxu0 0
    %4358 = vmatpush1.bf16.msra.mxu0 0
    %4359 = vmatprep.subr.bf16.mxu0 0
    %4360 = vmatpush1.bf16.msra.mxu0 0
    %4361 = vmatprep.subr.bf16.mxu0 0
    %4362 = vmatpush1.bf16.msra.mxu0 0
    %4363 = vmatprep.subr.bf16.mxu0 0
    %4364 = vmatpush1.bf16.msra.mxu0 0
    %4365 = vmatprep.subr.bf16.mxu0 0
    %4366 = vmatpush1.bf16.msra.mxu0 0
    %4367 = vmatprep.subr.bf16.mxu0 0
    %4368 = vmatpush1.bf16.msra.mxu0 0
    %4369 = vmatprep.subr.bf16.mxu0 0
    %4370 = vmatpush1.bf16.msra.mxu0 0
    %4371 = vmatprep.subr.bf16.mxu0 0
    %4372 = vmatpush1.bf16.msra.mxu0 0
    %4373 = vmatprep.subr.bf16.mxu0 0
    %4374 = vmatpush1.bf16.msra.mxu0 0
    %4375 = vmatprep.subr.bf16.mxu0 0
    %4376 = vmatpush1.bf16.msra.mxu0 0
    %4377 = vmatprep.subr.bf16.mxu0 0
    %4378 = vmatpush1.bf16.msra.mxu0 0
    %4379 = vmatprep.subr.bf16.mxu0 0
    %4380 = vmatpush1.bf16.msra.mxu0 0
    %4381 = vmatprep.subr.bf16.mxu0 0
    %4382 = vmatpush1.bf16.msra.mxu0 0
    %4383 = vmatprep.mubr.bf16.mxu0 0
    %4384 = vmatmul.mubr.bf16.gmra.mrb[0].mxu0 %v4343
    %v4385 = vpop.f32.mrb[0].mxu0
    %v4386 = vadd.f32 0.0, %v4385
    %v4387 = vpop.f32.mrb[0].mxu0
    %v4388 = vpop.f32.mrb[0].mxu0
    %v4389 = vadd.f32 0.0, %v4388
    %v4390 = vpop.f32.mrb[0].mxu0
    %4391 = vmatprep.mubr.bf16.mxu0 0
    %4392 = vmatmul.mubr.bf16.gmra.mrb[0].mxu0 %v4346
    %v4393 = vpop.f32.mrb[0].mxu0
    %v4394 = vadd.f32 0.0, %v4393
    %v4395 = vpop.f32.mrb[0].mxu0
    %v4396 = vpop.f32.mrb[0].mxu0
    %v4397 = vadd.f32 0.0, %v4396
    %v4398 = vpop.f32.mrb[0].mxu0
    %4399 = vmatprep.mubr.bf16.mxu0 0
    %4400 = vmatmul.mubr.bf16.gmra.mrb[0].mxu0 %v4349
    %v4401 = vpop.f32.mrb[0].mxu0
    %v4402 = vadd.f32 0.0, %v4401
    %v4403 = vpop.f32.mrb[0].mxu0
    %v4404 = vpop.f32.mrb[0].mxu0
    %v4405 = vadd.f32 0.0, %v4404
    %v4406 = vpop.f32.mrb[0].mxu0
    %4407 = vdwg.mxu0
    %v4408 = vadd.f32 %v4090, %v4386
    %v4409 = vadd.f32 %v4091, %v4389
    %v4410 = vadd.f32 %v4092, %v4394
    %v4411 = vadd.f32 %v4093, %v4397
    %v4412 = vadd.f32 %v4094, %v4402
    %v4413 = vadd.f32 %v4095, %v4405
    %v4414 = vadd.f32 %v2599, %v4408
    %v4415 = vadd.f32 %v2600, %v4409
    %v4416 = vadd.f32 %v2601, %v4410
    %v4417 = vadd.f32 %v2602, %v4411
    %v4418 = vadd.f32 %v2603, %v4412
    %v4419 = vadd.f32 %v2604, %v4413
    %s4420 = scalar_lea.vmem %s13, 1
    %v4421 = vld [vmem:[%s4420] sm:$0x1]
    %v4422 = vmul.f32 %v4414, %v4414
    %v4423 = vmul.f32 %v4415, %v4415
    %v4424 = vmul.f32 %v4416, %v4416
    %v4425 = vmul.f32 %v4417, %v4417
    %v4426 = vmul.f32 %v4418, %v4418
    %v4427 = vmul.f32 %v4419, %v4419
    %4428 = vadd.xlane.f32.xlu0 %v4422
    %v4429 = vpop.xlane.xlu0 %4428
    %4430 = vadd.xlane.f32.xlu0 %v4423
    %v4431 = vpop.xlane.xlu0 %4430
    %4432 = vadd.xlane.f32.xlu0 %v4424
    %v4433 = vpop.xlane.xlu0 %4432
    %4434 = vadd.xlane.f32.xlu0 %v4425
    %v4435 = vpop.xlane.xlu0 %4434
    %4436 = vadd.xlane.f32.xlu0 %v4426
    %v4437 = vpop.xlane.xlu0 %4436
    %4438 = vadd.xlane.f32.xlu0 %v4427
    %v4439 = vpop.xlane.xlu0 %4438
    %v4440 = vmul.f32 %v4429, %v200
    %v4441 = vmul.f32 %v4431, %v200
    %v4442 = vmul.f32 %v4433, %v200
    %v4443 = vmul.f32 %v4435, %v200
    %v4444 = vmul.f32 %v4437, %v200
    %v4445 = vmul.f32 %v4439, %v200
    %v4446 = vadd.f32 %v4440, 1e-05
    %v4447 = vadd.f32 %v4441, 1e-05
    %v4448 = vadd.f32 %v4442, 1e-05
    %v4449 = vadd.f32 %v4443, 1e-05
    %v4450 = vadd.f32 %v4444, 1e-05
    %v4451 = vadd.f32 %v4445, 1e-05
    %v4452 = vrsqrt.pop %v4446
    %v4453 = vrsqrt.pop %v4447
    %v4454 = vrsqrt.pop %v4448
    %v4455 = vrsqrt.pop %v4449
    %v4456 = vrsqrt.pop %v4450
    %v4457 = vrsqrt.pop %v4451
    %v4458 = vmul.f32 %v4414, %v4452
    %v4459 = vmul.f32 %v4415, %v4453
    %v4460 = vmul.f32 %v4416, %v4454
    %v4461 = vmul.f32 %v4417, %v4455
    %v4462 = vmul.f32 %v4418, %v4456
    %v4463 = vmul.f32 %v4419, %v4457
    %v4465 = vlaneseq
    %v4466 = vshrl.u32 %v4465, 7
    %v4467 = vsub.s32 0, %v4466
    %v4468 = vrot.slane %v4421, %v4467
    %v4470 = vmul.f32 %v4458, %v4468
    %v4471 = vmul.f32 %v4459, %v4468
    %v4472 = vmul.f32 %v4460, %v4468
    %v4473 = vmul.f32 %v4461, %v4468
    %v4474 = vmul.f32 %v4462, %v4468
    %v4475 = vmul.f32 %v4463, %v4468
    %s4476 = scalar_lea.vmem [#allocation4], 256
    %v4477 = vld [vmem:[%s4476] sm:$0xff]
    %v4478 = vld [vmem:[%s4476 + $0x8] sm:$0xff]
    %v4479 = vld [vmem:[%s4476 + $0x10] sm:$0xff]
    %v4480 = vld [vmem:[%s4476 + $0x18] sm:$0xff]
    %v4481 = vld [vmem:[%s4476 + $0x20] sm:$0xff]
    %v4482 = vld [vmem:[%s4476 + $0x28] sm:$0xff]
    %v4483 = vld [vmem:[%s4476 + $0x30] sm:$0xff]
    %v4484 = vld [vmem:[%s4476 + $0x38] sm:$0xff]
    %v4485 = vld [vmem:[%s4476 + $0x40] sm:$0xff]
    %v4486 = vld [vmem:[%s4476 + $0x48] sm:$0xff]
    %v4487 = vld [vmem:[%s4476 + $0x50] sm:$0xff]
    %v4488 = vld [vmem:[%s4476 + $0x58] sm:$0xff]
    %v4489 = vld [vmem:[%s4476 + $0x60] sm:$0xff]
    %v4490 = vld [vmem:[%s4476 + $0x68] sm:$0xff]
    %v4491 = vld [vmem:[%s4476 + $0x70] sm:$0xff]
    %v4492 = vld [vmem:[%s4476 + $0x78] sm:$0xff]
    %v4493 = vld [vmem:[%s4476 + $0x80] sm:$0xff]
    %v4494 = vld [vmem:[%s4476 + $0x88] sm:$0xff]
    %v4495 = vld [vmem:[%s4476 + $0x90] sm:$0xff]
    %v4496 = vld [vmem:[%s4476 + $0x98] sm:$0xff]
    %v4497 = vld [vmem:[%s4476 + $0xa0] sm:$0xff]
    %v4498 = vld [vmem:[%s4476 + $0xa8] sm:$0xff]
    %v4499 = vld [vmem:[%s4476 + $0xb0] sm:$0xff]
    %v4500 = vld [vmem:[%s4476 + $0xb8] sm:$0xff]
    %v4501 = vld [vmem:[%s4476 + $0xc0] sm:$0xff]
    %v4502 = vld [vmem:[%s4476 + $0xc8] sm:$0xff]
    %v4503 = vld [vmem:[%s4476 + $0xd0] sm:$0xff]
    %v4504 = vld [vmem:[%s4476 + $0xd8] sm:$0xff]
    %v4505 = vld [vmem:[%s4476 + $0xe0] sm:$0xff]
    %v4506 = vld [vmem:[%s4476 + $0xe8] sm:$0xff]
    %v4507 = vld [vmem:[%s4476 + $0xf0] sm:$0xff]
    %v4508 = vld [vmem:[%s4476 + $0xf8] sm:$0xff]
    %v4509 = vpack.c.bf16 %v4471, %v4470
    %v4510 = vpack.c.bf16 %v4473, %v4472
    %v4511 = vpack.c.bf16 %v4475, %v4474
    %v4544 = vunpack.c.l.b16 %v4477
    %v4545 = vunpack.c.h.b16 %v4477
    %v4546 = vunpack.c.l.b16 %v4478
    %v4547 = vunpack.c.h.b16 %v4478
    %v4548 = vunpack.c.l.b16 %v4479
    %v4549 = vunpack.c.h.b16 %v4479
    %v4550 = vunpack.c.l.b16 %v4480
    %v4551 = vunpack.c.h.b16 %v4480
    %v4552 = vunpack.c.l.b16 %v4481
    %v4553 = vunpack.c.h.b16 %v4481
    %v4554 = vunpack.c.l.b16 %v4482
    %v4555 = vunpack.c.h.b16 %v4482
    %v4556 = vunpack.c.l.b16 %v4483
    %v4557 = vunpack.c.h.b16 %v4483
    %v4558 = vunpack.c.l.b16 %v4484
    %v4559 = vunpack.c.h.b16 %v4484
    %v4560 = vunpack.c.l.b16 %v4485
    %v4561 = vunpack.c.h.b16 %v4485
    %v4562 = vunpack.c.l.b16 %v4486
    %v4563 = vunpack.c.h.b16 %v4486
    %v4564 = vunpack.c.l.b16 %v4487
    %v4565 = vunpack.c.h.b16 %v4487
    %v4566 = vunpack.c.l.b16 %v4488
    %v4567 = vunpack.c.h.b16 %v4488
    %v4568 = vunpack.c.l.b16 %v4489
    %v4569 = vunpack.c.h.b16 %v4489
    %v4570 = vunpack.c.l.b16 %v4490
    %v4571 = vunpack.c.h.b16 %v4490
    %v4572 = vunpack.c.l.b16 %v4491
    %v4573 = vunpack.c.h.b16 %v4491
    %v4574 = vunpack.c.l.b16 %v4492
    %v4575 = vunpack.c.h.b16 %v4492
    %v4576 = vunpack.c.l.b16 %v4493
    %v4577 = vunpack.c.h.b16 %v4493
    %v4578 = vunpack.c.l.b16 %v4494
    %v4579 = vunpack.c.h.b16 %v4494
    %v4580 = vunpack.c.l.b16 %v4495
    %v4581 = vunpack.c.h.b16 %v4495
    %v4582 = vunpack.c.l.b16 %v4496
    %v4583 = vunpack.c.h.b16 %v4496
    %v4584 = vunpack.c.l.b16 %v4497
    %v4585 = vunpack.c.h.b16 %v4497
    %v4586 = vunpack.c.l.b16 %v4498
    %v4587 = vunpack.c.h.b16 %v4498
    %v4588 = vunpack.c.l.b16 %v4499
    %v4589 = vunpack.c.h.b16 %v4499
    %v4590 = vunpack.c.l.b16 %v4500
    %v4591 = vunpack.c.h.b16 %v4500
    %v4592 = vunpack.c.l.b16 %v4501
    %v4593 = vunpack.c.h.b16 %v4501
    %v4594 = vunpack.c.l.b16 %v4502
    %v4595 = vunpack.c.h.b16 %v4502
    %v4596 = vunpack.c.l.b16 %v4503
    %v4597 = vunpack.c.h.b16 %v4503
    %v4598 = vunpack.c.l.b16 %v4504
    %v4599 = vunpack.c.h.b16 %v4504
    %v4600 = vunpack.c.l.b16 %v4505
    %v4601 = vunpack.c.h.b16 %v4505
    %v4602 = vunpack.c.l.b16 %v4506
    %v4603 = vunpack.c.h.b16 %v4506
    %v4604 = vunpack.c.l.b16 %v4507
    %v4605 = vunpack.c.h.b16 %v4507
    %v4606 = vunpack.c.l.b16 %v4508
    %v4607 = vunpack.c.h.b16 %v4508
    %v4608 = vpack.c.b16 %v4548, %v4544
    %v4609 = vpack.c.b16 %v4549, %v4545
    %v4610 = vpack.c.b16 %v4550, %v4546
    %v4611 = vpack.c.b16 %v4551, %v4547
    %v4612 = vpack.c.b16 %v4556, %v4552
    %v4613 = vpack.c.b16 %v4557, %v4553
    %v4614 = vpack.c.b16 %v4558, %v4554
    %v4615 = vpack.c.b16 %v4559, %v4555
    %v4616 = vpack.c.b16 %v4564, %v4560
    %v4617 = vpack.c.b16 %v4565, %v4561
    %v4618 = vpack.c.b16 %v4566, %v4562
    %v4619 = vpack.c.b16 %v4567, %v4563
    %v4620 = vpack.c.b16 %v4572, %v4568
    %v4621 = vpack.c.b16 %v4573, %v4569
    %v4622 = vpack.c.b16 %v4574, %v4570
    %v4623 = vpack.c.b16 %v4575, %v4571
    %v4624 = vpack.c.b16 %v4580, %v4576
    %v4625 = vpack.c.b16 %v4581, %v4577
    %v4626 = vpack.c.b16 %v4582, %v4578
    %v4627 = vpack.c.b16 %v4583, %v4579
    %v4628 = vpack.c.b16 %v4588, %v4584
    %v4629 = vpack.c.b16 %v4589, %v4585
    %v4630 = vpack.c.b16 %v4590, %v4586
    %v4631 = vpack.c.b16 %v4591, %v4587
    %v4632 = vpack.c.b16 %v4596, %v4592
    %v4633 = vpack.c.b16 %v4597, %v4593
    %v4634 = vpack.c.b16 %v4598, %v4594
    %v4635 = vpack.c.b16 %v4599, %v4595
    %v4636 = vpack.c.b16 %v4604, %v4600
    %v4637 = vpack.c.b16 %v4605, %v4601
    %v4638 = vpack.c.b16 %v4606, %v4602
    %v4639 = vpack.c.b16 %v4607, %v4603
    %4672 = vmatprep.subr.bf16.mxu0 %v4609
    %4673 = vmatpush1.bf16.msra.mxu0 %v4608
    %4674 = vmatprep.subr.bf16.mxu0 %v4613
    %4675 = vmatpush1.bf16.msra.mxu0 %v4612
    %4676 = vmatprep.subr.bf16.mxu0 %v4617
    %4677 = vmatpush1.bf16.msra.mxu0 %v4616
    %4678 = vmatprep.subr.bf16.mxu0 %v4621
    %4679 = vmatpush1.bf16.msra.mxu0 %v4620
    %4680 = vmatprep.subr.bf16.mxu0 %v4625
    %4681 = vmatpush1.bf16.msra.mxu0 %v4624
    %4682 = vmatprep.subr.bf16.mxu0 %v4629
    %4683 = vmatpush1.bf16.msra.mxu0 %v4628
    %4684 = vmatprep.subr.bf16.mxu0 %v4633
    %4685 = vmatpush1.bf16.msra.mxu0 %v4632
    %4686 = vmatprep.subr.bf16.mxu0 %v4637
    %4687 = vmatpush1.bf16.msra.mxu0 %v4636
    %4688 = vmatprep.subr.bf16.mxu0 0
    %4689 = vmatpush1.bf16.msra.mxu0 0
    %4690 = vmatprep.subr.bf16.mxu0 0
    %4691 = vmatpush1.bf16.msra.mxu0 0
    %4692 = vmatprep.subr.bf16.mxu0 0
    %4693 = vmatpush1.bf16.msra.mxu0 0
    %4694 = vmatprep.subr.bf16.mxu0 0
    %4695 = vmatpush1.bf16.msra.mxu0 0
    %4696 = vmatprep.subr.bf16.mxu0 0
    %4697 = vmatpush1.bf16.msra.mxu0 0
    %4698 = vmatprep.subr.bf16.mxu0 0
    %4699 = vmatpush1.bf16.msra.mxu0 0
    %4700 = vmatprep.subr.bf16.mxu0 0
    %4701 = vmatpush1.bf16.msra.mxu0 0
    %4702 = vmatprep.subr.bf16.mxu0 0
    %4703 = vmatpush1.bf16.msra.mxu0 0
    %4704 = vmatprep.mubr.bf16.mxu0 0
    %4705 = vmatmul.mubr.bf16.gmra.mrb[0].mxu0 %v4509
    %v4706 = vpop.f32.mrb[0].mxu0
    %v4707 = vadd.f32 0.0, %v4706
    %v4708 = vpop.f32.mrb[0].mxu0
    %v4709 = vadd.f32 0.0, %v4708
    %v4710 = vpop.f32.mrb[0].mxu0
    %v4711 = vadd.f32 0.0, %v4710
    %v4712 = vpop.f32.mrb[0].mxu0
    %v4713 = vadd.f32 0.0, %v4712
    %4714 = vmatprep.mubr.bf16.mxu0 0
    %4715 = vmatmul.mubr.bf16.gmra.mrb[0].mxu0 %v4510
    %v4716 = vpop.f32.mrb[0].mxu0
    %v4717 = vadd.f32 0.0, %v4716
    %v4718 = vpop.f32.mrb[0].mxu0
    %v4719 = vadd.f32 0.0, %v4718
    %v4720 = vpop.f32.mrb[0].mxu0
    %v4721 = vadd.f32 0.0, %v4720
    %v4722 = vpop.f32.mrb[0].mxu0
    %v4723 = vadd.f32 0.0, %v4722
    %4724 = vmatprep.mubr.bf16.mxu0 0
    %4725 = vmatmul.mubr.bf16.gmra.mrb[0].mxu0 %v4511
    %v4726 = vpop.f32.mrb[0].mxu0
    %v4727 = vadd.f32 0.0, %v4726
    %v4728 = vpop.f32.mrb[0].mxu0
    %v4729 = vadd.f32 0.0, %v4728
    %v4730 = vpop.f32.mrb[0].mxu0
    %v4731 = vadd.f32 0.0, %v4730
    %v4732 = vpop.f32.mrb[0].mxu0
    %v4733 = vadd.f32 0.0, %v4732
    %4734 = vdwg.mxu0
    %4735 = vmatprep.subr.bf16.mxu0 %v4611
    %4736 = vmatpush1.bf16.msra.mxu0 %v4610
    %4737 = vmatprep.subr.bf16.mxu0 %v4615
    %4738 = vmatpush1.bf16.msra.mxu0 %v4614
    %4739 = vmatprep.subr.bf16.mxu0 %v4619
    %4740 = vmatpush1.bf16.msra.mxu0 %v4618
    %4741 = vmatprep.subr.bf16.mxu0 %v4623
    %4742 = vmatpush1.bf16.msra.mxu0 %v4622
    %4743 = vmatprep.subr.bf16.mxu0 %v4627
    %4744 = vmatpush1.bf16.msra.mxu0 %v4626
    %4745 = vmatprep.subr.bf16.mxu0 %v4631
    %4746 = vmatpush1.bf16.msra.mxu0 %v4630
    %4747 = vmatprep.subr.bf16.mxu0 %v4635
    %4748 = vmatpush1.bf16.msra.mxu0 %v4634
    %4749 = vmatprep.subr.bf16.mxu0 %v4639
    %4750 = vmatpush1.bf16.msra.mxu0 %v4638
    %4751 = vmatprep.subr.bf16.mxu0 0
    %4752 = vmatpush1.bf16.msra.mxu0 0
    %4753 = vmatprep.subr.bf16.mxu0 0
    %4754 = vmatpush1.bf16.msra.mxu0 0
    %4755 = vmatprep.subr.bf16.mxu0 0
    %4756 = vmatpush1.bf16.msra.mxu0 0
    %4757 = vmatprep.subr.bf16.mxu0 0
    %4758 = vmatpush1.bf16.msra.mxu0 0
    %4759 = vmatprep.subr.bf16.mxu0 0
    %4760 = vmatpush1.bf16.msra.mxu0 0
    %4761 = vmatprep.subr.bf16.mxu0 0
    %4762 = vmatpush1.bf16.msra.mxu0 0
    %4763 = vmatprep.subr.bf16.mxu0 0
    %4764 = vmatpush1.bf16.msra.mxu0 0
    %4765 = vmatprep.subr.bf16.mxu0 0
    %4766 = vmatpush1.bf16.msra.mxu0 0
    %4767 = vmatprep.mubr.bf16.mxu0 0
    %4768 = vmatmul.mubr.bf16.gmra.mrb[0].mxu0 %v4509
    %v4769 = vpop.f32.mrb[0].mxu0
    %v4770 = vadd.f32 0.0, %v4769
    %v4771 = vpop.f32.mrb[0].mxu0
    %v4772 = vadd.f32 0.0, %v4771
    %v4773 = vpop.f32.mrb[0].mxu0
    %v4774 = vadd.f32 0.0, %v4773
    %v4775 = vpop.f32.mrb[0].mxu0
    %v4776 = vadd.f32 0.0, %v4775
    %4777 = vmatprep.mubr.bf16.mxu0 0
    %4778 = vmatmul.mubr.bf16.gmra.mrb[0].mxu0 %v4510
    %v4779 = vpop.f32.mrb[0].mxu0
    %v4780 = vadd.f32 0.0, %v4779
    %v4781 = vpop.f32.mrb[0].mxu0
    %v4782 = vadd.f32 0.0, %v4781
    %v4783 = vpop.f32.mrb[0].mxu0
    %v4784 = vadd.f32 0.0, %v4783
    %v4785 = vpop.f32.mrb[0].mxu0
    %v4786 = vadd.f32 0.0, %v4785
    %4787 = vmatprep.mubr.bf16.mxu0 0
    %4788 = vmatmul.mubr.bf16.gmra.mrb[0].mxu0 %v4511
    %v4789 = vpop.f32.mrb[0].mxu0
    %v4790 = vadd.f32 0.0, %v4789
    %v4791 = vpop.f32.mrb[0].mxu0
    %v4792 = vadd.f32 0.0, %v4791
    %v4793 = vpop.f32.mrb[0].mxu0
    %v4794 = vadd.f32 0.0, %v4793
    %v4795 = vpop.f32.mrb[0].mxu0
    %v4796 = vadd.f32 0.0, %v4795
    %4797 = vdwg.mxu0
    %v4798 = vsub.f32 0.0, %v4707
    %v4799 = vsub.f32 0.0, %v4709
    %v4800 = vsub.f32 0.0, %v4711
    %v4801 = vsub.f32 0.0, %v4713
    %v4802 = vsub.f32 0.0, %v4717
    %v4803 = vsub.f32 0.0, %v4719
    %v4804 = vsub.f32 0.0, %v4721
    %v4805 = vsub.f32 0.0, %v4723
    %v4806 = vsub.f32 0.0, %v4727
    %v4807 = vsub.f32 0.0, %v4729
    %v4808 = vsub.f32 0.0, %v4731
    %v4809 = vsub.f32 0.0, %v4733
    %v4810 = vmul.f32 %v4798, 1.442695
    %v4811 = vpow.pop %v4810
    %v4812 = vmul.f32 %v4799, 1.442695
    %v4813 = vpow.pop %v4812
    %v4814 = vmul.f32 %v4800, 1.442695
    %v4815 = vpow.pop %v4814
    %v4816 = vmul.f32 %v4801, 1.442695
    %v4817 = vpow.pop %v4816
    %v4818 = vmul.f32 %v4802, 1.442695
    %v4819 = vpow.pop %v4818
    %v4820 = vmul.f32 %v4803, 1.442695
    %v4821 = vpow.pop %v4820
    %v4822 = vmul.f32 %v4804, 1.442695
    %v4823 = vpow.pop %v4822
    %v4824 = vmul.f32 %v4805, 1.442695
    %v4825 = vpow.pop %v4824
    %v4826 = vmul.f32 %v4806, 1.442695
    %v4827 = vpow.pop %v4826
    %v4828 = vmul.f32 %v4807, 1.442695
    %v4829 = vpow.pop %v4828
    %v4830 = vmul.f32 %v4808, 1.442695
    %v4831 = vpow.pop %v4830
    %v4832 = vmul.f32 %v4809, 1.442695
    %v4833 = vpow.pop %v4832
    %v4834 = vadd.f32 %v4811, 1.0
    %v4835 = vadd.f32 %v4813, 1.0
    %v4836 = vadd.f32 %v4815, 1.0
    %v4837 = vadd.f32 %v4817, 1.0
    %v4838 = vadd.f32 %v4819, 1.0
    %v4839 = vadd.f32 %v4821, 1.0
    %v4840 = vadd.f32 %v4823, 1.0
    %v4841 = vadd.f32 %v4825, 1.0
    %v4842 = vadd.f32 %v4827, 1.0
    %v4843 = vadd.f32 %v4829, 1.0
    %v4844 = vadd.f32 %v4831, 1.0
    %v4845 = vadd.f32 %v4833, 1.0
    %v4846 = vrcp.pop %v4834
    %v4847 = vrcp.pop %v4835
    %v4848 = vrcp.pop %v4836
    %v4849 = vrcp.pop %v4837
    %v4850 = vrcp.pop %v4838
    %v4851 = vrcp.pop %v4839
    %v4852 = vrcp.pop %v4840
    %v4853 = vrcp.pop %v4841
    %v4854 = vrcp.pop %v4842
    %v4855 = vrcp.pop %v4843
    %v4856 = vrcp.pop %v4844
    %v4857 = vrcp.pop %v4845
    %v4858 = vmul.f32 %v4707, %v4846
    %v4859 = vmul.f32 %v4709, %v4847
    %v4860 = vmul.f32 %v4711, %v4848
    %v4861 = vmul.f32 %v4713, %v4849
    %v4862 = vmul.f32 %v4717, %v4850
    %v4863 = vmul.f32 %v4719, %v4851
    %v4864 = vmul.f32 %v4721, %v4852
    %v4865 = vmul.f32 %v4723, %v4853
    %v4866 = vmul.f32 %v4727, %v4854
    %v4867 = vmul.f32 %v4729, %v4855
    %v4868 = vmul.f32 %v4731, %v4856
    %v4869 = vmul.f32 %v4733, %v4857
    %v4870 = vmul.f32 %v4858, %v4770
    %v4871 = vmul.f32 %v4859, %v4772
    %v4872 = vmul.f32 %v4860, %v4774
    %v4873 = vmul.f32 %v4861, %v4776
    %v4874 = vmul.f32 %v4862, %v4780
    %v4875 = vmul.f32 %v4863, %v4782
    %v4876 = vmul.f32 %v4864, %v4784
    %v4877 = vmul.f32 %v4865, %v4786
    %v4878 = vmul.f32 %v4866, %v4790
    %v4879 = vmul.f32 %v4867, %v4792
    %v4880 = vmul.f32 %v4868, %v4794
    %v4881 = vmul.f32 %v4869, %v4796
    %s4882 = scalar_lea.vmem [#allocation6], 128
    %v4883 = vld [vmem:[%s4882] sm:$0xf]
    %v4884 = vld [vmem:[%s4882 + $0x4] sm:$0xf]
    %v4885 = vld [vmem:[%s4882 + $0x8] sm:$0xf]
    %v4886 = vld [vmem:[%s4882 + $0xc] sm:$0xf]
    %v4887 = vld [vmem:[%s4882 + $0x10] sm:$0xf]
    %v4888 = vld [vmem:[%s4882 + $0x14] sm:$0xf]
    %v4889 = vld [vmem:[%s4882 + $0x18] sm:$0xf]
    %v4890 = vld [vmem:[%s4882 + $0x1c] sm:$0xf]
    %v4891 = vld [vmem:[%s4882 + $0x20] sm:$0xf]
    %v4892 = vld [vmem:[%s4882 + $0x24] sm:$0xf]
    %v4893 = vld [vmem:[%s4882 + $0x28] sm:$0xf]
    %v4894 = vld [vmem:[%s4882 + $0x2c] sm:$0xf]
    %v4895 = vld [vmem:[%s4882 + $0x30] sm:$0xf]
    %v4896 = vld [vmem:[%s4882 + $0x34] sm:$0xf]
    %v4897 = vld [vmem:[%s4882 + $0x38] sm:$0xf]
    %v4898 = vld [vmem:[%s4882 + $0x3c] sm:$0xf]
    %v4899 = vld [vmem:[%s4882 + $0x40] sm:$0xf]
    %v4900 = vld [vmem:[%s4882 + $0x44] sm:$0xf]
    %v4901 = vld [vmem:[%s4882 + $0x48] sm:$0xf]
    %v4902 = vld [vmem:[%s4882 + $0x4c] sm:$0xf]
    %v4903 = vld [vmem:[%s4882 + $0x50] sm:$0xf]
    %v4904 = vld [vmem:[%s4882 + $0x54] sm:$0xf]
    %v4905 = vld [vmem:[%s4882 + $0x58] sm:$0xf]
    %v4906 = vld [vmem:[%s4882 + $0x5c] sm:$0xf]
    %v4907 = vld [vmem:[%s4882 + $0x60] sm:$0xf]
    %v4908 = vld [vmem:[%s4882 + $0x64] sm:$0xf]
    %v4909 = vld [vmem:[%s4882 + $0x68] sm:$0xf]
    %v4910 = vld [vmem:[%s4882 + $0x6c] sm:$0xf]
    %v4911 = vld [vmem:[%s4882 + $0x70] sm:$0xf]
    %v4912 = vld [vmem:[%s4882 + $0x74] sm:$0xf]
    %v4913 = vld [vmem:[%s4882 + $0x78] sm:$0xf]
    %v4914 = vld [vmem:[%s4882 + $0x7c] sm:$0xf]
    %v4915 = vpack.c.bf16 %v4872, %v4870
    %v4916 = vpack.c.bf16 %v4873, %v4871
    %v4917 = vpack.c.bf16 %v4876, %v4874
    %v4918 = vpack.c.bf16 %v4877, %v4875
    %v4919 = vpack.c.bf16 %v4880, %v4878
    %v4920 = vpack.c.bf16 %v4881, %v4879
    %v4953 = vunpack.c.l.b16 %v4883
    %v4954 = vunpack.c.l.b16 %v4884
    %v4955 = vunpack.c.l.b16 %v4885
    %v4956 = vunpack.c.l.b16 %v4886
    %v4957 = vunpack.c.l.b16 %v4887
    %v4958 = vunpack.c.l.b16 %v4888
    %v4959 = vunpack.c.l.b16 %v4889
    %v4960 = vunpack.c.l.b16 %v4890
    %v4961 = vunpack.c.l.b16 %v4891
    %v4962 = vunpack.c.l.b16 %v4892
    %v4963 = vunpack.c.l.b16 %v4893
    %v4964 = vunpack.c.l.b16 %v4894
    %v4965 = vunpack.c.l.b16 %v4895
    %v4966 = vunpack.c.l.b16 %v4896
    %v4967 = vunpack.c.l.b16 %v4897
    %v4968 = vunpack.c.l.b16 %v4898
    %v4969 = vunpack.c.l.b16 %v4899
    %v4970 = vunpack.c.l.b16 %v4900
    %v4971 = vunpack.c.l.b16 %v4901
    %v4972 = vunpack.c.l.b16 %v4902
    %v4973 = vunpack.c.l.b16 %v4903
    %v4974 = vunpack.c.l.b16 %v4904
    %v4975 = vunpack.c.l.b16 %v4905
    %v4976 = vunpack.c.l.b16 %v4906
    %v4977 = vunpack.c.l.b16 %v4907
    %v4978 = vunpack.c.l.b16 %v4908
    %v4979 = vunpack.c.l.b16 %v4909
    %v4980 = vunpack.c.l.b16 %v4910
    %v4981 = vunpack.c.l.b16 %v4911
    %v4982 = vunpack.c.l.b16 %v4912
    %v4983 = vunpack.c.l.b16 %v4913
    %v4984 = vunpack.c.l.b16 %v4914
    %v4985 = vpack.c.b16 %v4954, %v4953
    %v4986 = vpack.c.b16 %v4956, %v4955
    %v4987 = vpack.c.b16 %v4958, %v4957
    %v4988 = vpack.c.b16 %v4960, %v4959
    %v4989 = vpack.c.b16 %v4962, %v4961
    %v4990 = vpack.c.b16 %v4964, %v4963
    %v4991 = vpack.c.b16 %v4966, %v4965
    %v4992 = vpack.c.b16 %v4968, %v4967
    %v4993 = vpack.c.b16 %v4970, %v4969
    %v4994 = vpack.c.b16 %v4972, %v4971
    %v4995 = vpack.c.b16 %v4974, %v4973
    %v4996 = vpack.c.b16 %v4976, %v4975
    %v4997 = vpack.c.b16 %v4978, %v4977
    %v4998 = vpack.c.b16 %v4980, %v4979
    %v4999 = vpack.c.b16 %v4982, %v4981
    %v5000 = vpack.c.b16 %v4984, %v4983
    %5017 = vmatprep.subr.bf16.mxu0 0
    %5018 = vmatpush1.bf16.msra.mxu0 %v4985
    %5019 = vmatprep.subr.bf16.mxu0 0
    %5020 = vmatpush1.bf16.msra.mxu0 %v4986
    %5021 = vmatprep.subr.bf16.mxu0 0
    %5022 = vmatpush1.bf16.msra.mxu0 %v4987
    %5023 = vmatprep.subr.bf16.mxu0 0
    %5024 = vmatpush1.bf16.msra.mxu0 %v4988
    %5025 = vmatprep.subr.bf16.mxu0 0
    %5026 = vmatpush1.bf16.msra.mxu0 %v4989
    %5027 = vmatprep.subr.bf16.mxu0 0
    %5028 = vmatpush1.bf16.msra.mxu0 %v4990
    %5029 = vmatprep.subr.bf16.mxu0 0
    %5030 = vmatpush1.bf16.msra.mxu0 %v4991
    %5031 = vmatprep.subr.bf16.mxu0 0
    %5032 = vmatpush1.bf16.msra.mxu0 %v4992
    %5033 = vmatprep.subr.bf16.mxu0 0
    %5034 = vmatpush1.bf16.msra.mxu0 %v4993
    %5035 = vmatprep.subr.bf16.mxu0 0
    %5036 = vmatpush1.bf16.msra.mxu0 %v4994
    %5037 = vmatprep.subr.bf16.mxu0 0
    %5038 = vmatpush1.bf16.msra.mxu0 %v4995
    %5039 = vmatprep.subr.bf16.mxu0 0
    %5040 = vmatpush1.bf16.msra.mxu0 %v4996
    %5041 = vmatprep.subr.bf16.mxu0 0
    %5042 = vmatpush1.bf16.msra.mxu0 %v4997
    %5043 = vmatprep.subr.bf16.mxu0 0
    %5044 = vmatpush1.bf16.msra.mxu0 %v4998
    %5045 = vmatprep.subr.bf16.mxu0 0
    %5046 = vmatpush1.bf16.msra.mxu0 %v4999
    %5047 = vmatprep.subr.bf16.mxu0 0
    %5048 = vmatpush1.bf16.msra.mxu0 %v5000
    %5049 = vmatprep.mubr.bf16.mxu0 %v4916
    %5050 = vmatmul.mubr.bf16.gmra.mrb[0].mxu0 %v4915
    %v5051 = vpop.f32.mrb[0].mxu0
    %v5052 = vadd.f32 0.0, %v5051
    %v5053 = vpop.f32.mrb[0].mxu0
    %v5054 = vpop.f32.mrb[0].mxu0
    %v5055 = vadd.f32 0.0, %v5054
    %v5056 = vpop.f32.mrb[0].mxu0
    %5057 = vmatprep.mubr.bf16.mxu0 %v4918
    %5058 = vmatmul.mubr.bf16.gmra.mrb[0].mxu0 %v4917
    %v5059 = vpop.f32.mrb[0].mxu0
    %v5060 = vadd.f32 0.0, %v5059
    %v5061 = vpop.f32.mrb[0].mxu0
    %v5062 = vpop.f32.mrb[0].mxu0
    %v5063 = vadd.f32 0.0, %v5062
    %v5064 = vpop.f32.mrb[0].mxu0
    %5065 = vmatprep.mubr.bf16.mxu0 %v4920
    %5066 = vmatmul.mubr.bf16.gmra.mrb[0].mxu0 %v4919
    %v5067 = vpop.f32.mrb[0].mxu0
    %v5068 = vadd.f32 0.0, %v5067
    %v5069 = vpop.f32.mrb[0].mxu0
    %v5070 = vpop.f32.mrb[0].mxu0
    %v5071 = vadd.f32 0.0, %v5070
    %v5072 = vpop.f32.mrb[0].mxu0
    %5073 = vdwg.mxu0
    %v5074 = vadd.f32 %v4414, %v5052
    %v5075 = vadd.f32 %v4415, %v5055
    %v5076 = vadd.f32 %v4416, %v5060
    %v5077 = vadd.f32 %v4417, %v5063
    %v5078 = vadd.f32 %v4418, %v5068
    %v5079 = vadd.f32 %v4419, %v5071
    %s5080 = scalar_lea.vmem %s8, 640
    %v5081 = vld [vmem:[%s5080] sm:$0xff]
    %v5082 = vld [vmem:[%s5080 + $0x8] sm:$0xff]
    %v5083 = vld [vmem:[%s5080 + $0x10] sm:$0xf]
    %v5084 = vld [vmem:[%s5080 + $0x14] sm:$0xff]
    %v5085 = vld [vmem:[%s5080 + $0x1c] sm:$0xff]
    %v5086 = vld [vmem:[%s5080 + $0x24] sm:$0xf]
    %v5087 = vld [vmem:[%s5080 + $0x28] sm:$0xff]
    %v5088 = vld [vmem:[%s5080 + $0x30] sm:$0xff]
    %v5089 = vld [vmem:[%s5080 + $0x38] sm:$0xf]
    %v5090 = vld [vmem:[%s5080 + $0x3c] sm:$0xff]
    %v5091 = vld [vmem:[%s5080 + $0x44] sm:$0xff]
    %v5092 = vld [vmem:[%s5080 + $0x4c] sm:$0xf]
    %v5093 = vld [vmem:[%s5080 + $0x50] sm:$0xff]
    %v5094 = vld [vmem:[%s5080 + $0x58] sm:$0xff]
    %v5095 = vld [vmem:[%s5080 + $0x60] sm:$0xf]
    %v5096 = vld [vmem:[%s5080 + $0x64] sm:$0xff]
    %v5097 = vld [vmem:[%s5080 + $0x6c] sm:$0xff]
    %v5098 = vld [vmem:[%s5080 + $0x74] sm:$0xf]
    %v5099 = vld [vmem:[%s5080 + $0x78] sm:$0xff]
    %v5100 = vld [vmem:[%s5080 + $0x80] sm:$0xff]
    %v5101 = vld [vmem:[%s5080 + $0x88] sm:$0xf]
    %v5102 = vld [vmem:[%s5080 + $0x8c] sm:$0xff]
    %v5103 = vld [vmem:[%s5080 + $0x94] sm:$0xff]
    %v5104 = vld [vmem:[%s5080 + $0x9c] sm:$0xf]
    %v5105 = vld [vmem:[%s5080 + $0xa0] sm:$0xff]
    %v5106 = vld [vmem:[%s5080 + $0xa8] sm:$0xff]
    %v5107 = vld [vmem:[%s5080 + $0xb0] sm:$0xf]
    %v5108 = vld [vmem:[%s5080 + $0xb4] sm:$0xff]
    %v5109 = vld [vmem:[%s5080 + $0xbc] sm:$0xff]
    %v5110 = vld [vmem:[%s5080 + $0xc4] sm:$0xf]
    %v5111 = vld [vmem:[%s5080 + $0xc8] sm:$0xff]
    %v5112 = vld [vmem:[%s5080 + $0xd0] sm:$0xff]
    %v5113 = vld [vmem:[%s5080 + $0xd8] sm:$0xf]
    %v5114 = vld [vmem:[%s5080 + $0xdc] sm:$0xff]
    %v5115 = vld [vmem:[%s5080 + $0xe4] sm:$0xff]
    %v5116 = vld [vmem:[%s5080 + $0xec] sm:$0xf]
    %v5117 = vld [vmem:[%s5080 + $0xf0] sm:$0xff]
    %v5118 = vld [vmem:[%s5080 + $0xf8] sm:$0xff]
    %v5119 = vld [vmem:[%s5080 + $0x100] sm:$0xf]
    %v5120 = vld [vmem:[%s5080 + $0x104] sm:$0xff]
    %v5121 = vld [vmem:[%s5080 + $0x10c] sm:$0xff]
    %v5122 = vld [vmem:[%s5080 + $0x114] sm:$0xf]
    %v5123 = vld [vmem:[%s5080 + $0x118] sm:$0xff]
    %v5124 = vld [vmem:[%s5080 + $0x120] sm:$0xff]
    %v5125 = vld [vmem:[%s5080 + $0x128] sm:$0xf]
    %v5126 = vld [vmem:[%s5080 + $0x12c] sm:$0xff]
    %v5127 = vld [vmem:[%s5080 + $0x134] sm:$0xff]
    %v5128 = vld [vmem:[%s5080 + $0x13c] sm:$0xf]
    %s5129 = scalar_lea.vmem %s12, 2
    %v5130 = vld [vmem:[%s5129] sm:$0x1]
    %v5131 = vmul.f32 %v5074, %v5074
    %v5132 = vmul.f32 %v5075, %v5075
    %v5133 = vmul.f32 %v5076, %v5076
    %v5134 = vmul.f32 %v5077, %v5077
    %v5135 = vmul.f32 %v5078, %v5078
    %v5136 = vmul.f32 %v5079, %v5079
    %5137 = vadd.xlane.f32.xlu0 %v5131
    %v5138 = vpop.xlane.xlu0 %5137
    %5139 = vadd.xlane.f32.xlu0 %v5132
    %v5140 = vpop.xlane.xlu0 %5139
    %5141 = vadd.xlane.f32.xlu0 %v5133
    %v5142 = vpop.xlane.xlu0 %5141
    %5143 = vadd.xlane.f32.xlu0 %v5134
    %v5144 = vpop.xlane.xlu0 %5143
    %5145 = vadd.xlane.f32.xlu0 %v5135
    %v5146 = vpop.xlane.xlu0 %5145
    %5147 = vadd.xlane.f32.xlu0 %v5136
    %v5148 = vpop.xlane.xlu0 %5147
    %v5149 = vmul.f32 %v5138, %v200
    %v5150 = vmul.f32 %v5140, %v200
    %v5151 = vmul.f32 %v5142, %v200
    %v5152 = vmul.f32 %v5144, %v200
    %v5153 = vmul.f32 %v5146, %v200
    %v5154 = vmul.f32 %v5148, %v200
    %v5155 = vadd.f32 %v5149, 1e-05
    %v5156 = vadd.f32 %v5150, 1e-05
    %v5157 = vadd.f32 %v5151, 1e-05
    %v5158 = vadd.f32 %v5152, 1e-05
    %v5159 = vadd.f32 %v5153, 1e-05
    %v5160 = vadd.f32 %v5154, 1e-05
    %v5161 = vrsqrt.pop %v5155
    %v5162 = vrsqrt.pop %v5156
    %v5163 = vrsqrt.pop %v5157
    %v5164 = vrsqrt.pop %v5158
    %v5165 = vrsqrt.pop %v5159
    %v5166 = vrsqrt.pop %v5160
    %v5167 = vmul.f32 %v5074, %v5161
    %v5168 = vmul.f32 %v5075, %v5162
    %v5169 = vmul.f32 %v5076, %v5163
    %v5170 = vmul.f32 %v5077, %v5164
    %v5171 = vmul.f32 %v5078, %v5165
    %v5172 = vmul.f32 %v5079, %v5166
    %v5174 = vlaneseq
    %v5175 = vshrl.u32 %v5174, 7
    %v5176 = vsub.s32 0, %v5175
    %v5177 = vrot.slane %v5130, %v5176
    %v5179 = vmul.f32 %v5167, %v5177
    %v5180 = vmul.f32 %v5168, %v5177
    %v5181 = vmul.f32 %v5169, %v5177
    %v5182 = vmul.f32 %v5170, %v5177
    %v5183 = vmul.f32 %v5171, %v5177
    %v5184 = vmul.f32 %v5172, %v5177
    %v5185 = vpack.c.bf16 %v5180, %v5179
    %v5186 = vpack.c.bf16 %v5182, %v5181
    %v5187 = vpack.c.bf16 %v5184, %v5183
    %v5236 = vunpack.c.l.b16 %v5081
    %v5237 = vunpack.c.h.b16 %v5081
    %v5238 = vunpack.c.l.b16 %v5082
    %v5239 = vunpack.c.h.b16 %v5082
    %v5240 = vunpack.c.l.b16 %v5083
    %v5241 = vunpack.c.l.b16 %v5084
    %v5242 = vunpack.c.h.b16 %v5084
    %v5243 = vunpack.c.l.b16 %v5085
    %v5244 = vunpack.c.h.b16 %v5085
    %v5245 = vunpack.c.l.b16 %v5086
    %v5246 = vunpack.c.l.b16 %v5087
    %v5247 = vunpack.c.h.b16 %v5087
    %v5248 = vunpack.c.l.b16 %v5088
    %v5249 = vunpack.c.h.b16 %v5088
    %v5250 = vunpack.c.l.b16 %v5089
    %v5251 = vunpack.c.l.b16 %v5090
    %v5252 = vunpack.c.h.b16 %v5090
    %v5253 = vunpack.c.l.b16 %v5091
    %v5254 = vunpack.c.h.b16 %v5091
    %v5255 = vunpack.c.l.b16 %v5092
    %v5256 = vunpack.c.l.b16 %v5093
    %v5257 = vunpack.c.h.b16 %v5093
    %v5258 = vunpack.c.l.b16 %v5094
    %v5259 = vunpack.c.h.b16 %v5094
    %v5260 = vunpack.c.l.b16 %v5095
    %v5261 = vunpack.c.l.b16 %v5096
    %v5262 = vunpack.c.h.b16 %v5096
    %v5263 = vunpack.c.l.b16 %v5097
    %v5264 = vunpack.c.h.b16 %v5097
    %v5265 = vunpack.c.l.b16 %v5098
    %v5266 = vunpack.c.l.b16 %v5099
    %v5267 = vunpack.c.h.b16 %v5099
    %v5268 = vunpack.c.l.b16 %v5100
    %v5269 = vunpack.c.h.b16 %v5100
    %v5270 = vunpack.c.l.b16 %v5101
    %v5271 = vunpack.c.l.b16 %v5102
    %v5272 = vunpack.c.h.b16 %v5102
    %v5273 = vunpack.c.l.b16 %v5103
    %v5274 = vunpack.c.h.b16 %v5103
    %v5275 = vunpack.c.l.b16 %v5104
    %v5276 = vunpack.c.l.b16 %v5105
    %v5277 = vunpack.c.h.b16 %v5105
    %v5278 = vunpack.c.l.b16 %v5106
    %v5279 = vunpack.c.h.b16 %v5106
    %v5280 = vunpack.c.l.b16 %v5107
    %v5281 = vunpack.c.l.b16 %v5108
    %v5282 = vunpack.c.h.b16 %v5108
    %v5283 = vunpack.c.l.b16 %v5109
    %v5284 = vunpack.c.h.b16 %v5109
    %v5285 = vunpack.c.l.b16 %v5110
    %v5286 = vunpack.c.l.b16 %v5111
    %v5287 = vunpack.c.h.b16 %v5111
    %v5288 = vunpack.c.l.b16 %v5112
    %v5289 = vunpack.c.h.b16 %v5112
    %v5290 = vunpack.c.l.b16 %v5113
    %v5291 = vunpack.c.l.b16 %v5114
    %v5292 = vunpack.c.h.b16 %v5114
    %v5293 = vunpack.c.l.b16 %v5115
    %v5294 = vunpack.c.h.b16 %v5115
    %v5295 = vunpack.c.l.b16 %v5116
    %v5296 = vunpack.c.l.b16 %v5117
    %v5297 = vunpack.c.h.b16 %v5117
    %v5298 = vunpack.c.l.b16 %v5118
    %v5299 = vunpack.c.h.b16 %v5118
    %v5300 = vunpack.c.l.b16 %v5119
    %v5301 = vunpack.c.l.b16 %v5120
    %v5302 = vunpack.c.h.b16 %v5120
    %v5303 = vunpack.c.l.b16 %v5121
    %v5304 = vunpack.c.h.b16 %v5121
    %v5305 = vunpack.c.l.b16 %v5122
    %v5306 = vunpack.c.l.b16 %v5123
    %v5307 = vunpack.c.h.b16 %v5123
    %v5308 = vunpack.c.l.b16 %v5124
    %v5309 = vunpack.c.h.b16 %v5124
    %v5310 = vunpack.c.l.b16 %v5125
    %v5311 = vunpack.c.l.b16 %v5126
    %v5312 = vunpack.c.h.b16 %v5126
    %v5313 = vunpack.c.l.b16 %v5127
    %v5314 = vunpack.c.h.b16 %v5127
    %v5315 = vunpack.c.l.b16 %v5128
    %v5316 = vpack.c.b16 %v5241, %v5236
    %v5317 = vpack.c.b16 %v5242, %v5237
    %v5318 = vpack.c.b16 %v5243, %v5238
    %v5319 = vpack.c.b16 %v5244, %v5239
    %v5320 = vpack.c.b16 %v5245, %v5240
    %v5321 = vpack.c.b16 %v5251, %v5246
    %v5322 = vpack.c.b16 %v5252, %v5247
    %v5323 = vpack.c.b16 %v5253, %v5248
    %v5324 = vpack.c.b16 %v5254, %v5249
    %v5325 = vpack.c.b16 %v5255, %v5250
    %v5326 = vpack.c.b16 %v5261, %v5256
    %v5327 = vpack.c.b16 %v5262, %v5257
    %v5328 = vpack.c.b16 %v5263, %v5258
    %v5329 = vpack.c.b16 %v5264, %v5259
    %v5330 = vpack.c.b16 %v5265, %v5260
    %v5331 = vpack.c.b16 %v5271, %v5266
    %v5332 = vpack.c.b16 %v5272, %v5267
    %v5333 = vpack.c.b16 %v5273, %v5268
    %v5334 = vpack.c.b16 %v5274, %v5269
    %v5335 = vpack.c.b16 %v5275, %v5270
    %v5336 = vpack.c.b16 %v5281, %v5276
    %v5337 = vpack.c.b16 %v5282, %v5277
    %v5338 = vpack.c.b16 %v5283, %v5278
    %v5339 = vpack.c.b16 %v5284, %v5279
    %v5340 = vpack.c.b16 %v5285, %v5280
    %v5341 = vpack.c.b16 %v5291, %v5286
    %v5342 = vpack.c.b16 %v5292, %v5287
    %v5343 = vpack.c.b16 %v5293, %v5288
    %v5344 = vpack.c.b16 %v5294, %v5289
    %v5345 = vpack.c.b16 %v5295, %v5290
    %v5346 = vpack.c.b16 %v5301, %v5296
    %v5347 = vpack.c.b16 %v5302, %v5297
    %v5348 = vpack.c.b16 %v5303, %v5298
    %v5349 = vpack.c.b16 %v5304, %v5299
    %v5350 = vpack.c.b16 %v5305, %v5300
    %v5351 = vpack.c.b16 %v5311, %v5306
    %v5352 = vpack.c.b16 %v5312, %v5307
    %v5353 = vpack.c.b16 %v5313, %v5308
    %v5354 = vpack.c.b16 %v5314, %v5309
    %v5355 = vpack.c.b16 %v5315, %v5310
    %5396 = vmatprep.subr.bf16.mxu0 %v5317
    %5397 = vmatpush1.bf16.msra.mxu0 %v5316
    %5398 = vmatprep.subr.bf16.mxu0 %v5322
    %5399 = vmatpush1.bf16.msra.mxu0 %v5321
    %5400 = vmatprep.subr.bf16.mxu0 %v5327
    %5401 = vmatpush1.bf16.msra.mxu0 %v5326
    %5402 = vmatprep.subr.bf16.mxu0 %v5332
    %5403 = vmatpush1.bf16.msra.mxu0 %v5331
    %5404 = vmatprep.subr.bf16.mxu0 %v5337
    %5405 = vmatpush1.bf16.msra.mxu0 %v5336
    %5406 = vmatprep.subr.bf16.mxu0 %v5342
    %5407 = vmatpush1.bf16.msra.mxu0 %v5341
    %5408 = vmatprep.subr.bf16.mxu0 %v5347
    %5409 = vmatpush1.bf16.msra.mxu0 %v5346
    %5410 = vmatprep.subr.bf16.mxu0 %v5352
    %5411 = vmatpush1.bf16.msra.mxu0 %v5351
    %5412 = vmatprep.subr.bf16.mxu0 0
    %5413 = vmatpush1.bf16.msra.mxu0 0
    %5414 = vmatprep.subr.bf16.mxu0 0
    %5415 = vmatpush1.bf16.msra.mxu0 0
    %5416 = vmatprep.subr.bf16.mxu0 0
    %5417 = vmatpush1.bf16.msra.mxu0 0
    %5418 = vmatprep.subr.bf16.mxu0 0
    %5419 = vmatpush1.bf16.msra.mxu0 0
    %5420 = vmatprep.subr.bf16.mxu0 0
    %5421 = vmatpush1.bf16.msra.mxu0 0
    %5422 = vmatprep.subr.bf16.mxu0 0
    %5423 = vmatpush1.bf16.msra.mxu0 0
    %5424 = vmatprep.subr.bf16.mxu0 0
    %5425 = vmatpush1.bf16.msra.mxu0 0
    %5426 = vmatprep.subr.bf16.mxu0 0
    %5427 = vmatpush1.bf16.msra.mxu0 0
    %5428 = vmatprep.mubr.bf16.mxu0 0
    %5429 = vmatmul.mubr.bf16.gmra.mrb[0].mxu0 %v5185
    %v5430 = vpop.f32.mrb[0].mxu0
    %v5431 = vadd.f32 0.0, %v5430
    %v5432 = vpop.f32.mrb[0].mxu0
    %v5433 = vadd.f32 0.0, %v5432
    %v5434 = vpop.f32.mrb[0].mxu0
    %v5435 = vadd.f32 0.0, %v5434
    %v5436 = vpop.f32.mrb[0].mxu0
    %v5437 = vadd.f32 0.0, %v5436
    %5438 = vmatprep.mubr.bf16.mxu0 0
    %5439 = vmatmul.mubr.bf16.gmra.mrb[0].mxu0 %v5186
    %v5440 = vpop.f32.mrb[0].mxu0
    %v5441 = vadd.f32 0.0, %v5440
    %v5442 = vpop.f32.mrb[0].mxu0
    %v5443 = vadd.f32 0.0, %v5442
    %v5444 = vpop.f32.mrb[0].mxu0
    %v5445 = vadd.f32 0.0, %v5444
    %v5446 = vpop.f32.mrb[0].mxu0
    %v5447 = vadd.f32 0.0, %v5446
    %5448 = vmatprep.mubr.bf16.mxu0 0
    %5449 = vmatmul.mubr.bf16.gmra.mrb[0].mxu0 %v5187
    %v5450 = vpop.f32.mrb[0].mxu0
    %v5451 = vadd.f32 0.0, %v5450
    %v5452 = vpop.f32.mrb[0].mxu0
    %v5453 = vadd.f32 0.0, %v5452
    %v5454 = vpop.f32.mrb[0].mxu0
    %v5455 = vadd.f32 0.0, %v5454
    %v5456 = vpop.f32.mrb[0].mxu0
    %v5457 = vadd.f32 0.0, %v5456
    %5458 = vdwg.mxu0
    %5459 = vmatprep.subr.bf16.mxu0 %v5319
    %5460 = vmatpush1.bf16.msra.mxu0 %v5318
    %5461 = vmatprep.subr.bf16.mxu0 %v5324
    %5462 = vmatpush1.bf16.msra.mxu0 %v5323
    %5463 = vmatprep.subr.bf16.mxu0 %v5329
    %5464 = vmatpush1.bf16.msra.mxu0 %v5328
    %5465 = vmatprep.subr.bf16.mxu0 %v5334
    %5466 = vmatpush1.bf16.msra.mxu0 %v5333
    %5467 = vmatprep.subr.bf16.mxu0 %v5339
    %5468 = vmatpush1.bf16.msra.mxu0 %v5338
    %5469 = vmatprep.subr.bf16.mxu0 %v5344
    %5470 = vmatpush1.bf16.msra.mxu0 %v5343
    %5471 = vmatprep.subr.bf16.mxu0 %v5349
    %5472 = vmatpush1.bf16.msra.mxu0 %v5348
    %5473 = vmatprep.subr.bf16.mxu0 %v5354
    %5474 = vmatpush1.bf16.msra.mxu0 %v5353
    %5475 = vmatprep.subr.bf16.mxu0 0
    %5476 = vmatpush1.bf16.msra.mxu0 0
    %5477 = vmatprep.subr.bf16.mxu0 0
    %5478 = vmatpush1.bf16.msra.mxu0 0
    %5479 = vmatprep.subr.bf16.mxu0 0
    %5480 = vmatpush1.bf16.msra.mxu0 0
    %5481 = vmatprep.subr.bf16.mxu0 0
    %5482 = vmatpush1.bf16.msra.mxu0 0
    %5483 = vmatprep.subr.bf16.mxu0 0
    %5484 = vmatpush1.bf16.msra.mxu0 0
    %5485 = vmatprep.subr.bf16.mxu0 0
    %5486 = vmatpush1.bf16.msra.mxu0 0
    %5487 = vmatprep.subr.bf16.mxu0 0
    %5488 = vmatpush1.bf16.msra.mxu0 0
    %5489 = vmatprep.subr.bf16.mxu0 0
    %5490 = vmatpush1.bf16.msra.mxu0 0
    %5491 = vmatprep.mubr.bf16.mxu0 0
    %5492 = vmatmul.mubr.bf16.gmra.mrb[0].mxu0 %v5185
    %v5493 = vpop.f32.mrb[0].mxu0
    %v5494 = vadd.f32 0.0, %v5493
    %v5495 = vpop.f32.mrb[0].mxu0
    %v5496 = vadd.f32 0.0, %v5495
    %v5497 = vpop.f32.mrb[0].mxu0
    %v5498 = vadd.f32 0.0, %v5497
    %v5499 = vpop.f32.mrb[0].mxu0
    %v5500 = vadd.f32 0.0, %v5499
    %5501 = vmatprep.mubr.bf16.mxu0 0
    %5502 = vmatmul.mubr.bf16.gmra.mrb[0].mxu0 %v5186
    %v5503 = vpop.f32.mrb[0].mxu0
    %v5504 = vadd.f32 0.0, %v5503
    %v5505 = vpop.f32.mrb[0].mxu0
    %v5506 = vadd.f32 0.0, %v5505
    %v5507 = vpop.f32.mrb[0].mxu0
    %v5508 = vadd.f32 0.0, %v5507
    %v5509 = vpop.f32.mrb[0].mxu0
    %v5510 = vadd.f32 0.0, %v5509
    %5511 = vmatprep.mubr.bf16.mxu0 0
    %5512 = vmatmul.mubr.bf16.gmra.mrb[0].mxu0 %v5187
    %v5513 = vpop.f32.mrb[0].mxu0
    %v5514 = vadd.f32 0.0, %v5513
    %v5515 = vpop.f32.mrb[0].mxu0
    %v5516 = vadd.f32 0.0, %v5515
    %v5517 = vpop.f32.mrb[0].mxu0
    %v5518 = vadd.f32 0.0, %v5517
    %v5519 = vpop.f32.mrb[0].mxu0
    %v5520 = vadd.f32 0.0, %v5519
    %5521 = vdwg.mxu0
    %5522 = vmatprep.subr.bf16.mxu0 0
    %5523 = vmatpush1.bf16.msra.mxu0 %v5320
    %5524 = vmatprep.subr.bf16.mxu0 0
    %5525 = vmatpush1.bf16.msra.mxu0 %v5325
    %5526 = vmatprep.subr.bf16.mxu0 0
    %5527 = vmatpush1.bf16.msra.mxu0 %v5330
    %5528 = vmatprep.subr.bf16.mxu0 0
    %5529 = vmatpush1.bf16.msra.mxu0 %v5335
    %5530 = vmatprep.subr.bf16.mxu0 0
    %5531 = vmatpush1.bf16.msra.mxu0 %v5340
    %5532 = vmatprep.subr.bf16.mxu0 0
    %5533 = vmatpush1.bf16.msra.mxu0 %v5345
    %5534 = vmatprep.subr.bf16.mxu0 0
    %5535 = vmatpush1.bf16.msra.mxu0 %v5350
    %5536 = vmatprep.subr.bf16.mxu0 0
    %5537 = vmatpush1.bf16.msra.mxu0 %v5355
    %5538 = vmatprep.subr.bf16.mxu0 0
    %5539 = vmatpush1.bf16.msra.mxu0 0
    %5540 = vmatprep.subr.bf16.mxu0 0
    %5541 = vmatpush1.bf16.msra.mxu0 0
    %5542 = vmatprep.subr.bf16.mxu0 0
    %5543 = vmatpush1.bf16.msra.mxu0 0
    %5544 = vmatprep.subr.bf16.mxu0 0
    %5545 = vmatpush1.bf16.msra.mxu0 0
    %5546 = vmatprep.subr.bf16.mxu0 0
    %5547 = vmatpush1.bf16.msra.mxu0 0
    %5548 = vmatprep.subr.bf16.mxu0 0
    %5549 = vmatpush1.bf16.msra.mxu0 0
    %5550 = vmatprep.subr.bf16.mxu0 0
    %5551 = vmatpush1.bf16.msra.mxu0 0
    %5552 = vmatprep.subr.bf16.mxu0 0
    %5553 = vmatpush1.bf16.msra.mxu0 0
    %5554 = vmatprep.mubr.bf16.mxu0 0
    %5555 = vmatmul.mubr.bf16.gmra.mrb[0].mxu0 %v5185
    %v5556 = vpop.f32.mrb[0].mxu0
    %v5557 = vadd.f32 0.0, %v5556
    %v5558 = vpop.f32.mrb[0].mxu0
    %v5559 = vpop.f32.mrb[0].mxu0
    %v5560 = vadd.f32 0.0, %v5559
    %v5561 = vpop.f32.mrb[0].mxu0
    %5562 = vmatprep.mubr.bf16.mxu0 0
    %5563 = vmatmul.mubr.bf16.gmra.mrb[0].mxu0 %v5186
    %v5564 = vpop.f32.mrb[0].mxu0
    %v5565 = vadd.f32 0.0, %v5564
    %v5566 = vpop.f32.mrb[0].mxu0
    %v5567 = vpop.f32.mrb[0].mxu0
    %v5568 = vadd.f32 0.0, %v5567
    %v5569 = vpop.f32.mrb[0].mxu0
    %5570 = vmatprep.mubr.bf16.mxu0 0
    %5571 = vmatmul.mubr.bf16.gmra.mrb[0].mxu0 %v5187
    %v5572 = vpop.f32.mrb[0].mxu0
    %v5573 = vadd.f32 0.0, %v5572
    %v5574 = vpop.f32.mrb[0].mxu0
    %v5575 = vpop.f32.mrb[0].mxu0
    %v5576 = vadd.f32 0.0, %v5575
    %v5577 = vpop.f32.mrb[0].mxu0
    %5578 = vdwg.mxu0
    %v5579 = vmul.f32 %v5431, %v115
    %v5580 = vmul.f32 %v5435, %v116
    %v5581 = vmul.f32 %v5441, %v117
    %v5582 = vmul.f32 %v5445, %v118
    %v5583 = vmul.f32 %v5451, %v119
    %v5584 = vmul.f32 %v5455, %v120
    %v5585 = vmul.f32 %v5496, %v121
    %v5586 = vmul.f32 %v5500, %v122
    %v5587 = vmul.f32 %v5506, %v123
    %v5588 = vmul.f32 %v5510, %v124
    %v5589 = vmul.f32 %v5516, %v125
    %v5590 = vmul.f32 %v5520, %v126
    %v5591 = vadd.f32 %v5579, %v5585
    %v5592 = vadd.f32 %v5580, %v5586
    %v5593 = vadd.f32 %v5581, %v5587
    %v5594 = vadd.f32 %v5582, %v5588
    %v5595 = vadd.f32 %v5583, %v5589
    %v5596 = vadd.f32 %v5584, %v5590
    %v5597 = vmul.f32 %v5433, %v115
    %v5598 = vmul.f32 %v5437, %v116
    %v5599 = vmul.f32 %v5443, %v117
    %v5600 = vmul.f32 %v5447, %v118
    %v5601 = vmul.f32 %v5453, %v119
    %v5602 = vmul.f32 %v5457, %v120
    %v5603 = vmul.f32 %v5557, %v121
    %v5604 = vmul.f32 %v5560, %v122
    %v5605 = vmul.f32 %v5565, %v123
    %v5606 = vmul.f32 %v5568, %v124
    %v5607 = vmul.f32 %v5573, %v125
    %v5608 = vmul.f32 %v5576, %v126
    %v5609 = vadd.f32 %v5597, %v5603
    %v5610 = vadd.f32 %v5598, %v5604
    %v5611 = vadd.f32 %v5599, %v5605
    %v5612 = vadd.f32 %v5600, %v5606
    %v5613 = vadd.f32 %v5601, %v5607
    %v5614 = vadd.f32 %v5602, %v5608
    %v5615 = vpack.c.bf16 %v5592, %v5591
    %v5616 = vpack.c.bf16 %v5594, %v5593
    %v5617 = vpack.c.bf16 %v5596, %v5595
    %v5618 = vpack.c.bf16 %v5610, %v5609
    %v5619 = vpack.c.bf16 %v5612, %v5611
    %v5620 = vpack.c.bf16 %v5614, %v5613
    %v5621 = vpack.c.bf16 %v5498, %v5494
    %v5622 = vpack.c.bf16 %v5508, %v5504
    %v5623 = vpack.c.bf16 %v5518, %v5514
    %v5625 = vsel %vm676, %v5615, 0
    %v5628 = vsel %vm676, %v5616, 0
    %v5631 = vsel %vm676, %v5617, 0
    %v5634 = vsel %vm676, %v5618, 0
    %v5637 = vsel %vm676, %v5619, 0
    %v5640 = vsel %vm676, %v5620, 0
    %5642 = vmatprep.subr.bf16.mxu0 0
    %5643 = vmatpush1.bf16.xpose.msra.mxu0 %v5634
    %5644 = vmatprep.subr.bf16.mxu0 0
    %5645 = vmatpush1.bf16.xpose.msra.mxu0 %v5637
    %5646 = vmatprep.subr.bf16.mxu0 0
    %5647 = vmatpush1.bf16.xpose.msra.mxu0 %v5640
    %5648 = vmatprep.subr.bf16.mxu0 0
    %5649 = vmatpush1.bf16.xpose.msra.mxu0 0
    %5650 = vmatprep.subr.bf16.mxu0 0
    %5651 = vmatpush1.bf16.xpose.msra.mxu0 0
    %5652 = vmatprep.subr.bf16.mxu0 0
    %5653 = vmatpush1.bf16.xpose.msra.mxu0 0
    %5654 = vmatprep.subr.bf16.mxu0 0
    %5655 = vmatpush1.bf16.xpose.msra.mxu0 0
    %5656 = vmatprep.subr.bf16.mxu0 0
    %5657 = vmatpush1.bf16.xpose.msra.mxu0 0
    %5658 = vmatprep.subr.bf16.mxu0 0
    %5659 = vmatpush1.bf16.xpose.msra.mxu0 0
    %5660 = vmatprep.subr.bf16.mxu0 0
    %5661 = vmatpush1.bf16.xpose.msra.mxu0 0
    %5662 = vmatprep.subr.bf16.mxu0 0
    %5663 = vmatpush1.bf16.xpose.msra.mxu0 0
    %5664 = vmatprep.subr.bf16.mxu0 0
    %5665 = vmatpush1.bf16.xpose.msra.mxu0 0
    %5666 = vmatprep.subr.bf16.mxu0 0
    %5667 = vmatpush1.bf16.xpose.msra.mxu0 0
    %5668 = vmatprep.subr.bf16.mxu0 0
    %5669 = vmatpush1.bf16.xpose.msra.mxu0 0
    %5670 = vmatprep.subr.bf16.mxu0 0
    %5671 = vmatpush1.bf16.xpose.msra.mxu0 0
    %5672 = vmatprep.subr.bf16.mxu0 0
    %5673 = vmatpush1.bf16.xpose.msra.mxu0 0
    %5674 = vmatprep.mubr.bf16.mxu0 0
    %5675 = vmatmul.mubr.bf16.gmra.mrb[0].mxu0 %v5625
    %v5676 = vpop.f32.mrb[0].mxu0
    %v5677 = vadd.f32 %v127, %v5676
    %v5678 = vpop.f32.mrb[0].mxu0
    %v5679 = vpop.f32.mrb[0].mxu0
    %v5680 = vadd.f32 %v128, %v5679
    %v5681 = vpop.f32.mrb[0].mxu0
    %5682 = vmatprep.mubr.bf16.mxu0 0
    %5683 = vmatmul.mubr.bf16.gmra.mrb[0].mxu0 %v5628
    %v5684 = vpop.f32.mrb[0].mxu0
    %v5685 = vadd.f32 %v129, %v5684
    %v5686 = vpop.f32.mrb[0].mxu0
    %v5687 = vpop.f32.mrb[0].mxu0
    %v5688 = vadd.f32 %v130, %v5687
    %v5689 = vpop.f32.mrb[0].mxu0
    %5690 = vmatprep.mubr.bf16.mxu0 0
    %5691 = vmatmul.mubr.bf16.gmra.mrb[0].mxu0 %v5631
    %v5692 = vpop.f32.mrb[0].mxu0
    %v5693 = vadd.f32 %v131, %v5692
    %v5694 = vpop.f32.mrb[0].mxu0
    %v5695 = vpop.f32.mrb[0].mxu0
    %v5696 = vadd.f32 %v132, %v5695
    %v5697 = vpop.f32.mrb[0].mxu0
    %5698 = vdwg.mxu0
    %v5699 = vsel %vm752, %v5677, -inf
    %5700 = vmax.xlane.f32.xlu0 %v5699
    %v5701 = vpop.xlane.xlu0 %5700
    %v5702 = vsel %vm752, %v5680, -inf
    %5703 = vmax.xlane.f32.xlu0 %v5702
    %v5704 = vpop.xlane.xlu0 %5703
    %v5705 = vsel %vm752, %v5685, -inf
    %5706 = vmax.xlane.f32.xlu0 %v5705
    %v5707 = vpop.xlane.xlu0 %5706
    %v5708 = vsel %vm752, %v5688, -inf
    %5709 = vmax.xlane.f32.xlu0 %v5708
    %v5710 = vpop.xlane.xlu0 %5709
    %v5711 = vsel %vm752, %v5693, -inf
    %5712 = vmax.xlane.f32.xlu0 %v5711
    %v5713 = vpop.xlane.xlu0 %5712
    %v5714 = vsel %vm752, %v5696, -inf
    %5715 = vmax.xlane.f32.xlu0 %v5714
    %v5716 = vpop.xlane.xlu0 %5715
    %v5717 = vsub.f32 %v5677, %v5701
    %v5718 = vsub.f32 %v5680, %v5704
    %v5719 = vsub.f32 %v5685, %v5707
    %v5720 = vsub.f32 %v5688, %v5710
    %v5721 = vsub.f32 %v5693, %v5713
    %v5722 = vsub.f32 %v5696, %v5716
    %v5723 = vmul.f32 %v5717, 1.442695
    %v5724 = vpow.pop %v5723
    %v5725 = vmul.f32 %v5718, 1.442695
    %v5726 = vpow.pop %v5725
    %v5727 = vmul.f32 %v5719, 1.442695
    %v5728 = vpow.pop %v5727
    %v5729 = vmul.f32 %v5720, 1.442695
    %v5730 = vpow.pop %v5729
    %v5731 = vmul.f32 %v5721, 1.442695
    %v5732 = vpow.pop %v5731
    %v5733 = vmul.f32 %v5722, 1.442695
    %v5734 = vpow.pop %v5733
    %v5735 = vsel %vm752, %v5724, 0.0
    %5736 = vadd.xlane.f32.xlu0 %v5735
    %v5737 = vpop.xlane.xlu0 %5736
    %v5738 = vsel %vm752, %v5726, 0.0
    %5739 = vadd.xlane.f32.xlu0 %v5738
    %v5740 = vpop.xlane.xlu0 %5739
    %v5741 = vsel %vm752, %v5728, 0.0
    %5742 = vadd.xlane.f32.xlu0 %v5741
    %v5743 = vpop.xlane.xlu0 %5742
    %v5744 = vsel %vm752, %v5730, 0.0
    %5745 = vadd.xlane.f32.xlu0 %v5744
    %v5746 = vpop.xlane.xlu0 %5745
    %v5747 = vsel %vm752, %v5732, 0.0
    %5748 = vadd.xlane.f32.xlu0 %v5747
    %v5749 = vpop.xlane.xlu0 %5748
    %v5750 = vsel %vm752, %v5734, 0.0
    %5751 = vadd.xlane.f32.xlu0 %v5750
    %v5752 = vpop.xlane.xlu0 %5751
    %v5753 = vrcp.pop %v5737
    %v5754 = vrcp.pop %v5740
    %v5755 = vrcp.pop %v5743
    %v5756 = vrcp.pop %v5746
    %v5757 = vrcp.pop %v5749
    %v5758 = vrcp.pop %v5752
    %v5759 = vmul.f32 %v5724, %v5753
    %v5760 = vmul.f32 %v5726, %v5754
    %v5761 = vmul.f32 %v5728, %v5755
    %v5762 = vmul.f32 %v5730, %v5756
    %v5763 = vmul.f32 %v5732, %v5757
    %v5764 = vmul.f32 %v5734, %v5758
    %v5765 = vpack.c.bf16 %v5760, %v5759
    %v5766 = vpack.c.bf16 %v5762, %v5761
    %v5767 = vpack.c.bf16 %v5764, %v5763
    %v5769 = vsel %vm752, %v5765, 0
    %v5772 = vsel %vm752, %v5766, 0
    %v5775 = vsel %vm752, %v5767, 0
    %5777 = vmatprep.subr.bf16.mxu0 0
    %5778 = vmatpush1.bf16.msra.mxu0 %v5621
    %5779 = vmatprep.subr.bf16.mxu0 0
    %5780 = vmatpush1.bf16.msra.mxu0 %v5622
    %5781 = vmatprep.subr.bf16.mxu0 0
    %5782 = vmatpush1.bf16.msra.mxu0 %v5623
    %5783 = vmatprep.subr.bf16.mxu0 0
    %5784 = vmatpush1.bf16.msra.mxu0 0
    %5785 = vmatprep.subr.bf16.mxu0 0
    %5786 = vmatpush1.bf16.msra.mxu0 0
    %5787 = vmatprep.subr.bf16.mxu0 0
    %5788 = vmatpush1.bf16.msra.mxu0 0
    %5789 = vmatprep.subr.bf16.mxu0 0
    %5790 = vmatpush1.bf16.msra.mxu0 0
    %5791 = vmatprep.subr.bf16.mxu0 0
    %5792 = vmatpush1.bf16.msra.mxu0 0
    %5793 = vmatprep.subr.bf16.mxu0 0
    %5794 = vmatpush1.bf16.msra.mxu0 0
    %5795 = vmatprep.subr.bf16.mxu0 0
    %5796 = vmatpush1.bf16.msra.mxu0 0
    %5797 = vmatprep.subr.bf16.mxu0 0
    %5798 = vmatpush1.bf16.msra.mxu0 0
    %5799 = vmatprep.subr.bf16.mxu0 0
    %5800 = vmatpush1.bf16.msra.mxu0 0
    %5801 = vmatprep.subr.bf16.mxu0 0
    %5802 = vmatpush1.bf16.msra.mxu0 0
    %5803 = vmatprep.subr.bf16.mxu0 0
    %5804 = vmatpush1.bf16.msra.mxu0 0
    %5805 = vmatprep.subr.bf16.mxu0 0
    %5806 = vmatpush1.bf16.msra.mxu0 0
    %5807 = vmatprep.subr.bf16.mxu0 0
    %5808 = vmatpush1.bf16.msra.mxu0 0
    %5809 = vmatprep.mubr.bf16.mxu0 0
    %5810 = vmatmul.mubr.bf16.gmra.mrb[0].mxu0 %v5769
    %v5811 = vpop.f32.mrb[0].mxu0
    %v5812 = vadd.f32 0.0, %v5811
    %v5813 = vpop.f32.mrb[0].mxu0
    %v5814 = vpop.f32.mrb[0].mxu0
    %v5815 = vadd.f32 0.0, %v5814
    %v5816 = vpop.f32.mrb[0].mxu0
    %5817 = vmatprep.mubr.bf16.mxu0 0
    %5818 = vmatmul.mubr.bf16.gmra.mrb[0].mxu0 %v5772
    %v5819 = vpop.f32.mrb[0].mxu0
    %v5820 = vadd.f32 0.0, %v5819
    %v5821 = vpop.f32.mrb[0].mxu0
    %v5822 = vpop.f32.mrb[0].mxu0
    %v5823 = vadd.f32 0.0, %v5822
    %v5824 = vpop.f32.mrb[0].mxu0
    %5825 = vmatprep.mubr.bf16.mxu0 0
    %5826 = vmatmul.mubr.bf16.gmra.mrb[0].mxu0 %v5775
    %v5827 = vpop.f32.mrb[0].mxu0
    %v5828 = vadd.f32 0.0, %v5827
    %v5829 = vpop.f32.mrb[0].mxu0
    %v5830 = vpop.f32.mrb[0].mxu0
    %v5831 = vadd.f32 0.0, %v5830
    %v5832 = vpop.f32.mrb[0].mxu0
    %5833 = vdwg.mxu0
    %s5834 = scalar_lea.vmem [#allocation2], 128
    %v5835 = vld [vmem:[%s5834] sm:$0xf]
    %v5836 = vld [vmem:[%s5834 + $0x4] sm:$0xf]
    %v5837 = vld [vmem:[%s5834 + $0x8] sm:$0xf]
    %v5838 = vld [vmem:[%s5834 + $0xc] sm:$0xf]
    %v5839 = vld [vmem:[%s5834 + $0x10] sm:$0xf]
    %v5840 = vld [vmem:[%s5834 + $0x14] sm:$0xf]
    %v5841 = vld [vmem:[%s5834 + $0x18] sm:$0xf]
    %v5842 = vld [vmem:[%s5834 + $0x1c] sm:$0xf]
    %v5843 = vld [vmem:[%s5834 + $0x20] sm:$0xf]
    %v5844 = vld [vmem:[%s5834 + $0x24] sm:$0xf]
    %v5845 = vld [vmem:[%s5834 + $0x28] sm:$0xf]
    %v5846 = vld [vmem:[%s5834 + $0x2c] sm:$0xf]
    %v5847 = vld [vmem:[%s5834 + $0x30] sm:$0xf]
    %v5848 = vld [vmem:[%s5834 + $0x34] sm:$0xf]
    %v5849 = vld [vmem:[%s5834 + $0x38] sm:$0xf]
    %v5850 = vld [vmem:[%s5834 + $0x3c] sm:$0xf]
    %v5851 = vpack.c.bf16 %v5815, %v5812
    %v5852 = vpack.c.bf16 %v5823, %v5820
    %v5853 = vpack.c.bf16 %v5831, %v5828
    %5857 = vrot.lane.b32.xlu0 %v5615, 96
    %v5858 = vpop.permute.xlu0 %5857
    %5859 = vrot.lane.b32.xlu0 %v5616, 96
    %v5860 = vpop.permute.xlu0 %5859
    %5861 = vrot.lane.b32.xlu0 %v5617, 96
    %v5862 = vpop.permute.xlu0 %5861
    %5866 = vrot.lane.b32.xlu0 %v5618, 96
    %v5867 = vpop.permute.xlu0 %5866
    %5868 = vrot.lane.b32.xlu0 %v5619, 96
    %v5869 = vpop.permute.xlu0 %5868
    %5870 = vrot.lane.b32.xlu0 %v5620, 96
    %v5871 = vpop.permute.xlu0 %5870
    %v5873 = vsel %vm676, %v5858, 0
    %v5876 = vsel %vm676, %v5860, 0
    %v5879 = vsel %vm676, %v5862, 0
    %v5882 = vsel %vm676, %v5867, 0
    %v5885 = vsel %vm676, %v5869, 0
    %v5888 = vsel %vm676, %v5871, 0
    %5890 = vmatprep.subr.bf16.mxu0 0
    %5891 = vmatpush1.bf16.xpose.msra.mxu0 %v5882
    %5892 = vmatprep.subr.bf16.mxu0 0
    %5893 = vmatpush1.bf16.xpose.msra.mxu0 %v5885
    %5894 = vmatprep.subr.bf16.mxu0 0
    %5895 = vmatpush1.bf16.xpose.msra.mxu0 %v5888
    %5896 = vmatprep.subr.bf16.mxu0 0
    %5897 = vmatpush1.bf16.xpose.msra.mxu0 0
    %5898 = vmatprep.subr.bf16.mxu0 0
    %5899 = vmatpush1.bf16.xpose.msra.mxu0 0
    %5900 = vmatprep.subr.bf16.mxu0 0
    %5901 = vmatpush1.bf16.xpose.msra.mxu0 0
    %5902 = vmatprep.subr.bf16.mxu0 0
    %5903 = vmatpush1.bf16.xpose.msra.mxu0 0
    %5904 = vmatprep.subr.bf16.mxu0 0
    %5905 = vmatpush1.bf16.xpose.msra.mxu0 0
    %5906 = vmatprep.subr.bf16.mxu0 0
    %5907 = vmatpush1.bf16.xpose.msra.mxu0 0
    %5908 = vmatprep.subr.bf16.mxu0 0
    %5909 = vmatpush1.bf16.xpose.msra.mxu0 0
    %5910 = vmatprep.subr.bf16.mxu0 0
    %5911 = vmatpush1.bf16.xpose.msra.mxu0 0
    %5912 = vmatprep.subr.bf16.mxu0 0
    %5913 = vmatpush1.bf16.xpose.msra.mxu0 0
    %5914 = vmatprep.subr.bf16.mxu0 0
    %5915 = vmatpush1.bf16.xpose.msra.mxu0 0
    %5916 = vmatprep.subr.bf16.mxu0 0
    %5917 = vmatpush1.bf16.xpose.msra.mxu0 0
    %5918 = vmatprep.subr.bf16.mxu0 0
    %5919 = vmatpush1.bf16.xpose.msra.mxu0 0
    %5920 = vmatprep.subr.bf16.mxu0 0
    %5921 = vmatpush1.bf16.xpose.msra.mxu0 0
    %5922 = vmatprep.mubr.bf16.mxu0 0
    %5923 = vmatmul.mubr.bf16.gmra.mrb[0].mxu0 %v5873
    %v5924 = vpop.f32.mrb[0].mxu0
    %v5925 = vadd.f32 %v127, %v5924
    %v5926 = vpop.f32.mrb[0].mxu0
    %v5927 = vpop.f32.mrb[0].mxu0
    %v5928 = vadd.f32 %v128, %v5927
    %v5929 = vpop.f32.mrb[0].mxu0
    %5930 = vmatprep.mubr.bf16.mxu0 0
    %5931 = vmatmul.mubr.bf16.gmra.mrb[0].mxu0 %v5876
    %v5932 = vpop.f32.mrb[0].mxu0
    %v5933 = vadd.f32 %v129, %v5932
    %v5934 = vpop.f32.mrb[0].mxu0
    %v5935 = vpop.f32.mrb[0].mxu0
    %v5936 = vadd.f32 %v130, %v5935
    %v5937 = vpop.f32.mrb[0].mxu0
    %5938 = vmatprep.mubr.bf16.mxu0 0
    %5939 = vmatmul.mubr.bf16.gmra.mrb[0].mxu0 %v5879
    %v5940 = vpop.f32.mrb[0].mxu0
    %v5941 = vadd.f32 %v131, %v5940
    %v5942 = vpop.f32.mrb[0].mxu0
    %v5943 = vpop.f32.mrb[0].mxu0
    %v5944 = vadd.f32 %v132, %v5943
    %v5945 = vpop.f32.mrb[0].mxu0
    %5946 = vdwg.mxu0
    %v5947 = vsel %vm752, %v5925, -inf
    %5948 = vmax.xlane.f32.xlu0 %v5947
    %v5949 = vpop.xlane.xlu0 %5948
    %v5950 = vsel %vm752, %v5928, -inf
    %5951 = vmax.xlane.f32.xlu0 %v5950
    %v5952 = vpop.xlane.xlu0 %5951
    %v5953 = vsel %vm752, %v5933, -inf
    %5954 = vmax.xlane.f32.xlu0 %v5953
    %v5955 = vpop.xlane.xlu0 %5954
    %v5956 = vsel %vm752, %v5936, -inf
    %5957 = vmax.xlane.f32.xlu0 %v5956
    %v5958 = vpop.xlane.xlu0 %5957
    %v5959 = vsel %vm752, %v5941, -inf
    %5960 = vmax.xlane.f32.xlu0 %v5959
    %v5961 = vpop.xlane.xlu0 %5960
    %v5962 = vsel %vm752, %v5944, -inf
    %5963 = vmax.xlane.f32.xlu0 %v5962
    %v5964 = vpop.xlane.xlu0 %5963
    %v5965 = vsub.f32 %v5925, %v5949
    %v5966 = vsub.f32 %v5928, %v5952
    %v5967 = vsub.f32 %v5933, %v5955
    %v5968 = vsub.f32 %v5936, %v5958
    %v5969 = vsub.f32 %v5941, %v5961
    %v5970 = vsub.f32 %v5944, %v5964
    %v5971 = vmul.f32 %v5965, 1.442695
    %v5972 = vpow.pop %v5971
    %v5973 = vmul.f32 %v5966, 1.442695
    %v5974 = vpow.pop %v5973
    %v5975 = vmul.f32 %v5967, 1.442695
    %v5976 = vpow.pop %v5975
    %v5977 = vmul.f32 %v5968, 1.442695
    %v5978 = vpow.pop %v5977
    %v5979 = vmul.f32 %v5969, 1.442695
    %v5980 = vpow.pop %v5979
    %v5981 = vmul.f32 %v5970, 1.442695
    %v5982 = vpow.pop %v5981
    %v5983 = vsel %vm752, %v5972, 0.0
    %5984 = vadd.xlane.f32.xlu0 %v5983
    %v5985 = vpop.xlane.xlu0 %5984
    %v5986 = vsel %vm752, %v5974, 0.0
    %5987 = vadd.xlane.f32.xlu0 %v5986
    %v5988 = vpop.xlane.xlu0 %5987
    %v5989 = vsel %vm752, %v5976, 0.0
    %5990 = vadd.xlane.f32.xlu0 %v5989
    %v5991 = vpop.xlane.xlu0 %5990
    %v5992 = vsel %vm752, %v5978, 0.0
    %5993 = vadd.xlane.f32.xlu0 %v5992
    %v5994 = vpop.xlane.xlu0 %5993
    %v5995 = vsel %vm752, %v5980, 0.0
    %5996 = vadd.xlane.f32.xlu0 %v5995
    %v5997 = vpop.xlane.xlu0 %5996
    %v5998 = vsel %vm752, %v5982, 0.0
    %5999 = vadd.xlane.f32.xlu0 %v5998
    %v6000 = vpop.xlane.xlu0 %5999
    %v6001 = vrcp.pop %v5985
    %v6002 = vrcp.pop %v5988
    %v6003 = vrcp.pop %v5991
    %v6004 = vrcp.pop %v5994
    %v6005 = vrcp.pop %v5997
    %v6006 = vrcp.pop %v6000
    %v6007 = vmul.f32 %v5972, %v6001
    %v6008 = vmul.f32 %v5974, %v6002
    %v6009 = vmul.f32 %v5976, %v6003
    %v6010 = vmul.f32 %v5978, %v6004
    %v6011 = vmul.f32 %v5980, %v6005
    %v6012 = vmul.f32 %v5982, %v6006
    %v6013 = vpack.c.bf16 %v6008, %v6007
    %v6014 = vpack.c.bf16 %v6010, %v6009
    %v6015 = vpack.c.bf16 %v6012, %v6011
    %6019 = vrot.lane.b32.xlu0 %v5621, 96
    %v6020 = vpop.permute.xlu0 %6019
    %6021 = vrot.lane.b32.xlu0 %v5622, 96
    %v6022 = vpop.permute.xlu0 %6021
    %6023 = vrot.lane.b32.xlu0 %v5623, 96
    %v6024 = vpop.permute.xlu0 %6023
    %v6029 = vsel %vm752, %v6013, 0
    %v6032 = vsel %vm752, %v6014, 0
    %v6035 = vsel %vm752, %v6015, 0
    %6037 = vmatprep.subr.bf16.mxu0 0
    %6038 = vmatpush1.bf16.msra.mxu0 %v6020
    %6039 = vmatprep.subr.bf16.mxu0 0
    %6040 = vmatpush1.bf16.msra.mxu0 %v6022
    %6041 = vmatprep.subr.bf16.mxu0 0
    %6042 = vmatpush1.bf16.msra.mxu0 %v6024
    %6043 = vmatprep.subr.bf16.mxu0 0
    %6044 = vmatpush1.bf16.msra.mxu0 0
    %6045 = vmatprep.subr.bf16.mxu0 0
    %6046 = vmatpush1.bf16.msra.mxu0 0
    %6047 = vmatprep.subr.bf16.mxu0 0
    %6048 = vmatpush1.bf16.msra.mxu0 0
    %6049 = vmatprep.subr.bf16.mxu0 0
    %6050 = vmatpush1.bf16.msra.mxu0 0
    %6051 = vmatprep.subr.bf16.mxu0 0
    %6052 = vmatpush1.bf16.msra.mxu0 0
    %6053 = vmatprep.subr.bf16.mxu0 0
    %6054 = vmatpush1.bf16.msra.mxu0 0
    %6055 = vmatprep.subr.bf16.mxu0 0
    %6056 = vmatpush1.bf16.msra.mxu0 0
    %6057 = vmatprep.subr.bf16.mxu0 0
    %6058 = vmatpush1.bf16.msra.mxu0 0
    %6059 = vmatprep.subr.bf16.mxu0 0
    %6060 = vmatpush1.bf16.msra.mxu0 0
    %6061 = vmatprep.subr.bf16.mxu0 0
    %6062 = vmatpush1.bf16.msra.mxu0 0
    %6063 = vmatprep.subr.bf16.mxu0 0
    %6064 = vmatpush1.bf16.msra.mxu0 0
    %6065 = vmatprep.subr.bf16.mxu0 0
    %6066 = vmatpush1.bf16.msra.mxu0 0
    %6067 = vmatprep.subr.bf16.mxu0 0
    %6068 = vmatpush1.bf16.msra.mxu0 0
    %6069 = vmatprep.mubr.bf16.mxu0 0
    %6070 = vmatmul.mubr.bf16.gmra.mrb[0].mxu0 %v6029
    %v6071 = vpop.f32.mrb[0].mxu0
    %v6072 = vadd.f32 0.0, %v6071
    %v6073 = vpop.f32.mrb[0].mxu0
    %v6074 = vpop.f32.mrb[0].mxu0
    %v6075 = vadd.f32 0.0, %v6074
    %v6076 = vpop.f32.mrb[0].mxu0
    %6077 = vmatprep.mubr.bf16.mxu0 0
    %6078 = vmatmul.mubr.bf16.gmra.mrb[0].mxu0 %v6032
    %v6079 = vpop.f32.mrb[0].mxu0
    %v6080 = vadd.f32 0.0, %v6079
    %v6081 = vpop.f32.mrb[0].mxu0
    %v6082 = vpop.f32.mrb[0].mxu0
    %v6083 = vadd.f32 0.0, %v6082
    %v6084 = vpop.f32.mrb[0].mxu0
    %6085 = vmatprep.mubr.bf16.mxu0 0
    %6086 = vmatmul.mubr.bf16.gmra.mrb[0].mxu0 %v6035
    %v6087 = vpop.f32.mrb[0].mxu0
    %v6088 = vadd.f32 0.0, %v6087
    %v6089 = vpop.f32.mrb[0].mxu0
    %v6090 = vpop.f32.mrb[0].mxu0
    %v6091 = vadd.f32 0.0, %v6090
    %v6092 = vpop.f32.mrb[0].mxu0
    %6093 = vdwg.mxu0
    %v6094 = vpack.c.bf16 %v6075, %v6072
    %v6095 = vpack.c.bf16 %v6083, %v6080
    %v6096 = vpack.c.bf16 %v6091, %v6088
    %v6101 = vunpack.c.l.b16 %v5839
    %v6102 = vunpack.c.l.b16 %v5840
    %v6103 = vunpack.c.l.b16 %v5841
    %v6104 = vunpack.c.l.b16 %v5842
    %v6105 = vpack.c.b16 %v6102, %v6101
    %v6106 = vpack.c.b16 %v6104, %v6103
    %v6110 = vsel %vm676, %v6094, 0
    %v6113 = vsel %vm676, %v6095, 0
    %v6116 = vsel %vm676, %v6096, 0
    %6118 = vmatprep.subr.bf16.mxu0 0
    %6119 = vmatpush1.bf16.msra.mxu0 %v6105
    %6120 = vmatprep.subr.bf16.mxu0 0
    %6121 = vmatpush1.bf16.msra.mxu0 %v6106
    %6122 = vmatprep.subr.bf16.mxu0 0
    %6123 = vmatpush1.bf16.msra.mxu0 0
    %6124 = vmatprep.subr.bf16.mxu0 0
    %6125 = vmatpush1.bf16.msra.mxu0 0
    %6126 = vmatprep.subr.bf16.mxu0 0
    %6127 = vmatpush1.bf16.msra.mxu0 0
    %6128 = vmatprep.subr.bf16.mxu0 0
    %6129 = vmatpush1.bf16.msra.mxu0 0
    %6130 = vmatprep.subr.bf16.mxu0 0
    %6131 = vmatpush1.bf16.msra.mxu0 0
    %6132 = vmatprep.subr.bf16.mxu0 0
    %6133 = vmatpush1.bf16.msra.mxu0 0
    %6134 = vmatprep.subr.bf16.mxu0 0
    %6135 = vmatpush1.bf16.msra.mxu0 0
    %6136 = vmatprep.subr.bf16.mxu0 0
    %6137 = vmatpush1.bf16.msra.mxu0 0
    %6138 = vmatprep.subr.bf16.mxu0 0
    %6139 = vmatpush1.bf16.msra.mxu0 0
    %6140 = vmatprep.subr.bf16.mxu0 0
    %6141 = vmatpush1.bf16.msra.mxu0 0
    %6142 = vmatprep.subr.bf16.mxu0 0
    %6143 = vmatpush1.bf16.msra.mxu0 0
    %6144 = vmatprep.subr.bf16.mxu0 0
    %6145 = vmatpush1.bf16.msra.mxu0 0
    %6146 = vmatprep.subr.bf16.mxu0 0
    %6147 = vmatpush1.bf16.msra.mxu0 0
    %6148 = vmatprep.subr.bf16.mxu0 0
    %6149 = vmatpush1.bf16.msra.mxu0 0
    %6150 = vmatprep.mubr.bf16.mxu0 0
    %6151 = vmatmul.mubr.bf16.gmra.mrb[0].mxu0 %v6110
    %v6152 = vpop.f32.mrb[0].mxu0
    %v6153 = vadd.f32 0.0, %v6152
    %v6154 = vpop.f32.mrb[0].mxu0
    %v6155 = vpop.f32.mrb[0].mxu0
    %v6156 = vadd.f32 0.0, %v6155
    %v6157 = vpop.f32.mrb[0].mxu0
    %6158 = vmatprep.mubr.bf16.mxu0 0
    %6159 = vmatmul.mubr.bf16.gmra.mrb[0].mxu0 %v6113
    %v6160 = vpop.f32.mrb[0].mxu0
    %v6161 = vadd.f32 0.0, %v6160
    %v6162 = vpop.f32.mrb[0].mxu0
    %v6163 = vpop.f32.mrb[0].mxu0
    %v6164 = vadd.f32 0.0, %v6163
    %v6165 = vpop.f32.mrb[0].mxu0
    %6166 = vmatprep.mubr.bf16.mxu0 0
    %6167 = vmatmul.mubr.bf16.gmra.mrb[0].mxu0 %v6116
    %v6168 = vpop.f32.mrb[0].mxu0
    %v6169 = vadd.f32 0.0, %v6168
    %v6170 = vpop.f32.mrb[0].mxu0
    %v6171 = vpop.f32.mrb[0].mxu0
    %v6172 = vadd.f32 0.0, %v6171
    %v6173 = vpop.f32.mrb[0].mxu0
    %6174 = vdwg.mxu0
    %v6179 = vunpack.c.l.b16 %v5835
    %v6180 = vunpack.c.l.b16 %v5836
    %v6181 = vunpack.c.l.b16 %v5837
    %v6182 = vunpack.c.l.b16 %v5838
    %v6183 = vpack.c.b16 %v6180, %v6179
    %v6184 = vpack.c.b16 %v6182, %v6181
    %v6188 = vsel %vm676, %v5851, 0
    %v6191 = vsel %vm676, %v5852, 0
    %v6194 = vsel %vm676, %v5853, 0
    %6196 = vmatprep.subr.bf16.mxu0 0
    %6197 = vmatpush1.bf16.msra.mxu0 %v6183
    %6198 = vmatprep.subr.bf16.mxu0 0
    %6199 = vmatpush1.bf16.msra.mxu0 %v6184
    %6200 = vmatprep.subr.bf16.mxu0 0
    %6201 = vmatpush1.bf16.msra.mxu0 0
    %6202 = vmatprep.subr.bf16.mxu0 0
    %6203 = vmatpush1.bf16.msra.mxu0 0
    %6204 = vmatprep.subr.bf16.mxu0 0
    %6205 = vmatpush1.bf16.msra.mxu0 0
    %6206 = vmatprep.subr.bf16.mxu0 0
    %6207 = vmatpush1.bf16.msra.mxu0 0
    %6208 = vmatprep.subr.bf16.mxu0 0
    %6209 = vmatpush1.bf16.msra.mxu0 0
    %6210 = vmatprep.subr.bf16.mxu0 0
    %6211 = vmatpush1.bf16.msra.mxu0 0
    %6212 = vmatprep.subr.bf16.mxu0 0
    %6213 = vmatpush1.bf16.msra.mxu0 0
    %6214 = vmatprep.subr.bf16.mxu0 0
    %6215 = vmatpush1.bf16.msra.mxu0 0
    %6216 = vmatprep.subr.bf16.mxu0 0
    %6217 = vmatpush1.bf16.msra.mxu0 0
    %6218 = vmatprep.subr.bf16.mxu0 0
    %6219 = vmatpush1.bf16.msra.mxu0 0
    %6220 = vmatprep.subr.bf16.mxu0 0
    %6221 = vmatpush1.bf16.msra.mxu0 0
    %6222 = vmatprep.subr.bf16.mxu0 0
    %6223 = vmatpush1.bf16.msra.mxu0 0
    %6224 = vmatprep.subr.bf16.mxu0 0
    %6225 = vmatpush1.bf16.msra.mxu0 0
    %6226 = vmatprep.subr.bf16.mxu0 0
    %6227 = vmatpush1.bf16.msra.mxu0 0
    %6228 = vmatprep.mubr.bf16.mxu0 0
    %6229 = vmatmul.mubr.bf16.gmra.mrb[0].mxu0 %v6188
    %v6230 = vpop.f32.mrb[0].mxu0
    %v6231 = vadd.f32 %v6153, %v6230
    %v6232 = vpop.f32.mrb[0].mxu0
    %v6233 = vpop.f32.mrb[0].mxu0
    %v6234 = vadd.f32 %v6156, %v6233
    %v6235 = vpop.f32.mrb[0].mxu0
    %6236 = vmatprep.mubr.bf16.mxu0 0
    %6237 = vmatmul.mubr.bf16.gmra.mrb[0].mxu0 %v6191
    %v6238 = vpop.f32.mrb[0].mxu0
    %v6239 = vadd.f32 %v6161, %v6238
    %v6240 = vpop.f32.mrb[0].mxu0
    %v6241 = vpop.f32.mrb[0].mxu0
    %v6242 = vadd.f32 %v6164, %v6241
    %v6243 = vpop.f32.mrb[0].mxu0
    %6244 = vmatprep.mubr.bf16.mxu0 0
    %6245 = vmatmul.mubr.bf16.gmra.mrb[0].mxu0 %v6194
    %v6246 = vpop.f32.mrb[0].mxu0
    %v6247 = vadd.f32 %v6169, %v6246
    %v6248 = vpop.f32.mrb[0].mxu0
    %v6249 = vpop.f32.mrb[0].mxu0
    %v6250 = vadd.f32 %v6172, %v6249
    %v6251 = vpop.f32.mrb[0].mxu0
    %6252 = vdwg.mxu0
    %6253 = vrot.lane.b32.xlu0 %v5615, 64
    %v6254 = vpop.permute.xlu0 %6253
    %6255 = vrot.lane.b32.xlu0 %v5616, 64
    %v6256 = vpop.permute.xlu0 %6255
    %6257 = vrot.lane.b32.xlu0 %v5617, 64
    %v6258 = vpop.permute.xlu0 %6257
    %6259 = vrot.lane.b32.xlu0 %v5618, 64
    %v6260 = vpop.permute.xlu0 %6259
    %6261 = vrot.lane.b32.xlu0 %v5619, 64
    %v6262 = vpop.permute.xlu0 %6261
    %6263 = vrot.lane.b32.xlu0 %v5620, 64
    %v6264 = vpop.permute.xlu0 %6263
    %v6266 = vsel %vm676, %v6254, 0
    %v6269 = vsel %vm676, %v6256, 0
    %v6272 = vsel %vm676, %v6258, 0
    %v6275 = vsel %vm676, %v6260, 0
    %v6278 = vsel %vm676, %v6262, 0
    %v6281 = vsel %vm676, %v6264, 0
    %6283 = vmatprep.subr.bf16.mxu0 0
    %6284 = vmatpush1.bf16.xpose.msra.mxu0 %v6275
    %6285 = vmatprep.subr.bf16.mxu0 0
    %6286 = vmatpush1.bf16.xpose.msra.mxu0 %v6278
    %6287 = vmatprep.subr.bf16.mxu0 0
    %6288 = vmatpush1.bf16.xpose.msra.mxu0 %v6281
    %6289 = vmatprep.subr.bf16.mxu0 0
    %6290 = vmatpush1.bf16.xpose.msra.mxu0 0
    %6291 = vmatprep.subr.bf16.mxu0 0
    %6292 = vmatpush1.bf16.xpose.msra.mxu0 0
    %6293 = vmatprep.subr.bf16.mxu0 0
    %6294 = vmatpush1.bf16.xpose.msra.mxu0 0
    %6295 = vmatprep.subr.bf16.mxu0 0
    %6296 = vmatpush1.bf16.xpose.msra.mxu0 0
    %6297 = vmatprep.subr.bf16.mxu0 0
    %6298 = vmatpush1.bf16.xpose.msra.mxu0 0
    %6299 = vmatprep.subr.bf16.mxu0 0
    %6300 = vmatpush1.bf16.xpose.msra.mxu0 0
    %6301 = vmatprep.subr.bf16.mxu0 0
    %6302 = vmatpush1.bf16.xpose.msra.mxu0 0
    %6303 = vmatprep.subr.bf16.mxu0 0
    %6304 = vmatpush1.bf16.xpose.msra.mxu0 0
    %6305 = vmatprep.subr.bf16.mxu0 0
    %6306 = vmatpush1.bf16.xpose.msra.mxu0 0
    %6307 = vmatprep.subr.bf16.mxu0 0
    %6308 = vmatpush1.bf16.xpose.msra.mxu0 0
    %6309 = vmatprep.subr.bf16.mxu0 0
    %6310 = vmatpush1.bf16.xpose.msra.mxu0 0
    %6311 = vmatprep.subr.bf16.mxu0 0
    %6312 = vmatpush1.bf16.xpose.msra.mxu0 0
    %6313 = vmatprep.subr.bf16.mxu0 0
    %6314 = vmatpush1.bf16.xpose.msra.mxu0 0
    %6315 = vmatprep.mubr.bf16.mxu0 0
    %6316 = vmatmul.mubr.bf16.gmra.mrb[0].mxu0 %v6266
    %v6317 = vpop.f32.mrb[0].mxu0
    %v6318 = vadd.f32 %v127, %v6317
    %v6319 = vpop.f32.mrb[0].mxu0
    %v6320 = vpop.f32.mrb[0].mxu0
    %v6321 = vadd.f32 %v128, %v6320
    %v6322 = vpop.f32.mrb[0].mxu0
    %6323 = vmatprep.mubr.bf16.mxu0 0
    %6324 = vmatmul.mubr.bf16.gmra.mrb[0].mxu0 %v6269
    %v6325 = vpop.f32.mrb[0].mxu0
    %v6326 = vadd.f32 %v129, %v6325
    %v6327 = vpop.f32.mrb[0].mxu0
    %v6328 = vpop.f32.mrb[0].mxu0
    %v6329 = vadd.f32 %v130, %v6328
    %v6330 = vpop.f32.mrb[0].mxu0
    %6331 = vmatprep.mubr.bf16.mxu0 0
    %6332 = vmatmul.mubr.bf16.gmra.mrb[0].mxu0 %v6272
    %v6333 = vpop.f32.mrb[0].mxu0
    %v6334 = vadd.f32 %v131, %v6333
    %v6335 = vpop.f32.mrb[0].mxu0
    %v6336 = vpop.f32.mrb[0].mxu0
    %v6337 = vadd.f32 %v132, %v6336
    %v6338 = vpop.f32.mrb[0].mxu0
    %6339 = vdwg.mxu0
    %v6340 = vsel %vm752, %v6318, -inf
    %6341 = vmax.xlane.f32.xlu0 %v6340
    %v6342 = vpop.xlane.xlu0 %6341
    %v6343 = vsel %vm752, %v6321, -inf
    %6344 = vmax.xlane.f32.xlu0 %v6343
    %v6345 = vpop.xlane.xlu0 %6344
    %v6346 = vsel %vm752, %v6326, -inf
    %6347 = vmax.xlane.f32.xlu0 %v6346
    %v6348 = vpop.xlane.xlu0 %6347
    %v6349 = vsel %vm752, %v6329, -inf
    %6350 = vmax.xlane.f32.xlu0 %v6349
    %v6351 = vpop.xlane.xlu0 %6350
    %v6352 = vsel %vm752, %v6334, -inf
    %6353 = vmax.xlane.f32.xlu0 %v6352
    %v6354 = vpop.xlane.xlu0 %6353
    %v6355 = vsel %vm752, %v6337, -inf
    %6356 = vmax.xlane.f32.xlu0 %v6355
    %v6357 = vpop.xlane.xlu0 %6356
    %v6358 = vsub.f32 %v6318, %v6342
    %v6359 = vsub.f32 %v6321, %v6345
    %v6360 = vsub.f32 %v6326, %v6348
    %v6361 = vsub.f32 %v6329, %v6351
    %v6362 = vsub.f32 %v6334, %v6354
    %v6363 = vsub.f32 %v6337, %v6357
    %v6364 = vmul.f32 %v6358, 1.442695
    %v6365 = vpow.pop %v6364
    %v6366 = vmul.f32 %v6359, 1.442695
    %v6367 = vpow.pop %v6366
    %v6368 = vmul.f32 %v6360, 1.442695
    %v6369 = vpow.pop %v6368
    %v6370 = vmul.f32 %v6361, 1.442695
    %v6371 = vpow.pop %v6370
    %v6372 = vmul.f32 %v6362, 1.442695
    %v6373 = vpow.pop %v6372
    %v6374 = vmul.f32 %v6363, 1.442695
    %v6375 = vpow.pop %v6374
    %v6376 = vsel %vm752, %v6365, 0.0
    %6377 = vadd.xlane.f32.xlu0 %v6376
    %v6378 = vpop.xlane.xlu0 %6377
    %v6379 = vsel %vm752, %v6367, 0.0
    %6380 = vadd.xlane.f32.xlu0 %v6379
    %v6381 = vpop.xlane.xlu0 %6380
    %v6382 = vsel %vm752, %v6369, 0.0
    %6383 = vadd.xlane.f32.xlu0 %v6382
    %v6384 = vpop.xlane.xlu0 %6383
    %v6385 = vsel %vm752, %v6371, 0.0
    %6386 = vadd.xlane.f32.xlu0 %v6385
    %v6387 = vpop.xlane.xlu0 %6386
    %v6388 = vsel %vm752, %v6373, 0.0
    %6389 = vadd.xlane.f32.xlu0 %v6388
    %v6390 = vpop.xlane.xlu0 %6389
    %v6391 = vsel %vm752, %v6375, 0.0
    %6392 = vadd.xlane.f32.xlu0 %v6391
    %v6393 = vpop.xlane.xlu0 %6392
    %v6394 = vrcp.pop %v6378
    %v6395 = vrcp.pop %v6381
    %v6396 = vrcp.pop %v6384
    %v6397 = vrcp.pop %v6387
    %v6398 = vrcp.pop %v6390
    %v6399 = vrcp.pop %v6393
    %v6400 = vmul.f32 %v6365, %v6394
    %v6401 = vmul.f32 %v6367, %v6395
    %v6402 = vmul.f32 %v6369, %v6396
    %v6403 = vmul.f32 %v6371, %v6397
    %v6404 = vmul.f32 %v6373, %v6398
    %v6405 = vmul.f32 %v6375, %v6399
    %v6406 = vpack.c.bf16 %v6401, %v6400
    %v6407 = vpack.c.bf16 %v6403, %v6402
    %v6408 = vpack.c.bf16 %v6405, %v6404
    %6409 = vrot.lane.b32.xlu0 %v5621, 64
    %v6410 = vpop.permute.xlu0 %6409
    %6411 = vrot.lane.b32.xlu0 %v5622, 64
    %v6412 = vpop.permute.xlu0 %6411
    %6413 = vrot.lane.b32.xlu0 %v5623, 64
    %v6414 = vpop.permute.xlu0 %6413
    %v6419 = vsel %vm752, %v6406, 0
    %v6422 = vsel %vm752, %v6407, 0
    %v6425 = vsel %vm752, %v6408, 0
    %6427 = vmatprep.subr.bf16.mxu0 0
    %6428 = vmatpush1.bf16.msra.mxu0 %v6410
    %6429 = vmatprep.subr.bf16.mxu0 0
    %6430 = vmatpush1.bf16.msra.mxu0 %v6412
    %6431 = vmatprep.subr.bf16.mxu0 0
    %6432 = vmatpush1.bf16.msra.mxu0 %v6414
    %6433 = vmatprep.subr.bf16.mxu0 0
    %6434 = vmatpush1.bf16.msra.mxu0 0
    %6435 = vmatprep.subr.bf16.mxu0 0
    %6436 = vmatpush1.bf16.msra.mxu0 0
    %6437 = vmatprep.subr.bf16.mxu0 0
    %6438 = vmatpush1.bf16.msra.mxu0 0
    %6439 = vmatprep.subr.bf16.mxu0 0
    %6440 = vmatpush1.bf16.msra.mxu0 0
    %6441 = vmatprep.subr.bf16.mxu0 0
    %6442 = vmatpush1.bf16.msra.mxu0 0
    %6443 = vmatprep.subr.bf16.mxu0 0
    %6444 = vmatpush1.bf16.msra.mxu0 0
    %6445 = vmatprep.subr.bf16.mxu0 0
    %6446 = vmatpush1.bf16.msra.mxu0 0
    %6447 = vmatprep.subr.bf16.mxu0 0
    %6448 = vmatpush1.bf16.msra.mxu0 0
    %6449 = vmatprep.subr.bf16.mxu0 0
    %6450 = vmatpush1.bf16.msra.mxu0 0
    %6451 = vmatprep.subr.bf16.mxu0 0
    %6452 = vmatpush1.bf16.msra.mxu0 0
    %6453 = vmatprep.subr.bf16.mxu0 0
    %6454 = vmatpush1.bf16.msra.mxu0 0
    %6455 = vmatprep.subr.bf16.mxu0 0
    %6456 = vmatpush1.bf16.msra.mxu0 0
    %6457 = vmatprep.subr.bf16.mxu0 0
    %6458 = vmatpush1.bf16.msra.mxu0 0
    %6459 = vmatprep.mubr.bf16.mxu0 0
    %6460 = vmatmul.mubr.bf16.gmra.mrb[0].mxu0 %v6419
    %v6461 = vpop.f32.mrb[0].mxu0
    %v6462 = vadd.f32 0.0, %v6461
    %v6463 = vpop.f32.mrb[0].mxu0
    %v6464 = vpop.f32.mrb[0].mxu0
    %v6465 = vadd.f32 0.0, %v6464
    %v6466 = vpop.f32.mrb[0].mxu0
    %6467 = vmatprep.mubr.bf16.mxu0 0
    %6468 = vmatmul.mubr.bf16.gmra.mrb[0].mxu0 %v6422
    %v6469 = vpop.f32.mrb[0].mxu0
    %v6470 = vadd.f32 0.0, %v6469
    %v6471 = vpop.f32.mrb[0].mxu0
    %v6472 = vpop.f32.mrb[0].mxu0
    %v6473 = vadd.f32 0.0, %v6472
    %v6474 = vpop.f32.mrb[0].mxu0
    %6475 = vmatprep.mubr.bf16.mxu0 0
    %6476 = vmatmul.mubr.bf16.gmra.mrb[0].mxu0 %v6425
    %v6477 = vpop.f32.mrb[0].mxu0
    %v6478 = vadd.f32 0.0, %v6477
    %v6479 = vpop.f32.mrb[0].mxu0
    %v6480 = vpop.f32.mrb[0].mxu0
    %v6481 = vadd.f32 0.0, %v6480
    %v6482 = vpop.f32.mrb[0].mxu0
    %6483 = vdwg.mxu0
    %v6484 = vpack.c.bf16 %v6465, %v6462
    %v6485 = vpack.c.bf16 %v6473, %v6470
    %v6486 = vpack.c.bf16 %v6481, %v6478
    %v6491 = vunpack.c.l.b16 %v5843
    %v6492 = vunpack.c.l.b16 %v5844
    %v6493 = vunpack.c.l.b16 %v5845
    %v6494 = vunpack.c.l.b16 %v5846
    %v6495 = vpack.c.b16 %v6492, %v6491
    %v6496 = vpack.c.b16 %v6494, %v6493
    %v6500 = vsel %vm676, %v6484, 0
    %v6503 = vsel %vm676, %v6485, 0
    %v6506 = vsel %vm676, %v6486, 0
    %6508 = vmatprep.subr.bf16.mxu0 0
    %6509 = vmatpush1.bf16.msra.mxu0 %v6495
    %6510 = vmatprep.subr.bf16.mxu0 0
    %6511 = vmatpush1.bf16.msra.mxu0 %v6496
    %6512 = vmatprep.subr.bf16.mxu0 0
    %6513 = vmatpush1.bf16.msra.mxu0 0
    %6514 = vmatprep.subr.bf16.mxu0 0
    %6515 = vmatpush1.bf16.msra.mxu0 0
    %6516 = vmatprep.subr.bf16.mxu0 0
    %6517 = vmatpush1.bf16.msra.mxu0 0
    %6518 = vmatprep.subr.bf16.mxu0 0
    %6519 = vmatpush1.bf16.msra.mxu0 0
    %6520 = vmatprep.subr.bf16.mxu0 0
    %6521 = vmatpush1.bf16.msra.mxu0 0
    %6522 = vmatprep.subr.bf16.mxu0 0
    %6523 = vmatpush1.bf16.msra.mxu0 0
    %6524 = vmatprep.subr.bf16.mxu0 0
    %6525 = vmatpush1.bf16.msra.mxu0 0
    %6526 = vmatprep.subr.bf16.mxu0 0
    %6527 = vmatpush1.bf16.msra.mxu0 0
    %6528 = vmatprep.subr.bf16.mxu0 0
    %6529 = vmatpush1.bf16.msra.mxu0 0
    %6530 = vmatprep.subr.bf16.mxu0 0
    %6531 = vmatpush1.bf16.msra.mxu0 0
    %6532 = vmatprep.subr.bf16.mxu0 0
    %6533 = vmatpush1.bf16.msra.mxu0 0
    %6534 = vmatprep.subr.bf16.mxu0 0
    %6535 = vmatpush1.bf16.msra.mxu0 0
    %6536 = vmatprep.subr.bf16.mxu0 0
    %6537 = vmatpush1.bf16.msra.mxu0 0
    %6538 = vmatprep.subr.bf16.mxu0 0
    %6539 = vmatpush1.bf16.msra.mxu0 0
    %6540 = vmatprep.mubr.bf16.mxu0 0
    %6541 = vmatmul.mubr.bf16.gmra.mrb[0].mxu0 %v6500
    %v6542 = vpop.f32.mrb[0].mxu0
    %v6543 = vadd.f32 0.0, %v6542
    %v6544 = vpop.f32.mrb[0].mxu0
    %v6545 = vpop.f32.mrb[0].mxu0
    %v6546 = vadd.f32 0.0, %v6545
    %v6547 = vpop.f32.mrb[0].mxu0
    %6548 = vmatprep.mubr.bf16.mxu0 0
    %6549 = vmatmul.mubr.bf16.gmra.mrb[0].mxu0 %v6503
    %v6550 = vpop.f32.mrb[0].mxu0
    %v6551 = vadd.f32 0.0, %v6550
    %v6552 = vpop.f32.mrb[0].mxu0
    %v6553 = vpop.f32.mrb[0].mxu0
    %v6554 = vadd.f32 0.0, %v6553
    %v6555 = vpop.f32.mrb[0].mxu0
    %6556 = vmatprep.mubr.bf16.mxu0 0
    %6557 = vmatmul.mubr.bf16.gmra.mrb[0].mxu0 %v6506
    %v6558 = vpop.f32.mrb[0].mxu0
    %v6559 = vadd.f32 0.0, %v6558
    %v6560 = vpop.f32.mrb[0].mxu0
    %v6561 = vpop.f32.mrb[0].mxu0
    %v6562 = vadd.f32 0.0, %v6561
    %v6563 = vpop.f32.mrb[0].mxu0
    %6564 = vdwg.mxu0
    %v6565 = vadd.f32 %v6231, %v6543
    %v6566 = vadd.f32 %v6234, %v6546
    %v6567 = vadd.f32 %v6239, %v6551
    %v6568 = vadd.f32 %v6242, %v6554
    %v6569 = vadd.f32 %v6247, %v6559
    %v6570 = vadd.f32 %v6250, %v6562
    %6571 = vrot.lane.b32.xlu0 %v5615, 32
    %v6572 = vpop.permute.xlu0 %6571
    %6573 = vrot.lane.b32.xlu0 %v5616, 32
    %v6574 = vpop.permute.xlu0 %6573
    %6575 = vrot.lane.b32.xlu0 %v5617, 32
    %v6576 = vpop.permute.xlu0 %6575
    %6577 = vrot.lane.b32.xlu0 %v5618, 32
    %v6578 = vpop.permute.xlu0 %6577
    %6579 = vrot.lane.b32.xlu0 %v5619, 32
    %v6580 = vpop.permute.xlu0 %6579
    %6581 = vrot.lane.b32.xlu0 %v5620, 32
    %v6582 = vpop.permute.xlu0 %6581
    %v6584 = vsel %vm676, %v6572, 0
    %v6587 = vsel %vm676, %v6574, 0
    %v6590 = vsel %vm676, %v6576, 0
    %v6593 = vsel %vm676, %v6578, 0
    %v6596 = vsel %vm676, %v6580, 0
    %v6599 = vsel %vm676, %v6582, 0
    %6601 = vmatprep.subr.bf16.mxu0 0
    %6602 = vmatpush1.bf16.xpose.msra.mxu0 %v6593
    %6603 = vmatprep.subr.bf16.mxu0 0
    %6604 = vmatpush1.bf16.xpose.msra.mxu0 %v6596
    %6605 = vmatprep.subr.bf16.mxu0 0
    %6606 = vmatpush1.bf16.xpose.msra.mxu0 %v6599
    %6607 = vmatprep.subr.bf16.mxu0 0
    %6608 = vmatpush1.bf16.xpose.msra.mxu0 0
    %6609 = vmatprep.subr.bf16.mxu0 0
    %6610 = vmatpush1.bf16.xpose.msra.mxu0 0
    %6611 = vmatprep.subr.bf16.mxu0 0
    %6612 = vmatpush1.bf16.xpose.msra.mxu0 0
    %6613 = vmatprep.subr.bf16.mxu0 0
    %6614 = vmatpush1.bf16.xpose.msra.mxu0 0
    %6615 = vmatprep.subr.bf16.mxu0 0
    %6616 = vmatpush1.bf16.xpose.msra.mxu0 0
    %6617 = vmatprep.subr.bf16.mxu0 0
    %6618 = vmatpush1.bf16.xpose.msra.mxu0 0
    %6619 = vmatprep.subr.bf16.mxu0 0
    %6620 = vmatpush1.bf16.xpose.msra.mxu0 0
    %6621 = vmatprep.subr.bf16.mxu0 0
    %6622 = vmatpush1.bf16.xpose.msra.mxu0 0
    %6623 = vmatprep.subr.bf16.mxu0 0
    %6624 = vmatpush1.bf16.xpose.msra.mxu0 0
    %6625 = vmatprep.subr.bf16.mxu0 0
    %6626 = vmatpush1.bf16.xpose.msra.mxu0 0
    %6627 = vmatprep.subr.bf16.mxu0 0
    %6628 = vmatpush1.bf16.xpose.msra.mxu0 0
    %6629 = vmatprep.subr.bf16.mxu0 0
    %6630 = vmatpush1.bf16.xpose.msra.mxu0 0
    %6631 = vmatprep.subr.bf16.mxu0 0
    %6632 = vmatpush1.bf16.xpose.msra.mxu0 0
    %6633 = vmatprep.mubr.bf16.mxu0 0
    %6634 = vmatmul.mubr.bf16.gmra.mrb[0].mxu0 %v6584
    %v6635 = vpop.f32.mrb[0].mxu0
    %v6636 = vadd.f32 %v127, %v6635
    %v6637 = vpop.f32.mrb[0].mxu0
    %v6638 = vpop.f32.mrb[0].mxu0
    %v6639 = vadd.f32 %v128, %v6638
    %v6640 = vpop.f32.mrb[0].mxu0
    %6641 = vmatprep.mubr.bf16.mxu0 0
    %6642 = vmatmul.mubr.bf16.gmra.mrb[0].mxu0 %v6587
    %v6643 = vpop.f32.mrb[0].mxu0
    %v6644 = vadd.f32 %v129, %v6643
    %v6645 = vpop.f32.mrb[0].mxu0
    %v6646 = vpop.f32.mrb[0].mxu0
    %v6647 = vadd.f32 %v130, %v6646
    %v6648 = vpop.f32.mrb[0].mxu0
    %6649 = vmatprep.mubr.bf16.mxu0 0
    %6650 = vmatmul.mubr.bf16.gmra.mrb[0].mxu0 %v6590
    %v6651 = vpop.f32.mrb[0].mxu0
    %v6652 = vadd.f32 %v131, %v6651
    %v6653 = vpop.f32.mrb[0].mxu0
    %v6654 = vpop.f32.mrb[0].mxu0
    %v6655 = vadd.f32 %v132, %v6654
    %v6656 = vpop.f32.mrb[0].mxu0
    %6657 = vdwg.mxu0
    %v6658 = vsel %vm752, %v6636, -inf
    %6659 = vmax.xlane.f32.xlu0 %v6658
    %v6660 = vpop.xlane.xlu0 %6659
    %v6661 = vsel %vm752, %v6639, -inf
    %6662 = vmax.xlane.f32.xlu0 %v6661
    %v6663 = vpop.xlane.xlu0 %6662
    %v6664 = vsel %vm752, %v6644, -inf
    %6665 = vmax.xlane.f32.xlu0 %v6664
    %v6666 = vpop.xlane.xlu0 %6665
    %v6667 = vsel %vm752, %v6647, -inf
    %6668 = vmax.xlane.f32.xlu0 %v6667
    %v6669 = vpop.xlane.xlu0 %6668
    %v6670 = vsel %vm752, %v6652, -inf
    %6671 = vmax.xlane.f32.xlu0 %v6670
    %v6672 = vpop.xlane.xlu0 %6671
    %v6673 = vsel %vm752, %v6655, -inf
    %6674 = vmax.xlane.f32.xlu0 %v6673
    %v6675 = vpop.xlane.xlu0 %6674
    %v6676 = vsub.f32 %v6636, %v6660
    %v6677 = vsub.f32 %v6639, %v6663
    %v6678 = vsub.f32 %v6644, %v6666
    %v6679 = vsub.f32 %v6647, %v6669
    %v6680 = vsub.f32 %v6652, %v6672
    %v6681 = vsub.f32 %v6655, %v6675
    %v6682 = vmul.f32 %v6676, 1.442695
    %v6683 = vpow.pop %v6682
    %v6684 = vmul.f32 %v6677, 1.442695
    %v6685 = vpow.pop %v6684
    %v6686 = vmul.f32 %v6678, 1.442695
    %v6687 = vpow.pop %v6686
    %v6688 = vmul.f32 %v6679, 1.442695
    %v6689 = vpow.pop %v6688
    %v6690 = vmul.f32 %v6680, 1.442695
    %v6691 = vpow.pop %v6690
    %v6692 = vmul.f32 %v6681, 1.442695
    %v6693 = vpow.pop %v6692
    %v6694 = vsel %vm752, %v6683, 0.0
    %6695 = vadd.xlane.f32.xlu0 %v6694
    %v6696 = vpop.xlane.xlu0 %6695
    %v6697 = vsel %vm752, %v6685, 0.0
    %6698 = vadd.xlane.f32.xlu0 %v6697
    %v6699 = vpop.xlane.xlu0 %6698
    %v6700 = vsel %vm752, %v6687, 0.0
    %6701 = vadd.xlane.f32.xlu0 %v6700
    %v6702 = vpop.xlane.xlu0 %6701
    %v6703 = vsel %vm752, %v6689, 0.0
    %6704 = vadd.xlane.f32.xlu0 %v6703
    %v6705 = vpop.xlane.xlu0 %6704
    %v6706 = vsel %vm752, %v6691, 0.0
    %6707 = vadd.xlane.f32.xlu0 %v6706
    %v6708 = vpop.xlane.xlu0 %6707
    %v6709 = vsel %vm752, %v6693, 0.0
    %6710 = vadd.xlane.f32.xlu0 %v6709
    %v6711 = vpop.xlane.xlu0 %6710
    %v6712 = vrcp.pop %v6696
    %v6713 = vrcp.pop %v6699
    %v6714 = vrcp.pop %v6702
    %v6715 = vrcp.pop %v6705
    %v6716 = vrcp.pop %v6708
    %v6717 = vrcp.pop %v6711
    %v6718 = vmul.f32 %v6683, %v6712
    %v6719 = vmul.f32 %v6685, %v6713
    %v6720 = vmul.f32 %v6687, %v6714
    %v6721 = vmul.f32 %v6689, %v6715
    %v6722 = vmul.f32 %v6691, %v6716
    %v6723 = vmul.f32 %v6693, %v6717
    %v6724 = vpack.c.bf16 %v6719, %v6718
    %v6725 = vpack.c.bf16 %v6721, %v6720
    %v6726 = vpack.c.bf16 %v6723, %v6722
    %6727 = vrot.lane.b32.xlu0 %v5621, 32
    %v6728 = vpop.permute.xlu0 %6727
    %6729 = vrot.lane.b32.xlu0 %v5622, 32
    %v6730 = vpop.permute.xlu0 %6729
    %6731 = vrot.lane.b32.xlu0 %v5623, 32
    %v6732 = vpop.permute.xlu0 %6731
    %v6737 = vsel %vm752, %v6724, 0
    %v6740 = vsel %vm752, %v6725, 0
    %v6743 = vsel %vm752, %v6726, 0
    %6745 = vmatprep.subr.bf16.mxu0 0
    %6746 = vmatpush1.bf16.msra.mxu0 %v6728
    %6747 = vmatprep.subr.bf16.mxu0 0
    %6748 = vmatpush1.bf16.msra.mxu0 %v6730
    %6749 = vmatprep.subr.bf16.mxu0 0
    %6750 = vmatpush1.bf16.msra.mxu0 %v6732
    %6751 = vmatprep.subr.bf16.mxu0 0
    %6752 = vmatpush1.bf16.msra.mxu0 0
    %6753 = vmatprep.subr.bf16.mxu0 0
    %6754 = vmatpush1.bf16.msra.mxu0 0
    %6755 = vmatprep.subr.bf16.mxu0 0
    %6756 = vmatpush1.bf16.msra.mxu0 0
    %6757 = vmatprep.subr.bf16.mxu0 0
    %6758 = vmatpush1.bf16.msra.mxu0 0
    %6759 = vmatprep.subr.bf16.mxu0 0
    %6760 = vmatpush1.bf16.msra.mxu0 0
    %6761 = vmatprep.subr.bf16.mxu0 0
    %6762 = vmatpush1.bf16.msra.mxu0 0
    %6763 = vmatprep.subr.bf16.mxu0 0
    %6764 = vmatpush1.bf16.msra.mxu0 0
    %6765 = vmatprep.subr.bf16.mxu0 0
    %6766 = vmatpush1.bf16.msra.mxu0 0
    %6767 = vmatprep.subr.bf16.mxu0 0
    %6768 = vmatpush1.bf16.msra.mxu0 0
    %6769 = vmatprep.subr.bf16.mxu0 0
    %6770 = vmatpush1.bf16.msra.mxu0 0
    %6771 = vmatprep.subr.bf16.mxu0 0
    %6772 = vmatpush1.bf16.msra.mxu0 0
    %6773 = vmatprep.subr.bf16.mxu0 0
    %6774 = vmatpush1.bf16.msra.mxu0 0
    %6775 = vmatprep.subr.bf16.mxu0 0
    %6776 = vmatpush1.bf16.msra.mxu0 0
    %6777 = vmatprep.mubr.bf16.mxu0 0
    %6778 = vmatmul.mubr.bf16.gmra.mrb[0].mxu0 %v6737
    %v6779 = vpop.f32.mrb[0].mxu0
    %v6780 = vadd.f32 0.0, %v6779
    %v6781 = vpop.f32.mrb[0].mxu0
    %v6782 = vpop.f32.mrb[0].mxu0
    %v6783 = vadd.f32 0.0, %v6782
    %v6784 = vpop.f32.mrb[0].mxu0
    %6785 = vmatprep.mubr.bf16.mxu0 0
    %6786 = vmatmul.mubr.bf16.gmra.mrb[0].mxu0 %v6740
    %v6787 = vpop.f32.mrb[0].mxu0
    %v6788 = vadd.f32 0.0, %v6787
    %v6789 = vpop.f32.mrb[0].mxu0
    %v6790 = vpop.f32.mrb[0].mxu0
    %v6791 = vadd.f32 0.0, %v6790
    %v6792 = vpop.f32.mrb[0].mxu0
    %6793 = vmatprep.mubr.bf16.mxu0 0
    %6794 = vmatmul.mubr.bf16.gmra.mrb[0].mxu0 %v6743
    %v6795 = vpop.f32.mrb[0].mxu0
    %v6796 = vadd.f32 0.0, %v6795
    %v6797 = vpop.f32.mrb[0].mxu0
    %v6798 = vpop.f32.mrb[0].mxu0
    %v6799 = vadd.f32 0.0, %v6798
    %v6800 = vpop.f32.mrb[0].mxu0
    %6801 = vdwg.mxu0
    %v6802 = vpack.c.bf16 %v6783, %v6780
    %v6803 = vpack.c.bf16 %v6791, %v6788
    %v6804 = vpack.c.bf16 %v6799, %v6796
    %v6809 = vunpack.c.l.b16 %v5847
    %v6810 = vunpack.c.l.b16 %v5848
    %v6811 = vunpack.c.l.b16 %v5849
    %v6812 = vunpack.c.l.b16 %v5850
    %v6813 = vpack.c.b16 %v6810, %v6809
    %v6814 = vpack.c.b16 %v6812, %v6811
    %v6818 = vsel %vm676, %v6802, 0
    %v6821 = vsel %vm676, %v6803, 0
    %v6824 = vsel %vm676, %v6804, 0
    %6826 = vmatprep.subr.bf16.mxu0 0
    %6827 = vmatpush1.bf16.msra.mxu0 %v6813
    %6828 = vmatprep.subr.bf16.mxu0 0
    %6829 = vmatpush1.bf16.msra.mxu0 %v6814
    %6830 = vmatprep.subr.bf16.mxu0 0
    %6831 = vmatpush1.bf16.msra.mxu0 0
    %6832 = vmatprep.subr.bf16.mxu0 0
    %6833 = vmatpush1.bf16.msra.mxu0 0
    %6834 = vmatprep.subr.bf16.mxu0 0
    %6835 = vmatpush1.bf16.msra.mxu0 0
    %6836 = vmatprep.subr.bf16.mxu0 0
    %6837 = vmatpush1.bf16.msra.mxu0 0
    %6838 = vmatprep.subr.bf16.mxu0 0
    %6839 = vmatpush1.bf16.msra.mxu0 0
    %6840 = vmatprep.subr.bf16.mxu0 0
    %6841 = vmatpush1.bf16.msra.mxu0 0
    %6842 = vmatprep.subr.bf16.mxu0 0
    %6843 = vmatpush1.bf16.msra.mxu0 0
    %6844 = vmatprep.subr.bf16.mxu0 0
    %6845 = vmatpush1.bf16.msra.mxu0 0
    %6846 = vmatprep.subr.bf16.mxu0 0
    %6847 = vmatpush1.bf16.msra.mxu0 0
    %6848 = vmatprep.subr.bf16.mxu0 0
    %6849 = vmatpush1.bf16.msra.mxu0 0
    %6850 = vmatprep.subr.bf16.mxu0 0
    %6851 = vmatpush1.bf16.msra.mxu0 0
    %6852 = vmatprep.subr.bf16.mxu0 0
    %6853 = vmatpush1.bf16.msra.mxu0 0
    %6854 = vmatprep.subr.bf16.mxu0 0
    %6855 = vmatpush1.bf16.msra.mxu0 0
    %6856 = vmatprep.subr.bf16.mxu0 0
    %6857 = vmatpush1.bf16.msra.mxu0 0
    %6858 = vmatprep.mubr.bf16.mxu0 0
    %6859 = vmatmul.mubr.bf16.gmra.mrb[0].mxu0 %v6818
    %v6860 = vpop.f32.mrb[0].mxu0
    %v6861 = vadd.f32 0.0, %v6860
    %v6862 = vpop.f32.mrb[0].mxu0
    %v6863 = vpop.f32.mrb[0].mxu0
    %v6864 = vadd.f32 0.0, %v6863
    %v6865 = vpop.f32.mrb[0].mxu0
    %6866 = vmatprep.mubr.bf16.mxu0 0
    %6867 = vmatmul.mubr.bf16.gmra.mrb[0].mxu0 %v6821
    %v6868 = vpop.f32.mrb[0].mxu0
    %v6869 = vadd.f32 0.0, %v6868
    %v6870 = vpop.f32.mrb[0].mxu0
    %v6871 = vpop.f32.mrb[0].mxu0
    %v6872 = vadd.f32 0.0, %v6871
    %v6873 = vpop.f32.mrb[0].mxu0
    %6874 = vmatprep.mubr.bf16.mxu0 0
    %6875 = vmatmul.mubr.bf16.gmra.mrb[0].mxu0 %v6824
    %v6876 = vpop.f32.mrb[0].mxu0
    %v6877 = vadd.f32 0.0, %v6876
    %v6878 = vpop.f32.mrb[0].mxu0
    %v6879 = vpop.f32.mrb[0].mxu0
    %v6880 = vadd.f32 0.0, %v6879
    %v6881 = vpop.f32.mrb[0].mxu0
    %6882 = vdwg.mxu0
    %v6883 = vadd.f32 %v6565, %v6861
    %v6884 = vadd.f32 %v6566, %v6864
    %v6885 = vadd.f32 %v6567, %v6869
    %v6886 = vadd.f32 %v6568, %v6872
    %v6887 = vadd.f32 %v6569, %v6877
    %v6888 = vadd.f32 %v6570, %v6880
    %v6889 = vld [vmem:[%s5] sm:$0xff]
    %v6890 = vld [vmem:[%s5 + $0x8] sm:$0xff]
    %v6891 = vld [vmem:[%s5 + $0x10] sm:$0xff]
    %v6892 = vld [vmem:[%s5 + $0x18] sm:$0xff]
    %v6893 = vld [vmem:[%s5 + $0x20] sm:$0xff]
    %v6894 = vld [vmem:[%s5 + $0x28] sm:$0xff]
    %v6895 = vpack.c.bf16 %v6890, %v6889
    %v6896 = vpack.c.bf16 %v6892, %v6891
    %v6897 = vpack.c.bf16 %v6894, %v6893
    %6898 = vmatprep.subr.bf16.mxu0 0
    %6899 = vmatpush1.bf16.msra.mxu0 %v5318
    %6900 = vmatprep.subr.bf16.mxu0 0
    %6901 = vmatpush1.bf16.msra.mxu0 %v5323
    %6902 = vmatprep.subr.bf16.mxu0 0
    %6903 = vmatpush1.bf16.msra.mxu0 %v5328
    %6904 = vmatprep.subr.bf16.mxu0 0
    %6905 = vmatpush1.bf16.msra.mxu0 %v5333
    %6906 = vmatprep.subr.bf16.mxu0 0
    %6907 = vmatpush1.bf16.msra.mxu0 %v5338
    %6908 = vmatprep.subr.bf16.mxu0 0
    %6909 = vmatpush1.bf16.msra.mxu0 %v5343
    %6910 = vmatprep.subr.bf16.mxu0 0
    %6911 = vmatpush1.bf16.msra.mxu0 %v5348
    %6912 = vmatprep.subr.bf16.mxu0 0
    %6913 = vmatpush1.bf16.msra.mxu0 %v5353
    %6914 = vmatprep.subr.bf16.mxu0 0
    %6915 = vmatpush1.bf16.msra.mxu0 0
    %6916 = vmatprep.subr.bf16.mxu0 0
    %6917 = vmatpush1.bf16.msra.mxu0 0
    %6918 = vmatprep.subr.bf16.mxu0 0
    %6919 = vmatpush1.bf16.msra.mxu0 0
    %6920 = vmatprep.subr.bf16.mxu0 0
    %6921 = vmatpush1.bf16.msra.mxu0 0
    %6922 = vmatprep.subr.bf16.mxu0 0
    %6923 = vmatpush1.bf16.msra.mxu0 0
    %6924 = vmatprep.subr.bf16.mxu0 0
    %6925 = vmatpush1.bf16.msra.mxu0 0
    %6926 = vmatprep.subr.bf16.mxu0 0
    %6927 = vmatpush1.bf16.msra.mxu0 0
    %6928 = vmatprep.subr.bf16.mxu0 0
    %6929 = vmatpush1.bf16.msra.mxu0 0
    %6930 = vmatprep.mubr.bf16.mxu0 0
    %6931 = vmatmul.mubr.bf16.gmra.mrb[0].mxu0 %v6895
    %v6932 = vpop.f32.mrb[0].mxu0
    %v6933 = vadd.f32 0.0, %v6932
    %v6934 = vpop.f32.mrb[0].mxu0
    %v6935 = vpop.f32.mrb[0].mxu0
    %v6936 = vadd.f32 0.0, %v6935
    %v6937 = vpop.f32.mrb[0].mxu0
    %6938 = vmatprep.mubr.bf16.mxu0 0
    %6939 = vmatmul.mubr.bf16.gmra.mrb[0].mxu0 %v6896
    %v6940 = vpop.f32.mrb[0].mxu0
    %v6941 = vadd.f32 0.0, %v6940
    %v6942 = vpop.f32.mrb[0].mxu0
    %v6943 = vpop.f32.mrb[0].mxu0
    %v6944 = vadd.f32 0.0, %v6943
    %v6945 = vpop.f32.mrb[0].mxu0
    %6946 = vmatprep.mubr.bf16.mxu0 0
    %6947 = vmatmul.mubr.bf16.gmra.mrb[0].mxu0 %v6897
    %v6948 = vpop.f32.mrb[0].mxu0
    %v6949 = vadd.f32 0.0, %v6948
    %v6950 = vpop.f32.mrb[0].mxu0
    %v6951 = vpop.f32.mrb[0].mxu0
    %v6952 = vadd.f32 0.0, %v6951
    %v6953 = vpop.f32.mrb[0].mxu0
    %6954 = vdwg.mxu0
    %v6955 = vld [vmem:[%s6] sm:$0x1]
    %v6957 = vlaneseq
    %v6958 = vshrl.u32 %v6957, 7
    %v6959 = vsub.s32 0, %v6958
    %v6960 = vrot.slane %v6955, %v6959
    %v6962 = vmul.f32 %v6933, %v6960
    %v6963 = vmul.f32 %v6936, %v6960
    %v6964 = vmul.f32 %v6941, %v6960
    %v6965 = vmul.f32 %v6944, %v6960
    %v6966 = vmul.f32 %v6949, %v6960
    %v6967 = vmul.f32 %v6952, %v6960
    %v6968 = vpack.c.bf16 %v6963, %v6962
    %v6969 = vpack.c.bf16 %v6965, %v6964
    %v6970 = vpack.c.bf16 %v6967, %v6966
    %6971 = vmatprep.subr.bf16.mxu0 0
    %6972 = vmatpush1.bf16.msra.mxu0 %v6183
    %6973 = vmatprep.subr.bf16.mxu0 0
    %6974 = vmatpush1.bf16.msra.mxu0 %v6184
    %6975 = vmatprep.subr.bf16.mxu0 0
    %6976 = vmatpush1.bf16.msra.mxu0 %v6105
    %6977 = vmatprep.subr.bf16.mxu0 0
    %6978 = vmatpush1.bf16.msra.mxu0 %v6106
    %6979 = vmatprep.subr.bf16.mxu0 0
    %6980 = vmatpush1.bf16.msra.mxu0 %v6495
    %6981 = vmatprep.subr.bf16.mxu0 0
    %6982 = vmatpush1.bf16.msra.mxu0 %v6496
    %6983 = vmatprep.subr.bf16.mxu0 0
    %6984 = vmatpush1.bf16.msra.mxu0 %v6813
    %6985 = vmatprep.subr.bf16.mxu0 0
    %6986 = vmatpush1.bf16.msra.mxu0 %v6814
    %6987 = vmatprep.subr.bf16.mxu0 0
    %6988 = vmatpush1.bf16.msra.mxu0 0
    %6989 = vmatprep.subr.bf16.mxu0 0
    %6990 = vmatpush1.bf16.msra.mxu0 0
    %6991 = vmatprep.subr.bf16.mxu0 0
    %6992 = vmatpush1.bf16.msra.mxu0 0
    %6993 = vmatprep.subr.bf16.mxu0 0
    %6994 = vmatpush1.bf16.msra.mxu0 0
    %6995 = vmatprep.subr.bf16.mxu0 0
    %6996 = vmatpush1.bf16.msra.mxu0 0
    %6997 = vmatprep.subr.bf16.mxu0 0
    %6998 = vmatpush1.bf16.msra.mxu0 0
    %6999 = vmatprep.subr.bf16.mxu0 0
    %7000 = vmatpush1.bf16.msra.mxu0 0
    %7001 = vmatprep.subr.bf16.mxu0 0
    %7002 = vmatpush1.bf16.msra.mxu0 0
    %7003 = vmatprep.mubr.bf16.mxu0 0
    %7004 = vmatmul.mubr.bf16.gmra.mrb[0].mxu0 %v6968
    %v7005 = vpop.f32.mrb[0].mxu0
    %v7006 = vadd.f32 0.0, %v7005
    %v7007 = vpop.f32.mrb[0].mxu0
    %v7008 = vpop.f32.mrb[0].mxu0
    %v7009 = vadd.f32 0.0, %v7008
    %v7010 = vpop.f32.mrb[0].mxu0
    %7011 = vmatprep.mubr.bf16.mxu0 0
    %7012 = vmatmul.mubr.bf16.gmra.mrb[0].mxu0 %v6969
    %v7013 = vpop.f32.mrb[0].mxu0
    %v7014 = vadd.f32 0.0, %v7013
    %v7015 = vpop.f32.mrb[0].mxu0
    %v7016 = vpop.f32.mrb[0].mxu0
    %v7017 = vadd.f32 0.0, %v7016
    %v7018 = vpop.f32.mrb[0].mxu0
    %7019 = vmatprep.mubr.bf16.mxu0 0
    %7020 = vmatmul.mubr.bf16.gmra.mrb[0].mxu0 %v6970
    %v7021 = vpop.f32.mrb[0].mxu0
    %v7022 = vadd.f32 0.0, %v7021
    %v7023 = vpop.f32.mrb[0].mxu0
    %v7024 = vpop.f32.mrb[0].mxu0
    %v7025 = vadd.f32 0.0, %v7024
    %v7026 = vpop.f32.mrb[0].mxu0
    %7027 = vdwg.mxu0
    %v7028 = vadd.f32 %v6883, %v7006
    %v7029 = vadd.f32 %v6884, %v7009
    %v7030 = vadd.f32 %v6885, %v7014
    %v7031 = vadd.f32 %v6886, %v7017
    %v7032 = vadd.f32 %v6887, %v7022
    %v7033 = vadd.f32 %v6888, %v7025
    %v7034 = vadd.f32 %v5074, %v7028
    %v7035 = vadd.f32 %v5075, %v7029
    %v7036 = vadd.f32 %v5076, %v7030
    %v7037 = vadd.f32 %v5077, %v7031
    %v7038 = vadd.f32 %v5078, %v7032
    %v7039 = vadd.f32 %v5079, %v7033
    %s7040 = scalar_lea.vmem %s13, 2
    %v7041 = vld [vmem:[%s7040] sm:$0x1]
    %v7042 = vmul.f32 %v7034, %v7034
    %v7043 = vmul.f32 %v7035, %v7035
    %v7044 = vmul.f32 %v7036, %v7036
    %v7045 = vmul.f32 %v7037, %v7037
    %v7046 = vmul.f32 %v7038, %v7038
    %v7047 = vmul.f32 %v7039, %v7039
    %7048 = vadd.xlane.f32.xlu0 %v7042
    %v7049 = vpop.xlane.xlu0 %7048
    %7050 = vadd.xlane.f32.xlu0 %v7043
    %v7051 = vpop.xlane.xlu0 %7050
    %7052 = vadd.xlane.f32.xlu0 %v7044
    %v7053 = vpop.xlane.xlu0 %7052
    %7054 = vadd.xlane.f32.xlu0 %v7045
    %v7055 = vpop.xlane.xlu0 %7054
    %7056 = vadd.xlane.f32.xlu0 %v7046
    %v7057 = vpop.xlane.xlu0 %7056
    %7058 = vadd.xlane.f32.xlu0 %v7047
    %v7059 = vpop.xlane.xlu0 %7058
    %v7060 = vmul.f32 %v7049, %v200
    %v7061 = vmul.f32 %v7051, %v200
    %v7062 = vmul.f32 %v7053, %v200
    %v7063 = vmul.f32 %v7055, %v200
    %v7064 = vmul.f32 %v7057, %v200
    %v7065 = vmul.f32 %v7059, %v200
    %v7066 = vadd.f32 %v7060, 1e-05
    %v7067 = vadd.f32 %v7061, 1e-05
    %v7068 = vadd.f32 %v7062, 1e-05
    %v7069 = vadd.f32 %v7063, 1e-05
    %v7070 = vadd.f32 %v7064, 1e-05
    %v7071 = vadd.f32 %v7065, 1e-05
    %v7072 = vrsqrt.pop %v7066
    %v7073 = vrsqrt.pop %v7067
    %v7074 = vrsqrt.pop %v7068
    %v7075 = vrsqrt.pop %v7069
    %v7076 = vrsqrt.pop %v7070
    %v7077 = vrsqrt.pop %v7071
    %v7078 = vmul.f32 %v7034, %v7072
    %v7079 = vmul.f32 %v7035, %v7073
    %v7080 = vmul.f32 %v7036, %v7074
    %v7081 = vmul.f32 %v7037, %v7075
    %v7082 = vmul.f32 %v7038, %v7076
    %v7083 = vmul.f32 %v7039, %v7077
    %v7085 = vlaneseq
    %v7086 = vshrl.u32 %v7085, 7
    %v7087 = vsub.s32 0, %v7086
    %v7088 = vrot.slane %v7041, %v7087
    %v7090 = vmul.f32 %v7078, %v7088
    %v7091 = vmul.f32 %v7079, %v7088
    %v7092 = vmul.f32 %v7080, %v7088
    %v7093 = vmul.f32 %v7081, %v7088
    %v7094 = vmul.f32 %v7082, %v7088
    %v7095 = vmul.f32 %v7083, %v7088
    %s7096 = scalar_lea.vmem [#allocation4], 512
    %v7097 = vld [vmem:[%s7096] sm:$0xff]
    %v7098 = vld [vmem:[%s7096 + $0x8] sm:$0xff]
    %v7099 = vld [vmem:[%s7096 + $0x10] sm:$0xff]
    %v7100 = vld [vmem:[%s7096 + $0x18] sm:$0xff]
    %v7101 = vld [vmem:[%s7096 + $0x20] sm:$0xff]
    %v7102 = vld [vmem:[%s7096 + $0x28] sm:$0xff]
    %v7103 = vld [vmem:[%s7096 + $0x30] sm:$0xff]
    %v7104 = vld [vmem:[%s7096 + $0x38] sm:$0xff]
    %v7105 = vld [vmem:[%s7096 + $0x40] sm:$0xff]
    %v7106 = vld [vmem:[%s7096 + $0x48] sm:$0xff]
    %v7107 = vld [vmem:[%s7096 + $0x50] sm:$0xff]
    %v7108 = vld [vmem:[%s7096 + $0x58] sm:$0xff]
    %v7109 = vld [vmem:[%s7096 + $0x60] sm:$0xff]
    %v7110 = vld [vmem:[%s7096 + $0x68] sm:$0xff]
    %v7111 = vld [vmem:[%s7096 + $0x70] sm:$0xff]
    %v7112 = vld [vmem:[%s7096 + $0x78] sm:$0xff]
    %v7113 = vld [vmem:[%s7096 + $0x80] sm:$0xff]
    %v7114 = vld [vmem:[%s7096 + $0x88] sm:$0xff]
    %v7115 = vld [vmem:[%s7096 + $0x90] sm:$0xff]
    %v7116 = vld [vmem:[%s7096 + $0x98] sm:$0xff]
    %v7117 = vld [vmem:[%s7096 + $0xa0] sm:$0xff]
    %v7118 = vld [vmem:[%s7096 + $0xa8] sm:$0xff]
    %v7119 = vld [vmem:[%s7096 + $0xb0] sm:$0xff]
    %v7120 = vld [vmem:[%s7096 + $0xb8] sm:$0xff]
    %v7121 = vld [vmem:[%s7096 + $0xc0] sm:$0xff]
    %v7122 = vld [vmem:[%s7096 + $0xc8] sm:$0xff]
    %v7123 = vld [vmem:[%s7096 + $0xd0] sm:$0xff]
    %v7124 = vld [vmem:[%s7096 + $0xd8] sm:$0xff]
    %v7125 = vld [vmem:[%s7096 + $0xe0] sm:$0xff]
    %v7126 = vld [vmem:[%s7096 + $0xe8] sm:$0xff]
    %v7127 = vld [vmem:[%s7096 + $0xf0] sm:$0xff]
    %v7128 = vld [vmem:[%s7096 + $0xf8] sm:$0xff]
    %v7129 = vpack.c.bf16 %v7091, %v7090
    %v7130 = vpack.c.bf16 %v7093, %v7092
    %v7131 = vpack.c.bf16 %v7095, %v7094
    %v7164 = vunpack.c.l.b16 %v7097
    %v7165 = vunpack.c.h.b16 %v7097
    %v7166 = vunpack.c.l.b16 %v7098
    %v7167 = vunpack.c.h.b16 %v7098
    %v7168 = vunpack.c.l.b16 %v7099
    %v7169 = vunpack.c.h.b16 %v7099
    %v7170 = vunpack.c.l.b16 %v7100
    %v7171 = vunpack.c.h.b16 %v7100
    %v7172 = vunpack.c.l.b16 %v7101
    %v7173 = vunpack.c.h.b16 %v7101
    %v7174 = vunpack.c.l.b16 %v7102
    %v7175 = vunpack.c.h.b16 %v7102
    %v7176 = vunpack.c.l.b16 %v7103
    %v7177 = vunpack.c.h.b16 %v7103
    %v7178 = vunpack.c.l.b16 %v7104
    %v7179 = vunpack.c.h.b16 %v7104
    %v7180 = vunpack.c.l.b16 %v7105
    %v7181 = vunpack.c.h.b16 %v7105
    %v7182 = vunpack.c.l.b16 %v7106
    %v7183 = vunpack.c.h.b16 %v7106
    %v7184 = vunpack.c.l.b16 %v7107
    %v7185 = vunpack.c.h.b16 %v7107
    %v7186 = vunpack.c.l.b16 %v7108
    %v7187 = vunpack.c.h.b16 %v7108
    %v7188 = vunpack.c.l.b16 %v7109
    %v7189 = vunpack.c.h.b16 %v7109
    %v7190 = vunpack.c.l.b16 %v7110
    %v7191 = vunpack.c.h.b16 %v7110
    %v7192 = vunpack.c.l.b16 %v7111
    %v7193 = vunpack.c.h.b16 %v7111
    %v7194 = vunpack.c.l.b16 %v7112
    %v7195 = vunpack.c.h.b16 %v7112
    %v7196 = vunpack.c.l.b16 %v7113
    %v7197 = vunpack.c.h.b16 %v7113
    %v7198 = vunpack.c.l.b16 %v7114
    %v7199 = vunpack.c.h.b16 %v7114
    %v7200 = vunpack.c.l.b16 %v7115
    %v7201 = vunpack.c.h.b16 %v7115
    %v7202 = vunpack.c.l.b16 %v7116
    %v7203 = vunpack.c.h.b16 %v7116
    %v7204 = vunpack.c.l.b16 %v7117
    %v7205 = vunpack.c.h.b16 %v7117
    %v7206 = vunpack.c.l.b16 %v7118
    %v7207 = vunpack.c.h.b16 %v7118
    %v7208 = vunpack.c.l.b16 %v7119
    %v7209 = vunpack.c.h.b16 %v7119
    %v7210 = vunpack.c.l.b16 %v7120
    %v7211 = vunpack.c.h.b16 %v7120
    %v7212 = vunpack.c.l.b16 %v7121
    %v7213 = vunpack.c.h.b16 %v7121
    %v7214 = vunpack.c.l.b16 %v7122
    %v7215 = vunpack.c.h.b16 %v7122
    %v7216 = vunpack.c.l.b16 %v7123
    %v7217 = vunpack.c.h.b16 %v7123
    %v7218 = vunpack.c.l.b16 %v7124
    %v7219 = vunpack.c.h.b16 %v7124
    %v7220 = vunpack.c.l.b16 %v7125
    %v7221 = vunpack.c.h.b16 %v7125
    %v7222 = vunpack.c.l.b16 %v7126
    %v7223 = vunpack.c.h.b16 %v7126
    %v7224 = vunpack.c.l.b16 %v7127
    %v7225 = vunpack.c.h.b16 %v7127
    %v7226 = vunpack.c.l.b16 %v7128
    %v7227 = vunpack.c.h.b16 %v7128
    %v7228 = vpack.c.b16 %v7168, %v7164
    %v7229 = vpack.c.b16 %v7169, %v7165
    %v7230 = vpack.c.b16 %v7170, %v7166
    %v7231 = vpack.c.b16 %v7171, %v7167
    %v7232 = vpack.c.b16 %v7176, %v7172
    %v7233 = vpack.c.b16 %v7177, %v7173
    %v7234 = vpack.c.b16 %v7178, %v7174
    %v7235 = vpack.c.b16 %v7179, %v7175
    %v7236 = vpack.c.b16 %v7184, %v7180
    %v7237 = vpack.c.b16 %v7185, %v7181
    %v7238 = vpack.c.b16 %v7186, %v7182
    %v7239 = vpack.c.b16 %v7187, %v7183
    %v7240 = vpack.c.b16 %v7192, %v7188
    %v7241 = vpack.c.b16 %v7193, %v7189
    %v7242 = vpack.c.b16 %v7194, %v7190
    %v7243 = vpack.c.b16 %v7195, %v7191
    %v7244 = vpack.c.b16 %v7200, %v7196
    %v7245 = vpack.c.b16 %v7201, %v7197
    %v7246 = vpack.c.b16 %v7202, %v7198
    %v7247 = vpack.c.b16 %v7203, %v7199
    %v7248 = vpack.c.b16 %v7208, %v7204
    %v7249 = vpack.c.b16 %v7209, %v7205
    %v7250 = vpack.c.b16 %v7210, %v7206
    %v7251 = vpack.c.b16 %v7211, %v7207
    %v7252 = vpack.c.b16 %v7216, %v7212
    %v7253 = vpack.c.b16 %v7217, %v7213
    %v7254 = vpack.c.b16 %v7218, %v7214
    %v7255 = vpack.c.b16 %v7219, %v7215
    %v7256 = vpack.c.b16 %v7224, %v7220
    %v7257 = vpack.c.b16 %v7225, %v7221
    %v7258 = vpack.c.b16 %v7226, %v7222
    %v7259 = vpack.c.b16 %v7227, %v7223
    %7292 = vmatprep.subr.bf16.mxu0 %v7229
    %7293 = vmatpush1.bf16.msra.mxu0 %v7228
    %7294 = vmatprep.subr.bf16.mxu0 %v7233
    %7295 = vmatpush1.bf16.msra.mxu0 %v7232
    %7296 = vmatprep.subr.bf16.mxu0 %v7237
    %7297 = vmatpush1.bf16.msra.mxu0 %v7236
    %7298 = vmatprep.subr.bf16.mxu0 %v7241
    %7299 = vmatpush1.bf16.msra.mxu0 %v7240
    %7300 = vmatprep.subr.bf16.mxu0 %v7245
    %7301 = vmatpush1.bf16.msra.mxu0 %v7244
    %7302 = vmatprep.subr.bf16.mxu0 %v7249
    %7303 = vmatpush1.bf16.msra.mxu0 %v7248
    %7304 = vmatprep.subr.bf16.mxu0 %v7253
    %7305 = vmatpush1.bf16.msra.mxu0 %v7252
    %7306 = vmatprep.subr.bf16.mxu0 %v7257
    %7307 = vmatpush1.bf16.msra.mxu0 %v7256
    %7308 = vmatprep.subr.bf16.mxu0 0
    %7309 = vmatpush1.bf16.msra.mxu0 0
    %7310 = vmatprep.subr.bf16.mxu0 0
    %7311 = vmatpush1.bf16.msra.mxu0 0
    %7312 = vmatprep.subr.bf16.mxu0 0
    %7313 = vmatpush1.bf16.msra.mxu0 0
    %7314 = vmatprep.subr.bf16.mxu0 0
    %7315 = vmatpush1.bf16.msra.mxu0 0
    %7316 = vmatprep.subr.bf16.mxu0 0
    %7317 = vmatpush1.bf16.msra.mxu0 0
    %7318 = vmatprep.subr.bf16.mxu0 0
    %7319 = vmatpush1.bf16.msra.mxu0 0
    %7320 = vmatprep.subr.bf16.mxu0 0
    %7321 = vmatpush1.bf16.msra.mxu0 0
    %7322 = vmatprep.subr.bf16.mxu0 0
    %7323 = vmatpush1.bf16.msra.mxu0 0
    %7324 = vmatprep.mubr.bf16.mxu0 0
    %7325 = vmatmul.mubr.bf16.gmra.mrb[0].mxu0 %v7129
    %v7326 = vpop.f32.mrb[0].mxu0
    %v7327 = vadd.f32 0.0, %v7326
    %v7328 = vpop.f32.mrb[0].mxu0
    %v7329 = vadd.f32 0.0, %v7328
    %v7330 = vpop.f32.mrb[0].mxu0
    %v7331 = vadd.f32 0.0, %v7330
    %v7332 = vpop.f32.mrb[0].mxu0
    %v7333 = vadd.f32 0.0, %v7332
    %7334 = vmatprep.mubr.bf16.mxu0 0
    %7335 = vmatmul.mubr.bf16.gmra.mrb[0].mxu0 %v7130
    %v7336 = vpop.f32.mrb[0].mxu0
    %v7337 = vadd.f32 0.0, %v7336
    %v7338 = vpop.f32.mrb[0].mxu0
    %v7339 = vadd.f32 0.0, %v7338
    %v7340 = vpop.f32.mrb[0].mxu0
    %v7341 = vadd.f32 0.0, %v7340
    %v7342 = vpop.f32.mrb[0].mxu0
    %v7343 = vadd.f32 0.0, %v7342
    %7344 = vmatprep.mubr.bf16.mxu0 0
    %7345 = vmatmul.mubr.bf16.gmra.mrb[0].mxu0 %v7131
    %v7346 = vpop.f32.mrb[0].mxu0
    %v7347 = vadd.f32 0.0, %v7346
    %v7348 = vpop.f32.mrb[0].mxu0
    %v7349 = vadd.f32 0.0, %v7348
    %v7350 = vpop.f32.mrb[0].mxu0
    %v7351 = vadd.f32 0.0, %v7350
    %v7352 = vpop.f32.mrb[0].mxu0
    %v7353 = vadd.f32 0.0, %v7352
    %7354 = vdwg.mxu0
    %7355 = vmatprep.subr.bf16.mxu0 %v7231
    %7356 = vmatpush1.bf16.msra.mxu0 %v7230
    %7357 = vmatprep.subr.bf16.mxu0 %v7235
    %7358 = vmatpush1.bf16.msra.mxu0 %v7234
    %7359 = vmatprep.subr.bf16.mxu0 %v7239
    %7360 = vmatpush1.bf16.msra.mxu0 %v7238
    %7361 = vmatprep.subr.bf16.mxu0 %v7243
    %7362 = vmatpush1.bf16.msra.mxu0 %v7242
    %7363 = vmatprep.subr.bf16.mxu0 %v7247
    %7364 = vmatpush1.bf16.msra.mxu0 %v7246
    %7365 = vmatprep.subr.bf16.mxu0 %v7251
    %7366 = vmatpush1.bf16.msra.mxu0 %v7250
    %7367 = vmatprep.subr.bf16.mxu0 %v7255
    %7368 = vmatpush1.bf16.msra.mxu0 %v7254
    %7369 = vmatprep.subr.bf16.mxu0 %v7259
    %7370 = vmatpush1.bf16.msra.mxu0 %v7258
    %7371 = vmatprep.subr.bf16.mxu0 0
    %7372 = vmatpush1.bf16.msra.mxu0 0
    %7373 = vmatprep.subr.bf16.mxu0 0
    %7374 = vmatpush1.bf16.msra.mxu0 0
    %7375 = vmatprep.subr.bf16.mxu0 0
    %7376 = vmatpush1.bf16.msra.mxu0 0
    %7377 = vmatprep.subr.bf16.mxu0 0
    %7378 = vmatpush1.bf16.msra.mxu0 0
    %7379 = vmatprep.subr.bf16.mxu0 0
    %7380 = vmatpush1.bf16.msra.mxu0 0
    %7381 = vmatprep.subr.bf16.mxu0 0
    %7382 = vmatpush1.bf16.msra.mxu0 0
    %7383 = vmatprep.subr.bf16.mxu0 0
    %7384 = vmatpush1.bf16.msra.mxu0 0
    %7385 = vmatprep.subr.bf16.mxu0 0
    %7386 = vmatpush1.bf16.msra.mxu0 0
    %7387 = vmatprep.mubr.bf16.mxu0 0
    %7388 = vmatmul.mubr.bf16.gmra.mrb[0].mxu0 %v7129
    %v7389 = vpop.f32.mrb[0].mxu0
    %v7390 = vadd.f32 0.0, %v7389
    %v7391 = vpop.f32.mrb[0].mxu0
    %v7392 = vadd.f32 0.0, %v7391
    %v7393 = vpop.f32.mrb[0].mxu0
    %v7394 = vadd.f32 0.0, %v7393
    %v7395 = vpop.f32.mrb[0].mxu0
    %v7396 = vadd.f32 0.0, %v7395
    %7397 = vmatprep.mubr.bf16.mxu0 0
    %7398 = vmatmul.mubr.bf16.gmra.mrb[0].mxu0 %v7130
    %v7399 = vpop.f32.mrb[0].mxu0
    %v7400 = vadd.f32 0.0, %v7399
    %v7401 = vpop.f32.mrb[0].mxu0
    %v7402 = vadd.f32 0.0, %v7401
    %v7403 = vpop.f32.mrb[0].mxu0
    %v7404 = vadd.f32 0.0, %v7403
    %v7405 = vpop.f32.mrb[0].mxu0
    %v7406 = vadd.f32 0.0, %v7405
    %7407 = vmatprep.mubr.bf16.mxu0 0
    %7408 = vmatmul.mubr.bf16.gmra.mrb[0].mxu0 %v7131
    %v7409 = vpop.f32.mrb[0].mxu0
    %v7410 = vadd.f32 0.0, %v7409
    %v7411 = vpop.f32.mrb[0].mxu0
    %v7412 = vadd.f32 0.0, %v7411
    %v7413 = vpop.f32.mrb[0].mxu0
    %v7414 = vadd.f32 0.0, %v7413
    %v7415 = vpop.f32.mrb[0].mxu0
    %v7416 = vadd.f32 0.0, %v7415
    %7417 = vdwg.mxu0
    %v7418 = vsub.f32 0.0, %v7327
    %v7419 = vsub.f32 0.0, %v7329
    %v7420 = vsub.f32 0.0, %v7331
    %v7421 = vsub.f32 0.0, %v7333
    %v7422 = vsub.f32 0.0, %v7337
    %v7423 = vsub.f32 0.0, %v7339
    %v7424 = vsub.f32 0.0, %v7341
    %v7425 = vsub.f32 0.0, %v7343
    %v7426 = vsub.f32 0.0, %v7347
    %v7427 = vsub.f32 0.0, %v7349
    %v7428 = vsub.f32 0.0, %v7351
    %v7429 = vsub.f32 0.0, %v7353
    %v7430 = vmul.f32 %v7418, 1.442695
    %v7431 = vpow.pop %v7430
    %v7432 = vmul.f32 %v7419, 1.442695
    %v7433 = vpow.pop %v7432
    %v7434 = vmul.f32 %v7420, 1.442695
    %v7435 = vpow.pop %v7434
    %v7436 = vmul.f32 %v7421, 1.442695
    %v7437 = vpow.pop %v7436
    %v7438 = vmul.f32 %v7422, 1.442695
    %v7439 = vpow.pop %v7438
    %v7440 = vmul.f32 %v7423, 1.442695
    %v7441 = vpow.pop %v7440
    %v7442 = vmul.f32 %v7424, 1.442695
    %v7443 = vpow.pop %v7442
    %v7444 = vmul.f32 %v7425, 1.442695
    %v7445 = vpow.pop %v7444
    %v7446 = vmul.f32 %v7426, 1.442695
    %v7447 = vpow.pop %v7446
    %v7448 = vmul.f32 %v7427, 1.442695
    %v7449 = vpow.pop %v7448
    %v7450 = vmul.f32 %v7428, 1.442695
    %v7451 = vpow.pop %v7450
    %v7452 = vmul.f32 %v7429, 1.442695
    %v7453 = vpow.pop %v7452
    %v7454 = vadd.f32 %v7431, 1.0
    %v7455 = vadd.f32 %v7433, 1.0
    %v7456 = vadd.f32 %v7435, 1.0
    %v7457 = vadd.f32 %v7437, 1.0
    %v7458 = vadd.f32 %v7439, 1.0
    %v7459 = vadd.f32 %v7441, 1.0
    %v7460 = vadd.f32 %v7443, 1.0
    %v7461 = vadd.f32 %v7445, 1.0
    %v7462 = vadd.f32 %v7447, 1.0
    %v7463 = vadd.f32 %v7449, 1.0
    %v7464 = vadd.f32 %v7451, 1.0
    %v7465 = vadd.f32 %v7453, 1.0
    %v7466 = vrcp.pop %v7454
    %v7467 = vrcp.pop %v7455
    %v7468 = vrcp.pop %v7456
    %v7469 = vrcp.pop %v7457
    %v7470 = vrcp.pop %v7458
    %v7471 = vrcp.pop %v7459
    %v7472 = vrcp.pop %v7460
    %v7473 = vrcp.pop %v7461
    %v7474 = vrcp.pop %v7462
    %v7475 = vrcp.pop %v7463
    %v7476 = vrcp.pop %v7464
    %v7477 = vrcp.pop %v7465
    %v7478 = vmul.f32 %v7327, %v7466
    %v7479 = vmul.f32 %v7329, %v7467
    %v7480 = vmul.f32 %v7331, %v7468
    %v7481 = vmul.f32 %v7333, %v7469
    %v7482 = vmul.f32 %v7337, %v7470
    %v7483 = vmul.f32 %v7339, %v7471
    %v7484 = vmul.f32 %v7341, %v7472
    %v7485 = vmul.f32 %v7343, %v7473
    %v7486 = vmul.f32 %v7347, %v7474
    %v7487 = vmul.f32 %v7349, %v7475
    %v7488 = vmul.f32 %v7351, %v7476
    %v7489 = vmul.f32 %v7353, %v7477
    %v7490 = vmul.f32 %v7478, %v7390
    %v7491 = vmul.f32 %v7479, %v7392
    %v7492 = vmul.f32 %v7480, %v7394
    %v7493 = vmul.f32 %v7481, %v7396
    %v7494 = vmul.f32 %v7482, %v7400
    %v7495 = vmul.f32 %v7483, %v7402
    %v7496 = vmul.f32 %v7484, %v7404
    %v7497 = vmul.f32 %v7485, %v7406
    %v7498 = vmul.f32 %v7486, %v7410
    %v7499 = vmul.f32 %v7487, %v7412
    %v7500 = vmul.f32 %v7488, %v7414
    %v7501 = vmul.f32 %v7489, %v7416
    %s7502 = scalar_lea.vmem [#allocation6], 256
    %v7503 = vld [vmem:[%s7502] sm:$0xf]
    %v7504 = vld [vmem:[%s7502 + $0x4] sm:$0xf]
    %v7505 = vld [vmem:[%s7502 + $0x8] sm:$0xf]
    %v7506 = vld [vmem:[%s7502 + $0xc] sm:$0xf]
    %v7507 = vld [vmem:[%s7502 + $0x10] sm:$0xf]
    %v7508 = vld [vmem:[%s7502 + $0x14] sm:$0xf]
    %v7509 = vld [vmem:[%s7502 + $0x18] sm:$0xf]
    %v7510 = vld [vmem:[%s7502 + $0x1c] sm:$0xf]
    %v7511 = vld [vmem:[%s7502 + $0x20] sm:$0xf]
    %v7512 = vld [vmem:[%s7502 + $0x24] sm:$0xf]
    %v7513 = vld [vmem:[%s7502 + $0x28] sm:$0xf]
    %v7514 = vld [vmem:[%s7502 + $0x2c] sm:$0xf]
    %v7515 = vld [vmem:[%s7502 + $0x30] sm:$0xf]
    %v7516 = vld [vmem:[%s7502 + $0x34] sm:$0xf]
    %v7517 = vld [vmem:[%s7502 + $0x38] sm:$0xf]
    %v7518 = vld [vmem:[%s7502 + $0x3c] sm:$0xf]
    %v7519 = vld [vmem:[%s7502 + $0x40] sm:$0xf]
    %v7520 = vld [vmem:[%s7502 + $0x44] sm:$0xf]
    %v7521 = vld [vmem:[%s7502 + $0x48] sm:$0xf]
    %v7522 = vld [vmem:[%s7502 + $0x4c] sm:$0xf]
    %v7523 = vld [vmem:[%s7502 + $0x50] sm:$0xf]
    %v7524 = vld [vmem:[%s7502 + $0x54] sm:$0xf]
    %v7525 = vld [vmem:[%s7502 + $0x58] sm:$0xf]
    %v7526 = vld [vmem:[%s7502 + $0x5c] sm:$0xf]
    %v7527 = vld [vmem:[%s7502 + $0x60] sm:$0xf]
    %v7528 = vld [vmem:[%s7502 + $0x64] sm:$0xf]
    %v7529 = vld [vmem:[%s7502 + $0x68] sm:$0xf]
    %v7530 = vld [vmem:[%s7502 + $0x6c] sm:$0xf]
    %v7531 = vld [vmem:[%s7502 + $0x70] sm:$0xf]
    %v7532 = vld [vmem:[%s7502 + $0x74] sm:$0xf]
    %v7533 = vld [vmem:[%s7502 + $0x78] sm:$0xf]
    %v7534 = vld [vmem:[%s7502 + $0x7c] sm:$0xf]
    %v7535 = vpack.c.bf16 %v7492, %v7490
    %v7536 = vpack.c.bf16 %v7493, %v7491
    %v7537 = vpack.c.bf16 %v7496, %v7494
    %v7538 = vpack.c.bf16 %v7497, %v7495
    %v7539 = vpack.c.bf16 %v7500, %v7498
    %v7540 = vpack.c.bf16 %v7501, %v7499
    %v7573 = vunpack.c.l.b16 %v7503
    %v7574 = vunpack.c.l.b16 %v7504
    %v7575 = vunpack.c.l.b16 %v7505
    %v7576 = vunpack.c.l.b16 %v7506
    %v7577 = vunpack.c.l.b16 %v7507
    %v7578 = vunpack.c.l.b16 %v7508
    %v7579 = vunpack.c.l.b16 %v7509
    %v7580 = vunpack.c.l.b16 %v7510
    %v7581 = vunpack.c.l.b16 %v7511
    %v7582 = vunpack.c.l.b16 %v7512
    %v7583 = vunpack.c.l.b16 %v7513
    %v7584 = vunpack.c.l.b16 %v7514
    %v7585 = vunpack.c.l.b16 %v7515
    %v7586 = vunpack.c.l.b16 %v7516
    %v7587 = vunpack.c.l.b16 %v7517
    %v7588 = vunpack.c.l.b16 %v7518
    %v7589 = vunpack.c.l.b16 %v7519
    %v7590 = vunpack.c.l.b16 %v7520
    %v7591 = vunpack.c.l.b16 %v7521
    %v7592 = vunpack.c.l.b16 %v7522
    %v7593 = vunpack.c.l.b16 %v7523
    %v7594 = vunpack.c.l.b16 %v7524
    %v7595 = vunpack.c.l.b16 %v7525
    %v7596 = vunpack.c.l.b16 %v7526
    %v7597 = vunpack.c.l.b16 %v7527
    %v7598 = vunpack.c.l.b16 %v7528
    %v7599 = vunpack.c.l.b16 %v7529
    %v7600 = vunpack.c.l.b16 %v7530
    %v7601 = vunpack.c.l.b16 %v7531
    %v7602 = vunpack.c.l.b16 %v7532
    %v7603 = vunpack.c.l.b16 %v7533
    %v7604 = vunpack.c.l.b16 %v7534
    %v7605 = vpack.c.b16 %v7574, %v7573
    %v7606 = vpack.c.b16 %v7576, %v7575
    %v7607 = vpack.c.b16 %v7578, %v7577
    %v7608 = vpack.c.b16 %v7580, %v7579
    %v7609 = vpack.c.b16 %v7582, %v7581
    %v7610 = vpack.c.b16 %v7584, %v7583
    %v7611 = vpack.c.b16 %v7586, %v7585
    %v7612 = vpack.c.b16 %v7588, %v7587
    %v7613 = vpack.c.b16 %v7590, %v7589
    %v7614 = vpack.c.b16 %v7592, %v7591
    %v7615 = vpack.c.b16 %v7594, %v7593
    %v7616 = vpack.c.b16 %v7596, %v7595
    %v7617 = vpack.c.b16 %v7598, %v7597
    %v7618 = vpack.c.b16 %v7600, %v7599
    %v7619 = vpack.c.b16 %v7602, %v7601
    %v7620 = vpack.c.b16 %v7604, %v7603
    %7637 = vmatprep.subr.bf16.mxu0 0
    %7638 = vmatpush1.bf16.msra.mxu0 %v7605
    %7639 = vmatprep.subr.bf16.mxu0 0
    %7640 = vmatpush1.bf16.msra.mxu0 %v7606
    %7641 = vmatprep.subr.bf16.mxu0 0
    %7642 = vmatpush1.bf16.msra.mxu0 %v7607
    %7643 = vmatprep.subr.bf16.mxu0 0
    %7644 = vmatpush1.bf16.msra.mxu0 %v7608
    %7645 = vmatprep.subr.bf16.mxu0 0
    %7646 = vmatpush1.bf16.msra.mxu0 %v7609
    %7647 = vmatprep.subr.bf16.mxu0 0
    %7648 = vmatpush1.bf16.msra.mxu0 %v7610
    %7649 = vmatprep.subr.bf16.mxu0 0
    %7650 = vmatpush1.bf16.msra.mxu0 %v7611
    %7651 = vmatprep.subr.bf16.mxu0 0
    %7652 = vmatpush1.bf16.msra.mxu0 %v7612
    %7653 = vmatprep.subr.bf16.mxu0 0
    %7654 = vmatpush1.bf16.msra.mxu0 %v7613
    %7655 = vmatprep.subr.bf16.mxu0 0
    %7656 = vmatpush1.bf16.msra.mxu0 %v7614
    %7657 = vmatprep.subr.bf16.mxu0 0
    %7658 = vmatpush1.bf16.msra.mxu0 %v7615
    %7659 = vmatprep.subr.bf16.mxu0 0
    %7660 = vmatpush1.bf16.msra.mxu0 %v7616
    %7661 = vmatprep.subr.bf16.mxu0 0
    %7662 = vmatpush1.bf16.msra.mxu0 %v7617
    %7663 = vmatprep.subr.bf16.mxu0 0
    %7664 = vmatpush1.bf16.msra.mxu0 %v7618
    %7665 = vmatprep.subr.bf16.mxu0 0
    %7666 = vmatpush1.bf16.msra.mxu0 %v7619
    %7667 = vmatprep.subr.bf16.mxu0 0
    %7668 = vmatpush1.bf16.msra.mxu0 %v7620
    %7669 = vmatprep.mubr.bf16.mxu0 %v7536
    %7670 = vmatmul.mubr.bf16.gmra.mrb[0].mxu0 %v7535
    %v7671 = vpop.f32.mrb[0].mxu0
    %v7672 = vadd.f32 0.0, %v7671
    %v7673 = vpop.f32.mrb[0].mxu0
    %v7674 = vpop.f32.mrb[0].mxu0
    %v7675 = vadd.f32 0.0, %v7674
    %v7676 = vpop.f32.mrb[0].mxu0
    %7677 = vmatprep.mubr.bf16.mxu0 %v7538
    %7678 = vmatmul.mubr.bf16.gmra.mrb[0].mxu0 %v7537
    %v7679 = vpop.f32.mrb[0].mxu0
    %v7680 = vadd.f32 0.0, %v7679
    %v7681 = vpop.f32.mrb[0].mxu0
    %v7682 = vpop.f32.mrb[0].mxu0
    %v7683 = vadd.f32 0.0, %v7682
    %v7684 = vpop.f32.mrb[0].mxu0
    %7685 = vmatprep.mubr.bf16.mxu0 %v7540
    %7686 = vmatmul.mubr.bf16.gmra.mrb[0].mxu0 %v7539
    %v7687 = vpop.f32.mrb[0].mxu0
    %v7688 = vadd.f32 0.0, %v7687
    %v7689 = vpop.f32.mrb[0].mxu0
    %v7690 = vpop.f32.mrb[0].mxu0
    %v7691 = vadd.f32 0.0, %v7690
    %v7692 = vpop.f32.mrb[0].mxu0
    %7693 = vdwg.mxu0
    %v7694 = vadd.f32 %v7034, %v7672
    %v7695 = vadd.f32 %v7035, %v7675
    %v7696 = vadd.f32 %v7036, %v7680
    %v7697 = vadd.f32 %v7037, %v7683
    %v7698 = vadd.f32 %v7038, %v7688
    %v7699 = vadd.f32 %v7039, %v7691
    %s7700 = scalar_lea.vmem %s8, 960
    %v7701 = vld [vmem:[%s7700] sm:$0xff]
    %v7702 = vld [vmem:[%s7700 + $0x8] sm:$0xff]
    %v7703 = vld [vmem:[%s7700 + $0x10] sm:$0xf]
    %v7704 = vld [vmem:[%s7700 + $0x14] sm:$0xff]
    %v7705 = vld [vmem:[%s7700 + $0x1c] sm:$0xff]
    %v7706 = vld [vmem:[%s7700 + $0x24] sm:$0xf]
    %v7707 = vld [vmem:[%s7700 + $0x28] sm:$0xff]
    %v7708 = vld [vmem:[%s7700 + $0x30] sm:$0xff]
    %v7709 = vld [vmem:[%s7700 + $0x38] sm:$0xf]
    %v7710 = vld [vmem:[%s7700 + $0x3c] sm:$0xff]
    %v7711 = vld [vmem:[%s7700 + $0x44] sm:$0xff]
    %v7712 = vld [vmem:[%s7700 + $0x4c] sm:$0xf]
    %v7713 = vld [vmem:[%s7700 + $0x50] sm:$0xff]
    %v7714 = vld [vmem:[%s7700 + $0x58] sm:$0xff]
    %v7715 = vld [vmem:[%s7700 + $0x60] sm:$0xf]
    %v7716 = vld [vmem:[%s7700 + $0x64] sm:$0xff]
    %v7717 = vld [vmem:[%s7700 + $0x6c] sm:$0xff]
    %v7718 = vld [vmem:[%s7700 + $0x74] sm:$0xf]
    %v7719 = vld [vmem:[%s7700 + $0x78] sm:$0xff]
    %v7720 = vld [vmem:[%s7700 + $0x80] sm:$0xff]
    %v7721 = vld [vmem:[%s7700 + $0x88] sm:$0xf]
    %v7722 = vld [vmem:[%s7700 + $0x8c] sm:$0xff]
    %v7723 = vld [vmem:[%s7700 + $0x94] sm:$0xff]
    %v7724 = vld [vmem:[%s7700 + $0x9c] sm:$0xf]
    %v7725 = vld [vmem:[%s7700 + $0xa0] sm:$0xff]
    %v7726 = vld [vmem:[%s7700 + $0xa8] sm:$0xff]
    %v7727 = vld [vmem:[%s7700 + $0xb0] sm:$0xf]
    %v7728 = vld [vmem:[%s7700 + $0xb4] sm:$0xff]
    %v7729 = vld [vmem:[%s7700 + $0xbc] sm:$0xff]
    %v7730 = vld [vmem:[%s7700 + $0xc4] sm:$0xf]
    %v7731 = vld [vmem:[%s7700 + $0xc8] sm:$0xff]
    %v7732 = vld [vmem:[%s7700 + $0xd0] sm:$0xff]
    %v7733 = vld [vmem:[%s7700 + $0xd8] sm:$0xf]
    %v7734 = vld [vmem:[%s7700 + $0xdc] sm:$0xff]
    %v7735 = vld [vmem:[%s7700 + $0xe4] sm:$0xff]
    %v7736 = vld [vmem:[%s7700 + $0xec] sm:$0xf]
    %v7737 = vld [vmem:[%s7700 + $0xf0] sm:$0xff]
    %v7738 = vld [vmem:[%s7700 + $0xf8] sm:$0xff]
    %v7739 = vld [vmem:[%s7700 + $0x100] sm:$0xf]
    %v7740 = vld [vmem:[%s7700 + $0x104] sm:$0xff]
    %v7741 = vld [vmem:[%s7700 + $0x10c] sm:$0xff]
    %v7742 = vld [vmem:[%s7700 + $0x114] sm:$0xf]
    %v7743 = vld [vmem:[%s7700 + $0x118] sm:$0xff]
    %v7744 = vld [vmem:[%s7700 + $0x120] sm:$0xff]
    %v7745 = vld [vmem:[%s7700 + $0x128] sm:$0xf]
    %v7746 = vld [vmem:[%s7700 + $0x12c] sm:$0xff]
    %v7747 = vld [vmem:[%s7700 + $0x134] sm:$0xff]
    %v7748 = vld [vmem:[%s7700 + $0x13c] sm:$0xf]
    %s7749 = scalar_lea.vmem %s12, 3
    %v7750 = vld [vmem:[%s7749] sm:$0x1]
    %v7751 = vmul.f32 %v7694, %v7694
    %v7752 = vmul.f32 %v7695, %v7695
    %v7753 = vmul.f32 %v7696, %v7696
    %v7754 = vmul.f32 %v7697, %v7697
    %v7755 = vmul.f32 %v7698, %v7698
    %v7756 = vmul.f32 %v7699, %v7699
    %7757 = vadd.xlane.f32.xlu0 %v7751
    %v7758 = vpop.xlane.xlu0 %7757
    %7759 = vadd.xlane.f32.xlu0 %v7752
    %v7760 = vpop.xlane.xlu0 %7759
    %7761 = vadd.xlane.f32.xlu0 %v7753
    %v7762 = vpop.xlane.xlu0 %7761
    %7763 = vadd.xlane.f32.xlu0 %v7754
    %v7764 = vpop.xlane.xlu0 %7763
    %7765 = vadd.xlane.f32.xlu0 %v7755
    %v7766 = vpop.xlane.xlu0 %7765
    %7767 = vadd.xlane.f32.xlu0 %v7756
    %v7768 = vpop.xlane.xlu0 %7767
    %v7769 = vmul.f32 %v7758, %v200
    %v7770 = vmul.f32 %v7760, %v200
    %v7771 = vmul.f32 %v7762, %v200
    %v7772 = vmul.f32 %v7764, %v200
    %v7773 = vmul.f32 %v7766, %v200
    %v7774 = vmul.f32 %v7768, %v200
    %v7775 = vadd.f32 %v7769, 1e-05
    %v7776 = vadd.f32 %v7770, 1e-05
    %v7777 = vadd.f32 %v7771, 1e-05
    %v7778 = vadd.f32 %v7772, 1e-05
    %v7779 = vadd.f32 %v7773, 1e-05
    %v7780 = vadd.f32 %v7774, 1e-05
    %v7781 = vrsqrt.pop %v7775
    %v7782 = vrsqrt.pop %v7776
    %v7783 = vrsqrt.pop %v7777
    %v7784 = vrsqrt.pop %v7778
    %v7785 = vrsqrt.pop %v7779
    %v7786 = vrsqrt.pop %v7780
    %v7787 = vmul.f32 %v7694, %v7781
    %v7788 = vmul.f32 %v7695, %v7782
    %v7789 = vmul.f32 %v7696, %v7783
    %v7790 = vmul.f32 %v7697, %v7784
    %v7791 = vmul.f32 %v7698, %v7785
    %v7792 = vmul.f32 %v7699, %v7786
    %v7794 = vlaneseq
    %v7795 = vshrl.u32 %v7794, 7
    %v7796 = vsub.s32 0, %v7795
    %v7797 = vrot.slane %v7750, %v7796
    %v7799 = vmul.f32 %v7787, %v7797
    %v7800 = vmul.f32 %v7788, %v7797
    %v7801 = vmul.f32 %v7789, %v7797
    %v7802 = vmul.f32 %v7790, %v7797
    %v7803 = vmul.f32 %v7791, %v7797
    %v7804 = vmul.f32 %v7792, %v7797
    %v7805 = vpack.c.bf16 %v7800, %v7799
    %v7806 = vpack.c.bf16 %v7802, %v7801
    %v7807 = vpack.c.bf16 %v7804, %v7803
    %v7856 = vunpack.c.l.b16 %v7701
    %v7857 = vunpack.c.h.b16 %v7701
    %v7858 = vunpack.c.l.b16 %v7702
    %v7859 = vunpack.c.h.b16 %v7702
    %v7860 = vunpack.c.l.b16 %v7703
    %v7861 = vunpack.c.l.b16 %v7704
    %v7862 = vunpack.c.h.b16 %v7704
    %v7863 = vunpack.c.l.b16 %v7705
    %v7864 = vunpack.c.h.b16 %v7705
    %v7865 = vunpack.c.l.b16 %v7706
    %v7866 = vunpack.c.l.b16 %v7707
    %v7867 = vunpack.c.h.b16 %v7707
    %v7868 = vunpack.c.l.b16 %v7708
    %v7869 = vunpack.c.h.b16 %v7708
    %v7870 = vunpack.c.l.b16 %v7709
    %v7871 = vunpack.c.l.b16 %v7710
    %v7872 = vunpack.c.h.b16 %v7710
    %v7873 = vunpack.c.l.b16 %v7711
    %v7874 = vunpack.c.h.b16 %v7711
    %v7875 = vunpack.c.l.b16 %v7712
    %v7876 = vunpack.c.l.b16 %v7713
    %v7877 = vunpack.c.h.b16 %v7713
    %v7878 = vunpack.c.l.b16 %v7714
    %v7879 = vunpack.c.h.b16 %v7714
    %v7880 = vunpack.c.l.b16 %v7715
    %v7881 = vunpack.c.l.b16 %v7716
    %v7882 = vunpack.c.h.b16 %v7716
    %v7883 = vunpack.c.l.b16 %v7717
    %v7884 = vunpack.c.h.b16 %v7717
    %v7885 = vunpack.c.l.b16 %v7718
    %v7886 = vunpack.c.l.b16 %v7719
    %v7887 = vunpack.c.h.b16 %v7719
    %v7888 = vunpack.c.l.b16 %v7720
    %v7889 = vunpack.c.h.b16 %v7720
    %v7890 = vunpack.c.l.b16 %v7721
    %v7891 = vunpack.c.l.b16 %v7722
    %v7892 = vunpack.c.h.b16 %v7722
    %v7893 = vunpack.c.l.b16 %v7723
    %v7894 = vunpack.c.h.b16 %v7723
    %v7895 = vunpack.c.l.b16 %v7724
    %v7896 = vunpack.c.l.b16 %v7725
    %v7897 = vunpack.c.h.b16 %v7725
    %v7898 = vunpack.c.l.b16 %v7726
    %v7899 = vunpack.c.h.b16 %v7726
    %v7900 = vunpack.c.l.b16 %v7727
    %v7901 = vunpack.c.l.b16 %v7728
    %v7902 = vunpack.c.h.b16 %v7728
    %v7903 = vunpack.c.l.b16 %v7729
    %v7904 = vunpack.c.h.b16 %v7729
    %v7905 = vunpack.c.l.b16 %v7730
    %v7906 = vunpack.c.l.b16 %v7731
    %v7907 = vunpack.c.h.b16 %v7731
    %v7908 = vunpack.c.l.b16 %v7732
    %v7909 = vunpack.c.h.b16 %v7732
    %v7910 = vunpack.c.l.b16 %v7733
    %v7911 = vunpack.c.l.b16 %v7734
    %v7912 = vunpack.c.h.b16 %v7734
    %v7913 = vunpack.c.l.b16 %v7735
    %v7914 = vunpack.c.h.b16 %v7735
    %v7915 = vunpack.c.l.b16 %v7736
    %v7916 = vunpack.c.l.b16 %v7737
    %v7917 = vunpack.c.h.b16 %v7737
    %v7918 = vunpack.c.l.b16 %v7738
    %v7919 = vunpack.c.h.b16 %v7738
    %v7920 = vunpack.c.l.b16 %v7739
    %v7921 = vunpack.c.l.b16 %v7740
    %v7922 = vunpack.c.h.b16 %v7740
    %v7923 = vunpack.c.l.b16 %v7741
    %v7924 = vunpack.c.h.b16 %v7741
    %v7925 = vunpack.c.l.b16 %v7742
    %v7926 = vunpack.c.l.b16 %v7743
    %v7927 = vunpack.c.h.b16 %v7743
    %v7928 = vunpack.c.l.b16 %v7744
    %v7929 = vunpack.c.h.b16 %v7744
    %v7930 = vunpack.c.l.b16 %v7745
    %v7931 = vunpack.c.l.b16 %v7746
    %v7932 = vunpack.c.h.b16 %v7746
    %v7933 = vunpack.c.l.b16 %v7747
    %v7934 = vunpack.c.h.b16 %v7747
    %v7935 = vunpack.c.l.b16 %v7748
    %v7936 = vpack.c.b16 %v7861, %v7856
    %v7937 = vpack.c.b16 %v7862, %v7857
    %v7938 = vpack.c.b16 %v7863, %v7858
    %v7939 = vpack.c.b16 %v7864, %v7859
    %v7940 = vpack.c.b16 %v7865, %v7860
    %v7941 = vpack.c.b16 %v7871, %v7866
    %v7942 = vpack.c.b16 %v7872, %v7867
    %v7943 = vpack.c.b16 %v7873, %v7868
    %v7944 = vpack.c.b16 %v7874, %v7869
    %v7945 = vpack.c.b16 %v7875, %v7870
    %v7946 = vpack.c.b16 %v7881, %v7876
    %v7947 = vpack.c.b16 %v7882, %v7877
    %v7948 = vpack.c.b16 %v7883, %v7878
    %v7949 = vpack.c.b16 %v7884, %v7879
    %v7950 = vpack.c.b16 %v7885, %v7880
    %v7951 = vpack.c.b16 %v7891, %v7886
    %v7952 = vpack.c.b16 %v7892, %v7887
    %v7953 = vpack.c.b16 %v7893, %v7888
    %v7954 = vpack.c.b16 %v7894, %v7889
    %v7955 = vpack.c.b16 %v7895, %v7890
    %v7956 = vpack.c.b16 %v7901, %v7896
    %v7957 = vpack.c.b16 %v7902, %v7897
    %v7958 = vpack.c.b16 %v7903, %v7898
    %v7959 = vpack.c.b16 %v7904, %v7899
    %v7960 = vpack.c.b16 %v7905, %v7900
    %v7961 = vpack.c.b16 %v7911, %v7906
    %v7962 = vpack.c.b16 %v7912, %v7907
    %v7963 = vpack.c.b16 %v7913, %v7908
    %v7964 = vpack.c.b16 %v7914, %v7909
    %v7965 = vpack.c.b16 %v7915, %v7910
    %v7966 = vpack.c.b16 %v7921, %v7916
    %v7967 = vpack.c.b16 %v7922, %v7917
    %v7968 = vpack.c.b16 %v7923, %v7918
    %v7969 = vpack.c.b16 %v7924, %v7919
    %v7970 = vpack.c.b16 %v7925, %v7920
    %v7971 = vpack.c.b16 %v7931, %v7926
    %v7972 = vpack.c.b16 %v7932, %v7927
    %v7973 = vpack.c.b16 %v7933, %v7928
    %v7974 = vpack.c.b16 %v7934, %v7929
    %v7975 = vpack.c.b16 %v7935, %v7930
    %8016 = vmatprep.subr.bf16.mxu0 %v7937
    %8017 = vmatpush1.bf16.msra.mxu0 %v7936
    %8018 = vmatprep.subr.bf16.mxu0 %v7942
    %8019 = vmatpush1.bf16.msra.mxu0 %v7941
    %8020 = vmatprep.subr.bf16.mxu0 %v7947
    %8021 = vmatpush1.bf16.msra.mxu0 %v7946
    %8022 = vmatprep.subr.bf16.mxu0 %v7952
    %8023 = vmatpush1.bf16.msra.mxu0 %v7951
    %8024 = vmatprep.subr.bf16.mxu0 %v7957
    %8025 = vmatpush1.bf16.msra.mxu0 %v7956
    %8026 = vmatprep.subr.bf16.mxu0 %v7962
    %8027 = vmatpush1.bf16.msra.mxu0 %v7961
    %8028 = vmatprep.subr.bf16.mxu0 %v7967
    %8029 = vmatpush1.bf16.msra.mxu0 %v7966
    %8030 = vmatprep.subr.bf16.mxu0 %v7972
    %8031 = vmatpush1.bf16.msra.mxu0 %v7971
    %8032 = vmatprep.subr.bf16.mxu0 0
    %8033 = vmatpush1.bf16.msra.mxu0 0
    %8034 = vmatprep.subr.bf16.mxu0 0
    %8035 = vmatpush1.bf16.msra.mxu0 0
    %8036 = vmatprep.subr.bf16.mxu0 0
    %8037 = vmatpush1.bf16.msra.mxu0 0
    %8038 = vmatprep.subr.bf16.mxu0 0
    %8039 = vmatpush1.bf16.msra.mxu0 0
    %8040 = vmatprep.subr.bf16.mxu0 0
    %8041 = vmatpush1.bf16.msra.mxu0 0
    %8042 = vmatprep.subr.bf16.mxu0 0
    %8043 = vmatpush1.bf16.msra.mxu0 0
    %8044 = vmatprep.subr.bf16.mxu0 0
    %8045 = vmatpush1.bf16.msra.mxu0 0
    %8046 = vmatprep.subr.bf16.mxu0 0
    %8047 = vmatpush1.bf16.msra.mxu0 0
    %8048 = vmatprep.mubr.bf16.mxu0 0
    %8049 = vmatmul.mubr.bf16.gmra.mrb[0].mxu0 %v7805
    %v8050 = vpop.f32.mrb[0].mxu0
    %v8051 = vadd.f32 0.0, %v8050
    %v8052 = vpop.f32.mrb[0].mxu0
    %v8053 = vadd.f32 0.0, %v8052
    %v8054 = vpop.f32.mrb[0].mxu0
    %v8055 = vadd.f32 0.0, %v8054
    %v8056 = vpop.f32.mrb[0].mxu0
    %v8057 = vadd.f32 0.0, %v8056
    %8058 = vmatprep.mubr.bf16.mxu0 0
    %8059 = vmatmul.mubr.bf16.gmra.mrb[0].mxu0 %v7806
    %v8060 = vpop.f32.mrb[0].mxu0
    %v8061 = vadd.f32 0.0, %v8060
    %v8062 = vpop.f32.mrb[0].mxu0
    %v8063 = vadd.f32 0.0, %v8062
    %v8064 = vpop.f32.mrb[0].mxu0
    %v8065 = vadd.f32 0.0, %v8064
    %v8066 = vpop.f32.mrb[0].mxu0
    %v8067 = vadd.f32 0.0, %v8066
    %8068 = vmatprep.mubr.bf16.mxu0 0
    %8069 = vmatmul.mubr.bf16.gmra.mrb[0].mxu0 %v7807
    %v8070 = vpop.f32.mrb[0].mxu0
    %v8071 = vadd.f32 0.0, %v8070
    %v8072 = vpop.f32.mrb[0].mxu0
    %v8073 = vadd.f32 0.0, %v8072
    %v8074 = vpop.f32.mrb[0].mxu0
    %v8075 = vadd.f32 0.0, %v8074
    %v8076 = vpop.f32.mrb[0].mxu0
    %v8077 = vadd.f32 0.0, %v8076
    %8078 = vdwg.mxu0
    %8079 = vmatprep.subr.bf16.mxu0 %v7939
    %8080 = vmatpush1.bf16.msra.mxu0 %v7938
    %8081 = vmatprep.subr.bf16.mxu0 %v7944
    %8082 = vmatpush1.bf16.msra.mxu0 %v7943
    %8083 = vmatprep.subr.bf16.mxu0 %v7949
    %8084 = vmatpush1.bf16.msra.mxu0 %v7948
    %8085 = vmatprep.subr.bf16.mxu0 %v7954
    %8086 = vmatpush1.bf16.msra.mxu0 %v7953
    %8087 = vmatprep.subr.bf16.mxu0 %v7959
    %8088 = vmatpush1.bf16.msra.mxu0 %v7958
    %8089 = vmatprep.subr.bf16.mxu0 %v7964
    %8090 = vmatpush1.bf16.msra.mxu0 %v7963
    %8091 = vmatprep.subr.bf16.mxu0 %v7969
    %8092 = vmatpush1.bf16.msra.mxu0 %v7968
    %8093 = vmatprep.subr.bf16.mxu0 %v7974
    %8094 = vmatpush1.bf16.msra.mxu0 %v7973
    %8095 = vmatprep.subr.bf16.mxu0 0
    %8096 = vmatpush1.bf16.msra.mxu0 0
    %8097 = vmatprep.subr.bf16.mxu0 0
    %8098 = vmatpush1.bf16.msra.mxu0 0
    %8099 = vmatprep.subr.bf16.mxu0 0
    %8100 = vmatpush1.bf16.msra.mxu0 0
    %8101 = vmatprep.subr.bf16.mxu0 0
    %8102 = vmatpush1.bf16.msra.mxu0 0
    %8103 = vmatprep.subr.bf16.mxu0 0
    %8104 = vmatpush1.bf16.msra.mxu0 0
    %8105 = vmatprep.subr.bf16.mxu0 0
    %8106 = vmatpush1.bf16.msra.mxu0 0
    %8107 = vmatprep.subr.bf16.mxu0 0
    %8108 = vmatpush1.bf16.msra.mxu0 0
    %8109 = vmatprep.subr.bf16.mxu0 0
    %8110 = vmatpush1.bf16.msra.mxu0 0
    %8111 = vmatprep.mubr.bf16.mxu0 0
    %8112 = vmatmul.mubr.bf16.gmra.mrb[0].mxu0 %v7805
    %v8113 = vpop.f32.mrb[0].mxu0
    %v8114 = vadd.f32 0.0, %v8113
    %v8115 = vpop.f32.mrb[0].mxu0
    %v8116 = vadd.f32 0.0, %v8115
    %v8117 = vpop.f32.mrb[0].mxu0
    %v8118 = vadd.f32 0.0, %v8117
    %v8119 = vpop.f32.mrb[0].mxu0
    %v8120 = vadd.f32 0.0, %v8119
    %8121 = vmatprep.mubr.bf16.mxu0 0
    %8122 = vmatmul.mubr.bf16.gmra.mrb[0].mxu0 %v7806
    %v8123 = vpop.f32.mrb[0].mxu0
    %v8124 = vadd.f32 0.0, %v8123
    %v8125 = vpop.f32.mrb[0].mxu0
    %v8126 = vadd.f32 0.0, %v8125
    %v8127 = vpop.f32.mrb[0].mxu0
    %v8128 = vadd.f32 0.0, %v8127
    %v8129 = vpop.f32.mrb[0].mxu0
    %v8130 = vadd.f32 0.0, %v8129
    %8131 = vmatprep.mubr.bf16.mxu0 0
    %8132 = vmatmul.mubr.bf16.gmra.mrb[0].mxu0 %v7807
    %v8133 = vpop.f32.mrb[0].mxu0
    %v8134 = vadd.f32 0.0, %v8133
    %v8135 = vpop.f32.mrb[0].mxu0
    %v8136 = vadd.f32 0.0, %v8135
    %v8137 = vpop.f32.mrb[0].mxu0
    %v8138 = vadd.f32 0.0, %v8137
    %v8139 = vpop.f32.mrb[0].mxu0
    %v8140 = vadd.f32 0.0, %v8139
    %8141 = vdwg.mxu0
    %8142 = vmatprep.subr.bf16.mxu0 0
    %8143 = vmatpush1.bf16.msra.mxu0 %v7940
    %8144 = vmatprep.subr.bf16.mxu0 0
    %8145 = vmatpush1.bf16.msra.mxu0 %v7945
    %8146 = vmatprep.subr.bf16.mxu0 0
    %8147 = vmatpush1.bf16.msra.mxu0 %v7950
    %8148 = vmatprep.subr.bf16.mxu0 0
    %8149 = vmatpush1.bf16.msra.mxu0 %v7955
    %8150 = vmatprep.subr.bf16.mxu0 0
    %8151 = vmatpush1.bf16.msra.mxu0 %v7960
    %8152 = vmatprep.subr.bf16.mxu0 0
    %8153 = vmatpush1.bf16.msra.mxu0 %v7965
    %8154 = vmatprep.subr.bf16.mxu0 0
    %8155 = vmatpush1.bf16.msra.mxu0 %v7970
    %8156 = vmatprep.subr.bf16.mxu0 0
    %8157 = vmatpush1.bf16.msra.mxu0 %v7975
    %8158 = vmatprep.subr.bf16.mxu0 0
    %8159 = vmatpush1.bf16.msra.mxu0 0
    %8160 = vmatprep.subr.bf16.mxu0 0
    %8161 = vmatpush1.bf16.msra.mxu0 0
    %8162 = vmatprep.subr.bf16.mxu0 0
    %8163 = vmatpush1.bf16.msra.mxu0 0
    %8164 = vmatprep.subr.bf16.mxu0 0
    %8165 = vmatpush1.bf16.msra.mxu0 0
    %8166 = vmatprep.subr.bf16.mxu0 0
    %8167 = vmatpush1.bf16.msra.mxu0 0
    %8168 = vmatprep.subr.bf16.mxu0 0
    %8169 = vmatpush1.bf16.msra.mxu0 0
    %8170 = vmatprep.subr.bf16.mxu0 0
    %8171 = vmatpush1.bf16.msra.mxu0 0
    %8172 = vmatprep.subr.bf16.mxu0 0
    %8173 = vmatpush1.bf16.msra.mxu0 0
    %8174 = vmatprep.mubr.bf16.mxu0 0
    %8175 = vmatmul.mubr.bf16.gmra.mrb[0].mxu0 %v7805
    %v8176 = vpop.f32.mrb[0].mxu0
    %v8177 = vadd.f32 0.0, %v8176
    %v8178 = vpop.f32.mrb[0].mxu0
    %v8179 = vpop.f32.mrb[0].mxu0
    %v8180 = vadd.f32 0.0, %v8179
    %v8181 = vpop.f32.mrb[0].mxu0
    %8182 = vmatprep.mubr.bf16.mxu0 0
    %8183 = vmatmul.mubr.bf16.gmra.mrb[0].mxu0 %v7806
    %v8184 = vpop.f32.mrb[0].mxu0
    %v8185 = vadd.f32 0.0, %v8184
    %v8186 = vpop.f32.mrb[0].mxu0
    %v8187 = vpop.f32.mrb[0].mxu0
    %v8188 = vadd.f32 0.0, %v8187
    %v8189 = vpop.f32.mrb[0].mxu0
    %8190 = vmatprep.mubr.bf16.mxu0 0
    %8191 = vmatmul.mubr.bf16.gmra.mrb[0].mxu0 %v7807
    %v8192 = vpop.f32.mrb[0].mxu0
    %v8193 = vadd.f32 0.0, %v8192
    %v8194 = vpop.f32.mrb[0].mxu0
    %v8195 = vpop.f32.mrb[0].mxu0
    %v8196 = vadd.f32 0.0, %v8195
    %v8197 = vpop.f32.mrb[0].mxu0
    %8198 = vdwg.mxu0
    %v8199 = vmul.f32 %v8051, %v115
    %v8200 = vmul.f32 %v8055, %v116
    %v8201 = vmul.f32 %v8061, %v117
    %v8202 = vmul.f32 %v8065, %v118
    %v8203 = vmul.f32 %v8071, %v119
    %v8204 = vmul.f32 %v8075, %v120
    %v8205 = vmul.f32 %v8116, %v121
    %v8206 = vmul.f32 %v8120, %v122
    %v8207 = vmul.f32 %v8126, %v123
    %v8208 = vmul.f32 %v8130, %v124
    %v8209 = vmul.f32 %v8136, %v125
    %v8210 = vmul.f32 %v8140, %v126
    %v8211 = vadd.f32 %v8199, %v8205
    %v8212 = vadd.f32 %v8200, %v8206
    %v8213 = vadd.f32 %v8201, %v8207
    %v8214 = vadd.f32 %v8202, %v8208
    %v8215 = vadd.f32 %v8203, %v8209
    %v8216 = vadd.f32 %v8204, %v8210
    %v8217 = vmul.f32 %v8053, %v115
    %v8218 = vmul.f32 %v8057, %v116
    %v8219 = vmul.f32 %v8063, %v117
    %v8220 = vmul.f32 %v8067, %v118
    %v8221 = vmul.f32 %v8073, %v119
    %v8222 = vmul.f32 %v8077, %v120
    %v8223 = vmul.f32 %v8177, %v121
    %v8224 = vmul.f32 %v8180, %v122
    %v8225 = vmul.f32 %v8185, %v123
    %v8226 = vmul.f32 %v8188, %v124
    %v8227 = vmul.f32 %v8193, %v125
    %v8228 = vmul.f32 %v8196, %v126
    %v8229 = vadd.f32 %v8217, %v8223
    %v8230 = vadd.f32 %v8218, %v8224
    %v8231 = vadd.f32 %v8219, %v8225
    %v8232 = vadd.f32 %v8220, %v8226
    %v8233 = vadd.f32 %v8221, %v8227
    %v8234 = vadd.f32 %v8222, %v8228
    %v8235 = vpack.c.bf16 %v8212, %v8211
    %v8236 = vpack.c.bf16 %v8214, %v8213
    %v8237 = vpack.c.bf16 %v8216, %v8215
    %v8238 = vpack.c.bf16 %v8230, %v8229
    %v8239 = vpack.c.bf16 %v8232, %v8231
    %v8240 = vpack.c.bf16 %v8234, %v8233
    %v8241 = vpack.c.bf16 %v8118, %v8114
    %v8242 = vpack.c.bf16 %v8128, %v8124
    %v8243 = vpack.c.bf16 %v8138, %v8134
    %v8245 = vsel %vm676, %v8235, 0
    %v8248 = vsel %vm676, %v8236, 0
    %v8251 = vsel %vm676, %v8237, 0
    %v8254 = vsel %vm676, %v8238, 0
    %v8257 = vsel %vm676, %v8239, 0
    %v8260 = vsel %vm676, %v8240, 0
    %8262 = vmatprep.subr.bf16.mxu0 0
    %8263 = vmatpush1.bf16.xpose.msra.mxu0 %v8254
    %8264 = vmatprep.subr.bf16.mxu0 0
    %8265 = vmatpush1.bf16.xpose.msra.mxu0 %v8257
    %8266 = vmatprep.subr.bf16.mxu0 0
    %8267 = vmatpush1.bf16.xpose.msra.mxu0 %v8260
    %8268 = vmatprep.subr.bf16.mxu0 0
    %8269 = vmatpush1.bf16.xpose.msra.mxu0 0
    %8270 = vmatprep.subr.bf16.mxu0 0
    %8271 = vmatpush1.bf16.xpose.msra.mxu0 0
    %8272 = vmatprep.subr.bf16.mxu0 0
    %8273 = vmatpush1.bf16.xpose.msra.mxu0 0
    %8274 = vmatprep.subr.bf16.mxu0 0
    %8275 = vmatpush1.bf16.xpose.msra.mxu0 0
    %8276 = vmatprep.subr.bf16.mxu0 0
    %8277 = vmatpush1.bf16.xpose.msra.mxu0 0
    %8278 = vmatprep.subr.bf16.mxu0 0
    %8279 = vmatpush1.bf16.xpose.msra.mxu0 0
    %8280 = vmatprep.subr.bf16.mxu0 0
    %8281 = vmatpush1.bf16.xpose.msra.mxu0 0
    %8282 = vmatprep.subr.bf16.mxu0 0
    %8283 = vmatpush1.bf16.xpose.msra.mxu0 0
    %8284 = vmatprep.subr.bf16.mxu0 0
    %8285 = vmatpush1.bf16.xpose.msra.mxu0 0
    %8286 = vmatprep.subr.bf16.mxu0 0
    %8287 = vmatpush1.bf16.xpose.msra.mxu0 0
    %8288 = vmatprep.subr.bf16.mxu0 0
    %8289 = vmatpush1.bf16.xpose.msra.mxu0 0
    %8290 = vmatprep.subr.bf16.mxu0 0
    %8291 = vmatpush1.bf16.xpose.msra.mxu0 0
    %8292 = vmatprep.subr.bf16.mxu0 0
    %8293 = vmatpush1.bf16.xpose.msra.mxu0 0
    %8294 = vmatprep.mubr.bf16.mxu0 0
    %8295 = vmatmul.mubr.bf16.gmra.mrb[0].mxu0 %v8245
    %v8296 = vpop.f32.mrb[0].mxu0
    %v8297 = vadd.f32 %v127, %v8296
    %v8298 = vpop.f32.mrb[0].mxu0
    %v8299 = vpop.f32.mrb[0].mxu0
    %v8300 = vadd.f32 %v128, %v8299
    %v8301 = vpop.f32.mrb[0].mxu0
    %8302 = vmatprep.mubr.bf16.mxu0 0
    %8303 = vmatmul.mubr.bf16.gmra.mrb[0].mxu0 %v8248
    %v8304 = vpop.f32.mrb[0].mxu0
    %v8305 = vadd.f32 %v129, %v8304
    %v8306 = vpop.f32.mrb[0].mxu0
    %v8307 = vpop.f32.mrb[0].mxu0
    %v8308 = vadd.f32 %v130, %v8307
    %v8309 = vpop.f32.mrb[0].mxu0
    %8310 = vmatprep.mubr.bf16.mxu0 0
    %8311 = vmatmul.mubr.bf16.gmra.mrb[0].mxu0 %v8251
    %v8312 = vpop.f32.mrb[0].mxu0
    %v8313 = vadd.f32 %v131, %v8312
    %v8314 = vpop.f32.mrb[0].mxu0
    %v8315 = vpop.f32.mrb[0].mxu0
    %v8316 = vadd.f32 %v132, %v8315
    %v8317 = vpop.f32.mrb[0].mxu0
    %8318 = vdwg.mxu0
    %v8319 = vsel %vm752, %v8297, -inf
    %8320 = vmax.xlane.f32.xlu0 %v8319
    %v8321 = vpop.xlane.xlu0 %8320
    %v8322 = vsel %vm752, %v8300, -inf
    %8323 = vmax.xlane.f32.xlu0 %v8322
    %v8324 = vpop.xlane.xlu0 %8323
    %v8325 = vsel %vm752, %v8305, -inf
    %8326 = vmax.xlane.f32.xlu0 %v8325
    %v8327 = vpop.xlane.xlu0 %8326
    %v8328 = vsel %vm752, %v8308, -inf
    %8329 = vmax.xlane.f32.xlu0 %v8328
    %v8330 = vpop.xlane.xlu0 %8329
    %v8331 = vsel %vm752, %v8313, -inf
    %8332 = vmax.xlane.f32.xlu0 %v8331
    %v8333 = vpop.xlane.xlu0 %8332
    %v8334 = vsel %vm752, %v8316, -inf
    %8335 = vmax.xlane.f32.xlu0 %v8334
    %v8336 = vpop.xlane.xlu0 %8335
    %v8337 = vsub.f32 %v8297, %v8321
    %v8338 = vsub.f32 %v8300, %v8324
    %v8339 = vsub.f32 %v8305, %v8327
    %v8340 = vsub.f32 %v8308, %v8330
    %v8341 = vsub.f32 %v8313, %v8333
    %v8342 = vsub.f32 %v8316, %v8336
    %v8343 = vmul.f32 %v8337, 1.442695
    %v8344 = vpow.pop %v8343
    %v8345 = vmul.f32 %v8338, 1.442695
    %v8346 = vpow.pop %v8345
    %v8347 = vmul.f32 %v8339, 1.442695
    %v8348 = vpow.pop %v8347
    %v8349 = vmul.f32 %v8340, 1.442695
    %v8350 = vpow.pop %v8349
    %v8351 = vmul.f32 %v8341, 1.442695
    %v8352 = vpow.pop %v8351
    %v8353 = vmul.f32 %v8342, 1.442695
    %v8354 = vpow.pop %v8353
    %v8355 = vsel %vm752, %v8344, 0.0
    %8356 = vadd.xlane.f32.xlu0 %v8355
    %v8357 = vpop.xlane.xlu0 %8356
    %v8358 = vsel %vm752, %v8346, 0.0
    %8359 = vadd.xlane.f32.xlu0 %v8358
    %v8360 = vpop.xlane.xlu0 %8359
    %v8361 = vsel %vm752, %v8348, 0.0
    %8362 = vadd.xlane.f32.xlu0 %v8361
    %v8363 = vpop.xlane.xlu0 %8362
    %v8364 = vsel %vm752, %v8350, 0.0
    %8365 = vadd.xlane.f32.xlu0 %v8364
    %v8366 = vpop.xlane.xlu0 %8365
    %v8367 = vsel %vm752, %v8352, 0.0
    %8368 = vadd.xlane.f32.xlu0 %v8367
    %v8369 = vpop.xlane.xlu0 %8368
    %v8370 = vsel %vm752, %v8354, 0.0
    %8371 = vadd.xlane.f32.xlu0 %v8370
    %v8372 = vpop.xlane.xlu0 %8371
    %v8373 = vrcp.pop %v8357
    %v8374 = vrcp.pop %v8360
    %v8375 = vrcp.pop %v8363
    %v8376 = vrcp.pop %v8366
    %v8377 = vrcp.pop %v8369
    %v8378 = vrcp.pop %v8372
    %v8379 = vmul.f32 %v8344, %v8373
    %v8380 = vmul.f32 %v8346, %v8374
    %v8381 = vmul.f32 %v8348, %v8375
    %v8382 = vmul.f32 %v8350, %v8376
    %v8383 = vmul.f32 %v8352, %v8377
    %v8384 = vmul.f32 %v8354, %v8378
    %v8385 = vpack.c.bf16 %v8380, %v8379
    %v8386 = vpack.c.bf16 %v8382, %v8381
    %v8387 = vpack.c.bf16 %v8384, %v8383
    %v8389 = vsel %vm752, %v8385, 0
    %v8392 = vsel %vm752, %v8386, 0
    %v8395 = vsel %vm752, %v8387, 0
    %8397 = vmatprep.subr.bf16.mxu0 0
    %8398 = vmatpush1.bf16.msra.mxu0 %v8241
    %8399 = vmatprep.subr.bf16.mxu0 0
    %8400 = vmatpush1.bf16.msra.mxu0 %v8242
    %8401 = vmatprep.subr.bf16.mxu0 0
    %8402 = vmatpush1.bf16.msra.mxu0 %v8243
    %8403 = vmatprep.subr.bf16.mxu0 0
    %8404 = vmatpush1.bf16.msra.mxu0 0
    %8405 = vmatprep.subr.bf16.mxu0 0
    %8406 = vmatpush1.bf16.msra.mxu0 0
    %8407 = vmatprep.subr.bf16.mxu0 0
    %8408 = vmatpush1.bf16.msra.mxu0 0
    %8409 = vmatprep.subr.bf16.mxu0 0
    %8410 = vmatpush1.bf16.msra.mxu0 0
    %8411 = vmatprep.subr.bf16.mxu0 0
    %8412 = vmatpush1.bf16.msra.mxu0 0
    %8413 = vmatprep.subr.bf16.mxu0 0
    %8414 = vmatpush1.bf16.msra.mxu0 0
    %8415 = vmatprep.subr.bf16.mxu0 0
    %8416 = vmatpush1.bf16.msra.mxu0 0
    %8417 = vmatprep.subr.bf16.mxu0 0
    %8418 = vmatpush1.bf16.msra.mxu0 0
    %8419 = vmatprep.subr.bf16.mxu0 0
    %8420 = vmatpush1.bf16.msra.mxu0 0
    %8421 = vmatprep.subr.bf16.mxu0 0
    %8422 = vmatpush1.bf16.msra.mxu0 0
    %8423 = vmatprep.subr.bf16.mxu0 0
    %8424 = vmatpush1.bf16.msra.mxu0 0
    %8425 = vmatprep.subr.bf16.mxu0 0
    %8426 = vmatpush1.bf16.msra.mxu0 0
    %8427 = vmatprep.subr.bf16.mxu0 0
    %8428 = vmatpush1.bf16.msra.mxu0 0
    %8429 = vmatprep.mubr.bf16.mxu0 0
    %8430 = vmatmul.mubr.bf16.gmra.mrb[0].mxu0 %v8389
    %v8431 = vpop.f32.mrb[0].mxu0
    %v8432 = vadd.f32 0.0, %v8431
    %v8433 = vpop.f32.mrb[0].mxu0
    %v8434 = vpop.f32.mrb[0].mxu0
    %v8435 = vadd.f32 0.0, %v8434
    %v8436 = vpop.f32.mrb[0].mxu0
    %8437 = vmatprep.mubr.bf16.mxu0 0
    %8438 = vmatmul.mubr.bf16.gmra.mrb[0].mxu0 %v8392
    %v8439 = vpop.f32.mrb[0].mxu0
    %v8440 = vadd.f32 0.0, %v8439
    %v8441 = vpop.f32.mrb[0].mxu0
    %v8442 = vpop.f32.mrb[0].mxu0
    %v8443 = vadd.f32 0.0, %v8442
    %v8444 = vpop.f32.mrb[0].mxu0
    %8445 = vmatprep.mubr.bf16.mxu0 0
    %8446 = vmatmul.mubr.bf16.gmra.mrb[0].mxu0 %v8395
    %v8447 = vpop.f32.mrb[0].mxu0
    %v8448 = vadd.f32 0.0, %v8447
    %v8449 = vpop.f32.mrb[0].mxu0
    %v8450 = vpop.f32.mrb[0].mxu0
    %v8451 = vadd.f32 0.0, %v8450
    %v8452 = vpop.f32.mrb[0].mxu0
    %8453 = vdwg.mxu0
    %s8454 = scalar_lea.vmem [#allocation2], 192
    %v8455 = vld [vmem:[%s8454] sm:$0xf]
    %v8456 = vld [vmem:[%s8454 + $0x4] sm:$0xf]
    %v8457 = vld [vmem:[%s8454 + $0x8] sm:$0xf]
    %v8458 = vld [vmem:[%s8454 + $0xc] sm:$0xf]
    %v8459 = vld [vmem:[%s8454 + $0x10] sm:$0xf]
    %v8460 = vld [vmem:[%s8454 + $0x14] sm:$0xf]
    %v8461 = vld [vmem:[%s8454 + $0x18] sm:$0xf]
    %v8462 = vld [vmem:[%s8454 + $0x1c] sm:$0xf]
    %v8463 = vld [vmem:[%s8454 + $0x20] sm:$0xf]
    %v8464 = vld [vmem:[%s8454 + $0x24] sm:$0xf]
    %v8465 = vld [vmem:[%s8454 + $0x28] sm:$0xf]
    %v8466 = vld [vmem:[%s8454 + $0x2c] sm:$0xf]
    %v8467 = vld [vmem:[%s8454 + $0x30] sm:$0xf]
    %v8468 = vld [vmem:[%s8454 + $0x34] sm:$0xf]
    %v8469 = vld [vmem:[%s8454 + $0x38] sm:$0xf]
    %v8470 = vld [vmem:[%s8454 + $0x3c] sm:$0xf]
    %v8471 = vpack.c.bf16 %v8435, %v8432
    %v8472 = vpack.c.bf16 %v8443, %v8440
    %v8473 = vpack.c.bf16 %v8451, %v8448
    %8477 = vrot.lane.b32.xlu0 %v8235, 96
    %v8478 = vpop.permute.xlu0 %8477
    %8479 = vrot.lane.b32.xlu0 %v8236, 96
    %v8480 = vpop.permute.xlu0 %8479
    %8481 = vrot.lane.b32.xlu0 %v8237, 96
    %v8482 = vpop.permute.xlu0 %8481
    %8486 = vrot.lane.b32.xlu0 %v8238, 96
    %v8487 = vpop.permute.xlu0 %8486
    %8488 = vrot.lane.b32.xlu0 %v8239, 96
    %v8489 = vpop.permute.xlu0 %8488
    %8490 = vrot.lane.b32.xlu0 %v8240, 96
    %v8491 = vpop.permute.xlu0 %8490
    %v8493 = vsel %vm676, %v8478, 0
    %v8496 = vsel %vm676, %v8480, 0
    %v8499 = vsel %vm676, %v8482, 0
    %v8502 = vsel %vm676, %v8487, 0
    %v8505 = vsel %vm676, %v8489, 0
    %v8508 = vsel %vm676, %v8491, 0
    %8510 = vmatprep.subr.bf16.mxu0 0
    %8511 = vmatpush1.bf16.xpose.msra.mxu0 %v8502
    %8512 = vmatprep.subr.bf16.mxu0 0
    %8513 = vmatpush1.bf16.xpose.msra.mxu0 %v8505
    %8514 = vmatprep.subr.bf16.mxu0 0
    %8515 = vmatpush1.bf16.xpose.msra.mxu0 %v8508
    %8516 = vmatprep.subr.bf16.mxu0 0
    %8517 = vmatpush1.bf16.xpose.msra.mxu0 0
    %8518 = vmatprep.subr.bf16.mxu0 0
    %8519 = vmatpush1.bf16.xpose.msra.mxu0 0
    %8520 = vmatprep.subr.bf16.mxu0 0
    %8521 = vmatpush1.bf16.xpose.msra.mxu0 0
    %8522 = vmatprep.subr.bf16.mxu0 0
    %8523 = vmatpush1.bf16.xpose.msra.mxu0 0
    %8524 = vmatprep.subr.bf16.mxu0 0
    %8525 = vmatpush1.bf16.xpose.msra.mxu0 0
    %8526 = vmatprep.subr.bf16.mxu0 0
    %8527 = vmatpush1.bf16.xpose.msra.mxu0 0
    %8528 = vmatprep.subr.bf16.mxu0 0
    %8529 = vmatpush1.bf16.xpose.msra.mxu0 0
    %8530 = vmatprep.subr.bf16.mxu0 0
    %8531 = vmatpush1.bf16.xpose.msra.mxu0 0
    %8532 = vmatprep.subr.bf16.mxu0 0
    %8533 = vmatpush1.bf16.xpose.msra.mxu0 0
    %8534 = vmatprep.subr.bf16.mxu0 0
    %8535 = vmatpush1.bf16.xpose.msra.mxu0 0
    %8536 = vmatprep.subr.bf16.mxu0 0
    %8537 = vmatpush1.bf16.xpose.msra.mxu0 0
    %8538 = vmatprep.subr.bf16.mxu0 0
    %8539 = vmatpush1.bf16.xpose.msra.mxu0 0
    %8540 = vmatprep.subr.bf16.mxu0 0
    %8541 = vmatpush1.bf16.xpose.msra.mxu0 0
    %8542 = vmatprep.mubr.bf16.mxu0 0
    %8543 = vmatmul.mubr.bf16.gmra.mrb[0].mxu0 %v8493
    %v8544 = vpop.f32.mrb[0].mxu0
    %v8545 = vadd.f32 %v127, %v8544
    %v8546 = vpop.f32.mrb[0].mxu0
    %v8547 = vpop.f32.mrb[0].mxu0
    %v8548 = vadd.f32 %v128, %v8547
    %v8549 = vpop.f32.mrb[0].mxu0
    %8550 = vmatprep.mubr.bf16.mxu0 0
    %8551 = vmatmul.mubr.bf16.gmra.mrb[0].mxu0 %v8496
    %v8552 = vpop.f32.mrb[0].mxu0
    %v8553 = vadd.f32 %v129, %v8552
    %v8554 = vpop.f32.mrb[0].mxu0
    %v8555 = vpop.f32.mrb[0].mxu0
    %v8556 = vadd.f32 %v130, %v8555
    %v8557 = vpop.f32.mrb[0].mxu0
    %8558 = vmatprep.mubr.bf16.mxu0 0
    %8559 = vmatmul.mubr.bf16.gmra.mrb[0].mxu0 %v8499
    %v8560 = vpop.f32.mrb[0].mxu0
    %v8561 = vadd.f32 %v131, %v8560
    %v8562 = vpop.f32.mrb[0].mxu0
    %v8563 = vpop.f32.mrb[0].mxu0
    %v8564 = vadd.f32 %v132, %v8563
    %v8565 = vpop.f32.mrb[0].mxu0
    %8566 = vdwg.mxu0
    %v8567 = vsel %vm752, %v8545, -inf
    %8568 = vmax.xlane.f32.xlu0 %v8567
    %v8569 = vpop.xlane.xlu0 %8568
    %v8570 = vsel %vm752, %v8548, -inf
    %8571 = vmax.xlane.f32.xlu0 %v8570
    %v8572 = vpop.xlane.xlu0 %8571
    %v8573 = vsel %vm752, %v8553, -inf
    %8574 = vmax.xlane.f32.xlu0 %v8573
    %v8575 = vpop.xlane.xlu0 %8574
    %v8576 = vsel %vm752, %v8556, -inf
    %8577 = vmax.xlane.f32.xlu0 %v8576
    %v8578 = vpop.xlane.xlu0 %8577
    %v8579 = vsel %vm752, %v8561, -inf
    %8580 = vmax.xlane.f32.xlu0 %v8579
    %v8581 = vpop.xlane.xlu0 %8580
    %v8582 = vsel %vm752, %v8564, -inf
    %8583 = vmax.xlane.f32.xlu0 %v8582
    %v8584 = vpop.xlane.xlu0 %8583
    %v8585 = vsub.f32 %v8545, %v8569
    %v8586 = vsub.f32 %v8548, %v8572
    %v8587 = vsub.f32 %v8553, %v8575
    %v8588 = vsub.f32 %v8556, %v8578
    %v8589 = vsub.f32 %v8561, %v8581
    %v8590 = vsub.f32 %v8564, %v8584
    %v8591 = vmul.f32 %v8585, 1.442695
    %v8592 = vpow.pop %v8591
    %v8593 = vmul.f32 %v8586, 1.442695
    %v8594 = vpow.pop %v8593
    %v8595 = vmul.f32 %v8587, 1.442695
    %v8596 = vpow.pop %v8595
    %v8597 = vmul.f32 %v8588, 1.442695
    %v8598 = vpow.pop %v8597
    %v8599 = vmul.f32 %v8589, 1.442695
    %v8600 = vpow.pop %v8599
    %v8601 = vmul.f32 %v8590, 1.442695
    %v8602 = vpow.pop %v8601
    %v8603 = vsel %vm752, %v8592, 0.0
    %8604 = vadd.xlane.f32.xlu0 %v8603
    %v8605 = vpop.xlane.xlu0 %8604
    %v8606 = vsel %vm752, %v8594, 0.0
    %8607 = vadd.xlane.f32.xlu0 %v8606
    %v8608 = vpop.xlane.xlu0 %8607
    %v8609 = vsel %vm752, %v8596, 0.0
    %8610 = vadd.xlane.f32.xlu0 %v8609
    %v8611 = vpop.xlane.xlu0 %8610
    %v8612 = vsel %vm752, %v8598, 0.0
    %8613 = vadd.xlane.f32.xlu0 %v8612
    %v8614 = vpop.xlane.xlu0 %8613
    %v8615 = vsel %vm752, %v8600, 0.0
    %8616 = vadd.xlane.f32.xlu0 %v8615
    %v8617 = vpop.xlane.xlu0 %8616
    %v8618 = vsel %vm752, %v8602, 0.0
    %8619 = vadd.xlane.f32.xlu0 %v8618
    %v8620 = vpop.xlane.xlu0 %8619
    %v8621 = vrcp.pop %v8605
    %v8622 = vrcp.pop %v8608
    %v8623 = vrcp.pop %v8611
    %v8624 = vrcp.pop %v8614
    %v8625 = vrcp.pop %v8617
    %v8626 = vrcp.pop %v8620
    %v8627 = vmul.f32 %v8592, %v8621
    %v8628 = vmul.f32 %v8594, %v8622
    %v8629 = vmul.f32 %v8596, %v8623
    %v8630 = vmul.f32 %v8598, %v8624
    %v8631 = vmul.f32 %v8600, %v8625
    %v8632 = vmul.f32 %v8602, %v8626
    %v8633 = vpack.c.bf16 %v8628, %v8627
    %v8634 = vpack.c.bf16 %v8630, %v8629
    %v8635 = vpack.c.bf16 %v8632, %v8631
    %8639 = vrot.lane.b32.xlu0 %v8241, 96
    %v8640 = vpop.permute.xlu0 %8639
    %8641 = vrot.lane.b32.xlu0 %v8242, 96
    %v8642 = vpop.permute.xlu0 %8641
    %8643 = vrot.lane.b32.xlu0 %v8243, 96
    %v8644 = vpop.permute.xlu0 %8643
    %v8649 = vsel %vm752, %v8633, 0
    %v8652 = vsel %vm752, %v8634, 0
    %v8655 = vsel %vm752, %v8635, 0
    %8657 = vmatprep.subr.bf16.mxu0 0
    %8658 = vmatpush1.bf16.msra.mxu0 %v8640
    %8659 = vmatprep.subr.bf16.mxu0 0
    %8660 = vmatpush1.bf16.msra.mxu0 %v8642
    %8661 = vmatprep.subr.bf16.mxu0 0
    %8662 = vmatpush1.bf16.msra.mxu0 %v8644
    %8663 = vmatprep.subr.bf16.mxu0 0
    %8664 = vmatpush1.bf16.msra.mxu0 0
    %8665 = vmatprep.subr.bf16.mxu0 0
    %8666 = vmatpush1.bf16.msra.mxu0 0
    %8667 = vmatprep.subr.bf16.mxu0 0
    %8668 = vmatpush1.bf16.msra.mxu0 0
    %8669 = vmatprep.subr.bf16.mxu0 0
    %8670 = vmatpush1.bf16.msra.mxu0 0
    %8671 = vmatprep.subr.bf16.mxu0 0
    %8672 = vmatpush1.bf16.msra.mxu0 0
    %8673 = vmatprep.subr.bf16.mxu0 0
    %8674 = vmatpush1.bf16.msra.mxu0 0
    %8675 = vmatprep.subr.bf16.mxu0 0
    %8676 = vmatpush1.bf16.msra.mxu0 0
    %8677 = vmatprep.subr.bf16.mxu0 0
    %8678 = vmatpush1.bf16.msra.mxu0 0
    %8679 = vmatprep.subr.bf16.mxu0 0
    %8680 = vmatpush1.bf16.msra.mxu0 0
    %8681 = vmatprep.subr.bf16.mxu0 0
    %8682 = vmatpush1.bf16.msra.mxu0 0
    %8683 = vmatprep.subr.bf16.mxu0 0
    %8684 = vmatpush1.bf16.msra.mxu0 0
    %8685 = vmatprep.subr.bf16.mxu0 0
    %8686 = vmatpush1.bf16.msra.mxu0 0
    %8687 = vmatprep.subr.bf16.mxu0 0
    %8688 = vmatpush1.bf16.msra.mxu0 0
    %8689 = vmatprep.mubr.bf16.mxu0 0
    %8690 = vmatmul.mubr.bf16.gmra.mrb[0].mxu0 %v8649
    %v8691 = vpop.f32.mrb[0].mxu0
    %v8692 = vadd.f32 0.0, %v8691
    %v8693 = vpop.f32.mrb[0].mxu0
    %v8694 = vpop.f32.mrb[0].mxu0
    %v8695 = vadd.f32 0.0, %v8694
    %v8696 = vpop.f32.mrb[0].mxu0
    %8697 = vmatprep.mubr.bf16.mxu0 0
    %8698 = vmatmul.mubr.bf16.gmra.mrb[0].mxu0 %v8652
    %v8699 = vpop.f32.mrb[0].mxu0
    %v8700 = vadd.f32 0.0, %v8699
    %v8701 = vpop.f32.mrb[0].mxu0
    %v8702 = vpop.f32.mrb[0].mxu0
    %v8703 = vadd.f32 0.0, %v8702
    %v8704 = vpop.f32.mrb[0].mxu0
    %8705 = vmatprep.mubr.bf16.mxu0 0
    %8706 = vmatmul.mubr.bf16.gmra.mrb[0].mxu0 %v8655
    %v8707 = vpop.f32.mrb[0].mxu0
    %v8708 = vadd.f32 0.0, %v8707
    %v8709 = vpop.f32.mrb[0].mxu0
    %v8710 = vpop.f32.mrb[0].mxu0
    %v8711 = vadd.f32 0.0, %v8710
    %v8712 = vpop.f32.mrb[0].mxu0
    %8713 = vdwg.mxu0
    %v8714 = vpack.c.bf16 %v8695, %v8692
    %v8715 = vpack.c.bf16 %v8703, %v8700
    %v8716 = vpack.c.bf16 %v8711, %v8708
    %v8721 = vunpack.c.l.b16 %v8459
    %v8722 = vunpack.c.l.b16 %v8460
    %v8723 = vunpack.c.l.b16 %v8461
    %v8724 = vunpack.c.l.b16 %v8462
    %v8725 = vpack.c.b16 %v8722, %v8721
    %v8726 = vpack.c.b16 %v8724, %v8723
    %v8730 = vsel %vm676, %v8714, 0
    %v8733 = vsel %vm676, %v8715, 0
    %v8736 = vsel %vm676, %v8716, 0
    %8738 = vmatprep.subr.bf16.mxu0 0
    %8739 = vmatpush1.bf16.msra.mxu0 %v8725
    %8740 = vmatprep.subr.bf16.mxu0 0
    %8741 = vmatpush1.bf16.msra.mxu0 %v8726
    %8742 = vmatprep.subr.bf16.mxu0 0
    %8743 = vmatpush1.bf16.msra.mxu0 0
    %8744 = vmatprep.subr.bf16.mxu0 0
    %8745 = vmatpush1.bf16.msra.mxu0 0
    %8746 = vmatprep.subr.bf16.mxu0 0
    %8747 = vmatpush1.bf16.msra.mxu0 0
    %8748 = vmatprep.subr.bf16.mxu0 0
    %8749 = vmatpush1.bf16.msra.mxu0 0
    %8750 = vmatprep.subr.bf16.mxu0 0
    %8751 = vmatpush1.bf16.msra.mxu0 0
    %8752 = vmatprep.subr.bf16.mxu0 0
    %8753 = vmatpush1.bf16.msra.mxu0 0
    %8754 = vmatprep.subr.bf16.mxu0 0
    %8755 = vmatpush1.bf16.msra.mxu0 0
    %8756 = vmatprep.subr.bf16.mxu0 0
    %8757 = vmatpush1.bf16.msra.mxu0 0
    %8758 = vmatprep.subr.bf16.mxu0 0
    %8759 = vmatpush1.bf16.msra.mxu0 0
    %8760 = vmatprep.subr.bf16.mxu0 0
    %8761 = vmatpush1.bf16.msra.mxu0 0
    %8762 = vmatprep.subr.bf16.mxu0 0
    %8763 = vmatpush1.bf16.msra.mxu0 0
    %8764 = vmatprep.subr.bf16.mxu0 0
    %8765 = vmatpush1.bf16.msra.mxu0 0
    %8766 = vmatprep.subr.bf16.mxu0 0
    %8767 = vmatpush1.bf16.msra.mxu0 0
    %8768 = vmatprep.subr.bf16.mxu0 0
    %8769 = vmatpush1.bf16.msra.mxu0 0
    %8770 = vmatprep.mubr.bf16.mxu0 0
    %8771 = vmatmul.mubr.bf16.gmra.mrb[0].mxu0 %v8730
    %v8772 = vpop.f32.mrb[0].mxu0
    %v8773 = vadd.f32 0.0, %v8772
    %v8774 = vpop.f32.mrb[0].mxu0
    %v8775 = vpop.f32.mrb[0].mxu0
    %v8776 = vadd.f32 0.0, %v8775
    %v8777 = vpop.f32.mrb[0].mxu0
    %8778 = vmatprep.mubr.bf16.mxu0 0
    %8779 = vmatmul.mubr.bf16.gmra.mrb[0].mxu0 %v8733
    %v8780 = vpop.f32.mrb[0].mxu0
    %v8781 = vadd.f32 0.0, %v8780
    %v8782 = vpop.f32.mrb[0].mxu0
    %v8783 = vpop.f32.mrb[0].mxu0
    %v8784 = vadd.f32 0.0, %v8783
    %v8785 = vpop.f32.mrb[0].mxu0
    %8786 = vmatprep.mubr.bf16.mxu0 0
    %8787 = vmatmul.mubr.bf16.gmra.mrb[0].mxu0 %v8736
    %v8788 = vpop.f32.mrb[0].mxu0
    %v8789 = vadd.f32 0.0, %v8788
    %v8790 = vpop.f32.mrb[0].mxu0
    %v8791 = vpop.f32.mrb[0].mxu0
    %v8792 = vadd.f32 0.0, %v8791
    %v8793 = vpop.f32.mrb[0].mxu0
    %8794 = vdwg.mxu0
    %v8799 = vunpack.c.l.b16 %v8455
    %v8800 = vunpack.c.l.b16 %v8456
    %v8801 = vunpack.c.l.b16 %v8457
    %v8802 = vunpack.c.l.b16 %v8458
    %v8803 = vpack.c.b16 %v8800, %v8799
    %v8804 = vpack.c.b16 %v8802, %v8801
    %v8808 = vsel %vm676, %v8471, 0
    %v8811 = vsel %vm676, %v8472, 0
    %v8814 = vsel %vm676, %v8473, 0
    %8816 = vmatprep.subr.bf16.mxu0 0
    %8817 = vmatpush1.bf16.msra.mxu0 %v8803
    %8818 = vmatprep.subr.bf16.mxu0 0
    %8819 = vmatpush1.bf16.msra.mxu0 %v8804
    %8820 = vmatprep.subr.bf16.mxu0 0
    %8821 = vmatpush1.bf16.msra.mxu0 0
    %8822 = vmatprep.subr.bf16.mxu0 0
    %8823 = vmatpush1.bf16.msra.mxu0 0
    %8824 = vmatprep.subr.bf16.mxu0 0
    %8825 = vmatpush1.bf16.msra.mxu0 0
    %8826 = vmatprep.subr.bf16.mxu0 0
    %8827 = vmatpush1.bf16.msra.mxu0 0
    %8828 = vmatprep.subr.bf16.mxu0 0
    %8829 = vmatpush1.bf16.msra.mxu0 0
    %8830 = vmatprep.subr.bf16.mxu0 0
    %8831 = vmatpush1.bf16.msra.mxu0 0
    %8832 = vmatprep.subr.bf16.mxu0 0
    %8833 = vmatpush1.bf16.msra.mxu0 0
    %8834 = vmatprep.subr.bf16.mxu0 0
    %8835 = vmatpush1.bf16.msra.mxu0 0
    %8836 = vmatprep.subr.bf16.mxu0 0
    %8837 = vmatpush1.bf16.msra.mxu0 0
    %8838 = vmatprep.subr.bf16.mxu0 0
    %8839 = vmatpush1.bf16.msra.mxu0 0
    %8840 = vmatprep.subr.bf16.mxu0 0
    %8841 = vmatpush1.bf16.msra.mxu0 0
    %8842 = vmatprep.subr.bf16.mxu0 0
    %8843 = vmatpush1.bf16.msra.mxu0 0
    %8844 = vmatprep.subr.bf16.mxu0 0
    %8845 = vmatpush1.bf16.msra.mxu0 0
    %8846 = vmatprep.subr.bf16.mxu0 0
    %8847 = vmatpush1.bf16.msra.mxu0 0
    %8848 = vmatprep.mubr.bf16.mxu0 0
    %8849 = vmatmul.mubr.bf16.gmra.mrb[0].mxu0 %v8808
    %v8850 = vpop.f32.mrb[0].mxu0
    %v8851 = vadd.f32 %v8773, %v8850
    %v8852 = vpop.f32.mrb[0].mxu0
    %v8853 = vpop.f32.mrb[0].mxu0
    %v8854 = vadd.f32 %v8776, %v8853
    %v8855 = vpop.f32.mrb[0].mxu0
    %8856 = vmatprep.mubr.bf16.mxu0 0
    %8857 = vmatmul.mubr.bf16.gmra.mrb[0].mxu0 %v8811
    %v8858 = vpop.f32.mrb[0].mxu0
    %v8859 = vadd.f32 %v8781, %v8858
    %v8860 = vpop.f32.mrb[0].mxu0
    %v8861 = vpop.f32.mrb[0].mxu0
    %v8862 = vadd.f32 %v8784, %v8861
    %v8863 = vpop.f32.mrb[0].mxu0
    %8864 = vmatprep.mubr.bf16.mxu0 0
    %8865 = vmatmul.mubr.bf16.gmra.mrb[0].mxu0 %v8814
    %v8866 = vpop.f32.mrb[0].mxu0
    %v8867 = vadd.f32 %v8789, %v8866
    %v8868 = vpop.f32.mrb[0].mxu0
    %v8869 = vpop.f32.mrb[0].mxu0
    %v8870 = vadd.f32 %v8792, %v8869
    %v8871 = vpop.f32.mrb[0].mxu0
    %8872 = vdwg.mxu0
    %8873 = vrot.lane.b32.xlu0 %v8235, 64
    %v8874 = vpop.permute.xlu0 %8873
    %8875 = vrot.lane.b32.xlu0 %v8236, 64
    %v8876 = vpop.permute.xlu0 %8875
    %8877 = vrot.lane.b32.xlu0 %v8237, 64
    %v8878 = vpop.permute.xlu0 %8877
    %8879 = vrot.lane.b32.xlu0 %v8238, 64
    %v8880 = vpop.permute.xlu0 %8879
    %8881 = vrot.lane.b32.xlu0 %v8239, 64
    %v8882 = vpop.permute.xlu0 %8881
    %8883 = vrot.lane.b32.xlu0 %v8240, 64
    %v8884 = vpop.permute.xlu0 %8883
    %v8886 = vsel %vm676, %v8874, 0
    %v8889 = vsel %vm676, %v8876, 0
    %v8892 = vsel %vm676, %v8878, 0
    %v8895 = vsel %vm676, %v8880, 0
    %v8898 = vsel %vm676, %v8882, 0
    %v8901 = vsel %vm676, %v8884, 0
    %8903 = vmatprep.subr.bf16.mxu0 0
    %8904 = vmatpush1.bf16.xpose.msra.mxu0 %v8895
    %8905 = vmatprep.subr.bf16.mxu0 0
    %8906 = vmatpush1.bf16.xpose.msra.mxu0 %v8898
    %8907 = vmatprep.subr.bf16.mxu0 0
    %8908 = vmatpush1.bf16.xpose.msra.mxu0 %v8901
    %8909 = vmatprep.subr.bf16.mxu0 0
    %8910 = vmatpush1.bf16.xpose.msra.mxu0 0
    %8911 = vmatprep.subr.bf16.mxu0 0
    %8912 = vmatpush1.bf16.xpose.msra.mxu0 0
    %8913 = vmatprep.subr.bf16.mxu0 0
    %8914 = vmatpush1.bf16.xpose.msra.mxu0 0
    %8915 = vmatprep.subr.bf16.mxu0 0
    %8916 = vmatpush1.bf16.xpose.msra.mxu0 0
    %8917 = vmatprep.subr.bf16.mxu0 0
    %8918 = vmatpush1.bf16.xpose.msra.mxu0 0
    %8919 = vmatprep.subr.bf16.mxu0 0
    %8920 = vmatpush1.bf16.xpose.msra.mxu0 0
    %8921 = vmatprep.subr.bf16.mxu0 0
    %8922 = vmatpush1.bf16.xpose.msra.mxu0 0
    %8923 = vmatprep.subr.bf16.mxu0 0
    %8924 = vmatpush1.bf16.xpose.msra.mxu0 0
    %8925 = vmatprep.subr.bf16.mxu0 0
    %8926 = vmatpush1.bf16.xpose.msra.mxu0 0
    %8927 = vmatprep.subr.bf16.mxu0 0
    %8928 = vmatpush1.bf16.xpose.msra.mxu0 0
    %8929 = vmatprep.subr.bf16.mxu0 0
    %8930 = vmatpush1.bf16.xpose.msra.mxu0 0
    %8931 = vmatprep.subr.bf16.mxu0 0
    %8932 = vmatpush1.bf16.xpose.msra.mxu0 0
    %8933 = vmatprep.subr.bf16.mxu0 0
    %8934 = vmatpush1.bf16.xpose.msra.mxu0 0
    %8935 = vmatprep.mubr.bf16.mxu0 0
    %8936 = vmatmul.mubr.bf16.gmra.mrb[0].mxu0 %v8886
    %v8937 = vpop.f32.mrb[0].mxu0
    %v8938 = vadd.f32 %v127, %v8937
    %v8939 = vpop.f32.mrb[0].mxu0
    %v8940 = vpop.f32.mrb[0].mxu0
    %v8941 = vadd.f32 %v128, %v8940
    %v8942 = vpop.f32.mrb[0].mxu0
    %8943 = vmatprep.mubr.bf16.mxu0 0
    %8944 = vmatmul.mubr.bf16.gmra.mrb[0].mxu0 %v8889
    %v8945 = vpop.f32.mrb[0].mxu0
    %v8946 = vadd.f32 %v129, %v8945
    %v8947 = vpop.f32.mrb[0].mxu0
    %v8948 = vpop.f32.mrb[0].mxu0
    %v8949 = vadd.f32 %v130, %v8948
    %v8950 = vpop.f32.mrb[0].mxu0
    %8951 = vmatprep.mubr.bf16.mxu0 0
    %8952 = vmatmul.mubr.bf16.gmra.mrb[0].mxu0 %v8892
    %v8953 = vpop.f32.mrb[0].mxu0
    %v8954 = vadd.f32 %v131, %v8953
    %v8955 = vpop.f32.mrb[0].mxu0
    %v8956 = vpop.f32.mrb[0].mxu0
    %v8957 = vadd.f32 %v132, %v8956
    %v8958 = vpop.f32.mrb[0].mxu0
    %8959 = vdwg.mxu0
    %v8960 = vsel %vm752, %v8938, -inf
    %8961 = vmax.xlane.f32.xlu0 %v8960
    %v8962 = vpop.xlane.xlu0 %8961
    %v8963 = vsel %vm752, %v8941, -inf
    %8964 = vmax.xlane.f32.xlu0 %v8963
    %v8965 = vpop.xlane.xlu0 %8964
    %v8966 = vsel %vm752, %v8946, -inf
    %8967 = vmax.xlane.f32.xlu0 %v8966
    %v8968 = vpop.xlane.xlu0 %8967
    %v8969 = vsel %vm752, %v8949, -inf
    %8970 = vmax.xlane.f32.xlu0 %v8969
    %v8971 = vpop.xlane.xlu0 %8970
    %v8972 = vsel %vm752, %v8954, -inf
    %8973 = vmax.xlane.f32.xlu0 %v8972
    %v8974 = vpop.xlane.xlu0 %8973
    %v8975 = vsel %vm752, %v8957, -inf
    %8976 = vmax.xlane.f32.xlu0 %v8975
    %v8977 = vpop.xlane.xlu0 %8976
    %v8978 = vsub.f32 %v8938, %v8962
    %v8979 = vsub.f32 %v8941, %v8965
    %v8980 = vsub.f32 %v8946, %v8968
    %v8981 = vsub.f32 %v8949, %v8971
    %v8982 = vsub.f32 %v8954, %v8974
    %v8983 = vsub.f32 %v8957, %v8977
    %v8984 = vmul.f32 %v8978, 1.442695
    %v8985 = vpow.pop %v8984
    %v8986 = vmul.f32 %v8979, 1.442695
    %v8987 = vpow.pop %v8986
    %v8988 = vmul.f32 %v8980, 1.442695
    %v8989 = vpow.pop %v8988
    %v8990 = vmul.f32 %v8981, 1.442695
    %v8991 = vpow.pop %v8990
    %v8992 = vmul.f32 %v8982, 1.442695
    %v8993 = vpow.pop %v8992
    %v8994 = vmul.f32 %v8983, 1.442695
    %v8995 = vpow.pop %v8994
    %v8996 = vsel %vm752, %v8985, 0.0
    %8997 = vadd.xlane.f32.xlu0 %v8996
    %v8998 = vpop.xlane.xlu0 %8997
    %v8999 = vsel %vm752, %v8987, 0.0
    %9000 = vadd.xlane.f32.xlu0 %v8999
    %v9001 = vpop.xlane.xlu0 %9000
    %v9002 = vsel %vm752, %v8989, 0.0
    %9003 = vadd.xlane.f32.xlu0 %v9002
    %v9004 = vpop.xlane.xlu0 %9003
    %v9005 = vsel %vm752, %v8991, 0.0
    %9006 = vadd.xlane.f32.xlu0 %v9005
    %v9007 = vpop.xlane.xlu0 %9006
    %v9008 = vsel %vm752, %v8993, 0.0
    %9009 = vadd.xlane.f32.xlu0 %v9008
    %v9010 = vpop.xlane.xlu0 %9009
    %v9011 = vsel %vm752, %v8995, 0.0
    %9012 = vadd.xlane.f32.xlu0 %v9011
    %v9013 = vpop.xlane.xlu0 %9012
    %v9014 = vrcp.pop %v8998
    %v9015 = vrcp.pop %v9001
    %v9016 = vrcp.pop %v9004
    %v9017 = vrcp.pop %v9007
    %v9018 = vrcp.pop %v9010
    %v9019 = vrcp.pop %v9013
    %v9020 = vmul.f32 %v8985, %v9014
    %v9021 = vmul.f32 %v8987, %v9015
    %v9022 = vmul.f32 %v8989, %v9016
    %v9023 = vmul.f32 %v8991, %v9017
    %v9024 = vmul.f32 %v8993, %v9018
    %v9025 = vmul.f32 %v8995, %v9019
    %v9026 = vpack.c.bf16 %v9021, %v9020
    %v9027 = vpack.c.bf16 %v9023, %v9022
    %v9028 = vpack.c.bf16 %v9025, %v9024
    %9029 = vrot.lane.b32.xlu0 %v8241, 64
    %v9030 = vpop.permute.xlu0 %9029
    %9031 = vrot.lane.b32.xlu0 %v8242, 64
    %v9032 = vpop.permute.xlu0 %9031
    %9033 = vrot.lane.b32.xlu0 %v8243, 64
    %v9034 = vpop.permute.xlu0 %9033
    %v9039 = vsel %vm752, %v9026, 0
    %v9042 = vsel %vm752, %v9027, 0
    %v9045 = vsel %vm752, %v9028, 0
    %9047 = vmatprep.subr.bf16.mxu0 0
    %9048 = vmatpush1.bf16.msra.mxu0 %v9030
    %9049 = vmatprep.subr.bf16.mxu0 0
    %9050 = vmatpush1.bf16.msra.mxu0 %v9032
    %9051 = vmatprep.subr.bf16.mxu0 0
    %9052 = vmatpush1.bf16.msra.mxu0 %v9034
    %9053 = vmatprep.subr.bf16.mxu0 0
    %9054 = vmatpush1.bf16.msra.mxu0 0
    %9055 = vmatprep.subr.bf16.mxu0 0
    %9056 = vmatpush1.bf16.msra.mxu0 0
    %9057 = vmatprep.subr.bf16.mxu0 0
    %9058 = vmatpush1.bf16.msra.mxu0 0
    %9059 = vmatprep.subr.bf16.mxu0 0
    %9060 = vmatpush1.bf16.msra.mxu0 0
    %9061 = vmatprep.subr.bf16.mxu0 0
    %9062 = vmatpush1.bf16.msra.mxu0 0
    %9063 = vmatprep.subr.bf16.mxu0 0
    %9064 = vmatpush1.bf16.msra.mxu0 0
    %9065 = vmatprep.subr.bf16.mxu0 0
    %9066 = vmatpush1.bf16.msra.mxu0 0
    %9067 = vmatprep.subr.bf16.mxu0 0
    %9068 = vmatpush1.bf16.msra.mxu0 0
    %9069 = vmatprep.subr.bf16.mxu0 0
    %9070 = vmatpush1.bf16.msra.mxu0 0
    %9071 = vmatprep.subr.bf16.mxu0 0
    %9072 = vmatpush1.bf16.msra.mxu0 0
    %9073 = vmatprep.subr.bf16.mxu0 0
    %9074 = vmatpush1.bf16.msra.mxu0 0
    %9075 = vmatprep.subr.bf16.mxu0 0
    %9076 = vmatpush1.bf16.msra.mxu0 0
    %9077 = vmatprep.subr.bf16.mxu0 0
    %9078 = vmatpush1.bf16.msra.mxu0 0
    %9079 = vmatprep.mubr.bf16.mxu0 0
    %9080 = vmatmul.mubr.bf16.gmra.mrb[0].mxu0 %v9039
    %v9081 = vpop.f32.mrb[0].mxu0
    %v9082 = vadd.f32 0.0, %v9081
    %v9083 = vpop.f32.mrb[0].mxu0
    %v9084 = vpop.f32.mrb[0].mxu0
    %v9085 = vadd.f32 0.0, %v9084
    %v9086 = vpop.f32.mrb[0].mxu0
    %9087 = vmatprep.mubr.bf16.mxu0 0
    %9088 = vmatmul.mubr.bf16.gmra.mrb[0].mxu0 %v9042
    %v9089 = vpop.f32.mrb[0].mxu0
    %v9090 = vadd.f32 0.0, %v9089
    %v9091 = vpop.f32.mrb[0].mxu0
    %v9092 = vpop.f32.mrb[0].mxu0
    %v9093 = vadd.f32 0.0, %v9092
    %v9094 = vpop.f32.mrb[0].mxu0
    %9095 = vmatprep.mubr.bf16.mxu0 0
    %9096 = vmatmul.mubr.bf16.gmra.mrb[0].mxu0 %v9045
    %v9097 = vpop.f32.mrb[0].mxu0
    %v9098 = vadd.f32 0.0, %v9097
    %v9099 = vpop.f32.mrb[0].mxu0
    %v9100 = vpop.f32.mrb[0].mxu0
    %v9101 = vadd.f32 0.0, %v9100
    %v9102 = vpop.f32.mrb[0].mxu0
    %9103 = vdwg.mxu0
    %v9104 = vpack.c.bf16 %v9085, %v9082
    %v9105 = vpack.c.bf16 %v9093, %v9090
    %v9106 = vpack.c.bf16 %v9101, %v9098
    %v9111 = vunpack.c.l.b16 %v8463
    %v9112 = vunpack.c.l.b16 %v8464
    %v9113 = vunpack.c.l.b16 %v8465
    %v9114 = vunpack.c.l.b16 %v8466
    %v9115 = vpack.c.b16 %v9112, %v9111
    %v9116 = vpack.c.b16 %v9114, %v9113
    %v9120 = vsel %vm676, %v9104, 0
    %v9123 = vsel %vm676, %v9105, 0
    %v9126 = vsel %vm676, %v9106, 0
    %9128 = vmatprep.subr.bf16.mxu0 0
    %9129 = vmatpush1.bf16.msra.mxu0 %v9115
    %9130 = vmatprep.subr.bf16.mxu0 0
    %9131 = vmatpush1.bf16.msra.mxu0 %v9116
    %9132 = vmatprep.subr.bf16.mxu0 0
    %9133 = vmatpush1.bf16.msra.mxu0 0
    %9134 = vmatprep.subr.bf16.mxu0 0
    %9135 = vmatpush1.bf16.msra.mxu0 0
    %9136 = vmatprep.subr.bf16.mxu0 0
    %9137 = vmatpush1.bf16.msra.mxu0 0
    %9138 = vmatprep.subr.bf16.mxu0 0
    %9139 = vmatpush1.bf16.msra.mxu0 0
    %9140 = vmatprep.subr.bf16.mxu0 0
    %9141 = vmatpush1.bf16.msra.mxu0 0
    %9142 = vmatprep.subr.bf16.mxu0 0
    %9143 = vmatpush1.bf16.msra.mxu0 0
    %9144 = vmatprep.subr.bf16.mxu0 0
    %9145 = vmatpush1.bf16.msra.mxu0 0
    %9146 = vmatprep.subr.bf16.mxu0 0
    %9147 = vmatpush1.bf16.msra.mxu0 0
    %9148 = vmatprep.subr.bf16.mxu0 0
    %9149 = vmatpush1.bf16.msra.mxu0 0
    %9150 = vmatprep.subr.bf16.mxu0 0
    %9151 = vmatpush1.bf16.msra.mxu0 0
    %9152 = vmatprep.subr.bf16.mxu0 0
    %9153 = vmatpush1.bf16.msra.mxu0 0
    %9154 = vmatprep.subr.bf16.mxu0 0
    %9155 = vmatpush1.bf16.msra.mxu0 0
    %9156 = vmatprep.subr.bf16.mxu0 0
    %9157 = vmatpush1.bf16.msra.mxu0 0
    %9158 = vmatprep.subr.bf16.mxu0 0
    %9159 = vmatpush1.bf16.msra.mxu0 0
    %9160 = vmatprep.mubr.bf16.mxu0 0
    %9161 = vmatmul.mubr.bf16.gmra.mrb[0].mxu0 %v9120
    %v9162 = vpop.f32.mrb[0].mxu0
    %v9163 = vadd.f32 0.0, %v9162
    %v9164 = vpop.f32.mrb[0].mxu0
    %v9165 = vpop.f32.mrb[0].mxu0
    %v9166 = vadd.f32 0.0, %v9165
    %v9167 = vpop.f32.mrb[0].mxu0
    %9168 = vmatprep.mubr.bf16.mxu0 0
    %9169 = vmatmul.mubr.bf16.gmra.mrb[0].mxu0 %v9123
    %v9170 = vpop.f32.mrb[0].mxu0
    %v9171 = vadd.f32 0.0, %v9170
    %v9172 = vpop.f32.mrb[0].mxu0
    %v9173 = vpop.f32.mrb[0].mxu0
    %v9174 = vadd.f32 0.0, %v9173
    %v9175 = vpop.f32.mrb[0].mxu0
    %9176 = vmatprep.mubr.bf16.mxu0 0
    %9177 = vmatmul.mubr.bf16.gmra.mrb[0].mxu0 %v9126
    %v9178 = vpop.f32.mrb[0].mxu0
    %v9179 = vadd.f32 0.0, %v9178
    %v9180 = vpop.f32.mrb[0].mxu0
    %v9181 = vpop.f32.mrb[0].mxu0
    %v9182 = vadd.f32 0.0, %v9181
    %v9183 = vpop.f32.mrb[0].mxu0
    %9184 = vdwg.mxu0
    %v9185 = vadd.f32 %v8851, %v9163
    %v9186 = vadd.f32 %v8854, %v9166
    %v9187 = vadd.f32 %v8859, %v9171
    %v9188 = vadd.f32 %v8862, %v9174
    %v9189 = vadd.f32 %v8867, %v9179
    %v9190 = vadd.f32 %v8870, %v9182
    %9191 = vrot.lane.b32.xlu0 %v8235, 32
    %v9192 = vpop.permute.xlu0 %9191
    %9193 = vrot.lane.b32.xlu0 %v8236, 32
    %v9194 = vpop.permute.xlu0 %9193
    %9195 = vrot.lane.b32.xlu0 %v8237, 32
    %v9196 = vpop.permute.xlu0 %9195
    %9197 = vrot.lane.b32.xlu0 %v8238, 32
    %v9198 = vpop.permute.xlu0 %9197
    %9199 = vrot.lane.b32.xlu0 %v8239, 32
    %v9200 = vpop.permute.xlu0 %9199
    %9201 = vrot.lane.b32.xlu0 %v8240, 32
    %v9202 = vpop.permute.xlu0 %9201
    %v9204 = vsel %vm676, %v9192, 0
    %v9207 = vsel %vm676, %v9194, 0
    %v9210 = vsel %vm676, %v9196, 0
    %v9213 = vsel %vm676, %v9198, 0
    %v9216 = vsel %vm676, %v9200, 0
    %v9219 = vsel %vm676, %v9202, 0
    %9221 = vmatprep.subr.bf16.mxu0 0
    %9222 = vmatpush1.bf16.xpose.msra.mxu0 %v9213
    %9223 = vmatprep.subr.bf16.mxu0 0
    %9224 = vmatpush1.bf16.xpose.msra.mxu0 %v9216
    %9225 = vmatprep.subr.bf16.mxu0 0
    %9226 = vmatpush1.bf16.xpose.msra.mxu0 %v9219
    %9227 = vmatprep.subr.bf16.mxu0 0
    %9228 = vmatpush1.bf16.xpose.msra.mxu0 0
    %9229 = vmatprep.subr.bf16.mxu0 0
    %9230 = vmatpush1.bf16.xpose.msra.mxu0 0
    %9231 = vmatprep.subr.bf16.mxu0 0
    %9232 = vmatpush1.bf16.xpose.msra.mxu0 0
    %9233 = vmatprep.subr.bf16.mxu0 0
    %9234 = vmatpush1.bf16.xpose.msra.mxu0 0
    %9235 = vmatprep.subr.bf16.mxu0 0
    %9236 = vmatpush1.bf16.xpose.msra.mxu0 0
    %9237 = vmatprep.subr.bf16.mxu0 0
    %9238 = vmatpush1.bf16.xpose.msra.mxu0 0
    %9239 = vmatprep.subr.bf16.mxu0 0
    %9240 = vmatpush1.bf16.xpose.msra.mxu0 0
    %9241 = vmatprep.subr.bf16.mxu0 0
    %9242 = vmatpush1.bf16.xpose.msra.mxu0 0
    %9243 = vmatprep.subr.bf16.mxu0 0
    %9244 = vmatpush1.bf16.xpose.msra.mxu0 0
    %9245 = vmatprep.subr.bf16.mxu0 0
    %9246 = vmatpush1.bf16.xpose.msra.mxu0 0
    %9247 = vmatprep.subr.bf16.mxu0 0
    %9248 = vmatpush1.bf16.xpose.msra.mxu0 0
    %9249 = vmatprep.subr.bf16.mxu0 0
    %9250 = vmatpush1.bf16.xpose.msra.mxu0 0
    %9251 = vmatprep.subr.bf16.mxu0 0
    %9252 = vmatpush1.bf16.xpose.msra.mxu0 0
    %9253 = vmatprep.mubr.bf16.mxu0 0
    %9254 = vmatmul.mubr.bf16.gmra.mrb[0].mxu0 %v9204
    %v9255 = vpop.f32.mrb[0].mxu0
    %v9256 = vadd.f32 %v127, %v9255
    %v9257 = vpop.f32.mrb[0].mxu0
    %v9258 = vpop.f32.mrb[0].mxu0
    %v9259 = vadd.f32 %v128, %v9258
    %v9260 = vpop.f32.mrb[0].mxu0
    %9261 = vmatprep.mubr.bf16.mxu0 0
    %9262 = vmatmul.mubr.bf16.gmra.mrb[0].mxu0 %v9207
    %v9263 = vpop.f32.mrb[0].mxu0
    %v9264 = vadd.f32 %v129, %v9263
    %v9265 = vpop.f32.mrb[0].mxu0
    %v9266 = vpop.f32.mrb[0].mxu0
    %v9267 = vadd.f32 %v130, %v9266
    %v9268 = vpop.f32.mrb[0].mxu0
    %9269 = vmatprep.mubr.bf16.mxu0 0
    %9270 = vmatmul.mubr.bf16.gmra.mrb[0].mxu0 %v9210
    %v9271 = vpop.f32.mrb[0].mxu0
    %v9272 = vadd.f32 %v131, %v9271
    %v9273 = vpop.f32.mrb[0].mxu0
    %v9274 = vpop.f32.mrb[0].mxu0
    %v9275 = vadd.f32 %v132, %v9274
    %v9276 = vpop.f32.mrb[0].mxu0
    %9277 = vdwg.mxu0
    %v9278 = vsel %vm752, %v9256, -inf
    %9279 = vmax.xlane.f32.xlu0 %v9278
    %v9280 = vpop.xlane.xlu0 %9279
    %v9281 = vsel %vm752, %v9259, -inf
    %9282 = vmax.xlane.f32.xlu0 %v9281
    %v9283 = vpop.xlane.xlu0 %9282
    %v9284 = vsel %vm752, %v9264, -inf
    %9285 = vmax.xlane.f32.xlu0 %v9284
    %v9286 = vpop.xlane.xlu0 %9285
    %v9287 = vsel %vm752, %v9267, -inf
    %9288 = vmax.xlane.f32.xlu0 %v9287
    %v9289 = vpop.xlane.xlu0 %9288
    %v9290 = vsel %vm752, %v9272, -inf
    %9291 = vmax.xlane.f32.xlu0 %v9290
    %v9292 = vpop.xlane.xlu0 %9291
    %v9293 = vsel %vm752, %v9275, -inf
    %9294 = vmax.xlane.f32.xlu0 %v9293
    %v9295 = vpop.xlane.xlu0 %9294
    %v9296 = vsub.f32 %v9256, %v9280
    %v9297 = vsub.f32 %v9259, %v9283
    %v9298 = vsub.f32 %v9264, %v9286
    %v9299 = vsub.f32 %v9267, %v9289
    %v9300 = vsub.f32 %v9272, %v9292
    %v9301 = vsub.f32 %v9275, %v9295
    %v9302 = vmul.f32 %v9296, 1.442695
    %v9303 = vpow.pop %v9302
    %v9304 = vmul.f32 %v9297, 1.442695
    %v9305 = vpow.pop %v9304
    %v9306 = vmul.f32 %v9298, 1.442695
    %v9307 = vpow.pop %v9306
    %v9308 = vmul.f32 %v9299, 1.442695
    %v9309 = vpow.pop %v9308
    %v9310 = vmul.f32 %v9300, 1.442695
    %v9311 = vpow.pop %v9310
    %v9312 = vmul.f32 %v9301, 1.442695
    %v9313 = vpow.pop %v9312
    %v9314 = vsel %vm752, %v9303, 0.0
    %9315 = vadd.xlane.f32.xlu0 %v9314
    %v9316 = vpop.xlane.xlu0 %9315
    %v9317 = vsel %vm752, %v9305, 0.0
    %9318 = vadd.xlane.f32.xlu0 %v9317
    %v9319 = vpop.xlane.xlu0 %9318
    %v9320 = vsel %vm752, %v9307, 0.0
    %9321 = vadd.xlane.f32.xlu0 %v9320
    %v9322 = vpop.xlane.xlu0 %9321
    %v9323 = vsel %vm752, %v9309, 0.0
    %9324 = vadd.xlane.f32.xlu0 %v9323
    %v9325 = vpop.xlane.xlu0 %9324
    %v9326 = vsel %vm752, %v9311, 0.0
    %9327 = vadd.xlane.f32.xlu0 %v9326
    %v9328 = vpop.xlane.xlu0 %9327
    %v9329 = vsel %vm752, %v9313, 0.0
    %9330 = vadd.xlane.f32.xlu0 %v9329
    %v9331 = vpop.xlane.xlu0 %9330
    %v9332 = vrcp.pop %v9316
    %v9333 = vrcp.pop %v9319
    %v9334 = vrcp.pop %v9322
    %v9335 = vrcp.pop %v9325
    %v9336 = vrcp.pop %v9328
    %v9337 = vrcp.pop %v9331
    %v9338 = vmul.f32 %v9303, %v9332
    %v9339 = vmul.f32 %v9305, %v9333
    %v9340 = vmul.f32 %v9307, %v9334
    %v9341 = vmul.f32 %v9309, %v9335
    %v9342 = vmul.f32 %v9311, %v9336
    %v9343 = vmul.f32 %v9313, %v9337
    %v9344 = vpack.c.bf16 %v9339, %v9338
    %v9345 = vpack.c.bf16 %v9341, %v9340
    %v9346 = vpack.c.bf16 %v9343, %v9342
    %9347 = vrot.lane.b32.xlu0 %v8241, 32
    %v9348 = vpop.permute.xlu0 %9347
    %9349 = vrot.lane.b32.xlu0 %v8242, 32
    %v9350 = vpop.permute.xlu0 %9349
    %9351 = vrot.lane.b32.xlu0 %v8243, 32
    %v9352 = vpop.permute.xlu0 %9351
    %v9357 = vsel %vm752, %v9344, 0
    %v9360 = vsel %vm752, %v9345, 0
    %v9363 = vsel %vm752, %v9346, 0
    %9365 = vmatprep.subr.bf16.mxu0 0
    %9366 = vmatpush1.bf16.msra.mxu0 %v9348
    %9367 = vmatprep.subr.bf16.mxu0 0
    %9368 = vmatpush1.bf16.msra.mxu0 %v9350
    %9369 = vmatprep.subr.bf16.mxu0 0
    %9370 = vmatpush1.bf16.msra.mxu0 %v9352
    %9371 = vmatprep.subr.bf16.mxu0 0
    %9372 = vmatpush1.bf16.msra.mxu0 0
    %9373 = vmatprep.subr.bf16.mxu0 0
    %9374 = vmatpush1.bf16.msra.mxu0 0
    %9375 = vmatprep.subr.bf16.mxu0 0
    %9376 = vmatpush1.bf16.msra.mxu0 0
    %9377 = vmatprep.subr.bf16.mxu0 0
    %9378 = vmatpush1.bf16.msra.mxu0 0
    %9379 = vmatprep.subr.bf16.mxu0 0
    %9380 = vmatpush1.bf16.msra.mxu0 0
    %9381 = vmatprep.subr.bf16.mxu0 0
    %9382 = vmatpush1.bf16.msra.mxu0 0
    %9383 = vmatprep.subr.bf16.mxu0 0
    %9384 = vmatpush1.bf16.msra.mxu0 0
    %9385 = vmatprep.subr.bf16.mxu0 0
    %9386 = vmatpush1.bf16.msra.mxu0 0
    %9387 = vmatprep.subr.bf16.mxu0 0
    %9388 = vmatpush1.bf16.msra.mxu0 0
    %9389 = vmatprep.subr.bf16.mxu0 0
    %9390 = vmatpush1.bf16.msra.mxu0 0
    %9391 = vmatprep.subr.bf16.mxu0 0
    %9392 = vmatpush1.bf16.msra.mxu0 0
    %9393 = vmatprep.subr.bf16.mxu0 0
    %9394 = vmatpush1.bf16.msra.mxu0 0
    %9395 = vmatprep.subr.bf16.mxu0 0
    %9396 = vmatpush1.bf16.msra.mxu0 0
    %9397 = vmatprep.mubr.bf16.mxu0 0
    %9398 = vmatmul.mubr.bf16.gmra.mrb[0].mxu0 %v9357
    %v9399 = vpop.f32.mrb[0].mxu0
    %v9400 = vadd.f32 0.0, %v9399
    %v9401 = vpop.f32.mrb[0].mxu0
    %v9402 = vpop.f32.mrb[0].mxu0
    %v9403 = vadd.f32 0.0, %v9402
    %v9404 = vpop.f32.mrb[0].mxu0
    %9405 = vmatprep.mubr.bf16.mxu0 0
    %9406 = vmatmul.mubr.bf16.gmra.mrb[0].mxu0 %v9360
    %v9407 = vpop.f32.mrb[0].mxu0
    %v9408 = vadd.f32 0.0, %v9407
    %v9409 = vpop.f32.mrb[0].mxu0
    %v9410 = vpop.f32.mrb[0].mxu0
    %v9411 = vadd.f32 0.0, %v9410
    %v9412 = vpop.f32.mrb[0].mxu0
    %9413 = vmatprep.mubr.bf16.mxu0 0
    %9414 = vmatmul.mubr.bf16.gmra.mrb[0].mxu0 %v9363
    %v9415 = vpop.f32.mrb[0].mxu0
    %v9416 = vadd.f32 0.0, %v9415
    %v9417 = vpop.f32.mrb[0].mxu0
    %v9418 = vpop.f32.mrb[0].mxu0
    %v9419 = vadd.f32 0.0, %v9418
    %v9420 = vpop.f32.mrb[0].mxu0
    %9421 = vdwg.mxu0
    %v9422 = vpack.c.bf16 %v9403, %v9400
    %v9423 = vpack.c.bf16 %v9411, %v9408
    %v9424 = vpack.c.bf16 %v9419, %v9416
    %v9429 = vunpack.c.l.b16 %v8467
    %v9430 = vunpack.c.l.b16 %v8468
    %v9431 = vunpack.c.l.b16 %v8469
    %v9432 = vunpack.c.l.b16 %v8470
    %v9433 = vpack.c.b16 %v9430, %v9429
    %v9434 = vpack.c.b16 %v9432, %v9431
    %v9438 = vsel %vm676, %v9422, 0
    %v9441 = vsel %vm676, %v9423, 0
    %v9444 = vsel %vm676, %v9424, 0
    %9446 = vmatprep.subr.bf16.mxu0 0
    %9447 = vmatpush1.bf16.msra.mxu0 %v9433
    %9448 = vmatprep.subr.bf16.mxu0 0
    %9449 = vmatpush1.bf16.msra.mxu0 %v9434
    %9450 = vmatprep.subr.bf16.mxu0 0
    %9451 = vmatpush1.bf16.msra.mxu0 0
    %9452 = vmatprep.subr.bf16.mxu0 0
    %9453 = vmatpush1.bf16.msra.mxu0 0
    %9454 = vmatprep.subr.bf16.mxu0 0
    %9455 = vmatpush1.bf16.msra.mxu0 0
    %9456 = vmatprep.subr.bf16.mxu0 0
    %9457 = vmatpush1.bf16.msra.mxu0 0
    %9458 = vmatprep.subr.bf16.mxu0 0
    %9459 = vmatpush1.bf16.msra.mxu0 0
    %9460 = vmatprep.subr.bf16.mxu0 0
    %9461 = vmatpush1.bf16.msra.mxu0 0
    %9462 = vmatprep.subr.bf16.mxu0 0
    %9463 = vmatpush1.bf16.msra.mxu0 0
    %9464 = vmatprep.subr.bf16.mxu0 0
    %9465 = vmatpush1.bf16.msra.mxu0 0
    %9466 = vmatprep.subr.bf16.mxu0 0
    %9467 = vmatpush1.bf16.msra.mxu0 0
    %9468 = vmatprep.subr.bf16.mxu0 0
    %9469 = vmatpush1.bf16.msra.mxu0 0
    %9470 = vmatprep.subr.bf16.mxu0 0
    %9471 = vmatpush1.bf16.msra.mxu0 0
    %9472 = vmatprep.subr.bf16.mxu0 0
    %9473 = vmatpush1.bf16.msra.mxu0 0
    %9474 = vmatprep.subr.bf16.mxu0 0
    %9475 = vmatpush1.bf16.msra.mxu0 0
    %9476 = vmatprep.subr.bf16.mxu0 0
    %9477 = vmatpush1.bf16.msra.mxu0 0
    %9478 = vmatprep.mubr.bf16.mxu0 0
    %9479 = vmatmul.mubr.bf16.gmra.mrb[0].mxu0 %v9438
    %v9480 = vpop.f32.mrb[0].mxu0
    %v9481 = vadd.f32 0.0, %v9480
    %v9482 = vpop.f32.mrb[0].mxu0
    %v9483 = vpop.f32.mrb[0].mxu0
    %v9484 = vadd.f32 0.0, %v9483
    %v9485 = vpop.f32.mrb[0].mxu0
    %9486 = vmatprep.mubr.bf16.mxu0 0
    %9487 = vmatmul.mubr.bf16.gmra.mrb[0].mxu0 %v9441
    %v9488 = vpop.f32.mrb[0].mxu0
    %v9489 = vadd.f32 0.0, %v9488
    %v9490 = vpop.f32.mrb[0].mxu0
    %v9491 = vpop.f32.mrb[0].mxu0
    %v9492 = vadd.f32 0.0, %v9491
    %v9493 = vpop.f32.mrb[0].mxu0
    %9494 = vmatprep.mubr.bf16.mxu0 0
    %9495 = vmatmul.mubr.bf16.gmra.mrb[0].mxu0 %v9444
    %v9496 = vpop.f32.mrb[0].mxu0
    %v9497 = vadd.f32 0.0, %v9496
    %v9498 = vpop.f32.mrb[0].mxu0
    %v9499 = vpop.f32.mrb[0].mxu0
    %v9500 = vadd.f32 0.0, %v9499
    %v9501 = vpop.f32.mrb[0].mxu0
    %9502 = vdwg.mxu0
    %v9503 = vadd.f32 %v9185, %v9481
    %v9504 = vadd.f32 %v9186, %v9484
    %v9505 = vadd.f32 %v9187, %v9489
    %v9506 = vadd.f32 %v9188, %v9492
    %v9507 = vadd.f32 %v9189, %v9497
    %v9508 = vadd.f32 %v9190, %v9500
    %s9509 = scalar_lea.vmem %s5, 48
    %v9510 = vld [vmem:[%s9509] sm:$0xff]
    %v9511 = vld [vmem:[%s9509 + $0x8] sm:$0xff]
    %v9512 = vld [vmem:[%s9509 + $0x10] sm:$0xff]
    %v9513 = vld [vmem:[%s9509 + $0x18] sm:$0xff]
    %v9514 = vld [vmem:[%s9509 + $0x20] sm:$0xff]
    %v9515 = vld [vmem:[%s9509 + $0x28] sm:$0xff]
    %v9516 = vpack.c.bf16 %v9511, %v9510
    %v9517 = vpack.c.bf16 %v9513, %v9512
    %v9518 = vpack.c.bf16 %v9515, %v9514
    %9519 = vmatprep.subr.bf16.mxu0 0
    %9520 = vmatpush1.bf16.msra.mxu0 %v7938
    %9521 = vmatprep.subr.bf16.mxu0 0
    %9522 = vmatpush1.bf16.msra.mxu0 %v7943
    %9523 = vmatprep.subr.bf16.mxu0 0
    %9524 = vmatpush1.bf16.msra.mxu0 %v7948
    %9525 = vmatprep.subr.bf16.mxu0 0
    %9526 = vmatpush1.bf16.msra.mxu0 %v7953
    %9527 = vmatprep.subr.bf16.mxu0 0
    %9528 = vmatpush1.bf16.msra.mxu0 %v7958
    %9529 = vmatprep.subr.bf16.mxu0 0
    %9530 = vmatpush1.bf16.msra.mxu0 %v7963
    %9531 = vmatprep.subr.bf16.mxu0 0
    %9532 = vmatpush1.bf16.msra.mxu0 %v7968
    %9533 = vmatprep.subr.bf16.mxu0 0
    %9534 = vmatpush1.bf16.msra.mxu0 %v7973
    %9535 = vmatprep.subr.bf16.mxu0 0
    %9536 = vmatpush1.bf16.msra.mxu0 0
    %9537 = vmatprep.subr.bf16.mxu0 0
    %9538 = vmatpush1.bf16.msra.mxu0 0
    %9539 = vmatprep.subr.bf16.mxu0 0
    %9540 = vmatpush1.bf16.msra.mxu0 0
    %9541 = vmatprep.subr.bf16.mxu0 0
    %9542 = vmatpush1.bf16.msra.mxu0 0
    %9543 = vmatprep.subr.bf16.mxu0 0
    %9544 = vmatpush1.bf16.msra.mxu0 0
    %9545 = vmatprep.subr.bf16.mxu0 0
    %9546 = vmatpush1.bf16.msra.mxu0 0
    %9547 = vmatprep.subr.bf16.mxu0 0
    %9548 = vmatpush1.bf16.msra.mxu0 0
    %9549 = vmatprep.subr.bf16.mxu0 0
    %9550 = vmatpush1.bf16.msra.mxu0 0
    %9551 = vmatprep.mubr.bf16.mxu0 0
    %9552 = vmatmul.mubr.bf16.gmra.mrb[0].mxu0 %v9516
    %v9553 = vpop.f32.mrb[0].mxu0
    %v9554 = vadd.f32 0.0, %v9553
    %v9555 = vpop.f32.mrb[0].mxu0
    %v9556 = vpop.f32.mrb[0].mxu0
    %v9557 = vadd.f32 0.0, %v9556
    %v9558 = vpop.f32.mrb[0].mxu0
    %9559 = vmatprep.mubr.bf16.mxu0 0
    %9560 = vmatmul.mubr.bf16.gmra.mrb[0].mxu0 %v9517
    %v9561 = vpop.f32.mrb[0].mxu0
    %v9562 = vadd.f32 0.0, %v9561
    %v9563 = vpop.f32.mrb[0].mxu0
    %v9564 = vpop.f32.mrb[0].mxu0
    %v9565 = vadd.f32 0.0, %v9564
    %v9566 = vpop.f32.mrb[0].mxu0
    %9567 = vmatprep.mubr.bf16.mxu0 0
    %9568 = vmatmul.mubr.bf16.gmra.mrb[0].mxu0 %v9518
    %v9569 = vpop.f32.mrb[0].mxu0
    %v9570 = vadd.f32 0.0, %v9569
    %v9571 = vpop.f32.mrb[0].mxu0
    %v9572 = vpop.f32.mrb[0].mxu0
    %v9573 = vadd.f32 0.0, %v9572
    %v9574 = vpop.f32.mrb[0].mxu0
    %9575 = vdwg.mxu0
    %s9576 = scalar_lea.vmem %s6, 1
    %v9577 = vld [vmem:[%s9576] sm:$0x1]
    %v9579 = vlaneseq
    %v9580 = vshrl.u32 %v9579, 7
    %v9581 = vsub.s32 0, %v9580
    %v9582 = vrot.slane %v9577, %v9581
    %v9584 = vmul.f32 %v9554, %v9582
    %v9585 = vmul.f32 %v9557, %v9582
    %v9586 = vmul.f32 %v9562, %v9582
    %v9587 = vmul.f32 %v9565, %v9582
    %v9588 = vmul.f32 %v9570, %v9582
    %v9589 = vmul.f32 %v9573, %v9582
    %v9590 = vpack.c.bf16 %v9585, %v9584
    %v9591 = vpack.c.bf16 %v9587, %v9586
    %v9592 = vpack.c.bf16 %v9589, %v9588
    %9593 = vmatprep.subr.bf16.mxu0 0
    %9594 = vmatpush1.bf16.msra.mxu0 %v8803
    %9595 = vmatprep.subr.bf16.mxu0 0
    %9596 = vmatpush1.bf16.msra.mxu0 %v8804
    %9597 = vmatprep.subr.bf16.mxu0 0
    %9598 = vmatpush1.bf16.msra.mxu0 %v8725
    %9599 = vmatprep.subr.bf16.mxu0 0
    %9600 = vmatpush1.bf16.msra.mxu0 %v8726
    %9601 = vmatprep.subr.bf16.mxu0 0
    %9602 = vmatpush1.bf16.msra.mxu0 %v9115
    %9603 = vmatprep.subr.bf16.mxu0 0
    %9604 = vmatpush1.bf16.msra.mxu0 %v9116
    %9605 = vmatprep.subr.bf16.mxu0 0
    %9606 = vmatpush1.bf16.msra.mxu0 %v9433
    %9607 = vmatprep.subr.bf16.mxu0 0
    %9608 = vmatpush1.bf16.msra.mxu0 %v9434
    %9609 = vmatprep.subr.bf16.mxu0 0
    %9610 = vmatpush1.bf16.msra.mxu0 0
    %9611 = vmatprep.subr.bf16.mxu0 0
    %9612 = vmatpush1.bf16.msra.mxu0 0
    %9613 = vmatprep.subr.bf16.mxu0 0
    %9614 = vmatpush1.bf16.msra.mxu0 0
    %9615 = vmatprep.subr.bf16.mxu0 0
    %9616 = vmatpush1.bf16.msra.mxu0 0
    %9617 = vmatprep.subr.bf16.mxu0 0
    %9618 = vmatpush1.bf16.msra.mxu0 0
    %9619 = vmatprep.subr.bf16.mxu0 0
    %9620 = vmatpush1.bf16.msra.mxu0 0
    %9621 = vmatprep.subr.bf16.mxu0 0
    %9622 = vmatpush1.bf16.msra.mxu0 0
    %9623 = vmatprep.subr.bf16.mxu0 0
    %9624 = vmatpush1.bf16.msra.mxu0 0
    %9625 = vmatprep.mubr.bf16.mxu0 0
    %9626 = vmatmul.mubr.bf16.gmra.mrb[0].mxu0 %v9590
    %v9627 = vpop.f32.mrb[0].mxu0
    %v9628 = vadd.f32 0.0, %v9627
    %v9629 = vpop.f32.mrb[0].mxu0
    %v9630 = vpop.f32.mrb[0].mxu0
    %v9631 = vadd.f32 0.0, %v9630
    %v9632 = vpop.f32.mrb[0].mxu0
    %9633 = vmatprep.mubr.bf16.mxu0 0
    %9634 = vmatmul.mubr.bf16.gmra.mrb[0].mxu0 %v9591
    %v9635 = vpop.f32.mrb[0].mxu0
    %v9636 = vadd.f32 0.0, %v9635
    %v9637 = vpop.f32.mrb[0].mxu0
    %v9638 = vpop.f32.mrb[0].mxu0
    %v9639 = vadd.f32 0.0, %v9638
    %v9640 = vpop.f32.mrb[0].mxu0
    %9641 = vmatprep.mubr.bf16.mxu0 0
    %9642 = vmatmul.mubr.bf16.gmra.mrb[0].mxu0 %v9592
    %v9643 = vpop.f32.mrb[0].mxu0
    %v9644 = vadd.f32 0.0, %v9643
    %v9645 = vpop.f32.mrb[0].mxu0
    %v9646 = vpop.f32.mrb[0].mxu0
    %v9647 = vadd.f32 0.0, %v9646
    %v9648 = vpop.f32.mrb[0].mxu0
    %9649 = vdwg.mxu0
    %v9650 = vadd.f32 %v9503, %v9628
    %v9651 = vadd.f32 %v9504, %v9631
    %v9652 = vadd.f32 %v9505, %v9636
    %v9653 = vadd.f32 %v9506, %v9639
    %v9654 = vadd.f32 %v9507, %v9644
    %v9655 = vadd.f32 %v9508, %v9647
    %v9656 = vadd.f32 %v7694, %v9650
    %v9657 = vadd.f32 %v7695, %v9651
    %v9658 = vadd.f32 %v7696, %v9652
    %v9659 = vadd.f32 %v7697, %v9653
    %v9660 = vadd.f32 %v7698, %v9654
    %v9661 = vadd.f32 %v7699, %v9655
    %s9662 = scalar_lea.vmem %s13, 3
    %v9663 = vld [vmem:[%s9662] sm:$0x1]
    %v9664 = vmul.f32 %v9656, %v9656
    %v9665 = vmul.f32 %v9657, %v9657
    %v9666 = vmul.f32 %v9658, %v9658
    %v9667 = vmul.f32 %v9659, %v9659
    %v9668 = vmul.f32 %v9660, %v9660
    %v9669 = vmul.f32 %v9661, %v9661
    %9670 = vadd.xlane.f32.xlu0 %v9664
    %v9671 = vpop.xlane.xlu0 %9670
    %9672 = vadd.xlane.f32.xlu0 %v9665
    %v9673 = vpop.xlane.xlu0 %9672
    %9674 = vadd.xlane.f32.xlu0 %v9666
    %v9675 = vpop.xlane.xlu0 %9674
    %9676 = vadd.xlane.f32.xlu0 %v9667
    %v9677 = vpop.xlane.xlu0 %9676
    %9678 = vadd.xlane.f32.xlu0 %v9668
    %v9679 = vpop.xlane.xlu0 %9678
    %9680 = vadd.xlane.f32.xlu0 %v9669
    %v9681 = vpop.xlane.xlu0 %9680
    %v9682 = vmul.f32 %v9671, %v200
    %v9683 = vmul.f32 %v9673, %v200
    %v9684 = vmul.f32 %v9675, %v200
    %v9685 = vmul.f32 %v9677, %v200
    %v9686 = vmul.f32 %v9679, %v200
    %v9687 = vmul.f32 %v9681, %v200
    %v9688 = vadd.f32 %v9682, 1e-05
    %v9689 = vadd.f32 %v9683, 1e-05
    %v9690 = vadd.f32 %v9684, 1e-05
    %v9691 = vadd.f32 %v9685, 1e-05
    %v9692 = vadd.f32 %v9686, 1e-05
    %v9693 = vadd.f32 %v9687, 1e-05
    %v9694 = vrsqrt.pop %v9688
    %v9695 = vrsqrt.pop %v9689
    %v9696 = vrsqrt.pop %v9690
    %v9697 = vrsqrt.pop %v9691
    %v9698 = vrsqrt.pop %v9692
    %v9699 = vrsqrt.pop %v9693
    %v9700 = vmul.f32 %v9656, %v9694
    %v9701 = vmul.f32 %v9657, %v9695
    %v9702 = vmul.f32 %v9658, %v9696
    %v9703 = vmul.f32 %v9659, %v9697
    %v9704 = vmul.f32 %v9660, %v9698
    %v9705 = vmul.f32 %v9661, %v9699
    %v9707 = vlaneseq
    %v9708 = vshrl.u32 %v9707, 7
    %v9709 = vsub.s32 0, %v9708
    %v9710 = vrot.slane %v9663, %v9709
    %v9712 = vmul.f32 %v9700, %v9710
    %v9713 = vmul.f32 %v9701, %v9710
    %v9714 = vmul.f32 %v9702, %v9710
    %v9715 = vmul.f32 %v9703, %v9710
    %v9716 = vmul.f32 %v9704, %v9710
    %v9717 = vmul.f32 %v9705, %v9710
    %s9718 = scalar_lea.vmem [#allocation4], 768
    %v9719 = vld [vmem:[%s9718] sm:$0xff]
    %v9720 = vld [vmem:[%s9718 + $0x8] sm:$0xff]
    %v9721 = vld [vmem:[%s9718 + $0x10] sm:$0xff]
    %v9722 = vld [vmem:[%s9718 + $0x18] sm:$0xff]
    %v9723 = vld [vmem:[%s9718 + $0x20] sm:$0xff]
    %v9724 = vld [vmem:[%s9718 + $0x28] sm:$0xff]
    %v9725 = vld [vmem:[%s9718 + $0x30] sm:$0xff]
    %v9726 = vld [vmem:[%s9718 + $0x38] sm:$0xff]
    %v9727 = vld [vmem:[%s9718 + $0x40] sm:$0xff]
    %v9728 = vld [vmem:[%s9718 + $0x48] sm:$0xff]
    %v9729 = vld [vmem:[%s9718 + $0x50] sm:$0xff]
    %v9730 = vld [vmem:[%s9718 + $0x58] sm:$0xff]
    %v9731 = vld [vmem:[%s9718 + $0x60] sm:$0xff]
    %v9732 = vld [vmem:[%s9718 + $0x68] sm:$0xff]
    %v9733 = vld [vmem:[%s9718 + $0x70] sm:$0xff]
    %v9734 = vld [vmem:[%s9718 + $0x78] sm:$0xff]
    %v9735 = vld [vmem:[%s9718 + $0x80] sm:$0xff]
    %v9736 = vld [vmem:[%s9718 + $0x88] sm:$0xff]
    %v9737 = vld [vmem:[%s9718 + $0x90] sm:$0xff]
    %v9738 = vld [vmem:[%s9718 + $0x98] sm:$0xff]
    %v9739 = vld [vmem:[%s9718 + $0xa0] sm:$0xff]
    %v9740 = vld [vmem:[%s9718 + $0xa8] sm:$0xff]
    %v9741 = vld [vmem:[%s9718 + $0xb0] sm:$0xff]
    %v9742 = vld [vmem:[%s9718 + $0xb8] sm:$0xff]
    %v9743 = vld [vmem:[%s9718 + $0xc0] sm:$0xff]
    %v9744 = vld [vmem:[%s9718 + $0xc8] sm:$0xff]
    %v9745 = vld [vmem:[%s9718 + $0xd0] sm:$0xff]
    %v9746 = vld [vmem:[%s9718 + $0xd8] sm:$0xff]
    %v9747 = vld [vmem:[%s9718 + $0xe0] sm:$0xff]
    %v9748 = vld [vmem:[%s9718 + $0xe8] sm:$0xff]
    %v9749 = vld [vmem:[%s9718 + $0xf0] sm:$0xff]
    %v9750 = vld [vmem:[%s9718 + $0xf8] sm:$0xff]
    %v9751 = vpack.c.bf16 %v9713, %v9712
    %v9752 = vpack.c.bf16 %v9715, %v9714
    %v9753 = vpack.c.bf16 %v9717, %v9716
    %v9786 = vunpack.c.l.b16 %v9719
    %v9787 = vunpack.c.h.b16 %v9719
    %v9788 = vunpack.c.l.b16 %v9720
    %v9789 = vunpack.c.h.b16 %v9720
    %v9790 = vunpack.c.l.b16 %v9721
    %v9791 = vunpack.c.h.b16 %v9721
    %v9792 = vunpack.c.l.b16 %v9722
    %v9793 = vunpack.c.h.b16 %v9722
    %v9794 = vunpack.c.l.b16 %v9723
    %v9795 = vunpack.c.h.b16 %v9723
    %v9796 = vunpack.c.l.b16 %v9724
    %v9797 = vunpack.c.h.b16 %v9724
    %v9798 = vunpack.c.l.b16 %v9725
    %v9799 = vunpack.c.h.b16 %v9725
    %v9800 = vunpack.c.l.b16 %v9726
    %v9801 = vunpack.c.h.b16 %v9726
    %v9802 = vunpack.c.l.b16 %v9727
    %v9803 = vunpack.c.h.b16 %v9727
    %v9804 = vunpack.c.l.b16 %v9728
    %v9805 = vunpack.c.h.b16 %v9728
    %v9806 = vunpack.c.l.b16 %v9729
    %v9807 = vunpack.c.h.b16 %v9729
    %v9808 = vunpack.c.l.b16 %v9730
    %v9809 = vunpack.c.h.b16 %v9730
    %v9810 = vunpack.c.l.b16 %v9731
    %v9811 = vunpack.c.h.b16 %v9731
    %v9812 = vunpack.c.l.b16 %v9732
    %v9813 = vunpack.c.h.b16 %v9732
    %v9814 = vunpack.c.l.b16 %v9733
    %v9815 = vunpack.c.h.b16 %v9733
    %v9816 = vunpack.c.l.b16 %v9734
    %v9817 = vunpack.c.h.b16 %v9734
    %v9818 = vunpack.c.l.b16 %v9735
    %v9819 = vunpack.c.h.b16 %v9735
    %v9820 = vunpack.c.l.b16 %v9736
    %v9821 = vunpack.c.h.b16 %v9736
    %v9822 = vunpack.c.l.b16 %v9737
    %v9823 = vunpack.c.h.b16 %v9737
    %v9824 = vunpack.c.l.b16 %v9738
    %v9825 = vunpack.c.h.b16 %v9738
    %v9826 = vunpack.c.l.b16 %v9739
    %v9827 = vunpack.c.h.b16 %v9739
    %v9828 = vunpack.c.l.b16 %v9740
    %v9829 = vunpack.c.h.b16 %v9740
    %v9830 = vunpack.c.l.b16 %v9741
    %v9831 = vunpack.c.h.b16 %v9741
    %v9832 = vunpack.c.l.b16 %v9742
    %v9833 = vunpack.c.h.b16 %v9742
    %v9834 = vunpack.c.l.b16 %v9743
    %v9835 = vunpack.c.h.b16 %v9743
    %v9836 = vunpack.c.l.b16 %v9744
    %v9837 = vunpack.c.h.b16 %v9744
    %v9838 = vunpack.c.l.b16 %v9745
    %v9839 = vunpack.c.h.b16 %v9745
    %v9840 = vunpack.c.l.b16 %v9746
    %v9841 = vunpack.c.h.b16 %v9746
    %v9842 = vunpack.c.l.b16 %v9747
    %v9843 = vunpack.c.h.b16 %v9747
    %v9844 = vunpack.c.l.b16 %v9748
    %v9845 = vunpack.c.h.b16 %v9748
    %v9846 = vunpack.c.l.b16 %v9749
    %v9847 = vunpack.c.h.b16 %v9749
    %v9848 = vunpack.c.l.b16 %v9750
    %v9849 = vunpack.c.h.b16 %v9750
    %v9850 = vpack.c.b16 %v9790, %v9786
    %v9851 = vpack.c.b16 %v9791, %v9787
    %v9852 = vpack.c.b16 %v9792, %v9788
    %v9853 = vpack.c.b16 %v9793, %v9789
    %v9854 = vpack.c.b16 %v9798, %v9794
    %v9855 = vpack.c.b16 %v9799, %v9795
    %v9856 = vpack.c.b16 %v9800, %v9796
    %v9857 = vpack.c.b16 %v9801, %v9797
    %v9858 = vpack.c.b16 %v9806, %v9802
    %v9859 = vpack.c.b16 %v9807, %v9803
    %v9860 = vpack.c.b16 %v9808, %v9804
    %v9861 = vpack.c.b16 %v9809, %v9805
    %v9862 = vpack.c.b16 %v9814, %v9810
    %v9863 = vpack.c.b16 %v9815, %v9811
    %v9864 = vpack.c.b16 %v9816, %v9812
    %v9865 = vpack.c.b16 %v9817, %v9813
    %v9866 = vpack.c.b16 %v9822, %v9818
    %v9867 = vpack.c.b16 %v9823, %v9819
    %v9868 = vpack.c.b16 %v9824, %v9820
    %v9869 = vpack.c.b16 %v9825, %v9821
    %v9870 = vpack.c.b16 %v9830, %v9826
    %v9871 = vpack.c.b16 %v9831, %v9827
    %v9872 = vpack.c.b16 %v9832, %v9828
    %v9873 = vpack.c.b16 %v9833, %v9829
    %v9874 = vpack.c.b16 %v9838, %v9834
    %v9875 = vpack.c.b16 %v9839, %v9835
    %v9876 = vpack.c.b16 %v9840, %v9836
    %v9877 = vpack.c.b16 %v9841, %v9837
    %v9878 = vpack.c.b16 %v9846, %v9842
    %v9879 = vpack.c.b16 %v9847, %v9843
    %v9880 = vpack.c.b16 %v9848, %v9844
    %v9881 = vpack.c.b16 %v9849, %v9845
    %9914 = vmatprep.subr.bf16.mxu0 %v9851
    %9915 = vmatpush1.bf16.msra.mxu0 %v9850
    %9916 = vmatprep.subr.bf16.mxu0 %v9855
    %9917 = vmatpush1.bf16.msra.mxu0 %v9854
    %9918 = vmatprep.subr.bf16.mxu0 %v9859
    %9919 = vmatpush1.bf16.msra.mxu0 %v9858
    %9920 = vmatprep.subr.bf16.mxu0 %v9863
    %9921 = vmatpush1.bf16.msra.mxu0 %v9862
    %9922 = vmatprep.subr.bf16.mxu0 %v9867
    %9923 = vmatpush1.bf16.msra.mxu0 %v9866
    %9924 = vmatprep.subr.bf16.mxu0 %v9871
    %9925 = vmatpush1.bf16.msra.mxu0 %v9870
    %9926 = vmatprep.subr.bf16.mxu0 %v9875
    %9927 = vmatpush1.bf16.msra.mxu0 %v9874
    %9928 = vmatprep.subr.bf16.mxu0 %v9879
    %9929 = vmatpush1.bf16.msra.mxu0 %v9878
    %9930 = vmatprep.subr.bf16.mxu0 0
    %9931 = vmatpush1.bf16.msra.mxu0 0
    %9932 = vmatprep.subr.bf16.mxu0 0
    %9933 = vmatpush1.bf16.msra.mxu0 0
    %9934 = vmatprep.subr.bf16.mxu0 0
    %9935 = vmatpush1.bf16.msra.mxu0 0
    %9936 = vmatprep.subr.bf16.mxu0 0
    %9937 = vmatpush1.bf16.msra.mxu0 0
    %9938 = vmatprep.subr.bf16.mxu0 0
    %9939 = vmatpush1.bf16.msra.mxu0 0
    %9940 = vmatprep.subr.bf16.mxu0 0
    %9941 = vmatpush1.bf16.msra.mxu0 0
    %9942 = vmatprep.subr.bf16.mxu0 0
    %9943 = vmatpush1.bf16.msra.mxu0 0
    %9944 = vmatprep.subr.bf16.mxu0 0
    %9945 = vmatpush1.bf16.msra.mxu0 0
    %9946 = vmatprep.mubr.bf16.mxu0 0
    %9947 = vmatmul.mubr.bf16.gmra.mrb[0].mxu0 %v9751
    %v9948 = vpop.f32.mrb[0].mxu0
    %v9949 = vadd.f32 0.0, %v9948
    %v9950 = vpop.f32.mrb[0].mxu0
    %v9951 = vadd.f32 0.0, %v9950
    %v9952 = vpop.f32.mrb[0].mxu0
    %v9953 = vadd.f32 0.0, %v9952
    %v9954 = vpop.f32.mrb[0].mxu0
    %v9955 = vadd.f32 0.0, %v9954
    %9956 = vmatprep.mubr.bf16.mxu0 0
    %9957 = vmatmul.mubr.bf16.gmra.mrb[0].mxu0 %v9752
    %v9958 = vpop.f32.mrb[0].mxu0
    %v9959 = vadd.f32 0.0, %v9958
    %v9960 = vpop.f32.mrb[0].mxu0
    %v9961 = vadd.f32 0.0, %v9960
    %v9962 = vpop.f32.mrb[0].mxu0
    %v9963 = vadd.f32 0.0, %v9962
    %v9964 = vpop.f32.mrb[0].mxu0
    %v9965 = vadd.f32 0.0, %v9964
    %9966 = vmatprep.mubr.bf16.mxu0 0
    %9967 = vmatmul.mubr.bf16.gmra.mrb[0].mxu0 %v9753
    %v9968 = vpop.f32.mrb[0].mxu0
    %v9969 = vadd.f32 0.0, %v9968
    %v9970 = vpop.f32.mrb[0].mxu0
    %v9971 = vadd.f32 0.0, %v9970
    %v9972 = vpop.f32.mrb[0].mxu0
    %v9973 = vadd.f32 0.0, %v9972
    %v9974 = vpop.f32.mrb[0].mxu0
    %v9975 = vadd.f32 0.0, %v9974
    %9976 = vdwg.mxu0
    %9977 = vmatprep.subr.bf16.mxu0 %v9853
    %9978 = vmatpush1.bf16.msra.mxu0 %v9852
    %9979 = vmatprep.subr.bf16.mxu0 %v9857
    %9980 = vmatpush1.bf16.msra.mxu0 %v9856
    %9981 = vmatprep.subr.bf16.mxu0 %v9861
    %9982 = vmatpush1.bf16.msra.mxu0 %v9860
    %9983 = vmatprep.subr.bf16.mxu0 %v9865
    %9984 = vmatpush1.bf16.msra.mxu0 %v9864
    %9985 = vmatprep.subr.bf16.mxu0 %v9869
    %9986 = vmatpush1.bf16.msra.mxu0 %v9868
    %9987 = vmatprep.subr.bf16.mxu0 %v9873
    %9988 = vmatpush1.bf16.msra.mxu0 %v9872
    %9989 = vmatprep.subr.bf16.mxu0 %v9877
    %9990 = vmatpush1.bf16.msra.mxu0 %v9876
    %9991 = vmatprep.subr.bf16.mxu0 %v9881
    %9992 = vmatpush1.bf16.msra.mxu0 %v9880
    %9993 = vmatprep.subr.bf16.mxu0 0
    %9994 = vmatpush1.bf16.msra.mxu0 0
    %9995 = vmatprep.subr.bf16.mxu0 0
    %9996 = vmatpush1.bf16.msra.mxu0 0
    %9997 = vmatprep.subr.bf16.mxu0 0
    %9998 = vmatpush1.bf16.msra.mxu0 0
    %9999 = vmatprep.subr.bf16.mxu0 0
    %10000 = vmatpush1.bf16.msra.mxu0 0
    %10001 = vmatprep.subr.bf16.mxu0 0
    %10002 = vmatpush1.bf16.msra.mxu0 0
    %10003 = vmatprep.subr.bf16.mxu0 0
    %10004 = vmatpush1.bf16.msra.mxu0 0
    %10005 = vmatprep.subr.bf16.mxu0 0
    %10006 = vmatpush1.bf16.msra.mxu0 0
    %10007 = vmatprep.subr.bf16.mxu0 0
    %10008 = vmatpush1.bf16.msra.mxu0 0
    %10009 = vmatprep.mubr.bf16.mxu0 0
    %10010 = vmatmul.mubr.bf16.gmra.mrb[0].mxu0 %v9751
    %v10011 = vpop.f32.mrb[0].mxu0
    %v10012 = vadd.f32 0.0, %v10011
    %v10013 = vpop.f32.mrb[0].mxu0
    %v10014 = vadd.f32 0.0, %v10013
    %v10015 = vpop.f32.mrb[0].mxu0
    %v10016 = vadd.f32 0.0, %v10015
    %v10017 = vpop.f32.mrb[0].mxu0
    %v10018 = vadd.f32 0.0, %v10017
    %10019 = vmatprep.mubr.bf16.mxu0 0
    %10020 = vmatmul.mubr.bf16.gmra.mrb[0].mxu0 %v9752
    %v10021 = vpop.f32.mrb[0].mxu0
    %v10022 = vadd.f32 0.0, %v10021
    %v10023 = vpop.f32.mrb[0].mxu0
    %v10024 = vadd.f32 0.0, %v10023
    %v10025 = vpop.f32.mrb[0].mxu0
    %v10026 = vadd.f32 0.0, %v10025
    %v10027 = vpop.f32.mrb[0].mxu0
    %v10028 = vadd.f32 0.0, %v10027
    %10029 = vmatprep.mubr.bf16.mxu0 0
    %10030 = vmatmul.mubr.bf16.gmra.mrb[0].mxu0 %v9753
    %v10031 = vpop.f32.mrb[0].mxu0
    %v10032 = vadd.f32 0.0, %v10031
    %v10033 = vpop.f32.mrb[0].mxu0
    %v10034 = vadd.f32 0.0, %v10033
    %v10035 = vpop.f32.mrb[0].mxu0
    %v10036 = vadd.f32 0.0, %v10035
    %v10037 = vpop.f32.mrb[0].mxu0
    %v10038 = vadd.f32 0.0, %v10037
    %10039 = vdwg.mxu0
    %v10040 = vsub.f32 0.0, %v9949
    %v10041 = vsub.f32 0.0, %v9951
    %v10042 = vsub.f32 0.0, %v9953
    %v10043 = vsub.f32 0.0, %v9955
    %v10044 = vsub.f32 0.0, %v9959
    %v10045 = vsub.f32 0.0, %v9961
    %v10046 = vsub.f32 0.0, %v9963
    %v10047 = vsub.f32 0.0, %v9965
    %v10048 = vsub.f32 0.0, %v9969
    %v10049 = vsub.f32 0.0, %v9971
    %v10050 = vsub.f32 0.0, %v9973
    %v10051 = vsub.f32 0.0, %v9975
    %v10052 = vmul.f32 %v10040, 1.442695
    %v10053 = vpow.pop %v10052
    %v10054 = vmul.f32 %v10041, 1.442695
    %v10055 = vpow.pop %v10054
    %v10056 = vmul.f32 %v10042, 1.442695
    %v10057 = vpow.pop %v10056
    %v10058 = vmul.f32 %v10043, 1.442695
    %v10059 = vpow.pop %v10058
    %v10060 = vmul.f32 %v10044, 1.442695
    %v10061 = vpow.pop %v10060
    %v10062 = vmul.f32 %v10045, 1.442695
    %v10063 = vpow.pop %v10062
    %v10064 = vmul.f32 %v10046, 1.442695
    %v10065 = vpow.pop %v10064
    %v10066 = vmul.f32 %v10047, 1.442695
    %v10067 = vpow.pop %v10066
    %v10068 = vmul.f32 %v10048, 1.442695
    %v10069 = vpow.pop %v10068
    %v10070 = vmul.f32 %v10049, 1.442695
    %v10071 = vpow.pop %v10070
    %v10072 = vmul.f32 %v10050, 1.442695
    %v10073 = vpow.pop %v10072
    %v10074 = vmul.f32 %v10051, 1.442695
    %v10075 = vpow.pop %v10074
    %v10076 = vadd.f32 %v10053, 1.0
    %v10077 = vadd.f32 %v10055, 1.0
    %v10078 = vadd.f32 %v10057, 1.0
    %v10079 = vadd.f32 %v10059, 1.0
    %v10080 = vadd.f32 %v10061, 1.0
    %v10081 = vadd.f32 %v10063, 1.0
    %v10082 = vadd.f32 %v10065, 1.0
    %v10083 = vadd.f32 %v10067, 1.0
    %v10084 = vadd.f32 %v10069, 1.0
    %v10085 = vadd.f32 %v10071, 1.0
    %v10086 = vadd.f32 %v10073, 1.0
    %v10087 = vadd.f32 %v10075, 1.0
    %v10088 = vrcp.pop %v10076
    %v10089 = vrcp.pop %v10077
    %v10090 = vrcp.pop %v10078
    %v10091 = vrcp.pop %v10079
    %v10092 = vrcp.pop %v10080
    %v10093 = vrcp.pop %v10081
    %v10094 = vrcp.pop %v10082
    %v10095 = vrcp.pop %v10083
    %v10096 = vrcp.pop %v10084
    %v10097 = vrcp.pop %v10085
    %v10098 = vrcp.pop %v10086
    %v10099 = vrcp.pop %v10087
    %v10100 = vmul.f32 %v9949, %v10088
    %v10101 = vmul.f32 %v9951, %v10089
    %v10102 = vmul.f32 %v9953, %v10090
    %v10103 = vmul.f32 %v9955, %v10091
    %v10104 = vmul.f32 %v9959, %v10092
    %v10105 = vmul.f32 %v9961, %v10093
    %v10106 = vmul.f32 %v9963, %v10094
    %v10107 = vmul.f32 %v9965, %v10095
    %v10108 = vmul.f32 %v9969, %v10096
    %v10109 = vmul.f32 %v9971, %v10097
    %v10110 = vmul.f32 %v9973, %v10098
    %v10111 = vmul.f32 %v9975, %v10099
    %v10112 = vmul.f32 %v10100, %v10012
    %v10113 = vmul.f32 %v10101, %v10014
    %v10114 = vmul.f32 %v10102, %v10016
    %v10115 = vmul.f32 %v10103, %v10018
    %v10116 = vmul.f32 %v10104, %v10022
    %v10117 = vmul.f32 %v10105, %v10024
    %v10118 = vmul.f32 %v10106, %v10026
    %v10119 = vmul.f32 %v10107, %v10028
    %v10120 = vmul.f32 %v10108, %v10032
    %v10121 = vmul.f32 %v10109, %v10034
    %v10122 = vmul.f32 %v10110, %v10036
    %v10123 = vmul.f32 %v10111, %v10038
    %s10124 = scalar_lea.vmem [#allocation6], 384
    %v10125 = vld [vmem:[%s10124] sm:$0xf]
    %v10126 = vld [vmem:[%s10124 + $0x4] sm:$0xf]
    %v10127 = vld [vmem:[%s10124 + $0x8] sm:$0xf]
    %v10128 = vld [vmem:[%s10124 + $0xc] sm:$0xf]
    %v10129 = vld [vmem:[%s10124 + $0x10] sm:$0xf]
    %v10130 = vld [vmem:[%s10124 + $0x14] sm:$0xf]
    %v10131 = vld [vmem:[%s10124 + $0x18] sm:$0xf]
    %v10132 = vld [vmem:[%s10124 + $0x1c] sm:$0xf]
    %v10133 = vld [vmem:[%s10124 + $0x20] sm:$0xf]
    %v10134 = vld [vmem:[%s10124 + $0x24] sm:$0xf]
    %v10135 = vld [vmem:[%s10124 + $0x28] sm:$0xf]
    %v10136 = vld [vmem:[%s10124 + $0x2c] sm:$0xf]
    %v10137 = vld [vmem:[%s10124 + $0x30] sm:$0xf]
    %v10138 = vld [vmem:[%s10124 + $0x34] sm:$0xf]
    %v10139 = vld [vmem:[%s10124 + $0x38] sm:$0xf]
    %v10140 = vld [vmem:[%s10124 + $0x3c] sm:$0xf]
    %v10141 = vld [vmem:[%s10124 + $0x40] sm:$0xf]
    %v10142 = vld [vmem:[%s10124 + $0x44] sm:$0xf]
    %v10143 = vld [vmem:[%s10124 + $0x48] sm:$0xf]
    %v10144 = vld [vmem:[%s10124 + $0x4c] sm:$0xf]
    %v10145 = vld [vmem:[%s10124 + $0x50] sm:$0xf]
    %v10146 = vld [vmem:[%s10124 + $0x54] sm:$0xf]
    %v10147 = vld [vmem:[%s10124 + $0x58] sm:$0xf]
    %v10148 = vld [vmem:[%s10124 + $0x5c] sm:$0xf]
    %v10149 = vld [vmem:[%s10124 + $0x60] sm:$0xf]
    %v10150 = vld [vmem:[%s10124 + $0x64] sm:$0xf]
    %v10151 = vld [vmem:[%s10124 + $0x68] sm:$0xf]
    %v10152 = vld [vmem:[%s10124 + $0x6c] sm:$0xf]
    %v10153 = vld [vmem:[%s10124 + $0x70] sm:$0xf]
    %v10154 = vld [vmem:[%s10124 + $0x74] sm:$0xf]
    %v10155 = vld [vmem:[%s10124 + $0x78] sm:$0xf]
    %v10156 = vld [vmem:[%s10124 + $0x7c] sm:$0xf]
    %v10157 = vpack.c.bf16 %v10114, %v10112
    %v10158 = vpack.c.bf16 %v10115, %v10113
    %v10159 = vpack.c.bf16 %v10118, %v10116
    %v10160 = vpack.c.bf16 %v10119, %v10117
    %v10161 = vpack.c.bf16 %v10122, %v10120
    %v10162 = vpack.c.bf16 %v10123, %v10121
    %v10195 = vunpack.c.l.b16 %v10125
    %v10196 = vunpack.c.l.b16 %v10126
    %v10197 = vunpack.c.l.b16 %v10127
    %v10198 = vunpack.c.l.b16 %v10128
    %v10199 = vunpack.c.l.b16 %v10129
    %v10200 = vunpack.c.l.b16 %v10130
    %v10201 = vunpack.c.l.b16 %v10131
    %v10202 = vunpack.c.l.b16 %v10132
    %v10203 = vunpack.c.l.b16 %v10133
    %v10204 = vunpack.c.l.b16 %v10134
    %v10205 = vunpack.c.l.b16 %v10135
    %v10206 = vunpack.c.l.b16 %v10136
    %v10207 = vunpack.c.l.b16 %v10137
    %v10208 = vunpack.c.l.b16 %v10138
    %v10209 = vunpack.c.l.b16 %v10139
    %v10210 = vunpack.c.l.b16 %v10140
    %v10211 = vunpack.c.l.b16 %v10141
    %v10212 = vunpack.c.l.b16 %v10142
    %v10213 = vunpack.c.l.b16 %v10143
    %v10214 = vunpack.c.l.b16 %v10144
    %v10215 = vunpack.c.l.b16 %v10145
    %v10216 = vunpack.c.l.b16 %v10146
    %v10217 = vunpack.c.l.b16 %v10147
    %v10218 = vunpack.c.l.b16 %v10148
    %v10219 = vunpack.c.l.b16 %v10149
    %v10220 = vunpack.c.l.b16 %v10150
    %v10221 = vunpack.c.l.b16 %v10151
    %v10222 = vunpack.c.l.b16 %v10152
    %v10223 = vunpack.c.l.b16 %v10153
    %v10224 = vunpack.c.l.b16 %v10154
    %v10225 = vunpack.c.l.b16 %v10155
    %v10226 = vunpack.c.l.b16 %v10156
    %v10227 = vpack.c.b16 %v10196, %v10195
    %v10228 = vpack.c.b16 %v10198, %v10197
    %v10229 = vpack.c.b16 %v10200, %v10199
    %v10230 = vpack.c.b16 %v10202, %v10201
    %v10231 = vpack.c.b16 %v10204, %v10203
    %v10232 = vpack.c.b16 %v10206, %v10205
    %v10233 = vpack.c.b16 %v10208, %v10207
    %v10234 = vpack.c.b16 %v10210, %v10209
    %v10235 = vpack.c.b16 %v10212, %v10211
    %v10236 = vpack.c.b16 %v10214, %v10213
    %v10237 = vpack.c.b16 %v10216, %v10215
    %v10238 = vpack.c.b16 %v10218, %v10217
    %v10239 = vpack.c.b16 %v10220, %v10219
    %v10240 = vpack.c.b16 %v10222, %v10221
    %v10241 = vpack.c.b16 %v10224, %v10223
    %v10242 = vpack.c.b16 %v10226, %v10225
    %10259 = vmatprep.subr.bf16.mxu0 0
    %10260 = vmatpush1.bf16.msra.mxu0 %v10227
    %10261 = vmatprep.subr.bf16.mxu0 0
    %10262 = vmatpush1.bf16.msra.mxu0 %v10228
    %10263 = vmatprep.subr.bf16.mxu0 0
    %10264 = vmatpush1.bf16.msra.mxu0 %v10229
    %10265 = vmatprep.subr.bf16.mxu0 0
    %10266 = vmatpush1.bf16.msra.mxu0 %v10230
    %10267 = vmatprep.subr.bf16.mxu0 0
    %10268 = vmatpush1.bf16.msra.mxu0 %v10231
    %10269 = vmatprep.subr.bf16.mxu0 0
    %10270 = vmatpush1.bf16.msra.mxu0 %v10232
    %10271 = vmatprep.subr.bf16.mxu0 0
    %10272 = vmatpush1.bf16.msra.mxu0 %v10233
    %10273 = vmatprep.subr.bf16.mxu0 0
    %10274 = vmatpush1.bf16.msra.mxu0 %v10234
    %10275 = vmatprep.subr.bf16.mxu0 0
    %10276 = vmatpush1.bf16.msra.mxu0 %v10235
    %10277 = vmatprep.subr.bf16.mxu0 0
    %10278 = vmatpush1.bf16.msra.mxu0 %v10236
    %10279 = vmatprep.subr.bf16.mxu0 0
    %10280 = vmatpush1.bf16.msra.mxu0 %v10237
    %10281 = vmatprep.subr.bf16.mxu0 0
    %10282 = vmatpush1.bf16.msra.mxu0 %v10238
    %10283 = vmatprep.subr.bf16.mxu0 0
    %10284 = vmatpush1.bf16.msra.mxu0 %v10239
    %10285 = vmatprep.subr.bf16.mxu0 0
    %10286 = vmatpush1.bf16.msra.mxu0 %v10240
    %10287 = vmatprep.subr.bf16.mxu0 0
    %10288 = vmatpush1.bf16.msra.mxu0 %v10241
    %10289 = vmatprep.subr.bf16.mxu0 0
    %10290 = vmatpush1.bf16.msra.mxu0 %v10242
    %10291 = vmatprep.mubr.bf16.mxu0 %v10158
    %10292 = vmatmul.mubr.bf16.gmra.mrb[0].mxu0 %v10157
    %v10293 = vpop.f32.mrb[0].mxu0
    %v10294 = vadd.f32 0.0, %v10293
    %v10295 = vpop.f32.mrb[0].mxu0
    %v10296 = vpop.f32.mrb[0].mxu0
    %v10297 = vadd.f32 0.0, %v10296
    %v10298 = vpop.f32.mrb[0].mxu0
    %10299 = vmatprep.mubr.bf16.mxu0 %v10160
    %10300 = vmatmul.mubr.bf16.gmra.mrb[0].mxu0 %v10159
    %v10301 = vpop.f32.mrb[0].mxu0
    %v10302 = vadd.f32 0.0, %v10301
    %v10303 = vpop.f32.mrb[0].mxu0
    %v10304 = vpop.f32.mrb[0].mxu0
    %v10305 = vadd.f32 0.0, %v10304
    %v10306 = vpop.f32.mrb[0].mxu0
    %10307 = vmatprep.mubr.bf16.mxu0 %v10162
    %10308 = vmatmul.mubr.bf16.gmra.mrb[0].mxu0 %v10161
    %v10309 = vpop.f32.mrb[0].mxu0
    %v10310 = vadd.f32 0.0, %v10309
    %v10311 = vpop.f32.mrb[0].mxu0
    %v10312 = vpop.f32.mrb[0].mxu0
    %v10313 = vadd.f32 0.0, %v10312
    %v10314 = vpop.f32.mrb[0].mxu0
    %10315 = vdwg.mxu0
    %v10316 = vadd.f32 %v9656, %v10294
    %v10317 = vadd.f32 %v9657, %v10297
    %v10318 = vadd.f32 %v9658, %v10302
    %v10319 = vadd.f32 %v9659, %v10305
    %v10320 = vadd.f32 %v9660, %v10310
    %v10321 = vadd.f32 %v9661, %v10313
    %v10322 = vld [vmem:[%s14] sm:$0x1]
    %v10323 = vmul.f32 %v10316, %v10316
    %v10324 = vmul.f32 %v10317, %v10317
    %v10325 = vmul.f32 %v10318, %v10318
    %v10326 = vmul.f32 %v10319, %v10319
    %v10327 = vmul.f32 %v10320, %v10320
    %v10328 = vmul.f32 %v10321, %v10321
    %10329 = vadd.xlane.f32.xlu0 %v10323
    %v10330 = vpop.xlane.xlu0 %10329
    %10331 = vadd.xlane.f32.xlu0 %v10324
    %v10332 = vpop.xlane.xlu0 %10331
    %10333 = vadd.xlane.f32.xlu0 %v10325
    %v10334 = vpop.xlane.xlu0 %10333
    %10335 = vadd.xlane.f32.xlu0 %v10326
    %v10336 = vpop.xlane.xlu0 %10335
    %10337 = vadd.xlane.f32.xlu0 %v10327
    %v10338 = vpop.xlane.xlu0 %10337
    %10339 = vadd.xlane.f32.xlu0 %v10328
    %v10340 = vpop.xlane.xlu0 %10339
    %v10341 = vmul.f32 %v10330, %v200
    %v10342 = vmul.f32 %v10332, %v200
    %v10343 = vmul.f32 %v10334, %v200
    %v10344 = vmul.f32 %v10336, %v200
    %v10345 = vmul.f32 %v10338, %v200
    %v10346 = vmul.f32 %v10340, %v200
    %v10347 = vadd.f32 %v10341, 1e-05
    %v10348 = vadd.f32 %v10342, 1e-05
    %v10349 = vadd.f32 %v10343, 1e-05
    %v10350 = vadd.f32 %v10344, 1e-05
    %v10351 = vadd.f32 %v10345, 1e-05
    %v10352 = vadd.f32 %v10346, 1e-05
    %v10353 = vrsqrt.pop %v10347
    %v10354 = vrsqrt.pop %v10348
    %v10355 = vrsqrt.pop %v10349
    %v10356 = vrsqrt.pop %v10350
    %v10357 = vrsqrt.pop %v10351
    %v10358 = vrsqrt.pop %v10352
    %v10359 = vmul.f32 %v10316, %v10353
    %v10360 = vmul.f32 %v10317, %v10354
    %v10361 = vmul.f32 %v10318, %v10355
    %v10362 = vmul.f32 %v10319, %v10356
    %v10363 = vmul.f32 %v10320, %v10357
    %v10364 = vmul.f32 %v10321, %v10358
    %v10366 = vlaneseq
    %v10367 = vshrl.u32 %v10366, 7
    %v10368 = vsub.s32 0, %v10367
    %v10369 = vrot.slane %v10322, %v10368
    %v10371 = vmul.f32 %v10359, %v10369
    %v10372 = vmul.f32 %v10360, %v10369
    %v10373 = vmul.f32 %v10361, %v10369
    %v10374 = vmul.f32 %v10362, %v10369
    %v10375 = vmul.f32 %v10363, %v10369
    %v10376 = vmul.f32 %v10364, %v10369
    %v10377 = vld [vmem:[#allocation7] sm:$0xff]
    %v10378 = vld [vmem:[#allocation7 + $0x8] sm:$0xff]
    %v10379 = vld [vmem:[#allocation7 + $0x10] sm:$0xff]
    %v10380 = vld [vmem:[#allocation7 + $0x18] sm:$0xff]
    %v10381 = vld [vmem:[#allocation7 + $0x20] sm:$0xff]
    %v10382 = vld [vmem:[#allocation7 + $0x28] sm:$0xff]
    %v10383 = vld [vmem:[#allocation7 + $0x30] sm:$0xff]
    %v10384 = vld [vmem:[#allocation7 + $0x38] sm:$0xff]
    %v10385 = vld [vmem:[#allocation7 + $0x40] sm:$0xff]
    %v10386 = vld [vmem:[#allocation7 + $0x48] sm:$0xff]
    %v10387 = vld [vmem:[#allocation7 + $0x50] sm:$0xff]
    %v10388 = vld [vmem:[#allocation7 + $0x58] sm:$0xff]
    %v10389 = vld [vmem:[#allocation7 + $0x60] sm:$0xff]
    %v10390 = vld [vmem:[#allocation7 + $0x68] sm:$0xff]
    %v10391 = vld [vmem:[#allocation7 + $0x70] sm:$0xff]
    %v10392 = vld [vmem:[#allocation7 + $0x78] sm:$0xff]
    %v10393 = vpack.c.bf16 %v10372, %v10371
    %v10394 = vpack.c.bf16 %v10374, %v10373
    %v10395 = vpack.c.bf16 %v10376, %v10375
    %v10412 = vunpack.c.l.b16 %v10377
    %v10413 = vunpack.c.h.b16 %v10377
    %v10414 = vunpack.c.l.b16 %v10378
    %v10415 = vunpack.c.h.b16 %v10378
    %v10416 = vunpack.c.l.b16 %v10379
    %v10417 = vunpack.c.h.b16 %v10379
    %v10418 = vunpack.c.l.b16 %v10380
    %v10419 = vunpack.c.h.b16 %v10380
    %v10420 = vunpack.c.l.b16 %v10381
    %v10421 = vunpack.c.h.b16 %v10381
    %v10422 = vunpack.c.l.b16 %v10382
    %v10423 = vunpack.c.h.b16 %v10382
    %v10424 = vunpack.c.l.b16 %v10383
    %v10425 = vunpack.c.h.b16 %v10383
    %v10426 = vunpack.c.l.b16 %v10384
    %v10427 = vunpack.c.h.b16 %v10384
    %v10428 = vunpack.c.l.b16 %v10385
    %v10429 = vunpack.c.h.b16 %v10385
    %v10430 = vunpack.c.l.b16 %v10386
    %v10431 = vunpack.c.h.b16 %v10386
    %v10432 = vunpack.c.l.b16 %v10387
    %v10433 = vunpack.c.h.b16 %v10387
    %v10434 = vunpack.c.l.b16 %v10388
    %v10435 = vunpack.c.h.b16 %v10388
    %v10436 = vunpack.c.l.b16 %v10389
    %v10437 = vunpack.c.h.b16 %v10389
    %v10438 = vunpack.c.l.b16 %v10390
    %v10439 = vunpack.c.h.b16 %v10390
    %v10440 = vunpack.c.l.b16 %v10391
    %v10441 = vunpack.c.h.b16 %v10391
    %v10442 = vunpack.c.l.b16 %v10392
    %v10443 = vunpack.c.h.b16 %v10392
    %v10444 = vpack.c.b16 %v10414, %v10412
    %v10445 = vpack.c.b16 %v10415, %v10413
    %v10446 = vpack.c.b16 %v10418, %v10416
    %v10447 = vpack.c.b16 %v10419, %v10417
    %v10448 = vpack.c.b16 %v10422, %v10420
    %v10449 = vpack.c.b16 %v10423, %v10421
    %v10450 = vpack.c.b16 %v10426, %v10424
    %v10451 = vpack.c.b16 %v10427, %v10425
    %v10452 = vpack.c.b16 %v10430, %v10428
    %v10453 = vpack.c.b16 %v10431, %v10429
    %v10454 = vpack.c.b16 %v10434, %v10432
    %v10455 = vpack.c.b16 %v10435, %v10433
    %v10456 = vpack.c.b16 %v10438, %v10436
    %v10457 = vpack.c.b16 %v10439, %v10437
    %v10458 = vpack.c.b16 %v10442, %v10440
    %v10459 = vpack.c.b16 %v10443, %v10441
    %10476 = vmatprep.subr.bf16.mxu0 %v10445
    %10477 = vmatpush1.bf16.msra.mxu0 %v10444
    %10478 = vmatprep.subr.bf16.mxu0 %v10447
    %10479 = vmatpush1.bf16.msra.mxu0 %v10446
    %10480 = vmatprep.subr.bf16.mxu0 %v10449
    %10481 = vmatpush1.bf16.msra.mxu0 %v10448
    %10482 = vmatprep.subr.bf16.mxu0 %v10451
    %10483 = vmatpush1.bf16.msra.mxu0 %v10450
    %10484 = vmatprep.subr.bf16.mxu0 %v10453
    %10485 = vmatpush1.bf16.msra.mxu0 %v10452
    %10486 = vmatprep.subr.bf16.mxu0 %v10455
    %10487 = vmatpush1.bf16.msra.mxu0 %v10454
    %10488 = vmatprep.subr.bf16.mxu0 %v10457
    %10489 = vmatpush1.bf16.msra.mxu0 %v10456
    %10490 = vmatprep.subr.bf16.mxu0 %v10459
    %10491 = vmatpush1.bf16.msra.mxu0 %v10458
    %10492 = vmatprep.subr.bf16.mxu0 0
    %10493 = vmatpush1.bf16.msra.mxu0 0
    %10494 = vmatprep.subr.bf16.mxu0 0
    %10495 = vmatpush1.bf16.msra.mxu0 0
    %10496 = vmatprep.subr.bf16.mxu0 0
    %10497 = vmatpush1.bf16.msra.mxu0 0
    %10498 = vmatprep.subr.bf16.mxu0 0
    %10499 = vmatpush1.bf16.msra.mxu0 0
    %10500 = vmatprep.subr.bf16.mxu0 0
    %10501 = vmatpush1.bf16.msra.mxu0 0
    %10502 = vmatprep.subr.bf16.mxu0 0
    %10503 = vmatpush1.bf16.msra.mxu0 0
    %10504 = vmatprep.subr.bf16.mxu0 0
    %10505 = vmatpush1.bf16.msra.mxu0 0
    %10506 = vmatprep.subr.bf16.mxu0 0
    %10507 = vmatpush1.bf16.msra.mxu0 0
    %10508 = vmatprep.mubr.bf16.mxu0 0
    %10509 = vmatmul.mubr.bf16.gmra.mrb[0].mxu0 %v10393
    %v10510 = vpop.f32.mrb[0].mxu0
    %v10511 = vadd.f32 0.0, %v10510
    %v10512 = vpop.f32.mrb[0].mxu0
    %v10513 = vadd.f32 0.0, %v10512
    %v10514 = vpop.f32.mrb[0].mxu0
    %v10515 = vadd.f32 0.0, %v10514
    %v10516 = vpop.f32.mrb[0].mxu0
    %v10517 = vadd.f32 0.0, %v10516
    %10518 = vmatprep.mubr.bf16.mxu0 0
    %10519 = vmatmul.mubr.bf16.gmra.mrb[0].mxu0 %v10394
    %v10520 = vpop.f32.mrb[0].mxu0
    %v10521 = vadd.f32 0.0, %v10520
    %v10522 = vpop.f32.mrb[0].mxu0
    %v10523 = vadd.f32 0.0, %v10522
    %v10524 = vpop.f32.mrb[0].mxu0
    %v10525 = vadd.f32 0.0, %v10524
    %v10526 = vpop.f32.mrb[0].mxu0
    %v10527 = vadd.f32 0.0, %v10526
    %10528 = vmatprep.mubr.bf16.mxu0 0
    %10529 = vmatmul.mubr.bf16.gmra.mrb[0].mxu0 %v10395
    %v10530 = vpop.f32.mrb[0].mxu0
    %v10531 = vadd.f32 0.0, %v10530
    %v10532 = vpop.f32.mrb[0].mxu0
    %v10533 = vadd.f32 0.0, %v10532
    %v10534 = vpop.f32.mrb[0].mxu0
    %v10535 = vadd.f32 0.0, %v10534
    %v10536 = vpop.f32.mrb[0].mxu0
    %v10537 = vadd.f32 0.0, %v10536
    %10538 = vdwg.mxu0
    %v10539 = vmax.f32 %v10511, %v10513
    %10540 = vmax.xlane.f32.xlu0 %v10539
    %v10541 = vpop.xlane.xlu0 %10540
    %v10542 = vmax.f32 %v10515, %v10517
    %10543 = vmax.xlane.f32.xlu0 %v10542
    %v10544 = vpop.xlane.xlu0 %10543
    %v10545 = vmax.f32 %v10521, %v10523
    %10546 = vmax.xlane.f32.xlu0 %v10545
    %v10547 = vpop.xlane.xlu0 %10546
    %v10548 = vmax.f32 %v10525, %v10527
    %10549 = vmax.xlane.f32.xlu0 %v10548
    %v10550 = vpop.xlane.xlu0 %10549
    %v10551 = vmax.f32 %v10531, %v10533
    %10552 = vmax.xlane.f32.xlu0 %v10551
    %v10553 = vpop.xlane.xlu0 %10552
    %v10554 = vmax.f32 %v10535, %v10537
    %10555 = vmax.xlane.f32.xlu0 %v10554
    %v10556 = vpop.xlane.xlu0 %10555
    %v10557 = vsub.f32 %v10511, %v10541
    %v10558 = vsub.f32 %v10513, %v10541
    %v10559 = vsub.f32 %v10515, %v10544
    %v10560 = vsub.f32 %v10517, %v10544
    %v10561 = vsub.f32 %v10521, %v10547
    %v10562 = vsub.f32 %v10523, %v10547
    %v10563 = vsub.f32 %v10525, %v10550
    %v10564 = vsub.f32 %v10527, %v10550
    %v10565 = vsub.f32 %v10531, %v10553
    %v10566 = vsub.f32 %v10533, %v10553
    %v10567 = vsub.f32 %v10535, %v10556
    %v10568 = vsub.f32 %v10537, %v10556
    %v10569 = vmul.f32 %v10557, 1.442695
    %v10570 = vpow.pop %v10569
    %v10571 = vmul.f32 %v10558, 1.442695
    %v10572 = vpow.pop %v10571
    %v10573 = vmul.f32 %v10559, 1.442695
    %v10574 = vpow.pop %v10573
    %v10575 = vmul.f32 %v10560, 1.442695
    %v10576 = vpow.pop %v10575
    %v10577 = vmul.f32 %v10561, 1.442695
    %v10578 = vpow.pop %v10577
    %v10579 = vmul.f32 %v10562, 1.442695
    %v10580 = vpow.pop %v10579
    %v10581 = vmul.f32 %v10563, 1.442695
    %v10582 = vpow.pop %v10581
    %v10583 = vmul.f32 %v10564, 1.442695
    %v10584 = vpow.pop %v10583
    %v10585 = vmul.f32 %v10565, 1.442695
    %v10586 = vpow.pop %v10585
    %v10587 = vmul.f32 %v10566, 1.442695
    %v10588 = vpow.pop %v10587
    %v10589 = vmul.f32 %v10567, 1.442695
    %v10590 = vpow.pop %v10589
    %v10591 = vmul.f32 %v10568, 1.442695
    %v10592 = vpow.pop %v10591
    %v10593 = vadd.f32 %v10570, %v10572
    %10594 = vadd.xlane.f32.xlu0 %v10593
    %v10595 = vpop.xlane.xlu0 %10594
    %v10596 = vadd.f32 %v10574, %v10576
    %10597 = vadd.xlane.f32.xlu0 %v10596
    %v10598 = vpop.xlane.xlu0 %10597
    %v10599 = vadd.f32 %v10578, %v10580
    %10600 = vadd.xlane.f32.xlu0 %v10599
    %v10601 = vpop.xlane.xlu0 %10600
    %v10602 = vadd.f32 %v10582, %v10584
    %10603 = vadd.xlane.f32.xlu0 %v10602
    %v10604 = vpop.xlane.xlu0 %10603
    %v10605 = vadd.f32 %v10586, %v10588
    %10606 = vadd.xlane.f32.xlu0 %v10605
    %v10607 = vpop.xlane.xlu0 %10606
    %v10608 = vadd.f32 %v10590, %v10592
    %10609 = vadd.xlane.f32.xlu0 %v10608
    %v10610 = vpop.xlane.xlu0 %10609
    %v10611 = vlog2.pop %v10595
    %v10612 = vmul.f32 %v10611, 0.6931472
    %v10613 = vlog2.pop %v10598
    %v10614 = vmul.f32 %v10613, 0.6931472
    %v10615 = vlog2.pop %v10601
    %v10616 = vmul.f32 %v10615, 0.6931472
    %v10617 = vlog2.pop %v10604
    %v10618 = vmul.f32 %v10617, 0.6931472
    %v10619 = vlog2.pop %v10607
    %v10620 = vmul.f32 %v10619, 0.6931472
    %v10621 = vlog2.pop %v10610
    %v10622 = vmul.f32 %v10621, 0.6931472
    %v10623 = vadd.f32 %v10612, %v10541
    %v10624 = vadd.f32 %v10614, %v10544
    %v10625 = vadd.f32 %v10616, %v10547
    %v10626 = vadd.f32 %v10618, %v10550
    %v10627 = vadd.f32 %v10620, %v10553
    %v10628 = vadd.f32 %v10622, %v10556
    %v10629 = vld [vmem:[%s4] sm:$0xff]
    %v10630 = vld [vmem:[%s4 + $0x8] sm:$0xff]
    %v10631 = vld [vmem:[%s4 + $0x10] sm:$0xff]
    %v10632 = vld [vmem:[%s4 + $0x18] sm:$0xff]
    %v10633 = vld [vmem:[%s4 + $0x20] sm:$0xff]
    %v10634 = vld [vmem:[%s4 + $0x28] sm:$0xff]
    %v10635 = vlaneseq
    %v10636 = vand.u32 %v10635, 127
    %v10637 = vadd.s32 %v10636, 128
    %10638 = vset.pattern.permute.xlu0 0
    %10639 = vperm.xlu0 %10638, %v10629
    %v10640 = vpop.permute.xlu0 %10639
    %10641 = vset.pattern.permute.xlu0 0
    %10642 = vperm.xlu0 %10641, %v10630
    %v10643 = vpop.permute.xlu0 %10642
    %10644 = vset.pattern.permute.xlu0 0
    %10645 = vperm.xlu0 %10644, %v10631
    %v10646 = vpop.permute.xlu0 %10645
    %10647 = vset.pattern.permute.xlu0 0
    %10648 = vperm.xlu0 %10647, %v10632
    %v10649 = vpop.permute.xlu0 %10648
    %10650 = vset.pattern.permute.xlu0 0
    %10651 = vperm.xlu0 %10650, %v10633
    %v10652 = vpop.permute.xlu0 %10651
    %10653 = vset.pattern.permute.xlu0 0
    %10654 = vperm.xlu0 %10653, %v10634
    %v10655 = vpop.permute.xlu0 %10654
    %vm10656 = vcmp.eq.s32.totalorder %v10636, %v10640
    %vm10657 = vcmp.eq.s32.totalorder %v10637, %v10640
    %vm10658 = vcmp.eq.s32.totalorder %v10636, %v10643
    %vm10659 = vcmp.eq.s32.totalorder %v10637, %v10643
    %vm10660 = vcmp.eq.s32.totalorder %v10636, %v10646
    %vm10661 = vcmp.eq.s32.totalorder %v10637, %v10646
    %vm10662 = vcmp.eq.s32.totalorder %v10636, %v10649
    %vm10663 = vcmp.eq.s32.totalorder %v10637, %v10649
    %vm10664 = vcmp.eq.s32.totalorder %v10636, %v10652
    %vm10665 = vcmp.eq.s32.totalorder %v10637, %v10652
    %vm10666 = vcmp.eq.s32.totalorder %v10636, %v10655
    %vm10667 = vcmp.eq.s32.totalorder %v10637, %v10655
    %v10668 = vsel %vm10656, 1, 0
    %v10669 = vsel %vm10657, 1, 0
    %v10670 = vsel %vm10658, 1, 0
    %v10671 = vsel %vm10659, 1, 0
    %v10672 = vsel %vm10660, 1, 0
    %v10673 = vsel %vm10661, 1, 0
    %v10674 = vsel %vm10662, 1, 0
    %v10675 = vsel %vm10663, 1, 0
    %v10676 = vsel %vm10664, 1, 0
    %v10677 = vsel %vm10665, 1, 0
    %v10678 = vsel %vm10666, 1, 0
    %v10679 = vsel %vm10667, 1, 0
    %v10680 = vcvt.s32.f32 %v10668
    %v10681 = vcvt.s32.f32 %v10669
    %v10682 = vcvt.s32.f32 %v10670
    %v10683 = vcvt.s32.f32 %v10671
    %v10684 = vcvt.s32.f32 %v10672
    %v10685 = vcvt.s32.f32 %v10673
    %v10686 = vcvt.s32.f32 %v10674
    %v10687 = vcvt.s32.f32 %v10675
    %v10688 = vcvt.s32.f32 %v10676
    %v10689 = vcvt.s32.f32 %v10677
    %v10690 = vcvt.s32.f32 %v10678
    %v10691 = vcvt.s32.f32 %v10679
    %v10692 = vmul.f32 %v10511, %v10680
    %v10693 = vmul.f32 %v10513, %v10681
    %v10694 = vmul.f32 %v10515, %v10682
    %v10695 = vmul.f32 %v10517, %v10683
    %v10696 = vmul.f32 %v10521, %v10684
    %v10697 = vmul.f32 %v10523, %v10685
    %v10698 = vmul.f32 %v10525, %v10686
    %v10699 = vmul.f32 %v10527, %v10687
    %v10700 = vmul.f32 %v10531, %v10688
    %v10701 = vmul.f32 %v10533, %v10689
    %v10702 = vmul.f32 %v10535, %v10690
    %v10703 = vmul.f32 %v10537, %v10691
    %v10704 = vadd.f32 %v10692, %v10693
    %10705 = vadd.xlane.f32.xlu0 %v10704
    %v10706 = vpop.xlane.xlu0 %10705
    %v10707 = vadd.f32 %v10694, %v10695
    %10708 = vadd.xlane.f32.xlu0 %v10707
    %v10709 = vpop.xlane.xlu0 %10708
    %v10710 = vadd.f32 %v10696, %v10697
    %10711 = vadd.xlane.f32.xlu0 %v10710
    %v10712 = vpop.xlane.xlu0 %10711
    %v10713 = vadd.f32 %v10698, %v10699
    %10714 = vadd.xlane.f32.xlu0 %v10713
    %v10715 = vpop.xlane.xlu0 %10714
    %v10716 = vadd.f32 %v10700, %v10701
    %10717 = vadd.xlane.f32.xlu0 %v10716
    %v10718 = vpop.xlane.xlu0 %10717
    %v10719 = vadd.f32 %v10702, %v10703
    %10720 = vadd.xlane.f32.xlu0 %v10719
    %v10721 = vpop.xlane.xlu0 %10720
    %vm10722 = vcmp.ne.s32.totalorder %v10629, 4294967196
    %vm10723 = vcmp.ne.s32.totalorder %v10630, 4294967196
    %vm10724 = vcmp.ne.s32.totalorder %v10631, 4294967196
    %vm10725 = vcmp.ne.s32.totalorder %v10632, 4294967196
    %vm10726 = vcmp.ne.s32.totalorder %v10633, 4294967196
    %vm10727 = vcmp.ne.s32.totalorder %v10634, 4294967196
    %v10728 = vsel %vm10722, 1, 0
    %v10729 = vsel %vm10723, 1, 0
    %v10730 = vsel %vm10724, 1, 0
    %v10731 = vsel %vm10725, 1, 0
    %v10732 = vsel %vm10726, 1, 0
    %v10733 = vsel %vm10727, 1, 0
    %v10734 = vcvt.s32.f32 %v10728
    %v10735 = vcvt.s32.f32 %v10729
    %v10736 = vcvt.s32.f32 %v10730
    %v10737 = vcvt.s32.f32 %v10731
    %v10738 = vcvt.s32.f32 %v10732
    %v10739 = vcvt.s32.f32 %v10733
    %v10740 = vsub.f32 %v10623, %v10706
    %v10741 = vsub.f32 %v10624, %v10709
    %v10742 = vsub.f32 %v10625, %v10712
    %v10743 = vsub.f32 %v10626, %v10715
    %v10744 = vsub.f32 %v10627, %v10718
    %v10745 = vsub.f32 %v10628, %v10721
    %v10746 = vmul.f32 %v10740, %v10734
    %v10747 = vmul.f32 %v10741, %v10735
    %v10748 = vmul.f32 %v10742, %v10736
    %v10749 = vmul.f32 %v10743, %v10737
    %v10750 = vmul.f32 %v10744, %v10738
    %v10751 = vmul.f32 %v10745, %v10739
    %v10752 = vld [vmem:[%s7] sm:$0x7]
    %v10754 = vsel %vm752, %v10752, 0
    %10756 = vmatprep.subr.mxu0 0.0
    %10757 = vmatpush1.msra.mxu0 %v10746
    %10758 = vmatprep.subr.mxu0 0.0
    %10759 = vmatpush1.msra.mxu0 %v10747
    %10760 = vmatprep.subr.mxu0 0.0
    %10761 = vmatpush1.msra.mxu0 %v10748
    %10762 = vmatprep.subr.mxu0 0.0
    %10763 = vmatpush1.msra.mxu0 %v10749
    %10764 = vmatprep.subr.mxu0 0.0
    %10765 = vmatpush1.msra.mxu0 %v10750
    %10766 = vmatprep.subr.mxu0 0.0
    %10767 = vmatpush1.msra.mxu0 %v10751
    %10768 = vmatprep.subr.mxu0 0.0
    %10769 = vmatpush1.msra.mxu0 0.0
    %10770 = vmatprep.subr.mxu0 0.0
    %10771 = vmatpush1.msra.mxu0 0.0
    %10772 = vmatprep.subr.mxu0 0.0
    %10773 = vmatpush1.msra.mxu0 0.0
    %10774 = vmatprep.subr.mxu0 0.0
    %10775 = vmatpush1.msra.mxu0 0.0
    %10776 = vmatprep.subr.mxu0 0.0
    %10777 = vmatpush1.msra.mxu0 0.0
    %10778 = vmatprep.subr.mxu0 0.0
    %10779 = vmatpush1.msra.mxu0 0.0
    %10780 = vmatprep.subr.mxu0 0.0
    %10781 = vmatpush1.msra.mxu0 0.0
    %10782 = vmatprep.subr.mxu0 0.0
    %10783 = vmatpush1.msra.mxu0 0.0
    %10784 = vmatprep.subr.mxu0 0.0
    %10785 = vmatpush1.msra.mxu0 0.0
    %10786 = vmatprep.subr.mxu0 0.0
    %10787 = vmatpush1.msra.mxu0 0.0
    %10788 = vmatprep.subr.mxu0 0.0
    %10789 = vmatpush1.msra.mxu0 0.0
    %10790 = vmatprep.subr.mxu0 0.0
    %10791 = vmatpush1.msra.mxu0 0.0
    %10792 = vmatprep.subr.mxu0 0.0
    %10793 = vmatpush1.msra.mxu0 0.0
    %10794 = vmatprep.subr.mxu0 0.0
    %10795 = vmatpush1.msra.mxu0 0.0
    %10796 = vmatprep.subr.mxu0 0.0
    %10797 = vmatpush1.msra.mxu0 0.0
    %10798 = vmatprep.subr.mxu0 0.0
    %10799 = vmatpush1.msra.mxu0 0.0
    %10800 = vmatprep.subr.mxu0 0.0
    %10801 = vmatpush1.msra.mxu0 0.0
    %10802 = vmatprep.subr.mxu0 0.0
    %10803 = vmatpush1.msra.mxu0 0.0
    %10804 = vmatprep.subr.mxu0 0.0
    %10805 = vmatpush1.msra.mxu0 0.0
    %10806 = vmatprep.subr.mxu0 0.0
    %10807 = vmatpush1.msra.mxu0 0.0
    %10808 = vmatprep.subr.mxu0 0.0
    %10809 = vmatpush1.msra.mxu0 0.0
    %10810 = vmatprep.subr.mxu0 0.0
    %10811 = vmatpush1.msra.mxu0 0.0
    %10812 = vmatprep.subr.mxu0 0.0
    %10813 = vmatpush1.msra.mxu0 0.0
    %10814 = vmatprep.subr.mxu0 0.0
    %10815 = vmatpush1.msra.mxu0 0.0
    %10816 = vmatprep.subr.mxu0 0.0
    %10817 = vmatpush1.msra.mxu0 0.0
    %10818 = vmatprep.subr.mxu0 0.0
    %10819 = vmatpush1.msra.mxu0 0.0
    %10820 = vmatprep.mubr.f32.mxu0 0.0
    %10821 = vmatmul.mubr.f32.gmra.mrb[0].mxu0 %v10754
    %v10822 = vpop.f32.mrb[0].mxu0
    %v10823 = vadd.f32 0.0, %v10822
    %v10824 = vpop.f32.mrb[0].mxu0
    %10825 = vdwg.mxu0
    %vm10826 = vcmask 2048
    %10827 = vst.msk [vmem:[%s16] sm:$0x7] %vm10826, %v10823
    // Predicated region
    $region82: #{_forward_losses.1} parent=1 // pred_check
      _
    $region83: #{_forward_losses.1} parent=1 // pred_check_branch
      %10829 = sbr.rel (0) target = $region85
    $region84: #{_forward_losses.1} parent=1 // pred_region
      _
    $region85: #{_forward_losses.1} parent=1 // pred_fallthru
      _
    // Predicated region
    $region86: #{_forward_losses.1} parent=1 // pred_check
      _
    $region87: #{_forward_losses.1} parent=1 // pred_check_branch
      %10831 = sbr.rel (0) target = $region89
    $region88: #{_forward_losses.1} parent=1 // pred_region
      _
    $region89: #{_forward_losses.1} parent=1 // pred_fallthru
      _
    %10832 = vsyncpa [#allocation3], 1
    %10833 = vsyncpa [#allocation5], 1
    %10834 = vsyncpa [#allocation8], 1

</llo_original>
